<compile_context>
chip_gen: v6e
topology: v6e:2x2x1
jax: 0.10.0
libtpu: 0.0.40
codegen_flags: <defaults>
</compile_context>

<pallas_src>
import functools

import jax
import jax.numpy as jnp
from jax.experimental import pallas as pl
from jax.experimental.pallas import tpu as pltpu


# ----------------------------------------------------------------------------
# Host-side (init-time) builders: conv weights as lane-mixing matrices.
# ----------------------------------------------------------------------------
def _build_w0(w0, B, W, C=4):
    """conv0 (15x15, zero W-pad folded in): (15, 2*B*W*C, B*W*C) bf16."""
    Lout = B * W * C
    Lin = 2 * Lout
    rho = jnp.arange(Lin)
    kap = jnp.arange(Lout)
    src = rho // Lout                         # 0 = ref (ci 0..3), 1 = warped (4..7)
    rem = rho % Lout
    b_i = rem // (W * C)
    j_i = (rem % (W * C)) // C
    ci = rem % C + C * src
    b_o = kap // (W * C)
    j_o = (kap % (W * C)) // C
    co = kap % C
    kw = j_i[:, None] - j_o[None, :] + 7
    valid = (kw >= 0) & (kw <= 14) & (b_i[:, None] == b_o[None, :])
    kw_c = jnp.clip(kw, 0, 14)
    w0_t = jnp.transpose(w0, (2, 3, 1, 0))                    # (kh, kw, ci, co)
    vals = w0_t[:, kw_c, ci[:, None], co[None, :]]            # (15, Lin, Lout)
    return jnp.where(valid[None], vals, 0.0).astype(jnp.bfloat16)


def _build_wc(wl, B, W, C=4):
    """3x3 stride-2 conv lane matrices (3, B*W*C, B*(W//2)*C); reflect-right pad."""
    Wo = W // 2
    Lin, Lout = B * W * C, B * Wo * C
    rho = jnp.arange(Lin)
    kap = jnp.arange(Lout)
    b_i = rho // (W * C)
    j_i = (rho % (W * C)) // C
    ci = rho % C
    b_o = kap // (Wo * C)
    j_o = (kap % (Wo * C)) // C
    co = kap % C
    wl_t = jnp.transpose(wl, (2, 3, 1, 0))                    # (kh, kw, ci, co)
    out = jnp.zeros((3, Lin, Lout), jnp.float32)
    for kw in range(3):
        srcj = 2 * j_o + kw
        srcj = jnp.where(srcj <= W - 1, srcj, W - 2)          # reflect col W -> W-2
        match = (j_i[:, None] == srcj[None, :]) & (b_i[:, None] == b_o[None, :])
        vals = wl_t[:, kw, ci[:, None], co[None, :]]
        out = out + jnp.where(match[None], vals, 0.0)
    return out


def _build_wu(wu, B, W, C=4):
    """ConvTranspose2d(k=2,s=2) lane matrices: (2, B*W*C, B*2W*C)."""
    Wo = 2 * W
    Lin, Lout = B * W * C, B * Wo * C
    rho = jnp.arange(Lin)
    kap = jnp.arange(Lout)
    b_i = rho // (W * C)
    j_i = (rho % (W * C)) // C
    ci = rho % C
    b_o = kap // (Wo * C)
    j_o = (kap % (Wo * C)) // C
    co = kap % C
    wu_t = jnp.transpose(wu, (2, 3, 0, 1))                    # (kh, kw, ci, co)
    out = jnp.zeros((2, Lin, Lout), jnp.float32)
    for kw in range(2):
        match = (j_o[None, :] == 2 * j_i[:, None] + kw) & \
                (b_i[:, None] == b_o[None, :])
        vals = wu_t[:, kw, ci[:, None], co[None, :]]
        out = out + jnp.where(match[None], vals, 0.0)
    return out


# ----------------------------------------------------------------------------
# Host-side (init-time) builders: 0/1 selection / placement matrices.
# ----------------------------------------------------------------------------
def _rowsel_mats(h):
    """(3, h//2, h): S[kh, i, r] = 1 iff r == 2*i + kh (reflect r == h -> h-2)."""
    i = jnp.arange(h // 2)
    r = jnp.arange(h)
    mats = []
    for kh in range(3):
        src = 2 * i + kh
        src = jnp.where(src <= h - 1, src, h - 2)
        mats.append((r[None, :] == src[:, None]).astype(jnp.float32))
    return jnp.stack(mats, axis=0)


def _rowplace_mats(h):
    """(2, 2h, h): P[kh, r, i] = 1 iff r == 2*i + kh."""
    r = jnp.arange(2 * h)
    i = jnp.arange(h)
    return jnp.stack([(r[:, None] == 2 * i[None, :] + kh).astype(jnp.float32)
                      for kh in range(2)], axis=0)


def _lanepool_mats(B, w, C):
    """(2, B*w*C, B*(w//2)*C): lane (b,j,c) -> lane (b,j2,c) with j == 2*j2 + d."""
    w2 = w // 2
    Rn, Kn = B * w * C, B * w2 * C
    rho = jnp.arange(Rn)
    kap = jnp.arange(Kn)
    b_i = rho // (w * C)
    j_i = (rho % (w * C)) // C
    c_i = rho % C
    b_o = kap // (w2 * C)
    j_o = (kap % (w2 * C)) // C
    c_o = kap % C
    mats = []
    for d in range(2):
        sel = ((b_i[:, None] == b_o[None, :]) & (c_i[:, None] == c_o[None, :]) &
               (j_i[:, None] == 2 * j_o[None, :] + d))
        mats.append(sel.astype(jnp.float32))
    return jnp.stack(mats, axis=0)


def _chan_sum_mat(L, C):
    """A[i,k] = 1 iff i//C == k//C: sums channel lanes and re-broadcasts."""
    i = jnp.arange(L)
    return ((i[:, None] // C) == (i[None, :] // C)).astype(jnp.float32)


def precompute_constants(params, B, H, W, C=4):
    """All call-invariant matrices, computed ONCE at init (perf-review item 1)."""
    assert H % 8 == 0 and W % 8 == 0
    HW = H * W
    WC = W * C
    L0 = B * WC
    f32 = jnp.float32

    # warp / layout-placement constants
    p = jnp.arange(HW, dtype=jnp.int32)
    basegrid = jnp.stack([(p % W).astype(f32), (p // W).astype(f32)], axis=0)    # (2,HW)
    srow = ((p[None, :] // W) == jnp.arange(H)[:, None]).astype(f32)             # (H,HW)
    mlane = jnp.arange(WC, dtype=jnp.int32)
    scolc = jnp.stack([(((p[:, None] % W) * C + c) == mlane[None, :]).astype(f32)
                       for c in range(C)], axis=0)                               # (C,HW,WC)
    xi = jnp.arange(W, dtype=jnp.int32)
    scolw = jnp.stack([((xi[:, None] * C + c) == mlane[None, :]).astype(f32)
                       for c in range(C)], axis=0)                               # (C,W,WC)

    # conv weights -> K-concatenated lane-mixing matrices (bf16 MXU operands)
    w0 = _build_w0(params["conv0"], B, W, C).reshape(15 * 2 * L0, L0)
    wc1 = _build_wc(params["conv1"], B, W, C).reshape(3 * L0, L0 // 2).astype(jnp.bfloat16)
    wc2 = _build_wc(params["conv2"], B, W // 2, C).reshape(3 * (L0 // 2), L0 // 4).astype(jnp.bfloat16)
    wc3 = _build_wc(params["conv3"], B, W // 4, C).reshape(3 * (L0 // 4), L0 // 8).astype(jnp.bfloat16)
    wu1t = _build_wu(params["up1"], B, W // 8, C)
    wu2t = _build_wu(params["up2"], B, W // 4, C)
    wu3t = _build_wu(params["up3"], B, W // 2, C)
    wu1 = jnp.concatenate([wu1t[0], wu1t[1]], axis=1).astype(jnp.bfloat16)        # (L0/8, L0/2)
    wu2 = jnp.concatenate([wu2t[0], wu2t[1]], axis=1).astype(jnp.bfloat16)        # (L0/4, L0)
    wu3 = jnp.concatenate([wu3t[0], wu3t[1]], axis=1).astype(jnp.bfloat16)        # (L0/2, 2*L0)

    rs1, rs2, rs3 = _rowsel_mats(H), _rowsel_mats(H // 2), _rowsel_mats(H // 4)
    rp1, rp2, rp3 = _rowplace_mats(H // 8), _rowplace_mats(H // 4), _rowplace_mats(H // 2)
    lp1, lp2, lp3 = (_lanepool_mats(B, W, C), _lanepool_mats(B, W // 2, C),
                     _lanepool_mats(B, W // 4, C))
    a4 = _chan_sum_mat(L0, C)

    return (basegrid, srow, scolc, scolw,
            w0, wc1, wc2, wc3, wu1, wu2, wu3,
            rs1, rs2, rs3, rp1, rp2, rp3, lp1, lp2, lp3, a4)


# ----------------------------------------------------------------------------
# Single fused kernel: warp + conv0 + mask + pyramids + blend + reconstruction.
# ----------------------------------------------------------------------------
def _fused_kernel(refalt_ref, flow_ref, *rest, B, H, W, C):
    (bg_ref, srow_ref, scolc_ref, scolw_ref,
     w0_ref, wc1_ref, wc2_ref, wc3_ref, wu1_ref, wu2_ref, wu3_ref,
     rs1_ref, rs2_ref, rs3_ref, rp1_ref, rp2_ref, rp3_ref,
     lp1_ref, lp2_ref, lp3_ref, a4_ref, out_ref) = rest

    f32 = jnp.float32
    bf16 = jnp.bfloat16
    HW = H * W
    L0 = B * W * C

    def dotf(a, b):                                  # small selection / warp matmuls
        return jnp.dot(a, b, preferred_element_type=f32)

    def dotw(a, w):                                  # bf16 MXU weight matmul, f32 acc
        return jnp.dot(a.astype(bf16), w, preferred_element_type=f32)

    srow = srow_ref[...]                             # (H, HW)
    bgx = bg_ref[0:1, :]                             # (1, HW) base x
    bgy = bg_ref[1:2, :]                             # (1, HW) base y

    # ---- stage 1: NCHW -> lane-dense rep (ref) + fused warp (alt) -----------
    ref_blocks = []
    warp_blocks = []
    for b in range(B):
        # ref channels -> (H, W*C) lane-dense block via placement matmuls
        rblk = None
        for c in range(C):
            t = dotf(refalt_ref[b, c], scolw_ref[c])              # (H,W)@(W,W*C)
            rblk = t if rblk is None else rblk + t
        ref_blocks.append(rblk)

        # --- grid_sample (bilinear, zeros padding, align_corners=False) ------
        fl = flow_ref[b]                                           # (2, HW)
        gx = bgx + fl[0:1, :]
        gy = bgy + fl[1:2, :]
        gxn = 2.0 * gx / max(W - 1, 1) - 1.0                      # MergeLayerC.warp
        gyn = 2.0 * gy / max(H - 1, 1) - 1.0
        sx = ((gxn + 1.0) * W - 1.0) * 0.5                        # un-normalize
        sy = ((gyn + 1.0) * H - 1.0) * 0.5

        x0 = jnp.floor(sx)
        y0 = jnp.floor(sy)
        x1 = x0 + 1.0
        y1 = y0 + 1.0
        wx1 = sx - x0
        wx0 = 1.0 - wx1
        wy1 = sy - y0
        wy0 = 1.0 - wy1

        def taps(c0, c1, w_0, w_1, n):
            in0 = ((c0 >= 0.0) & (c0 <= n - 1.0)).astype(f32)
            in1 = ((c1 >= 0.0) & (c1 <= n - 1.0)).astype(f32)
            i0 = jnp.clip(c0, 0.0, n - 1.0).astype(jnp.int32)
            i1 = jnp.clip(c1, 0.0, n - 1.0).astype(jnp.int32)
            return i0, i1, w_0 * in0, w_1 * in1

        x0i, x1i, wxa, wxb = taps(x0, x1, wx0, wx1, W)
        y0i, y1i, wya, wyb = taps(y0, y1, wy0, wy1, H)

        # Separable bilinear sampling matrices (flow-dependent, built in-kernel).
        xi = jax.lax.broadcasted_iota(jnp.int32, (W, HW), 0)
        cxt = jnp.where(xi == x0i, wxa, 0.0) + jnp.where(xi == x1i, wxb, 0.0)
        yi = jax.lax.broadcasted_iota(jnp.int32, (H, HW), 0)
        ryt = jnp.where(yi == y0i, wya, 0.0) + jnp.where(yi == y1i, wyb, 0.0)

        # grid_sample(ones) mask, binarized (<0.9999 -> 0, else 1).
        mval = (jnp.sum(cxt, axis=0, keepdims=True) *
                jnp.sum(ryt, axis=0, keepdims=True))
        keep = (mval >= 0.9999).astype(f32)                        # (1, HW)

        wblk = None
        for c in range(C):
            tmp = dotf(refalt_ref[b, C + c], cxt)                  # (H,W)@(W,HW)
            v = jnp.sum(ryt * tmp, axis=0, keepdims=True) * keep   # (1, HW)
            t = dotf(srow * v, scolc_ref[c])                       # -> (H, W*C)
            wblk = t if wblk is None else wblk + t
        warp_blocks.append(wblk)

    ref = jnp.concatenate(ref_blocks, axis=1)                      # (H, B*W*C)
    alt = jnp.concatenate(warp_blocks, axis=1)                     # (H, B*W*C)

    # ---- stage 2: conv0 (15x15, zero pad 7, 8->4) as ONE bf16 matmul --------
    xcat = jnp.concatenate([ref, alt], axis=1)                     # (H, 2*L0)
    zrow = jnp.zeros((7, 2 * L0), f32)
    xpad = jnp.concatenate([zrow, xcat, zrow], axis=0)             # (H+14, 2*L0)
    xg0 = jnp.concatenate([xpad[kh:kh + H] for kh in range(15)], axis=1)
    y_c0 = dotw(xg0, w0_ref[...])                                  # (H, L0)
    # mm = sum_c relu([y,-y]) = sum_c |y|; broadcast back over channel lanes.
    mask0 = jax.nn.sigmoid(dotf(jnp.abs(y_c0), a4_ref[...]) - 700.0)

    # ---- building blocks (K-concatenated taps, bf16 weight matmuls) ---------
    def conv_s2(x, rs_ref, wc_ref):                # 3x3, stride 2, reflect r/b pad
        xg = jnp.concatenate([dotf(rs_ref[kh], x) for kh in range(3)], axis=1)
        return dotw(xg, wc_ref[...])

    def upconv(x, rp_ref, wu_ref, lout):           # ConvTranspose2d(k=2, s=2)
        y = dotw(x, wu_ref[...])                                   # (h, 2*lout)
        return dotf(rp_ref[0], y[:, :lout]) + dotf(rp_ref[1], y[:, lout:])

    def maxpool2(m, rs_ref, lp_ref):               # 2x2 / stride-2 max pool
        r = jnp.maximum(dotf(rs_ref[0], m), dotf(rs_ref[1], m))
        return jnp.maximum(dotf(r, lp_ref[0]), dotf(r, lp_ref[1]))

    def lap_pyr(x0_):
        g0 = x0_
        g1 = conv_s2(g0, rs1_ref, wc1_ref)
        g2 = conv_s2(g1, rs2_ref, wc2_ref)
        g3 = conv_s2(g2, rs3_ref, wc3_ref)
        return [g3,
                g2 - upconv(g3, rp1_ref, wu1_ref, L0 // 4),
                g1 - upconv(g2, rp2_ref, wu2_ref, L0 // 2),
                g0 - upconv(g1, rp3_ref, wu3_ref, L0)]

    lp_r = lap_pyr(ref)
    lp_a = lap_pyr(alt)

    m0 = mask0
    m1 = maxpool2(m0, rs1_ref, lp1_ref)
    m2 = maxpool2(m1, rs2_ref, lp2_ref)
    m3 = maxpool2(m2, rs3_ref, lp3_ref)

    LS = [la * m + lb * (1.0 - m)
          for la, lb, m in zip(lp_r, lp_a, [m3, m2, m1, m0])]

    u = upconv(LS[0], rp1_ref, wu1_ref, L0 // 4) + LS[1]
    u = upconv(u, rp2_ref, wu2_ref, L0 // 2) + LS[2]
    u = upconv(u, rp3_ref, wu3_ref, L0) + LS[3]
    out_ref[...] = u                                               # (H, B*W*C)


# ----------------------------------------------------------------------------
# MergeLayerC forward (jit this; `consts` come from precompute_constants).
# ----------------------------------------------------------------------------
def merge_layer_c_forward(x_nchw, consts):
    x = x_nchw.astype(jnp.float32)
    B, cin, H, W = x.shape
    assert cin == 10 and H % 8 == 0 and W % 8 == 0
    C = 4
    HW = H * W
    L0 = B * W * C

    # Wrapper-side ops are slices / free reshapes only (no transposes on input).
    refalt = x[:, :8]                              # (B, 8, H, W): ref ch 0..3, alt 4..7
    flow = x[:, 8:10].reshape(B, 2, HW)            # (B, 2, H*W)

    n_in = 2 + len(consts)
    out_rep = pl.pallas_call(
        functools.partial(_fused_kernel, B=B, H=H, W=W, C=C),
        out_shape=jax.ShapeDtypeStruct((H, L0), jnp.float32),
        in_specs=[pl.BlockSpec(memory_space=pltpu.MemorySpace.VMEM)] * n_in,
        out_specs=pl.BlockSpec(memory_space=pltpu.MemorySpace.VMEM),
        compiler_params=pltpu.CompilerParams(vmem_limit_bytes=32 * 1024 * 1024),
    )(refalt, flow, *consts)

    out = out_rep.reshape(H, B, W, C)
    return jnp.transpose(out, (1, 3, 0, 2))        # -> (B, 4, H, W)


# ----------------------------------------------------------------------------
# Deterministic parameters + example run
# ----------------------------------------------------------------------------
def make_params(key):
    keys = jax.random.split(key, 7)
    return {
        "conv0": 0.05 * jax.random.normal(keys[0], (4, 8, 15, 15), jnp.float32),
        "conv1": 0.05 * jax.random.normal(keys[1], (4, 4, 3, 3), jnp.float32),
        "conv2": 0.05 * jax.random.normal(keys[2], (4, 4, 3, 3), jnp.float32),
        "conv3": 0.05 * jax.random.normal(keys[3], (4, 4, 3, 3), jnp.float32),
        # ConvTranspose2d weights: (Cin, Cout, KH, KW)
        "up1": 0.05 * jax.random.normal(keys[4], (4, 4, 2, 2), jnp.float32),
        "up2": 0.05 * jax.random.normal(keys[5], (4, 4, 2, 2), jnp.float32),
        "up3": 0.05 * jax.random.normal(keys[6], (4, 4, 2, 2), jnp.float32),
    }


if __name__ == "__main__":
    key = jax.random.PRNGKey(0)
    kp, kx, kf = jax.random.split(key, 3)
    params = make_params(kp)

    B, H, W = 2, 16, 16
    # x = [ref(4ch) | alt image(4ch) | optical flow(2ch)]  in NCHW
    imgs = jax.random.normal(kx, (B, 8, H, W), jnp.float32)
    flow = 2.0 * jax.random.normal(kf, (B, 2, H, W), jnp.float32)
    x = jnp.concatenate([imgs, flow], axis=1)                  # (2, 10, 16, 16)

    # All call-invariant matrices built once at init (not per forward call).
    consts = precompute_constants(params, B, H, W)

    fwd = jax.jit(merge_layer_c_forward)
    out = fwd(x, consts)
    jax.block_until_ready(out)
    assert out.shape == (B, 4, H, W)
    assert bool(jnp.all(jnp.isfinite(out)))
    print("KERNEL_OK")
</pallas_src>

<mosaic_0001>
module attributes {stable_mosaic.version = 11 : i64} {
  func.func @_fused_kernel(%arg0: memref<2x8x16x16xf32, #tpu.memory_space<vmem>>, %arg1: memref<2x2x256xf32, #tpu.memory_space<vmem>>, %arg2: memref<2x256xf32, #tpu.memory_space<vmem>>, %arg3: memref<16x256xf32, #tpu.memory_space<vmem>>, %arg4: memref<4x256x64xf32, #tpu.memory_space<vmem>>, %arg5: memref<4x16x64xf32, #tpu.memory_space<vmem>>, %arg6: memref<3840x128xbf16, #tpu.memory_space<vmem>>, %arg7: memref<384x64xbf16, #tpu.memory_space<vmem>>, %arg8: memref<192x32xbf16, #tpu.memory_space<vmem>>, %arg9: memref<96x16xbf16, #tpu.memory_space<vmem>>, %arg10: memref<16x64xbf16, #tpu.memory_space<vmem>>, %arg11: memref<32x128xbf16, #tpu.memory_space<vmem>>, %arg12: memref<64x256xbf16, #tpu.memory_space<vmem>>, %arg13: memref<3x8x16xf32, #tpu.memory_space<vmem>>, %arg14: memref<3x4x8xf32, #tpu.memory_space<vmem>>, %arg15: memref<3x2x4xf32, #tpu.memory_space<vmem>>, %arg16: memref<2x4x2xf32, #tpu.memory_space<vmem>>, %arg17: memref<2x8x4xf32, #tpu.memory_space<vmem>>, %arg18: memref<2x16x8xf32, #tpu.memory_space<vmem>>, %arg19: memref<2x128x64xf32, #tpu.memory_space<vmem>>, %arg20: memref<2x64x32xf32, #tpu.memory_space<vmem>>, %arg21: memref<2x32x16xf32, #tpu.memory_space<vmem>>, %arg22: memref<128x128xf32, #tpu.memory_space<vmem>>, %arg23: memref<16x128xf32, #tpu.memory_space<vmem>>) attributes {dimension_semantics = [], scalar_prefetch = 0 : i64, scratch_operands = 0 : i64, tpu.core_type = #tpu.core_type<tc>} {
    %c0 = arith.constant 0 : index
    %c0_0 = arith.constant 0 : index
    %0 = vector.load %arg3[%c0, %c0_0] : memref<16x256xf32, #tpu.memory_space<vmem>>, vector<16x256xf32>
    %c0_1 = arith.constant 0 : index
    %c0_2 = arith.constant 0 : index
    %1 = vector.load %arg2[%c0_1, %c0_2] : memref<2x256xf32, #tpu.memory_space<vmem>>, vector<1x256xf32>
    %c1 = arith.constant 1 : index
    %c0_3 = arith.constant 0 : index
    %2 = vector.load %arg2[%c1, %c0_3] : memref<2x256xf32, #tpu.memory_space<vmem>>, vector<1x256xf32>
    %c0_4 = arith.constant 0 : index
    %c0_5 = arith.constant 0 : index
    %c0_6 = arith.constant 0 : index
    %c0_7 = arith.constant 0 : index
    %3 = vector.load %arg0[%c0_4, %c0_5, %c0_6, %c0_7] : memref<2x8x16x16xf32, #tpu.memory_space<vmem>>, vector<1x1x16x16xf32>
    %4 = vector.shape_cast %3 : vector<1x1x16x16xf32> to vector<16x16xf32>
    %c0_8 = arith.constant 0 : index
    %c0_9 = arith.constant 0 : index
    %c0_10 = arith.constant 0 : index
    %5 = vector.load %arg5[%c0_8, %c0_9, %c0_10] : memref<4x16x64xf32, #tpu.memory_space<vmem>>, vector<1x16x64xf32>
    %6 = vector.shape_cast %5 : vector<1x16x64xf32> to vector<16x64xf32>
    %cst = arith.constant dense<0.000000e+00> : vector<16x64xf32>
    %7 = tpu.matmul %4, %6, %cst {dimension_numbers = #tpu.dot_dimension_numbers<[1], [0], [0], [1], [0, 0, 1, 1], [], []>} : vector<16x16xf32>, vector<16x64xf32>, vector<16x64xf32> -> vector<16x64xf32>
    %c0_11 = arith.constant 0 : index
    %c1_12 = arith.constant 1 : index
    %c0_13 = arith.constant 0 : index
    %c0_14 = arith.constant 0 : index
    %8 = vector.load %arg0[%c0_11, %c1_12, %c0_13, %c0_14] : memref<2x8x16x16xf32, #tpu.memory_space<vmem>>, vector<1x1x16x16xf32>
    %9 = vector.shape_cast %8 : vector<1x1x16x16xf32> to vector<16x16xf32>
    %c1_15 = arith.constant 1 : index
    %c0_16 = arith.constant 0 : index
    %c0_17 = arith.constant 0 : index
    %10 = vector.load %arg5[%c1_15, %c0_16, %c0_17] : memref<4x16x64xf32, #tpu.memory_space<vmem>>, vector<1x16x64xf32>
    %11 = vector.shape_cast %10 : vector<1x16x64xf32> to vector<16x64xf32>
    %cst_18 = arith.constant dense<0.000000e+00> : vector<16x64xf32>
    %12 = tpu.matmul %9, %11, %cst_18 {dimension_numbers = #tpu.dot_dimension_numbers<[1], [0], [0], [1], [0, 0, 1, 1], [], []>} : vector<16x16xf32>, vector<16x64xf32>, vector<16x64xf32> -> vector<16x64xf32>
    %13 = arith.addf %7, %12 : vector<16x64xf32>
    %c0_19 = arith.constant 0 : index
    %c2 = arith.constant 2 : index
    %c0_20 = arith.constant 0 : index
    %c0_21 = arith.constant 0 : index
    %14 = vector.load %arg0[%c0_19, %c2, %c0_20, %c0_21] : memref<2x8x16x16xf32, #tpu.memory_space<vmem>>, vector<1x1x16x16xf32>
    %15 = vector.shape_cast %14 : vector<1x1x16x16xf32> to vector<16x16xf32>
    %c2_22 = arith.constant 2 : index
    %c0_23 = arith.constant 0 : index
    %c0_24 = arith.constant 0 : index
    %16 = vector.load %arg5[%c2_22, %c0_23, %c0_24] : memref<4x16x64xf32, #tpu.memory_space<vmem>>, vector<1x16x64xf32>
    %17 = vector.shape_cast %16 : vector<1x16x64xf32> to vector<16x64xf32>
    %cst_25 = arith.constant dense<0.000000e+00> : vector<16x64xf32>
    %18 = tpu.matmul %15, %17, %cst_25 {dimension_numbers = #tpu.dot_dimension_numbers<[1], [0], [0], [1], [0, 0, 1, 1], [], []>} : vector<16x16xf32>, vector<16x64xf32>, vector<16x64xf32> -> vector<16x64xf32>
    %19 = arith.addf %13, %18 : vector<16x64xf32>
    %c0_26 = arith.constant 0 : index
    %c3 = arith.constant 3 : index
    %c0_27 = arith.constant 0 : index
    %c0_28 = arith.constant 0 : index
    %20 = vector.load %arg0[%c0_26, %c3, %c0_27, %c0_28] : memref<2x8x16x16xf32, #tpu.memory_space<vmem>>, vector<1x1x16x16xf32>
    %21 = vector.shape_cast %20 : vector<1x1x16x16xf32> to vector<16x16xf32>
    %c3_29 = arith.constant 3 : index
    %c0_30 = arith.constant 0 : index
    %c0_31 = arith.constant 0 : index
    %22 = vector.load %arg5[%c3_29, %c0_30, %c0_31] : memref<4x16x64xf32, #tpu.memory_space<vmem>>, vector<1x16x64xf32>
    %23 = vector.shape_cast %22 : vector<1x16x64xf32> to vector<16x64xf32>
    %cst_32 = arith.constant dense<0.000000e+00> : vector<16x64xf32>
    %24 = tpu.matmul %21, %23, %cst_32 {dimension_numbers = #tpu.dot_dimension_numbers<[1], [0], [0], [1], [0, 0, 1, 1], [], []>} : vector<16x16xf32>, vector<16x64xf32>, vector<16x64xf32> -> vector<16x64xf32>
    %25 = arith.addf %19, %24 : vector<16x64xf32>
    %c0_33 = arith.constant 0 : index
    %c0_34 = arith.constant 0 : index
    %c0_35 = arith.constant 0 : index
    %26 = vector.load %arg1[%c0_33, %c0_34, %c0_35] : memref<2x2x256xf32, #tpu.memory_space<vmem>>, vector<1x2x256xf32>
    %27 = vector.shape_cast %26 : vector<1x2x256xf32> to vector<2x256xf32>
    %28 = vector.extract_strided_slice %27 {offsets = [0, 0], sizes = [1, 256], strides = [1, 1]} : vector<2x256xf32> to vector<1x256xf32>
    %29 = arith.addf %1, %28 : vector<1x256xf32>
    %30 = vector.extract_strided_slice %27 {offsets = [1, 0], sizes = [1, 256], strides = [1, 1]} : vector<2x256xf32> to vector<1x256xf32>
    %31 = arith.addf %2, %30 : vector<1x256xf32>
    %cst_36 = arith.constant 2.000000e+00 : f32
    %32 = vector.broadcast %cst_36 : f32 to vector<1x256xf32>
    %33 = arith.mulf %32, %29 : vector<1x256xf32>
    %cst_37 = arith.constant 1.500000e+01 : f32
    %34 = vector.broadcast %cst_37 : f32 to vector<1x256xf32>
    %35 = arith.divf %33, %34 : vector<1x256xf32>
    %cst_38 = arith.constant 1.000000e+00 : f32
    %36 = vector.broadcast %cst_38 : f32 to vector<1x256xf32>
    %37 = arith.subf %35, %36 : vector<1x256xf32>
    %cst_39 = arith.constant 2.000000e+00 : f32
    %38 = vector.broadcast %cst_39 : f32 to vector<1x256xf32>
    %39 = arith.mulf %38, %31 : vector<1x256xf32>
    %cst_40 = arith.constant 1.500000e+01 : f32
    %40 = vector.broadcast %cst_40 : f32 to vector<1x256xf32>
    %41 = arith.divf %39, %40 : vector<1x256xf32>
    %cst_41 = arith.constant 1.000000e+00 : f32
    %42 = vector.broadcast %cst_41 : f32 to vector<1x256xf32>
    %43 = arith.subf %41, %42 : vector<1x256xf32>
    %cst_42 = arith.constant 1.000000e+00 : f32
    %44 = vector.broadcast %cst_42 : f32 to vector<1x256xf32>
    %45 = arith.addf %37, %44 : vector<1x256xf32>
    %cst_43 = arith.constant 1.600000e+01 : f32
    %46 = vector.broadcast %cst_43 : f32 to vector<1x256xf32>
    %47 = arith.mulf %45, %46 : vector<1x256xf32>
    %cst_44 = arith.constant 1.000000e+00 : f32
    %48 = vector.broadcast %cst_44 : f32 to vector<1x256xf32>
    %49 = arith.subf %47, %48 : vector<1x256xf32>
    %cst_45 = arith.constant 5.000000e-01 : f32
    %50 = vector.broadcast %cst_45 : f32 to vector<1x256xf32>
    %51 = arith.mulf %49, %50 : vector<1x256xf32>
    %cst_46 = arith.constant 1.000000e+00 : f32
    %52 = vector.broadcast %cst_46 : f32 to vector<1x256xf32>
    %53 = arith.addf %43, %52 : vector<1x256xf32>
    %cst_47 = arith.constant 1.600000e+01 : f32
    %54 = vector.broadcast %cst_47 : f32 to vector<1x256xf32>
    %55 = arith.mulf %53, %54 : vector<1x256xf32>
    %cst_48 = arith.constant 1.000000e+00 : f32
    %56 = vector.broadcast %cst_48 : f32 to vector<1x256xf32>
    %57 = arith.subf %55, %56 : vector<1x256xf32>
    %cst_49 = arith.constant 5.000000e-01 : f32
    %58 = vector.broadcast %cst_49 : f32 to vector<1x256xf32>
    %59 = arith.mulf %57, %58 : vector<1x256xf32>
    %60 = math.floor %51 : vector<1x256xf32>
    %61 = math.floor %59 : vector<1x256xf32>
    %cst_50 = arith.constant 1.000000e+00 : f32
    %62 = vector.broadcast %cst_50 : f32 to vector<1x256xf32>
    %63 = arith.addf %60, %62 : vector<1x256xf32>
    %cst_51 = arith.constant 1.000000e+00 : f32
    %64 = vector.broadcast %cst_51 : f32 to vector<1x256xf32>
    %65 = arith.addf %61, %64 : vector<1x256xf32>
    %66 = arith.subf %51, %60 : vector<1x256xf32>
    %cst_52 = arith.constant 1.000000e+00 : f32
    %67 = vector.broadcast %cst_52 : f32 to vector<1x256xf32>
    %68 = arith.subf %67, %66 : vector<1x256xf32>
    %69 = arith.subf %59, %61 : vector<1x256xf32>
    %cst_53 = arith.constant 1.000000e+00 : f32
    %70 = vector.broadcast %cst_53 : f32 to vector<1x256xf32>
    %71 = arith.subf %70, %69 : vector<1x256xf32>
    %cst_54 = arith.constant 0.000000e+00 : f32
    %72 = vector.broadcast %cst_54 : f32 to vector<1x256xf32>
    %73 = arith.cmpf oge, %60, %72 : vector<1x256xf32>
    %cst_55 = arith.constant 1.500000e+01 : f32
    %74 = vector.broadcast %cst_55 : f32 to vector<1x256xf32>
    %75 = arith.cmpf ole, %60, %74 : vector<1x256xf32>
    %76 = arith.andi %73, %75 : vector<1x256xi1>
    %77 = arith.extui %76 : vector<1x256xi1> to vector<1x256xi32>
    %78 = arith.sitofp %77 : vector<1x256xi32> to vector<1x256xf32>
    %cst_56 = arith.constant 0.000000e+00 : f32
    %79 = vector.broadcast %cst_56 : f32 to vector<1x256xf32>
    %80 = arith.cmpf oge, %63, %79 : vector<1x256xf32>
    %cst_57 = arith.constant 1.500000e+01 : f32
    %81 = vector.broadcast %cst_57 : f32 to vector<1x256xf32>
    %82 = arith.cmpf ole, %63, %81 : vector<1x256xf32>
    %83 = arith.andi %80, %82 : vector<1x256xi1>
    %84 = arith.extui %83 : vector<1x256xi1> to vector<1x256xi32>
    %85 = arith.sitofp %84 : vector<1x256xi32> to vector<1x256xf32>
    %cst_58 = arith.constant 0.000000e+00 : f32
    %cst_59 = arith.constant 1.500000e+01 : f32
    %86 = vector.broadcast %cst_58 : f32 to vector<1x256xf32>
    %87 = arith.maximumf %86, %60 : vector<1x256xf32>
    %88 = vector.broadcast %cst_59 : f32 to vector<1x256xf32>
    %89 = arith.minimumf %88, %87 : vector<1x256xf32>
    %90 = arith.fptosi %89 : vector<1x256xf32> to vector<1x256xi32>
    %cst_60 = arith.constant 0.000000e+00 : f32
    %cst_61 = arith.constant 1.500000e+01 : f32
    %91 = vector.broadcast %cst_60 : f32 to vector<1x256xf32>
    %92 = arith.maximumf %91, %63 : vector<1x256xf32>
    %93 = vector.broadcast %cst_61 : f32 to vector<1x256xf32>
    %94 = arith.minimumf %93, %92 : vector<1x256xf32>
    %95 = arith.fptosi %94 : vector<1x256xf32> to vector<1x256xi32>
    %96 = arith.mulf %68, %78 : vector<1x256xf32>
    %97 = arith.mulf %66, %85 : vector<1x256xf32>
    %cst_62 = arith.constant 0.000000e+00 : f32
    %98 = vector.broadcast %cst_62 : f32 to vector<1x256xf32>
    %99 = arith.cmpf oge, %61, %98 : vector<1x256xf32>
    %cst_63 = arith.constant 1.500000e+01 : f32
    %100 = vector.broadcast %cst_63 : f32 to vector<1x256xf32>
    %101 = arith.cmpf ole, %61, %100 : vector<1x256xf32>
    %102 = arith.andi %99, %101 : vector<1x256xi1>
    %103 = arith.extui %102 : vector<1x256xi1> to vector<1x256xi32>
    %104 = arith.sitofp %103 : vector<1x256xi32> to vector<1x256xf32>
    %cst_64 = arith.constant 0.000000e+00 : f32
    %105 = vector.broadcast %cst_64 : f32 to vector<1x256xf32>
    %106 = arith.cmpf oge, %65, %105 : vector<1x256xf32>
    %cst_65 = arith.constant 1.500000e+01 : f32
    %107 = vector.broadcast %cst_65 : f32 to vector<1x256xf32>
    %108 = arith.cmpf ole, %65, %107 : vector<1x256xf32>
    %109 = arith.andi %106, %108 : vector<1x256xi1>
    %110 = arith.extui %109 : vector<1x256xi1> to vector<1x256xi32>
    %111 = arith.sitofp %110 : vector<1x256xi32> to vector<1x256xf32>
    %cst_66 = arith.constant 0.000000e+00 : f32
    %cst_67 = arith.constant 1.500000e+01 : f32
    %112 = vector.broadcast %cst_66 : f32 to vector<1x256xf32>
    %113 = arith.maximumf %112, %61 : vector<1x256xf32>
    %114 = vector.broadcast %cst_67 : f32 to vector<1x256xf32>
    %115 = arith.minimumf %114, %113 : vector<1x256xf32>
    %116 = arith.fptosi %115 : vector<1x256xf32> to vector<1x256xi32>
    %cst_68 = arith.constant 0.000000e+00 : f32
    %cst_69 = arith.constant 1.500000e+01 : f32
    %117 = vector.broadcast %cst_68 : f32 to vector<1x256xf32>
    %118 = arith.maximumf %117, %65 : vector<1x256xf32>
    %119 = vector.broadcast %cst_69 : f32 to vector<1x256xf32>
    %120 = arith.minimumf %119, %118 : vector<1x256xf32>
    %121 = arith.fptosi %120 : vector<1x256xf32> to vector<1x256xi32>
    %122 = arith.mulf %71, %104 : vector<1x256xf32>
    %123 = arith.mulf %69, %111 : vector<1x256xf32>
    %124 = tpu.iota {dimensions = array<i32: 0>} : vector<16x256xi32>
    %125 = vector.broadcast %90 : vector<1x256xi32> to vector<16x256xi32>
    %126 = arith.cmpi eq, %124, %125 : vector<16x256xi32>
    %cst_70 = arith.constant 0.000000e+00 : f32
    %127 = vector.shape_cast %96 : vector<1x256xf32> to vector<1x256xf32>
    %128 = vector.broadcast %127 : vector<1x256xf32> to vector<16x256xf32>
    %129 = vector.broadcast %cst_70 : f32 to vector<16x256xf32>
    %130 = arith.select %126, %128, %129 : vector<16x256xi1>, vector<16x256xf32>
    %131 = vector.broadcast %95 : vector<1x256xi32> to vector<16x256xi32>
    %132 = arith.cmpi eq, %124, %131 : vector<16x256xi32>
    %cst_71 = arith.constant 0.000000e+00 : f32
    %133 = vector.shape_cast %97 : vector<1x256xf32> to vector<1x256xf32>
    %134 = vector.broadcast %133 : vector<1x256xf32> to vector<16x256xf32>
    %135 = vector.broadcast %cst_71 : f32 to vector<16x256xf32>
    %136 = arith.select %132, %134, %135 : vector<16x256xi1>, vector<16x256xf32>
    %137 = arith.addf %130, %136 : vector<16x256xf32>
    %138 = tpu.iota {dimensions = array<i32: 0>} : vector<16x256xi32>
    %139 = vector.broadcast %116 : vector<1x256xi32> to vector<16x256xi32>
    %140 = arith.cmpi eq, %138, %139 : vector<16x256xi32>
    %cst_72 = arith.constant 0.000000e+00 : f32
    %141 = vector.shape_cast %122 : vector<1x256xf32> to vector<1x256xf32>
    %142 = vector.broadcast %141 : vector<1x256xf32> to vector<16x256xf32>
    %143 = vector.broadcast %cst_72 : f32 to vector<16x256xf32>
    %144 = arith.select %140, %142, %143 : vector<16x256xi1>, vector<16x256xf32>
    %145 = vector.broadcast %121 : vector<1x256xi32> to vector<16x256xi32>
    %146 = arith.cmpi eq, %138, %145 : vector<16x256xi32>
    %cst_73 = arith.constant 0.000000e+00 : f32
    %147 = vector.shape_cast %123 : vector<1x256xf32> to vector<1x256xf32>
    %148 = vector.broadcast %147 : vector<1x256xf32> to vector<16x256xf32>
    %149 = vector.broadcast %cst_73 : f32 to vector<16x256xf32>
    %150 = arith.select %146, %148, %149 : vector<16x256xi1>, vector<16x256xf32>
    %151 = arith.addf %144, %150 : vector<16x256xf32>
    %cst_74 = arith.constant dense<0.000000e+00> : vector<256xf32>
    %152 = vector.multi_reduction <add>, %137, %cst_74 [0] : vector<16x256xf32> to vector<256xf32>
    %153 = vector.shape_cast %152 : vector<256xf32> to vector<1x256xf32>
    %cst_75 = arith.constant dense<0.000000e+00> : vector<256xf32>
    %154 = vector.multi_reduction <add>, %151, %cst_75 [0] : vector<16x256xf32> to vector<256xf32>
    %155 = vector.shape_cast %154 : vector<256xf32> to vector<1x256xf32>
    %156 = arith.mulf %153, %155 : vector<1x256xf32>
    %cst_76 = arith.constant 0.999899983 : f32
    %157 = vector.broadcast %cst_76 : f32 to vector<1x256xf32>
    %158 = arith.cmpf oge, %156, %157 : vector<1x256xf32>
    %159 = arith.extui %158 : vector<1x256xi1> to vector<1x256xi32>
    %160 = arith.sitofp %159 : vector<1x256xi32> to vector<1x256xf32>
    %c0_77 = arith.constant 0 : index
    %c4 = arith.constant 4 : index
    %c0_78 = arith.constant 0 : index
    %c0_79 = arith.constant 0 : index
    %161 = vector.load %arg0[%c0_77, %c4, %c0_78, %c0_79] : memref<2x8x16x16xf32, #tpu.memory_space<vmem>>, vector<1x1x16x16xf32>
    %162 = vector.shape_cast %161 : vector<1x1x16x16xf32> to vector<16x16xf32>
    %cst_80 = arith.constant dense<0.000000e+00> : vector<16x256xf32>
    %163 = tpu.matmul %162, %137, %cst_80 {dimension_numbers = #tpu.dot_dimension_numbers<[1], [0], [0], [1], [0, 0, 1, 1], [], []>} : vector<16x16xf32>, vector<16x256xf32>, vector<16x256xf32> -> vector<16x256xf32>
    %164 = arith.mulf %151, %163 : vector<16x256xf32>
    %cst_81 = arith.constant dense<0.000000e+00> : vector<256xf32>
    %165 = vector.multi_reduction <add>, %164, %cst_81 [0] : vector<16x256xf32> to vector<256xf32>
    %166 = vector.shape_cast %165 : vector<256xf32> to vector<1x256xf32>
    %167 = arith.mulf %166, %160 : vector<1x256xf32>
    %168 = vector.broadcast %167 : vector<1x256xf32> to vector<16x256xf32>
    %169 = arith.mulf %0, %168 : vector<16x256xf32>
    %c0_82 = arith.constant 0 : index
    %c0_83 = arith.constant 0 : index
    %c0_84 = arith.constant 0 : index
    %170 = vector.load %arg4[%c0_82, %c0_83, %c0_84] : memref<4x256x64xf32, #tpu.memory_space<vmem>>, vector<1x256x64xf32>
    %171 = vector.shape_cast %170 : vector<1x256x64xf32> to vector<256x64xf32>
    %cst_85 = arith.constant dense<0.000000e+00> : vector<16x64xf32>
    %172 = tpu.matmul %169, %171, %cst_85 {dimension_numbers = #tpu.dot_dimension_numbers<[1], [0], [0], [1], [0, 0, 1, 1], [], []>} : vector<16x256xf32>, vector<256x64xf32>, vector<16x64xf32> -> vector<16x64xf32>
    %c0_86 = arith.constant 0 : index
    %c5 = arith.constant 5 : index
    %c0_87 = arith.constant 0 : index
    %c0_88 = arith.constant 0 : index
    %173 = vector.load %arg0[%c0_86, %c5, %c0_87, %c0_88] : memref<2x8x16x16xf32, #tpu.memory_space<vmem>>, vector<1x1x16x16xf32>
    %174 = vector.shape_cast %173 : vector<1x1x16x16xf32> to vector<16x16xf32>
    %cst_89 = arith.constant dense<0.000000e+00> : vector<16x256xf32>
    %175 = tpu.matmul %174, %137, %cst_89 {dimension_numbers = #tpu.dot_dimension_numbers<[1], [0], [0], [1], [0, 0, 1, 1], [], []>} : vector<16x16xf32>, vector<16x256xf32>, vector<16x256xf32> -> vector<16x256xf32>
    %176 = arith.mulf %151, %175 : vector<16x256xf32>
    %cst_90 = arith.constant dense<0.000000e+00> : vector<256xf32>
    %177 = vector.multi_reduction <add>, %176, %cst_90 [0] : vector<16x256xf32> to vector<256xf32>
    %178 = vector.shape_cast %177 : vector<256xf32> to vector<1x256xf32>
    %179 = arith.mulf %178, %160 : vector<1x256xf32>
    %180 = vector.broadcast %179 : vector<1x256xf32> to vector<16x256xf32>
    %181 = arith.mulf %0, %180 : vector<16x256xf32>
    %c1_91 = arith.constant 1 : index
    %c0_92 = arith.constant 0 : index
    %c0_93 = arith.constant 0 : index
    %182 = vector.load %arg4[%c1_91, %c0_92, %c0_93] : memref<4x256x64xf32, #tpu.memory_space<vmem>>, vector<1x256x64xf32>
    %183 = vector.shape_cast %182 : vector<1x256x64xf32> to vector<256x64xf32>
    %cst_94 = arith.constant dense<0.000000e+00> : vector<16x64xf32>
    %184 = tpu.matmul %181, %183, %cst_94 {dimension_numbers = #tpu.dot_dimension_numbers<[1], [0], [0], [1], [0, 0, 1, 1], [], []>} : vector<16x256xf32>, vector<256x64xf32>, vector<16x64xf32> -> vector<16x64xf32>
    %185 = arith.addf %172, %184 : vector<16x64xf32>
    %c0_95 = arith.constant 0 : index
    %c6 = arith.constant 6 : index
    %c0_96 = arith.constant 0 : index
    %c0_97 = arith.constant 0 : index
    %186 = vector.load %arg0[%c0_95, %c6, %c0_96, %c0_97] : memref<2x8x16x16xf32, #tpu.memory_space<vmem>>, vector<1x1x16x16xf32>
    %187 = vector.shape_cast %186 : vector<1x1x16x16xf32> to vector<16x16xf32>
    %cst_98 = arith.constant dense<0.000000e+00> : vector<16x256xf32>
    %188 = tpu.matmul %187, %137, %cst_98 {dimension_numbers = #tpu.dot_dimension_numbers<[1], [0], [0], [1], [0, 0, 1, 1], [], []>} : vector<16x16xf32>, vector<16x256xf32>, vector<16x256xf32> -> vector<16x256xf32>
    %189 = arith.mulf %151, %188 : vector<16x256xf32>
    %cst_99 = arith.constant dense<0.000000e+00> : vector<256xf32>
    %190 = vector.multi_reduction <add>, %189, %cst_99 [0] : vector<16x256xf32> to vector<256xf32>
    %191 = vector.shape_cast %190 : vector<256xf32> to vector<1x256xf32>
    %192 = arith.mulf %191, %160 : vector<1x256xf32>
    %193 = vector.broadcast %192 : vector<1x256xf32> to vector<16x256xf32>
    %194 = arith.mulf %0, %193 : vector<16x256xf32>
    %c2_100 = arith.constant 2 : index
    %c0_101 = arith.constant 0 : index
    %c0_102 = arith.constant 0 : index
    %195 = vector.load %arg4[%c2_100, %c0_101, %c0_102] : memref<4x256x64xf32, #tpu.memory_space<vmem>>, vector<1x256x64xf32>
    %196 = vector.shape_cast %195 : vector<1x256x64xf32> to vector<256x64xf32>
    %cst_103 = arith.constant dense<0.000000e+00> : vector<16x64xf32>
    %197 = tpu.matmul %194, %196, %cst_103 {dimension_numbers = #tpu.dot_dimension_numbers<[1], [0], [0], [1], [0, 0, 1, 1], [], []>} : vector<16x256xf32>, vector<256x64xf32>, vector<16x64xf32> -> vector<16x64xf32>
    %198 = arith.addf %185, %197 : vector<16x64xf32>
    %c0_104 = arith.constant 0 : index
    %c7 = arith.constant 7 : index
    %c0_105 = arith.constant 0 : index
    %c0_106 = arith.constant 0 : index
    %199 = vector.load %arg0[%c0_104, %c7, %c0_105, %c0_106] : memref<2x8x16x16xf32, #tpu.memory_space<vmem>>, vector<1x1x16x16xf32>
    %200 = vector.shape_cast %199 : vector<1x1x16x16xf32> to vector<16x16xf32>
    %cst_107 = arith.constant dense<0.000000e+00> : vector<16x256xf32>
    %201 = tpu.matmul %200, %137, %cst_107 {dimension_numbers = #tpu.dot_dimension_numbers<[1], [0], [0], [1], [0, 0, 1, 1], [], []>} : vector<16x16xf32>, vector<16x256xf32>, vector<16x256xf32> -> vector<16x256xf32>
    %202 = arith.mulf %151, %201 : vector<16x256xf32>
    %cst_108 = arith.constant dense<0.000000e+00> : vector<256xf32>
    %203 = vector.multi_reduction <add>, %202, %cst_108 [0] : vector<16x256xf32> to vector<256xf32>
    %204 = vector.shape_cast %203 : vector<256xf32> to vector<1x256xf32>
    %205 = arith.mulf %204, %160 : vector<1x256xf32>
    %206 = vector.broadcast %205 : vector<1x256xf32> to vector<16x256xf32>
    %207 = arith.mulf %0, %206 : vector<16x256xf32>
    %c3_109 = arith.constant 3 : index
    %c0_110 = arith.constant 0 : index
    %c0_111 = arith.constant 0 : index
    %208 = vector.load %arg4[%c3_109, %c0_110, %c0_111] : memref<4x256x64xf32, #tpu.memory_space<vmem>>, vector<1x256x64xf32>
    %209 = vector.shape_cast %208 : vector<1x256x64xf32> to vector<256x64xf32>
    %cst_112 = arith.constant dense<0.000000e+00> : vector<16x64xf32>
    %210 = tpu.matmul %207, %209, %cst_112 {dimension_numbers = #tpu.dot_dimension_numbers<[1], [0], [0], [1], [0, 0, 1, 1], [], []>} : vector<16x256xf32>, vector<256x64xf32>, vector<16x64xf32> -> vector<16x64xf32>
    %211 = arith.addf %198, %210 : vector<16x64xf32>
    %c1_113 = arith.constant 1 : index
    %c0_114 = arith.constant 0 : index
    %c0_115 = arith.constant 0 : index
    %c0_116 = arith.constant 0 : index
    %212 = vector.load %arg0[%c1_113, %c0_114, %c0_115, %c0_116] : memref<2x8x16x16xf32, #tpu.memory_space<vmem>>, vector<1x1x16x16xf32>
    %213 = vector.shape_cast %212 : vector<1x1x16x16xf32> to vector<16x16xf32>
    %c0_117 = arith.constant 0 : index
    %c0_118 = arith.constant 0 : index
    %c0_119 = arith.constant 0 : index
    %214 = vector.load %arg5[%c0_117, %c0_118, %c0_119] : memref<4x16x64xf32, #tpu.memory_space<vmem>>, vector<1x16x64xf32>
    %215 = vector.shape_cast %214 : vector<1x16x64xf32> to vector<16x64xf32>
    %cst_120 = arith.constant dense<0.000000e+00> : vector<16x64xf32>
    %216 = tpu.matmul %213, %215, %cst_120 {dimension_numbers = #tpu.dot_dimension_numbers<[1], [0], [0], [1], [0, 0, 1, 1], [], []>} : vector<16x16xf32>, vector<16x64xf32>, vector<16x64xf32> -> vector<16x64xf32>
    %c1_121 = arith.constant 1 : index
    %c1_122 = arith.constant 1 : index
    %c0_123 = arith.constant 0 : index
    %c0_124 = arith.constant 0 : index
    %217 = vector.load %arg0[%c1_121, %c1_122, %c0_123, %c0_124] : memref<2x8x16x16xf32, #tpu.memory_space<vmem>>, vector<1x1x16x16xf32>
    %218 = vector.shape_cast %217 : vector<1x1x16x16xf32> to vector<16x16xf32>
    %c1_125 = arith.constant 1 : index
    %c0_126 = arith.constant 0 : index
    %c0_127 = arith.constant 0 : index
    %219 = vector.load %arg5[%c1_125, %c0_126, %c0_127] : memref<4x16x64xf32, #tpu.memory_space<vmem>>, vector<1x16x64xf32>
    %220 = vector.shape_cast %219 : vector<1x16x64xf32> to vector<16x64xf32>
    %cst_128 = arith.constant dense<0.000000e+00> : vector<16x64xf32>
    %221 = tpu.matmul %218, %220, %cst_128 {dimension_numbers = #tpu.dot_dimension_numbers<[1], [0], [0], [1], [0, 0, 1, 1], [], []>} : vector<16x16xf32>, vector<16x64xf32>, vector<16x64xf32> -> vector<16x64xf32>
    %222 = arith.addf %216, %221 : vector<16x64xf32>
    %c1_129 = arith.constant 1 : index
    %c2_130 = arith.constant 2 : index
    %c0_131 = arith.constant 0 : index
    %c0_132 = arith.constant 0 : index
    %223 = vector.load %arg0[%c1_129, %c2_130, %c0_131, %c0_132] : memref<2x8x16x16xf32, #tpu.memory_space<vmem>>, vector<1x1x16x16xf32>
    %224 = vector.shape_cast %223 : vector<1x1x16x16xf32> to vector<16x16xf32>
    %c2_133 = arith.constant 2 : index
    %c0_134 = arith.constant 0 : index
    %c0_135 = arith.constant 0 : index
    %225 = vector.load %arg5[%c2_133, %c0_134, %c0_135] : memref<4x16x64xf32, #tpu.memory_space<vmem>>, vector<1x16x64xf32>
    %226 = vector.shape_cast %225 : vector<1x16x64xf32> to vector<16x64xf32>
    %cst_136 = arith.constant dense<0.000000e+00> : vector<16x64xf32>
    %227 = tpu.matmul %224, %226, %cst_136 {dimension_numbers = #tpu.dot_dimension_numbers<[1], [0], [0], [1], [0, 0, 1, 1], [], []>} : vector<16x16xf32>, vector<16x64xf32>, vector<16x64xf32> -> vector<16x64xf32>
    %228 = arith.addf %222, %227 : vector<16x64xf32>
    %c1_137 = arith.constant 1 : index
    %c3_138 = arith.constant 3 : index
    %c0_139 = arith.constant 0 : index
    %c0_140 = arith.constant 0 : index
    %229 = vector.load %arg0[%c1_137, %c3_138, %c0_139, %c0_140] : memref<2x8x16x16xf32, #tpu.memory_space<vmem>>, vector<1x1x16x16xf32>
    %230 = vector.shape_cast %229 : vector<1x1x16x16xf32> to vector<16x16xf32>
    %c3_141 = arith.constant 3 : index
    %c0_142 = arith.constant 0 : index
    %c0_143 = arith.constant 0 : index
    %231 = vector.load %arg5[%c3_141, %c0_142, %c0_143] : memref<4x16x64xf32, #tpu.memory_space<vmem>>, vector<1x16x64xf32>
    %232 = vector.shape_cast %231 : vector<1x16x64xf32> to vector<16x64xf32>
    %cst_144 = arith.constant dense<0.000000e+00> : vector<16x64xf32>
    %233 = tpu.matmul %230, %232, %cst_144 {dimension_numbers = #tpu.dot_dimension_numbers<[1], [0], [0], [1], [0, 0, 1, 1], [], []>} : vector<16x16xf32>, vector<16x64xf32>, vector<16x64xf32> -> vector<16x64xf32>
    %234 = arith.addf %228, %233 : vector<16x64xf32>
    %c1_145 = arith.constant 1 : index
    %c0_146 = arith.constant 0 : index
    %c0_147 = arith.constant 0 : index
    %235 = vector.load %arg1[%c1_145, %c0_146, %c0_147] : memref<2x2x256xf32, #tpu.memory_space<vmem>>, vector<1x2x256xf32>
    %236 = vector.shape_cast %235 : vector<1x2x256xf32> to vector<2x256xf32>
    %237 = vector.extract_strided_slice %236 {offsets = [0, 0], sizes = [1, 256], strides = [1, 1]} : vector<2x256xf32> to vector<1x256xf32>
    %238 = arith.addf %1, %237 : vector<1x256xf32>
    %239 = vector.extract_strided_slice %236 {offsets = [1, 0], sizes = [1, 256], strides = [1, 1]} : vector<2x256xf32> to vector<1x256xf32>
    %240 = arith.addf %2, %239 : vector<1x256xf32>
    %cst_148 = arith.constant 2.000000e+00 : f32
    %241 = vector.broadcast %cst_148 : f32 to vector<1x256xf32>
    %242 = arith.mulf %241, %238 : vector<1x256xf32>
    %cst_149 = arith.constant 1.500000e+01 : f32
    %243 = vector.broadcast %cst_149 : f32 to vector<1x256xf32>
    %244 = arith.divf %242, %243 : vector<1x256xf32>
    %cst_150 = arith.constant 1.000000e+00 : f32
    %245 = vector.broadcast %cst_150 : f32 to vector<1x256xf32>
    %246 = arith.subf %244, %245 : vector<1x256xf32>
    %cst_151 = arith.constant 2.000000e+00 : f32
    %247 = vector.broadcast %cst_151 : f32 to vector<1x256xf32>
    %248 = arith.mulf %247, %240 : vector<1x256xf32>
    %cst_152 = arith.constant 1.500000e+01 : f32
    %249 = vector.broadcast %cst_152 : f32 to vector<1x256xf32>
    %250 = arith.divf %248, %249 : vector<1x256xf32>
    %cst_153 = arith.constant 1.000000e+00 : f32
    %251 = vector.broadcast %cst_153 : f32 to vector<1x256xf32>
    %252 = arith.subf %250, %251 : vector<1x256xf32>
    %cst_154 = arith.constant 1.000000e+00 : f32
    %253 = vector.broadcast %cst_154 : f32 to vector<1x256xf32>
    %254 = arith.addf %246, %253 : vector<1x256xf32>
    %cst_155 = arith.constant 1.600000e+01 : f32
    %255 = vector.broadcast %cst_155 : f32 to vector<1x256xf32>
    %256 = arith.mulf %254, %255 : vector<1x256xf32>
    %cst_156 = arith.constant 1.000000e+00 : f32
    %257 = vector.broadcast %cst_156 : f32 to vector<1x256xf32>
    %258 = arith.subf %256, %257 : vector<1x256xf32>
    %cst_157 = arith.constant 5.000000e-01 : f32
    %259 = vector.broadcast %cst_157 : f32 to vector<1x256xf32>
    %260 = arith.mulf %258, %259 : vector<1x256xf32>
    %cst_158 = arith.constant 1.000000e+00 : f32
    %261 = vector.broadcast %cst_158 : f32 to vector<1x256xf32>
    %262 = arith.addf %252, %261 : vector<1x256xf32>
    %cst_159 = arith.constant 1.600000e+01 : f32
    %263 = vector.broadcast %cst_159 : f32 to vector<1x256xf32>
    %264 = arith.mulf %262, %263 : vector<1x256xf32>
    %cst_160 = arith.constant 1.000000e+00 : f32
    %265 = vector.broadcast %cst_160 : f32 to vector<1x256xf32>
    %266 = arith.subf %264, %265 : vector<1x256xf32>
    %cst_161 = arith.constant 5.000000e-01 : f32
    %267 = vector.broadcast %cst_161 : f32 to vector<1x256xf32>
    %268 = arith.mulf %266, %267 : vector<1x256xf32>
    %269 = math.floor %260 : vector<1x256xf32>
    %270 = math.floor %268 : vector<1x256xf32>
    %cst_162 = arith.constant 1.000000e+00 : f32
    %271 = vector.broadcast %cst_162 : f32 to vector<1x256xf32>
    %272 = arith.addf %269, %271 : vector<1x256xf32>
    %cst_163 = arith.constant 1.000000e+00 : f32
    %273 = vector.broadcast %cst_163 : f32 to vector<1x256xf32>
    %274 = arith.addf %270, %273 : vector<1x256xf32>
    %275 = arith.subf %260, %269 : vector<1x256xf32>
    %cst_164 = arith.constant 1.000000e+00 : f32
    %276 = vector.broadcast %cst_164 : f32 to vector<1x256xf32>
    %277 = arith.subf %276, %275 : vector<1x256xf32>
    %278 = arith.subf %268, %270 : vector<1x256xf32>
    %cst_165 = arith.constant 1.000000e+00 : f32
    %279 = vector.broadcast %cst_165 : f32 to vector<1x256xf32>
    %280 = arith.subf %279, %278 : vector<1x256xf32>
    %cst_166 = arith.constant 0.000000e+00 : f32
    %281 = vector.broadcast %cst_166 : f32 to vector<1x256xf32>
    %282 = arith.cmpf oge, %269, %281 : vector<1x256xf32>
    %cst_167 = arith.constant 1.500000e+01 : f32
    %283 = vector.broadcast %cst_167 : f32 to vector<1x256xf32>
    %284 = arith.cmpf ole, %269, %283 : vector<1x256xf32>
    %285 = arith.andi %282, %284 : vector<1x256xi1>
    %286 = arith.extui %285 : vector<1x256xi1> to vector<1x256xi32>
    %287 = arith.sitofp %286 : vector<1x256xi32> to vector<1x256xf32>
    %cst_168 = arith.constant 0.000000e+00 : f32
    %288 = vector.broadcast %cst_168 : f32 to vector<1x256xf32>
    %289 = arith.cmpf oge, %272, %288 : vector<1x256xf32>
    %cst_169 = arith.constant 1.500000e+01 : f32
    %290 = vector.broadcast %cst_169 : f32 to vector<1x256xf32>
    %291 = arith.cmpf ole, %272, %290 : vector<1x256xf32>
    %292 = arith.andi %289, %291 : vector<1x256xi1>
    %293 = arith.extui %292 : vector<1x256xi1> to vector<1x256xi32>
    %294 = arith.sitofp %293 : vector<1x256xi32> to vector<1x256xf32>
    %cst_170 = arith.constant 0.000000e+00 : f32
    %cst_171 = arith.constant 1.500000e+01 : f32
    %295 = vector.broadcast %cst_170 : f32 to vector<1x256xf32>
    %296 = arith.maximumf %295, %269 : vector<1x256xf32>
    %297 = vector.broadcast %cst_171 : f32 to vector<1x256xf32>
    %298 = arith.minimumf %297, %296 : vector<1x256xf32>
    %299 = arith.fptosi %298 : vector<1x256xf32> to vector<1x256xi32>
    %cst_172 = arith.constant 0.000000e+00 : f32
    %cst_173 = arith.constant 1.500000e+01 : f32
    %300 = vector.broadcast %cst_172 : f32 to vector<1x256xf32>
    %301 = arith.maximumf %300, %272 : vector<1x256xf32>
    %302 = vector.broadcast %cst_173 : f32 to vector<1x256xf32>
    %303 = arith.minimumf %302, %301 : vector<1x256xf32>
    %304 = arith.fptosi %303 : vector<1x256xf32> to vector<1x256xi32>
    %305 = arith.mulf %277, %287 : vector<1x256xf32>
    %306 = arith.mulf %275, %294 : vector<1x256xf32>
    %cst_174 = arith.constant 0.000000e+00 : f32
    %307 = vector.broadcast %cst_174 : f32 to vector<1x256xf32>
    %308 = arith.cmpf oge, %270, %307 : vector<1x256xf32>
    %cst_175 = arith.constant 1.500000e+01 : f32
    %309 = vector.broadcast %cst_175 : f32 to vector<1x256xf32>
    %310 = arith.cmpf ole, %270, %309 : vector<1x256xf32>
    %311 = arith.andi %308, %310 : vector<1x256xi1>
    %312 = arith.extui %311 : vector<1x256xi1> to vector<1x256xi32>
    %313 = arith.sitofp %312 : vector<1x256xi32> to vector<1x256xf32>
    %cst_176 = arith.constant 0.000000e+00 : f32
    %314 = vector.broadcast %cst_176 : f32 to vector<1x256xf32>
    %315 = arith.cmpf oge, %274, %314 : vector<1x256xf32>
    %cst_177 = arith.constant 1.500000e+01 : f32
    %316 = vector.broadcast %cst_177 : f32 to vector<1x256xf32>
    %317 = arith.cmpf ole, %274, %316 : vector<1x256xf32>
    %318 = arith.andi %315, %317 : vector<1x256xi1>
    %319 = arith.extui %318 : vector<1x256xi1> to vector<1x256xi32>
    %320 = arith.sitofp %319 : vector<1x256xi32> to vector<1x256xf32>
    %cst_178 = arith.constant 0.000000e+00 : f32
    %cst_179 = arith.constant 1.500000e+01 : f32
    %321 = vector.broadcast %cst_178 : f32 to vector<1x256xf32>
    %322 = arith.maximumf %321, %270 : vector<1x256xf32>
    %323 = vector.broadcast %cst_179 : f32 to vector<1x256xf32>
    %324 = arith.minimumf %323, %322 : vector<1x256xf32>
    %325 = arith.fptosi %324 : vector<1x256xf32> to vector<1x256xi32>
    %cst_180 = arith.constant 0.000000e+00 : f32
    %cst_181 = arith.constant 1.500000e+01 : f32
    %326 = vector.broadcast %cst_180 : f32 to vector<1x256xf32>
    %327 = arith.maximumf %326, %274 : vector<1x256xf32>
    %328 = vector.broadcast %cst_181 : f32 to vector<1x256xf32>
    %329 = arith.minimumf %328, %327 : vector<1x256xf32>
    %330 = arith.fptosi %329 : vector<1x256xf32> to vector<1x256xi32>
    %331 = arith.mulf %280, %313 : vector<1x256xf32>
    %332 = arith.mulf %278, %320 : vector<1x256xf32>
    %333 = tpu.iota {dimensions = array<i32: 0>} : vector<16x256xi32>
    %334 = vector.broadcast %299 : vector<1x256xi32> to vector<16x256xi32>
    %335 = arith.cmpi eq, %333, %334 : vector<16x256xi32>
    %cst_182 = arith.constant 0.000000e+00 : f32
    %336 = vector.shape_cast %305 : vector<1x256xf32> to vector<1x256xf32>
    %337 = vector.broadcast %336 : vector<1x256xf32> to vector<16x256xf32>
    %338 = vector.broadcast %cst_182 : f32 to vector<16x256xf32>
    %339 = arith.select %335, %337, %338 : vector<16x256xi1>, vector<16x256xf32>
    %340 = vector.broadcast %304 : vector<1x256xi32> to vector<16x256xi32>
    %341 = arith.cmpi eq, %333, %340 : vector<16x256xi32>
    %cst_183 = arith.constant 0.000000e+00 : f32
    %342 = vector.shape_cast %306 : vector<1x256xf32> to vector<1x256xf32>
    %343 = vector.broadcast %342 : vector<1x256xf32> to vector<16x256xf32>
    %344 = vector.broadcast %cst_183 : f32 to vector<16x256xf32>
    %345 = arith.select %341, %343, %344 : vector<16x256xi1>, vector<16x256xf32>
    %346 = arith.addf %339, %345 : vector<16x256xf32>
    %347 = tpu.iota {dimensions = array<i32: 0>} : vector<16x256xi32>
    %348 = vector.broadcast %325 : vector<1x256xi32> to vector<16x256xi32>
    %349 = arith.cmpi eq, %347, %348 : vector<16x256xi32>
    %cst_184 = arith.constant 0.000000e+00 : f32
    %350 = vector.shape_cast %331 : vector<1x256xf32> to vector<1x256xf32>
    %351 = vector.broadcast %350 : vector<1x256xf32> to vector<16x256xf32>
    %352 = vector.broadcast %cst_184 : f32 to vector<16x256xf32>
    %353 = arith.select %349, %351, %352 : vector<16x256xi1>, vector<16x256xf32>
    %354 = vector.broadcast %330 : vector<1x256xi32> to vector<16x256xi32>
    %355 = arith.cmpi eq, %347, %354 : vector<16x256xi32>
    %cst_185 = arith.constant 0.000000e+00 : f32
    %356 = vector.shape_cast %332 : vector<1x256xf32> to vector<1x256xf32>
    %357 = vector.broadcast %356 : vector<1x256xf32> to vector<16x256xf32>
    %358 = vector.broadcast %cst_185 : f32 to vector<16x256xf32>
    %359 = arith.select %355, %357, %358 : vector<16x256xi1>, vector<16x256xf32>
    %360 = arith.addf %353, %359 : vector<16x256xf32>
    %cst_186 = arith.constant dense<0.000000e+00> : vector<256xf32>
    %361 = vector.multi_reduction <add>, %346, %cst_186 [0] : vector<16x256xf32> to vector<256xf32>
    %362 = vector.shape_cast %361 : vector<256xf32> to vector<1x256xf32>
    %cst_187 = arith.constant dense<0.000000e+00> : vector<256xf32>
    %363 = vector.multi_reduction <add>, %360, %cst_187 [0] : vector<16x256xf32> to vector<256xf32>
    %364 = vector.shape_cast %363 : vector<256xf32> to vector<1x256xf32>
    %365 = arith.mulf %362, %364 : vector<1x256xf32>
    %cst_188 = arith.constant 0.999899983 : f32
    %366 = vector.broadcast %cst_188 : f32 to vector<1x256xf32>
    %367 = arith.cmpf oge, %365, %366 : vector<1x256xf32>
    %368 = arith.extui %367 : vector<1x256xi1> to vector<1x256xi32>
    %369 = arith.sitofp %368 : vector<1x256xi32> to vector<1x256xf32>
    %c1_189 = arith.constant 1 : index
    %c4_190 = arith.constant 4 : index
    %c0_191 = arith.constant 0 : index
    %c0_192 = arith.constant 0 : index
    %370 = vector.load %arg0[%c1_189, %c4_190, %c0_191, %c0_192] : memref<2x8x16x16xf32, #tpu.memory_space<vmem>>, vector<1x1x16x16xf32>
    %371 = vector.shape_cast %370 : vector<1x1x16x16xf32> to vector<16x16xf32>
    %cst_193 = arith.constant dense<0.000000e+00> : vector<16x256xf32>
    %372 = tpu.matmul %371, %346, %cst_193 {dimension_numbers = #tpu.dot_dimension_numbers<[1], [0], [0], [1], [0, 0, 1, 1], [], []>} : vector<16x16xf32>, vector<16x256xf32>, vector<16x256xf32> -> vector<16x256xf32>
    %373 = arith.mulf %360, %372 : vector<16x256xf32>
    %cst_194 = arith.constant dense<0.000000e+00> : vector<256xf32>
    %374 = vector.multi_reduction <add>, %373, %cst_194 [0] : vector<16x256xf32> to vector<256xf32>
    %375 = vector.shape_cast %374 : vector<256xf32> to vector<1x256xf32>
    %376 = arith.mulf %375, %369 : vector<1x256xf32>
    %377 = vector.broadcast %376 : vector<1x256xf32> to vector<16x256xf32>
    %378 = arith.mulf %0, %377 : vector<16x256xf32>
    %c0_195 = arith.constant 0 : index
    %c0_196 = arith.constant 0 : index
    %c0_197 = arith.constant 0 : index
    %379 = vector.load %arg4[%c0_195, %c0_196, %c0_197] : memref<4x256x64xf32, #tpu.memory_space<vmem>>, vector<1x256x64xf32>
    %380 = vector.shape_cast %379 : vector<1x256x64xf32> to vector<256x64xf32>
    %cst_198 = arith.constant dense<0.000000e+00> : vector<16x64xf32>
    %381 = tpu.matmul %378, %380, %cst_198 {dimension_numbers = #tpu.dot_dimension_numbers<[1], [0], [0], [1], [0, 0, 1, 1], [], []>} : vector<16x256xf32>, vector<256x64xf32>, vector<16x64xf32> -> vector<16x64xf32>
    %c1_199 = arith.constant 1 : index
    %c5_200 = arith.constant 5 : index
    %c0_201 = arith.constant 0 : index
    %c0_202 = arith.constant 0 : index
    %382 = vector.load %arg0[%c1_199, %c5_200, %c0_201, %c0_202] : memref<2x8x16x16xf32, #tpu.memory_space<vmem>>, vector<1x1x16x16xf32>
    %383 = vector.shape_cast %382 : vector<1x1x16x16xf32> to vector<16x16xf32>
    %cst_203 = arith.constant dense<0.000000e+00> : vector<16x256xf32>
    %384 = tpu.matmul %383, %346, %cst_203 {dimension_numbers = #tpu.dot_dimension_numbers<[1], [0], [0], [1], [0, 0, 1, 1], [], []>} : vector<16x16xf32>, vector<16x256xf32>, vector<16x256xf32> -> vector<16x256xf32>
    %385 = arith.mulf %360, %384 : vector<16x256xf32>
    %cst_204 = arith.constant dense<0.000000e+00> : vector<256xf32>
    %386 = vector.multi_reduction <add>, %385, %cst_204 [0] : vector<16x256xf32> to vector<256xf32>
    %387 = vector.shape_cast %386 : vector<256xf32> to vector<1x256xf32>
    %388 = arith.mulf %387, %369 : vector<1x256xf32>
    %389 = vector.broadcast %388 : vector<1x256xf32> to vector<16x256xf32>
    %390 = arith.mulf %0, %389 : vector<16x256xf32>
    %c1_205 = arith.constant 1 : index
    %c0_206 = arith.constant 0 : index
    %c0_207 = arith.constant 0 : index
    %391 = vector.load %arg4[%c1_205, %c0_206, %c0_207] : memref<4x256x64xf32, #tpu.memory_space<vmem>>, vector<1x256x64xf32>
    %392 = vector.shape_cast %391 : vector<1x256x64xf32> to vector<256x64xf32>
    %cst_208 = arith.constant dense<0.000000e+00> : vector<16x64xf32>
    %393 = tpu.matmul %390, %392, %cst_208 {dimension_numbers = #tpu.dot_dimension_numbers<[1], [0], [0], [1], [0, 0, 1, 1], [], []>} : vector<16x256xf32>, vector<256x64xf32>, vector<16x64xf32> -> vector<16x64xf32>
    %394 = arith.addf %381, %393 : vector<16x64xf32>
    %c1_209 = arith.constant 1 : index
    %c6_210 = arith.constant 6 : index
    %c0_211 = arith.constant 0 : index
    %c0_212 = arith.constant 0 : index
    %395 = vector.load %arg0[%c1_209, %c6_210, %c0_211, %c0_212] : memref<2x8x16x16xf32, #tpu.memory_space<vmem>>, vector<1x1x16x16xf32>
    %396 = vector.shape_cast %395 : vector<1x1x16x16xf32> to vector<16x16xf32>
    %cst_213 = arith.constant dense<0.000000e+00> : vector<16x256xf32>
    %397 = tpu.matmul %396, %346, %cst_213 {dimension_numbers = #tpu.dot_dimension_numbers<[1], [0], [0], [1], [0, 0, 1, 1], [], []>} : vector<16x16xf32>, vector<16x256xf32>, vector<16x256xf32> -> vector<16x256xf32>
    %398 = arith.mulf %360, %397 : vector<16x256xf32>
    %cst_214 = arith.constant dense<0.000000e+00> : vector<256xf32>
    %399 = vector.multi_reduction <add>, %398, %cst_214 [0] : vector<16x256xf32> to vector<256xf32>
    %400 = vector.shape_cast %399 : vector<256xf32> to vector<1x256xf32>
    %401 = arith.mulf %400, %369 : vector<1x256xf32>
    %402 = vector.broadcast %401 : vector<1x256xf32> to vector<16x256xf32>
    %403 = arith.mulf %0, %402 : vector<16x256xf32>
    %c2_215 = arith.constant 2 : index
    %c0_216 = arith.constant 0 : index
    %c0_217 = arith.constant 0 : index
    %404 = vector.load %arg4[%c2_215, %c0_216, %c0_217] : memref<4x256x64xf32, #tpu.memory_space<vmem>>, vector<1x256x64xf32>
    %405 = vector.shape_cast %404 : vector<1x256x64xf32> to vector<256x64xf32>
    %cst_218 = arith.constant dense<0.000000e+00> : vector<16x64xf32>
    %406 = tpu.matmul %403, %405, %cst_218 {dimension_numbers = #tpu.dot_dimension_numbers<[1], [0], [0], [1], [0, 0, 1, 1], [], []>} : vector<16x256xf32>, vector<256x64xf32>, vector<16x64xf32> -> vector<16x64xf32>
    %407 = arith.addf %394, %406 : vector<16x64xf32>
    %c1_219 = arith.constant 1 : index
    %c7_220 = arith.constant 7 : index
    %c0_221 = arith.constant 0 : index
    %c0_222 = arith.constant 0 : index
    %408 = vector.load %arg0[%c1_219, %c7_220, %c0_221, %c0_222] : memref<2x8x16x16xf32, #tpu.memory_space<vmem>>, vector<1x1x16x16xf32>
    %409 = vector.shape_cast %408 : vector<1x1x16x16xf32> to vector<16x16xf32>
    %cst_223 = arith.constant dense<0.000000e+00> : vector<16x256xf32>
    %410 = tpu.matmul %409, %346, %cst_223 {dimension_numbers = #tpu.dot_dimension_numbers<[1], [0], [0], [1], [0, 0, 1, 1], [], []>} : vector<16x16xf32>, vector<16x256xf32>, vector<16x256xf32> -> vector<16x256xf32>
    %411 = arith.mulf %360, %410 : vector<16x256xf32>
    %cst_224 = arith.constant dense<0.000000e+00> : vector<256xf32>
    %412 = vector.multi_reduction <add>, %411, %cst_224 [0] : vector<16x256xf32> to vector<256xf32>
    %413 = vector.shape_cast %412 : vector<256xf32> to vector<1x256xf32>
    %414 = arith.mulf %413, %369 : vector<1x256xf32>
    %415 = vector.broadcast %414 : vector<1x256xf32> to vector<16x256xf32>
    %416 = arith.mulf %0, %415 : vector<16x256xf32>
    %c3_225 = arith.constant 3 : index
    %c0_226 = arith.constant 0 : index
    %c0_227 = arith.constant 0 : index
    %417 = vector.load %arg4[%c3_225, %c0_226, %c0_227] : memref<4x256x64xf32, #tpu.memory_space<vmem>>, vector<1x256x64xf32>
    %418 = vector.shape_cast %417 : vector<1x256x64xf32> to vector<256x64xf32>
    %cst_228 = arith.constant dense<0.000000e+00> : vector<16x64xf32>
    %419 = tpu.matmul %416, %418, %cst_228 {dimension_numbers = #tpu.dot_dimension_numbers<[1], [0], [0], [1], [0, 0, 1, 1], [], []>} : vector<16x256xf32>, vector<256x64xf32>, vector<16x64xf32> -> vector<16x64xf32>
    %420 = arith.addf %407, %419 : vector<16x64xf32>
    %421 = tpu.concatenate %25, %234 in 1 : vector<16x64xf32>, vector<16x64xf32> -> vector<16x128xf32>
    %422 = tpu.concatenate %211, %420 in 1 : vector<16x64xf32>, vector<16x64xf32> -> vector<16x128xf32>
    %423 = tpu.concatenate %421, %422 in 1 : vector<16x128xf32>, vector<16x128xf32> -> vector<16x256xf32>
    %cst_229 = arith.constant 0.000000e+00 : f32
    %424 = vector.broadcast %cst_229 : f32 to vector<7x256xf32>
    %425 = tpu.concatenate %424, %423, %424 in 0 : vector<7x256xf32>, vector<16x256xf32>, vector<7x256xf32> -> vector<30x256xf32>
    %426 = vector.extract_strided_slice %425 {offsets = [0, 0], sizes = [16, 256], strides = [1, 1]} : vector<30x256xf32> to vector<16x256xf32>
    %427 = vector.extract_strided_slice %425 {offsets = [1, 0], sizes = [16, 256], strides = [1, 1]} : vector<30x256xf32> to vector<16x256xf32>
    %428 = vector.extract_strided_slice %425 {offsets = [2, 0], sizes = [16, 256], strides = [1, 1]} : vector<30x256xf32> to vector<16x256xf32>
    %429 = vector.extract_strided_slice %425 {offsets = [3, 0], sizes = [16, 256], strides = [1, 1]} : vector<30x256xf32> to vector<16x256xf32>
    %430 = vector.extract_strided_slice %425 {offsets = [4, 0], sizes = [16, 256], strides = [1, 1]} : vector<30x256xf32> to vector<16x256xf32>
    %431 = vector.extract_strided_slice %425 {offsets = [5, 0], sizes = [16, 256], strides = [1, 1]} : vector<30x256xf32> to vector<16x256xf32>
    %432 = vector.extract_strided_slice %425 {offsets = [6, 0], sizes = [16, 256], strides = [1, 1]} : vector<30x256xf32> to vector<16x256xf32>
    %433 = vector.extract_strided_slice %425 {offsets = [7, 0], sizes = [16, 256], strides = [1, 1]} : vector<30x256xf32> to vector<16x256xf32>
    %434 = vector.extract_strided_slice %425 {offsets = [8, 0], sizes = [16, 256], strides = [1, 1]} : vector<30x256xf32> to vector<16x256xf32>
    %435 = vector.extract_strided_slice %425 {offsets = [9, 0], sizes = [16, 256], strides = [1, 1]} : vector<30x256xf32> to vector<16x256xf32>
    %436 = vector.extract_strided_slice %425 {offsets = [10, 0], sizes = [16, 256], strides = [1, 1]} : vector<30x256xf32> to vector<16x256xf32>
    %437 = vector.extract_strided_slice %425 {offsets = [11, 0], sizes = [16, 256], strides = [1, 1]} : vector<30x256xf32> to vector<16x256xf32>
    %438 = vector.extract_strided_slice %425 {offsets = [12, 0], sizes = [16, 256], strides = [1, 1]} : vector<30x256xf32> to vector<16x256xf32>
    %439 = vector.extract_strided_slice %425 {offsets = [13, 0], sizes = [16, 256], strides = [1, 1]} : vector<30x256xf32> to vector<16x256xf32>
    %440 = vector.extract_strided_slice %425 {offsets = [14, 0], sizes = [16, 256], strides = [1, 1]} : vector<30x256xf32> to vector<16x256xf32>
    %441 = tpu.concatenate %426, %427, %428, %429, %430, %431, %432, %433, %434, %435, %436, %437, %438, %439, %440 in 1 : vector<16x256xf32>, vector<16x256xf32>, vector<16x256xf32>, vector<16x256xf32>, vector<16x256xf32>, vector<16x256xf32>, vector<16x256xf32>, vector<16x256xf32>, vector<16x256xf32>, vector<16x256xf32>, vector<16x256xf32>, vector<16x256xf32>, vector<16x256xf32>, vector<16x256xf32>, vector<16x256xf32> -> vector<16x3840xf32>
    %c0_230 = arith.constant 0 : index
    %c0_231 = arith.constant 0 : index
    %442 = vector.load %arg6[%c0_230, %c0_231] : memref<3840x128xbf16, #tpu.memory_space<vmem>>, vector<3840x128xbf16>
    %443 = arith.truncf %441 : vector<16x3840xf32> to vector<16x3840xbf16>
    %cst_232 = arith.constant dense<0.000000e+00> : vector<16x128xf32>
    %444 = tpu.matmul %443, %442, %cst_232 {dimension_numbers = #tpu.dot_dimension_numbers<[1], [0], [0], [1], [0, 0, 1, 1], [], []>} : vector<16x3840xbf16>, vector<3840x128xbf16>, vector<16x128xf32> -> vector<16x128xf32>
    %445 = math.absf %444 : vector<16x128xf32>
    %c0_233 = arith.constant 0 : index
    %c0_234 = arith.constant 0 : index
    %446 = vector.load %arg22[%c0_233, %c0_234] : memref<128x128xf32, #tpu.memory_space<vmem>>, vector<128x128xf32>
    %cst_235 = arith.constant dense<0.000000e+00> : vector<16x128xf32>
    %447 = tpu.matmul %445, %446, %cst_235 {dimension_numbers = #tpu.dot_dimension_numbers<[1], [0], [0], [1], [0, 0, 1, 1], [], []>} : vector<16x128xf32>, vector<128x128xf32>, vector<16x128xf32> -> vector<16x128xf32>
    %cst_236 = arith.constant 7.000000e+02 : f32
    %448 = vector.broadcast %cst_236 : f32 to vector<16x128xf32>
    %449 = arith.subf %447, %448 : vector<16x128xf32>
    %450 = arith.negf %449 : vector<16x128xf32>
    %451 = math.exp %450 : vector<16x128xf32>
    %cst_237 = arith.constant 1.000000e+00 : f32
    %452 = vector.broadcast %cst_237 : f32 to vector<16x128xf32>
    %453 = arith.addf %452, %451 : vector<16x128xf32>
    %454 = arith.divf %452, %453 : vector<16x128xf32>
    %c0_238 = arith.constant 0 : index
    %c0_239 = arith.constant 0 : index
    %c0_240 = arith.constant 0 : index
    %455 = vector.load %arg13[%c0_238, %c0_239, %c0_240] : memref<3x8x16xf32, #tpu.memory_space<vmem>>, vector<1x8x16xf32>
    %456 = vector.shape_cast %455 : vector<1x8x16xf32> to vector<8x16xf32>
    %cst_241 = arith.constant dense<0.000000e+00> : vector<8x128xf32>
    %457 = tpu.matmul %456, %421, %cst_241 {dimension_numbers = #tpu.dot_dimension_numbers<[1], [0], [0], [1], [0, 0, 1, 1], [], []>} : vector<8x16xf32>, vector<16x128xf32>, vector<8x128xf32> -> vector<8x128xf32>
    %c1_242 = arith.constant 1 : index
    %c0_243 = arith.constant 0 : index
    %c0_244 = arith.constant 0 : index
    %458 = vector.load %arg13[%c1_242, %c0_243, %c0_244] : memref<3x8x16xf32, #tpu.memory_space<vmem>>, vector<1x8x16xf32>
    %459 = vector.shape_cast %458 : vector<1x8x16xf32> to vector<8x16xf32>
    %cst_245 = arith.constant dense<0.000000e+00> : vector<8x128xf32>
    %460 = tpu.matmul %459, %421, %cst_245 {dimension_numbers = #tpu.dot_dimension_numbers<[1], [0], [0], [1], [0, 0, 1, 1], [], []>} : vector<8x16xf32>, vector<16x128xf32>, vector<8x128xf32> -> vector<8x128xf32>
    %c2_246 = arith.constant 2 : index
    %c0_247 = arith.constant 0 : index
    %c0_248 = arith.constant 0 : index
    %461 = vector.load %arg13[%c2_246, %c0_247, %c0_248] : memref<3x8x16xf32, #tpu.memory_space<vmem>>, vector<1x8x16xf32>
    %462 = vector.shape_cast %461 : vector<1x8x16xf32> to vector<8x16xf32>
    %cst_249 = arith.constant dense<0.000000e+00> : vector<8x128xf32>
    %463 = tpu.matmul %462, %421, %cst_249 {dimension_numbers = #tpu.dot_dimension_numbers<[1], [0], [0], [1], [0, 0, 1, 1], [], []>} : vector<8x16xf32>, vector<16x128xf32>, vector<8x128xf32> -> vector<8x128xf32>
    %464 = tpu.concatenate %457, %460, %463 in 1 : vector<8x128xf32>, vector<8x128xf32>, vector<8x128xf32> -> vector<8x384xf32>
    %c0_250 = arith.constant 0 : index
    %c0_251 = arith.constant 0 : index
    %465 = vector.load %arg7[%c0_250, %c0_251] : memref<384x64xbf16, #tpu.memory_space<vmem>>, vector<384x64xbf16>
    %466 = arith.truncf %464 : vector<8x384xf32> to vector<8x384xbf16>
    %cst_252 = arith.constant dense<0.000000e+00> : vector<8x64xf32>
    %467 = tpu.matmul %466, %465, %cst_252 {dimension_numbers = #tpu.dot_dimension_numbers<[1], [0], [0], [1], [0, 0, 1, 1], [], []>} : vector<8x384xbf16>, vector<384x64xbf16>, vector<8x64xf32> -> vector<8x64xf32>
    %c0_253 = arith.constant 0 : index
    %c0_254 = arith.constant 0 : index
    %c0_255 = arith.constant 0 : index
    %468 = vector.load %arg14[%c0_253, %c0_254, %c0_255] : memref<3x4x8xf32, #tpu.memory_space<vmem>>, vector<1x4x8xf32>
    %469 = vector.shape_cast %468 : vector<1x4x8xf32> to vector<4x8xf32>
    %cst_256 = arith.constant dense<0.000000e+00> : vector<4x64xf32>
    %470 = tpu.matmul %469, %467, %cst_256 {dimension_numbers = #tpu.dot_dimension_numbers<[1], [0], [0], [1], [0, 0, 1, 1], [], []>} : vector<4x8xf32>, vector<8x64xf32>, vector<4x64xf32> -> vector<4x64xf32>
    %c1_257 = arith.constant 1 : index
    %c0_258 = arith.constant 0 : index
    %c0_259 = arith.constant 0 : index
    %471 = vector.load %arg14[%c1_257, %c0_258, %c0_259] : memref<3x4x8xf32, #tpu.memory_space<vmem>>, vector<1x4x8xf32>
    %472 = vector.shape_cast %471 : vector<1x4x8xf32> to vector<4x8xf32>
    %cst_260 = arith.constant dense<0.000000e+00> : vector<4x64xf32>
    %473 = tpu.matmul %472, %467, %cst_260 {dimension_numbers = #tpu.dot_dimension_numbers<[1], [0], [0], [1], [0, 0, 1, 1], [], []>} : vector<4x8xf32>, vector<8x64xf32>, vector<4x64xf32> -> vector<4x64xf32>
    %c2_261 = arith.constant 2 : index
    %c0_262 = arith.constant 0 : index
    %c0_263 = arith.constant 0 : index
    %474 = vector.load %arg14[%c2_261, %c0_262, %c0_263] : memref<3x4x8xf32, #tpu.memory_space<vmem>>, vector<1x4x8xf32>
    %475 = vector.shape_cast %474 : vector<1x4x8xf32> to vector<4x8xf32>
    %cst_264 = arith.constant dense<0.000000e+00> : vector<4x64xf32>
    %476 = tpu.matmul %475, %467, %cst_264 {dimension_numbers = #tpu.dot_dimension_numbers<[1], [0], [0], [1], [0, 0, 1, 1], [], []>} : vector<4x8xf32>, vector<8x64xf32>, vector<4x64xf32> -> vector<4x64xf32>
    %477 = tpu.concatenate %470, %473, %476 in 1 : vector<4x64xf32>, vector<4x64xf32>, vector<4x64xf32> -> vector<4x192xf32>
    %c0_265 = arith.constant 0 : index
    %c0_266 = arith.constant 0 : index
    %478 = vector.load %arg8[%c0_265, %c0_266] : memref<192x32xbf16, #tpu.memory_space<vmem>>, vector<192x32xbf16>
    %479 = arith.truncf %477 : vector<4x192xf32> to vector<4x192xbf16>
    %cst_267 = arith.constant dense<0.000000e+00> : vector<4x32xf32>
    %480 = tpu.matmul %479, %478, %cst_267 {dimension_numbers = #tpu.dot_dimension_numbers<[1], [0], [0], [1], [0, 0, 1, 1], [], []>} : vector<4x192xbf16>, vector<192x32xbf16>, vector<4x32xf32> -> vector<4x32xf32>
    %c0_268 = arith.constant 0 : index
    %c0_269 = arith.constant 0 : index
    %c0_270 = arith.constant 0 : index
    %481 = vector.load %arg15[%c0_268, %c0_269, %c0_270] : memref<3x2x4xf32, #tpu.memory_space<vmem>>, vector<1x2x4xf32>
    %482 = vector.shape_cast %481 : vector<1x2x4xf32> to vector<2x4xf32>
    %cst_271 = arith.constant dense<0.000000e+00> : vector<2x32xf32>
    %483 = tpu.matmul %482, %480, %cst_271 {dimension_numbers = #tpu.dot_dimension_numbers<[1], [0], [0], [1], [0, 0, 1, 1], [], []>} : vector<2x4xf32>, vector<4x32xf32>, vector<2x32xf32> -> vector<2x32xf32>
    %c1_272 = arith.constant 1 : index
    %c0_273 = arith.constant 0 : index
    %c0_274 = arith.constant 0 : index
    %484 = vector.load %arg15[%c1_272, %c0_273, %c0_274] : memref<3x2x4xf32, #tpu.memory_space<vmem>>, vector<1x2x4xf32>
    %485 = vector.shape_cast %484 : vector<1x2x4xf32> to vector<2x4xf32>
    %cst_275 = arith.constant dense<0.000000e+00> : vector<2x32xf32>
    %486 = tpu.matmul %485, %480, %cst_275 {dimension_numbers = #tpu.dot_dimension_numbers<[1], [0], [0], [1], [0, 0, 1, 1], [], []>} : vector<2x4xf32>, vector<4x32xf32>, vector<2x32xf32> -> vector<2x32xf32>
    %c2_276 = arith.constant 2 : index
    %c0_277 = arith.constant 0 : index
    %c0_278 = arith.constant 0 : index
    %487 = vector.load %arg15[%c2_276, %c0_277, %c0_278] : memref<3x2x4xf32, #tpu.memory_space<vmem>>, vector<1x2x4xf32>
    %488 = vector.shape_cast %487 : vector<1x2x4xf32> to vector<2x4xf32>
    %cst_279 = arith.constant dense<0.000000e+00> : vector<2x32xf32>
    %489 = tpu.matmul %488, %480, %cst_279 {dimension_numbers = #tpu.dot_dimension_numbers<[1], [0], [0], [1], [0, 0, 1, 1], [], []>} : vector<2x4xf32>, vector<4x32xf32>, vector<2x32xf32> -> vector<2x32xf32>
    %490 = tpu.concatenate %483, %486, %489 in 1 : vector<2x32xf32>, vector<2x32xf32>, vector<2x32xf32> -> vector<2x96xf32>
    %c0_280 = arith.constant 0 : index
    %c0_281 = arith.constant 0 : index
    %491 = vector.load %arg9[%c0_280, %c0_281] : memref<96x16xbf16, #tpu.memory_space<vmem>>, vector<96x16xbf16>
    %492 = arith.truncf %490 : vector<2x96xf32> to vector<2x96xbf16>
    %cst_282 = arith.constant dense<0.000000e+00> : vector<2x16xf32>
    %493 = tpu.matmul %492, %491, %cst_282 {dimension_numbers = #tpu.dot_dimension_numbers<[1], [0], [0], [1], [0, 0, 1, 1], [], []>} : vector<2x96xbf16>, vector<96x16xbf16>, vector<2x16xf32> -> vector<2x16xf32>
    %c0_283 = arith.constant 0 : index
    %c0_284 = arith.constant 0 : index
    %494 = vector.load %arg10[%c0_283, %c0_284] : memref<16x64xbf16, #tpu.memory_space<vmem>>, vector<16x64xbf16>
    %495 = arith.truncf %493 : vector<2x16xf32> to vector<2x16xbf16>
    %cst_285 = arith.constant dense<0.000000e+00> : vector<2x64xf32>
    %496 = tpu.matmul %495, %494, %cst_285 {dimension_numbers = #tpu.dot_dimension_numbers<[1], [0], [0], [1], [0, 0, 1, 1], [], []>} : vector<2x16xbf16>, vector<16x64xbf16>, vector<2x64xf32> -> vector<2x64xf32>
    %c0_286 = arith.constant 0 : index
    %c0_287 = arith.constant 0 : index
    %c0_288 = arith.constant 0 : index
    %497 = vector.load %arg16[%c0_286, %c0_287, %c0_288] : memref<2x4x2xf32, #tpu.memory_space<vmem>>, vector<1x4x2xf32>
    %498 = vector.shape_cast %497 : vector<1x4x2xf32> to vector<4x2xf32>
    %499 = vector.extract_strided_slice %496 {offsets = [0, 0], sizes = [2, 32], strides = [1, 1]} : vector<2x64xf32> to vector<2x32xf32>
    %cst_289 = arith.constant dense<0.000000e+00> : vector<4x32xf32>
    %500 = tpu.matmul %498, %499, %cst_289 {dimension_numbers = #tpu.dot_dimension_numbers<[1], [0], [0], [1], [0, 0, 1, 1], [], []>} : vector<4x2xf32>, vector<2x32xf32>, vector<4x32xf32> -> vector<4x32xf32>
    %c1_290 = arith.constant 1 : index
    %c0_291 = arith.constant 0 : index
    %c0_292 = arith.constant 0 : index
    %501 = vector.load %arg16[%c1_290, %c0_291, %c0_292] : memref<2x4x2xf32, #tpu.memory_space<vmem>>, vector<1x4x2xf32>
    %502 = vector.shape_cast %501 : vector<1x4x2xf32> to vector<4x2xf32>
    %503 = vector.extract_strided_slice %496 {offsets = [0, 32], sizes = [2, 32], strides = [1, 1]} : vector<2x64xf32> to vector<2x32xf32>
    %cst_293 = arith.constant dense<0.000000e+00> : vector<4x32xf32>
    %504 = tpu.matmul %502, %503, %cst_293 {dimension_numbers = #tpu.dot_dimension_numbers<[1], [0], [0], [1], [0, 0, 1, 1], [], []>} : vector<4x2xf32>, vector<2x32xf32>, vector<4x32xf32> -> vector<4x32xf32>
    %505 = arith.addf %500, %504 : vector<4x32xf32>
    %506 = arith.subf %480, %505 : vector<4x32xf32>
    %c0_294 = arith.constant 0 : index
    %c0_295 = arith.constant 0 : index
    %507 = vector.load %arg11[%c0_294, %c0_295] : memref<32x128xbf16, #tpu.memory_space<vmem>>, vector<32x128xbf16>
    %508 = arith.truncf %480 : vector<4x32xf32> to vector<4x32xbf16>
    %cst_296 = arith.constant dense<0.000000e+00> : vector<4x128xf32>
    %509 = tpu.matmul %508, %507, %cst_296 {dimension_numbers = #tpu.dot_dimension_numbers<[1], [0], [0], [1], [0, 0, 1, 1], [], []>} : vector<4x32xbf16>, vector<32x128xbf16>, vector<4x128xf32> -> vector<4x128xf32>
    %c0_297 = arith.constant 0 : index
    %c0_298 = arith.constant 0 : index
    %c0_299 = arith.constant 0 : index
    %510 = vector.load %arg17[%c0_297, %c0_298, %c0_299] : memref<2x8x4xf32, #tpu.memory_space<vmem>>, vector<1x8x4xf32>
    %511 = vector.shape_cast %510 : vector<1x8x4xf32> to vector<8x4xf32>
    %512 = vector.extract_strided_slice %509 {offsets = [0, 0], sizes = [4, 64], strides = [1, 1]} : vector<4x128xf32> to vector<4x64xf32>
    %cst_300 = arith.constant dense<0.000000e+00> : vector<8x64xf32>
    %513 = tpu.matmul %511, %512, %cst_300 {dimension_numbers = #tpu.dot_dimension_numbers<[1], [0], [0], [1], [0, 0, 1, 1], [], []>} : vector<8x4xf32>, vector<4x64xf32>, vector<8x64xf32> -> vector<8x64xf32>
    %c1_301 = arith.constant 1 : index
    %c0_302 = arith.constant 0 : index
    %c0_303 = arith.constant 0 : index
    %514 = vector.load %arg17[%c1_301, %c0_302, %c0_303] : memref<2x8x4xf32, #tpu.memory_space<vmem>>, vector<1x8x4xf32>
    %515 = vector.shape_cast %514 : vector<1x8x4xf32> to vector<8x4xf32>
    %516 = vector.extract_strided_slice %509 {offsets = [0, 64], sizes = [4, 64], strides = [1, 1]} : vector<4x128xf32> to vector<4x64xf32>
    %cst_304 = arith.constant dense<0.000000e+00> : vector<8x64xf32>
    %517 = tpu.matmul %515, %516, %cst_304 {dimension_numbers = #tpu.dot_dimension_numbers<[1], [0], [0], [1], [0, 0, 1, 1], [], []>} : vector<8x4xf32>, vector<4x64xf32>, vector<8x64xf32> -> vector<8x64xf32>
    %518 = arith.addf %513, %517 : vector<8x64xf32>
    %519 = arith.subf %467, %518 : vector<8x64xf32>
    %c0_305 = arith.constant 0 : index
    %c0_306 = arith.constant 0 : index
    %520 = vector.load %arg12[%c0_305, %c0_306] : memref<64x256xbf16, #tpu.memory_space<vmem>>, vector<64x256xbf16>
    %521 = arith.truncf %467 : vector<8x64xf32> to vector<8x64xbf16>
    %cst_307 = arith.constant dense<0.000000e+00> : vector<8x256xf32>
    %522 = tpu.matmul %521, %520, %cst_307 {dimension_numbers = #tpu.dot_dimension_numbers<[1], [0], [0], [1], [0, 0, 1, 1], [], []>} : vector<8x64xbf16>, vector<64x256xbf16>, vector<8x256xf32> -> vector<8x256xf32>
    %c0_308 = arith.constant 0 : index
    %c0_309 = arith.constant 0 : index
    %c0_310 = arith.constant 0 : index
    %523 = vector.load %arg18[%c0_308, %c0_309, %c0_310] : memref<2x16x8xf32, #tpu.memory_space<vmem>>, vector<1x16x8xf32>
    %524 = vector.shape_cast %523 : vector<1x16x8xf32> to vector<16x8xf32>
    %525 = vector.extract_strided_slice %522 {offsets = [0, 0], sizes = [8, 128], strides = [1, 1]} : vector<8x256xf32> to vector<8x128xf32>
    %cst_311 = arith.constant dense<0.000000e+00> : vector<16x128xf32>
    %526 = tpu.matmul %524, %525, %cst_311 {dimension_numbers = #tpu.dot_dimension_numbers<[1], [0], [0], [1], [0, 0, 1, 1], [], []>} : vector<16x8xf32>, vector<8x128xf32>, vector<16x128xf32> -> vector<16x128xf32>
    %c1_312 = arith.constant 1 : index
    %c0_313 = arith.constant 0 : index
    %c0_314 = arith.constant 0 : index
    %527 = vector.load %arg18[%c1_312, %c0_313, %c0_314] : memref<2x16x8xf32, #tpu.memory_space<vmem>>, vector<1x16x8xf32>
    %528 = vector.shape_cast %527 : vector<1x16x8xf32> to vector<16x8xf32>
    %529 = vector.extract_strided_slice %522 {offsets = [0, 128], sizes = [8, 128], strides = [1, 1]} : vector<8x256xf32> to vector<8x128xf32>
    %cst_315 = arith.constant dense<0.000000e+00> : vector<16x128xf32>
    %530 = tpu.matmul %528, %529, %cst_315 {dimension_numbers = #tpu.dot_dimension_numbers<[1], [0], [0], [1], [0, 0, 1, 1], [], []>} : vector<16x8xf32>, vector<8x128xf32>, vector<16x128xf32> -> vector<16x128xf32>
    %531 = arith.addf %526, %530 : vector<16x128xf32>
    %532 = arith.subf %421, %531 : vector<16x128xf32>
    %c0_316 = arith.constant 0 : index
    %c0_317 = arith.constant 0 : index
    %c0_318 = arith.constant 0 : index
    %533 = vector.load %arg13[%c0_316, %c0_317, %c0_318] : memref<3x8x16xf32, #tpu.memory_space<vmem>>, vector<1x8x16xf32>
    %534 = vector.shape_cast %533 : vector<1x8x16xf32> to vector<8x16xf32>
    %cst_319 = arith.constant dense<0.000000e+00> : vector<8x128xf32>
    %535 = tpu.matmul %534, %422, %cst_319 {dimension_numbers = #tpu.dot_dimension_numbers<[1], [0], [0], [1], [0, 0, 1, 1], [], []>} : vector<8x16xf32>, vector<16x128xf32>, vector<8x128xf32> -> vector<8x128xf32>
    %c1_320 = arith.constant 1 : index
    %c0_321 = arith.constant 0 : index
    %c0_322 = arith.constant 0 : index
    %536 = vector.load %arg13[%c1_320, %c0_321, %c0_322] : memref<3x8x16xf32, #tpu.memory_space<vmem>>, vector<1x8x16xf32>
    %537 = vector.shape_cast %536 : vector<1x8x16xf32> to vector<8x16xf32>
    %cst_323 = arith.constant dense<0.000000e+00> : vector<8x128xf32>
    %538 = tpu.matmul %537, %422, %cst_323 {dimension_numbers = #tpu.dot_dimension_numbers<[1], [0], [0], [1], [0, 0, 1, 1], [], []>} : vector<8x16xf32>, vector<16x128xf32>, vector<8x128xf32> -> vector<8x128xf32>
    %c2_324 = arith.constant 2 : index
    %c0_325 = arith.constant 0 : index
    %c0_326 = arith.constant 0 : index
    %539 = vector.load %arg13[%c2_324, %c0_325, %c0_326] : memref<3x8x16xf32, #tpu.memory_space<vmem>>, vector<1x8x16xf32>
    %540 = vector.shape_cast %539 : vector<1x8x16xf32> to vector<8x16xf32>
    %cst_327 = arith.constant dense<0.000000e+00> : vector<8x128xf32>
    %541 = tpu.matmul %540, %422, %cst_327 {dimension_numbers = #tpu.dot_dimension_numbers<[1], [0], [0], [1], [0, 0, 1, 1], [], []>} : vector<8x16xf32>, vector<16x128xf32>, vector<8x128xf32> -> vector<8x128xf32>
    %542 = tpu.concatenate %535, %538, %541 in 1 : vector<8x128xf32>, vector<8x128xf32>, vector<8x128xf32> -> vector<8x384xf32>
    %c0_328 = arith.constant 0 : index
    %c0_329 = arith.constant 0 : index
    %543 = vector.load %arg7[%c0_328, %c0_329] : memref<384x64xbf16, #tpu.memory_space<vmem>>, vector<384x64xbf16>
    %544 = arith.truncf %542 : vector<8x384xf32> to vector<8x384xbf16>
    %cst_330 = arith.constant dense<0.000000e+00> : vector<8x64xf32>
    %545 = tpu.matmul %544, %543, %cst_330 {dimension_numbers = #tpu.dot_dimension_numbers<[1], [0], [0], [1], [0, 0, 1, 1], [], []>} : vector<8x384xbf16>, vector<384x64xbf16>, vector<8x64xf32> -> vector<8x64xf32>
    %c0_331 = arith.constant 0 : index
    %c0_332 = arith.constant 0 : index
    %c0_333 = arith.constant 0 : index
    %546 = vector.load %arg14[%c0_331, %c0_332, %c0_333] : memref<3x4x8xf32, #tpu.memory_space<vmem>>, vector<1x4x8xf32>
    %547 = vector.shape_cast %546 : vector<1x4x8xf32> to vector<4x8xf32>
    %cst_334 = arith.constant dense<0.000000e+00> : vector<4x64xf32>
    %548 = tpu.matmul %547, %545, %cst_334 {dimension_numbers = #tpu.dot_dimension_numbers<[1], [0], [0], [1], [0, 0, 1, 1], [], []>} : vector<4x8xf32>, vector<8x64xf32>, vector<4x64xf32> -> vector<4x64xf32>
    %c1_335 = arith.constant 1 : index
    %c0_336 = arith.constant 0 : index
    %c0_337 = arith.constant 0 : index
    %549 = vector.load %arg14[%c1_335, %c0_336, %c0_337] : memref<3x4x8xf32, #tpu.memory_space<vmem>>, vector<1x4x8xf32>
    %550 = vector.shape_cast %549 : vector<1x4x8xf32> to vector<4x8xf32>
    %cst_338 = arith.constant dense<0.000000e+00> : vector<4x64xf32>
    %551 = tpu.matmul %550, %545, %cst_338 {dimension_numbers = #tpu.dot_dimension_numbers<[1], [0], [0], [1], [0, 0, 1, 1], [], []>} : vector<4x8xf32>, vector<8x64xf32>, vector<4x64xf32> -> vector<4x64xf32>
    %c2_339 = arith.constant 2 : index
    %c0_340 = arith.constant 0 : index
    %c0_341 = arith.constant 0 : index
    %552 = vector.load %arg14[%c2_339, %c0_340, %c0_341] : memref<3x4x8xf32, #tpu.memory_space<vmem>>, vector<1x4x8xf32>
    %553 = vector.shape_cast %552 : vector<1x4x8xf32> to vector<4x8xf32>
    %cst_342 = arith.constant dense<0.000000e+00> : vector<4x64xf32>
    %554 = tpu.matmul %553, %545, %cst_342 {dimension_numbers = #tpu.dot_dimension_numbers<[1], [0], [0], [1], [0, 0, 1, 1], [], []>} : vector<4x8xf32>, vector<8x64xf32>, vector<4x64xf32> -> vector<4x64xf32>
    %555 = tpu.concatenate %548, %551, %554 in 1 : vector<4x64xf32>, vector<4x64xf32>, vector<4x64xf32> -> vector<4x192xf32>
    %c0_343 = arith.constant 0 : index
    %c0_344 = arith.constant 0 : index
    %556 = vector.load %arg8[%c0_343, %c0_344] : memref<192x32xbf16, #tpu.memory_space<vmem>>, vector<192x32xbf16>
    %557 = arith.truncf %555 : vector<4x192xf32> to vector<4x192xbf16>
    %cst_345 = arith.constant dense<0.000000e+00> : vector<4x32xf32>
    %558 = tpu.matmul %557, %556, %cst_345 {dimension_numbers = #tpu.dot_dimension_numbers<[1], [0], [0], [1], [0, 0, 1, 1], [], []>} : vector<4x192xbf16>, vector<192x32xbf16>, vector<4x32xf32> -> vector<4x32xf32>
    %c0_346 = arith.constant 0 : index
    %c0_347 = arith.constant 0 : index
    %c0_348 = arith.constant 0 : index
    %559 = vector.load %arg15[%c0_346, %c0_347, %c0_348] : memref<3x2x4xf32, #tpu.memory_space<vmem>>, vector<1x2x4xf32>
    %560 = vector.shape_cast %559 : vector<1x2x4xf32> to vector<2x4xf32>
    %cst_349 = arith.constant dense<0.000000e+00> : vector<2x32xf32>
    %561 = tpu.matmul %560, %558, %cst_349 {dimension_numbers = #tpu.dot_dimension_numbers<[1], [0], [0], [1], [0, 0, 1, 1], [], []>} : vector<2x4xf32>, vector<4x32xf32>, vector<2x32xf32> -> vector<2x32xf32>
    %c1_350 = arith.constant 1 : index
    %c0_351 = arith.constant 0 : index
    %c0_352 = arith.constant 0 : index
    %562 = vector.load %arg15[%c1_350, %c0_351, %c0_352] : memref<3x2x4xf32, #tpu.memory_space<vmem>>, vector<1x2x4xf32>
    %563 = vector.shape_cast %562 : vector<1x2x4xf32> to vector<2x4xf32>
    %cst_353 = arith.constant dense<0.000000e+00> : vector<2x32xf32>
    %564 = tpu.matmul %563, %558, %cst_353 {dimension_numbers = #tpu.dot_dimension_numbers<[1], [0], [0], [1], [0, 0, 1, 1], [], []>} : vector<2x4xf32>, vector<4x32xf32>, vector<2x32xf32> -> vector<2x32xf32>
    %c2_354 = arith.constant 2 : index
    %c0_355 = arith.constant 0 : index
    %c0_356 = arith.constant 0 : index
    %565 = vector.load %arg15[%c2_354, %c0_355, %c0_356] : memref<3x2x4xf32, #tpu.memory_space<vmem>>, vector<1x2x4xf32>
    %566 = vector.shape_cast %565 : vector<1x2x4xf32> to vector<2x4xf32>
    %cst_357 = arith.constant dense<0.000000e+00> : vector<2x32xf32>
    %567 = tpu.matmul %566, %558, %cst_357 {dimension_numbers = #tpu.dot_dimension_numbers<[1], [0], [0], [1], [0, 0, 1, 1], [], []>} : vector<2x4xf32>, vector<4x32xf32>, vector<2x32xf32> -> vector<2x32xf32>
    %568 = tpu.concatenate %561, %564, %567 in 1 : vector<2x32xf32>, vector<2x32xf32>, vector<2x32xf32> -> vector<2x96xf32>
    %c0_358 = arith.constant 0 : index
    %c0_359 = arith.constant 0 : index
    %569 = vector.load %arg9[%c0_358, %c0_359] : memref<96x16xbf16, #tpu.memory_space<vmem>>, vector<96x16xbf16>
    %570 = arith.truncf %568 : vector<2x96xf32> to vector<2x96xbf16>
    %cst_360 = arith.constant dense<0.000000e+00> : vector<2x16xf32>
    %571 = tpu.matmul %570, %569, %cst_360 {dimension_numbers = #tpu.dot_dimension_numbers<[1], [0], [0], [1], [0, 0, 1, 1], [], []>} : vector<2x96xbf16>, vector<96x16xbf16>, vector<2x16xf32> -> vector<2x16xf32>
    %c0_361 = arith.constant 0 : index
    %c0_362 = arith.constant 0 : index
    %572 = vector.load %arg10[%c0_361, %c0_362] : memref<16x64xbf16, #tpu.memory_space<vmem>>, vector<16x64xbf16>
    %573 = arith.truncf %571 : vector<2x16xf32> to vector<2x16xbf16>
    %cst_363 = arith.constant dense<0.000000e+00> : vector<2x64xf32>
    %574 = tpu.matmul %573, %572, %cst_363 {dimension_numbers = #tpu.dot_dimension_numbers<[1], [0], [0], [1], [0, 0, 1, 1], [], []>} : vector<2x16xbf16>, vector<16x64xbf16>, vector<2x64xf32> -> vector<2x64xf32>
    %c0_364 = arith.constant 0 : index
    %c0_365 = arith.constant 0 : index
    %c0_366 = arith.constant 0 : index
    %575 = vector.load %arg16[%c0_364, %c0_365, %c0_366] : memref<2x4x2xf32, #tpu.memory_space<vmem>>, vector<1x4x2xf32>
    %576 = vector.shape_cast %575 : vector<1x4x2xf32> to vector<4x2xf32>
    %577 = vector.extract_strided_slice %574 {offsets = [0, 0], sizes = [2, 32], strides = [1, 1]} : vector<2x64xf32> to vector<2x32xf32>
    %cst_367 = arith.constant dense<0.000000e+00> : vector<4x32xf32>
    %578 = tpu.matmul %576, %577, %cst_367 {dimension_numbers = #tpu.dot_dimension_numbers<[1], [0], [0], [1], [0, 0, 1, 1], [], []>} : vector<4x2xf32>, vector<2x32xf32>, vector<4x32xf32> -> vector<4x32xf32>
    %c1_368 = arith.constant 1 : index
    %c0_369 = arith.constant 0 : index
    %c0_370 = arith.constant 0 : index
    %579 = vector.load %arg16[%c1_368, %c0_369, %c0_370] : memref<2x4x2xf32, #tpu.memory_space<vmem>>, vector<1x4x2xf32>
    %580 = vector.shape_cast %579 : vector<1x4x2xf32> to vector<4x2xf32>
    %581 = vector.extract_strided_slice %574 {offsets = [0, 32], sizes = [2, 32], strides = [1, 1]} : vector<2x64xf32> to vector<2x32xf32>
    %cst_371 = arith.constant dense<0.000000e+00> : vector<4x32xf32>
    %582 = tpu.matmul %580, %581, %cst_371 {dimension_numbers = #tpu.dot_dimension_numbers<[1], [0], [0], [1], [0, 0, 1, 1], [], []>} : vector<4x2xf32>, vector<2x32xf32>, vector<4x32xf32> -> vector<4x32xf32>
    %583 = arith.addf %578, %582 : vector<4x32xf32>
    %584 = arith.subf %558, %583 : vector<4x32xf32>
    %c0_372 = arith.constant 0 : index
    %c0_373 = arith.constant 0 : index
    %585 = vector.load %arg11[%c0_372, %c0_373] : memref<32x128xbf16, #tpu.memory_space<vmem>>, vector<32x128xbf16>
    %586 = arith.truncf %558 : vector<4x32xf32> to vector<4x32xbf16>
    %cst_374 = arith.constant dense<0.000000e+00> : vector<4x128xf32>
    %587 = tpu.matmul %586, %585, %cst_374 {dimension_numbers = #tpu.dot_dimension_numbers<[1], [0], [0], [1], [0, 0, 1, 1], [], []>} : vector<4x32xbf16>, vector<32x128xbf16>, vector<4x128xf32> -> vector<4x128xf32>
    %c0_375 = arith.constant 0 : index
    %c0_376 = arith.constant 0 : index
    %c0_377 = arith.constant 0 : index
    %588 = vector.load %arg17[%c0_375, %c0_376, %c0_377] : memref<2x8x4xf32, #tpu.memory_space<vmem>>, vector<1x8x4xf32>
    %589 = vector.shape_cast %588 : vector<1x8x4xf32> to vector<8x4xf32>
    %590 = vector.extract_strided_slice %587 {offsets = [0, 0], sizes = [4, 64], strides = [1, 1]} : vector<4x128xf32> to vector<4x64xf32>
    %cst_378 = arith.constant dense<0.000000e+00> : vector<8x64xf32>
    %591 = tpu.matmul %589, %590, %cst_378 {dimension_numbers = #tpu.dot_dimension_numbers<[1], [0], [0], [1], [0, 0, 1, 1], [], []>} : vector<8x4xf32>, vector<4x64xf32>, vector<8x64xf32> -> vector<8x64xf32>
    %c1_379 = arith.constant 1 : index
    %c0_380 = arith.constant 0 : index
    %c0_381 = arith.constant 0 : index
    %592 = vector.load %arg17[%c1_379, %c0_380, %c0_381] : memref<2x8x4xf32, #tpu.memory_space<vmem>>, vector<1x8x4xf32>
    %593 = vector.shape_cast %592 : vector<1x8x4xf32> to vector<8x4xf32>
    %594 = vector.extract_strided_slice %587 {offsets = [0, 64], sizes = [4, 64], strides = [1, 1]} : vector<4x128xf32> to vector<4x64xf32>
    %cst_382 = arith.constant dense<0.000000e+00> : vector<8x64xf32>
    %595 = tpu.matmul %593, %594, %cst_382 {dimension_numbers = #tpu.dot_dimension_numbers<[1], [0], [0], [1], [0, 0, 1, 1], [], []>} : vector<8x4xf32>, vector<4x64xf32>, vector<8x64xf32> -> vector<8x64xf32>
    %596 = arith.addf %591, %595 : vector<8x64xf32>
    %597 = arith.subf %545, %596 : vector<8x64xf32>
    %c0_383 = arith.constant 0 : index
    %c0_384 = arith.constant 0 : index
    %598 = vector.load %arg12[%c0_383, %c0_384] : memref<64x256xbf16, #tpu.memory_space<vmem>>, vector<64x256xbf16>
    %599 = arith.truncf %545 : vector<8x64xf32> to vector<8x64xbf16>
    %cst_385 = arith.constant dense<0.000000e+00> : vector<8x256xf32>
    %600 = tpu.matmul %599, %598, %cst_385 {dimension_numbers = #tpu.dot_dimension_numbers<[1], [0], [0], [1], [0, 0, 1, 1], [], []>} : vector<8x64xbf16>, vector<64x256xbf16>, vector<8x256xf32> -> vector<8x256xf32>
    %c0_386 = arith.constant 0 : index
    %c0_387 = arith.constant 0 : index
    %c0_388 = arith.constant 0 : index
    %601 = vector.load %arg18[%c0_386, %c0_387, %c0_388] : memref<2x16x8xf32, #tpu.memory_space<vmem>>, vector<1x16x8xf32>
    %602 = vector.shape_cast %601 : vector<1x16x8xf32> to vector<16x8xf32>
    %603 = vector.extract_strided_slice %600 {offsets = [0, 0], sizes = [8, 128], strides = [1, 1]} : vector<8x256xf32> to vector<8x128xf32>
    %cst_389 = arith.constant dense<0.000000e+00> : vector<16x128xf32>
    %604 = tpu.matmul %602, %603, %cst_389 {dimension_numbers = #tpu.dot_dimension_numbers<[1], [0], [0], [1], [0, 0, 1, 1], [], []>} : vector<16x8xf32>, vector<8x128xf32>, vector<16x128xf32> -> vector<16x128xf32>
    %c1_390 = arith.constant 1 : index
    %c0_391 = arith.constant 0 : index
    %c0_392 = arith.constant 0 : index
    %605 = vector.load %arg18[%c1_390, %c0_391, %c0_392] : memref<2x16x8xf32, #tpu.memory_space<vmem>>, vector<1x16x8xf32>
    %606 = vector.shape_cast %605 : vector<1x16x8xf32> to vector<16x8xf32>
    %607 = vector.extract_strided_slice %600 {offsets = [0, 128], sizes = [8, 128], strides = [1, 1]} : vector<8x256xf32> to vector<8x128xf32>
    %cst_393 = arith.constant dense<0.000000e+00> : vector<16x128xf32>
    %608 = tpu.matmul %606, %607, %cst_393 {dimension_numbers = #tpu.dot_dimension_numbers<[1], [0], [0], [1], [0, 0, 1, 1], [], []>} : vector<16x8xf32>, vector<8x128xf32>, vector<16x128xf32> -> vector<16x128xf32>
    %609 = arith.addf %604, %608 : vector<16x128xf32>
    %610 = arith.subf %422, %609 : vector<16x128xf32>
    %c0_394 = arith.constant 0 : index
    %c0_395 = arith.constant 0 : index
    %c0_396 = arith.constant 0 : index
    %611 = vector.load %arg13[%c0_394, %c0_395, %c0_396] : memref<3x8x16xf32, #tpu.memory_space<vmem>>, vector<1x8x16xf32>
    %612 = vector.shape_cast %611 : vector<1x8x16xf32> to vector<8x16xf32>
    %cst_397 = arith.constant dense<0.000000e+00> : vector<8x128xf32>
    %613 = tpu.matmul %612, %454, %cst_397 {dimension_numbers = #tpu.dot_dimension_numbers<[1], [0], [0], [1], [0, 0, 1, 1], [], []>} : vector<8x16xf32>, vector<16x128xf32>, vector<8x128xf32> -> vector<8x128xf32>
    %c1_398 = arith.constant 1 : index
    %c0_399 = arith.constant 0 : index
    %c0_400 = arith.constant 0 : index
    %614 = vector.load %arg13[%c1_398, %c0_399, %c0_400] : memref<3x8x16xf32, #tpu.memory_space<vmem>>, vector<1x8x16xf32>
    %615 = vector.shape_cast %614 : vector<1x8x16xf32> to vector<8x16xf32>
    %cst_401 = arith.constant dense<0.000000e+00> : vector<8x128xf32>
    %616 = tpu.matmul %615, %454, %cst_401 {dimension_numbers = #tpu.dot_dimension_numbers<[1], [0], [0], [1], [0, 0, 1, 1], [], []>} : vector<8x16xf32>, vector<16x128xf32>, vector<8x128xf32> -> vector<8x128xf32>
    %617 = arith.maximumf %613, %616 : vector<8x128xf32>
    %c0_402 = arith.constant 0 : index
    %c0_403 = arith.constant 0 : index
    %c0_404 = arith.constant 0 : index
    %618 = vector.load %arg19[%c0_402, %c0_403, %c0_404] : memref<2x128x64xf32, #tpu.memory_space<vmem>>, vector<1x128x64xf32>
    %619 = vector.shape_cast %618 : vector<1x128x64xf32> to vector<128x64xf32>
    %cst_405 = arith.constant dense<0.000000e+00> : vector<8x64xf32>
    %620 = tpu.matmul %617, %619, %cst_405 {dimension_numbers = #tpu.dot_dimension_numbers<[1], [0], [0], [1], [0, 0, 1, 1], [], []>} : vector<8x128xf32>, vector<128x64xf32>, vector<8x64xf32> -> vector<8x64xf32>
    %c1_406 = arith.constant 1 : index
    %c0_407 = arith.constant 0 : index
    %c0_408 = arith.constant 0 : index
    %621 = vector.load %arg19[%c1_406, %c0_407, %c0_408] : memref<2x128x64xf32, #tpu.memory_space<vmem>>, vector<1x128x64xf32>
    %622 = vector.shape_cast %621 : vector<1x128x64xf32> to vector<128x64xf32>
    %cst_409 = arith.constant dense<0.000000e+00> : vector<8x64xf32>
    %623 = tpu.matmul %617, %622, %cst_409 {dimension_numbers = #tpu.dot_dimension_numbers<[1], [0], [0], [1], [0, 0, 1, 1], [], []>} : vector<8x128xf32>, vector<128x64xf32>, vector<8x64xf32> -> vector<8x64xf32>
    %624 = arith.maximumf %620, %623 : vector<8x64xf32>
    %c0_410 = arith.constant 0 : index
    %c0_411 = arith.constant 0 : index
    %c0_412 = arith.constant 0 : index
    %625 = vector.load %arg14[%c0_410, %c0_411, %c0_412] : memref<3x4x8xf32, #tpu.memory_space<vmem>>, vector<1x4x8xf32>
    %626 = vector.shape_cast %625 : vector<1x4x8xf32> to vector<4x8xf32>
    %cst_413 = arith.constant dense<0.000000e+00> : vector<4x64xf32>
    %627 = tpu.matmul %626, %624, %cst_413 {dimension_numbers = #tpu.dot_dimension_numbers<[1], [0], [0], [1], [0, 0, 1, 1], [], []>} : vector<4x8xf32>, vector<8x64xf32>, vector<4x64xf32> -> vector<4x64xf32>
    %c1_414 = arith.constant 1 : index
    %c0_415 = arith.constant 0 : index
    %c0_416 = arith.constant 0 : index
    %628 = vector.load %arg14[%c1_414, %c0_415, %c0_416] : memref<3x4x8xf32, #tpu.memory_space<vmem>>, vector<1x4x8xf32>
    %629 = vector.shape_cast %628 : vector<1x4x8xf32> to vector<4x8xf32>
    %cst_417 = arith.constant dense<0.000000e+00> : vector<4x64xf32>
    %630 = tpu.matmul %629, %624, %cst_417 {dimension_numbers = #tpu.dot_dimension_numbers<[1], [0], [0], [1], [0, 0, 1, 1], [], []>} : vector<4x8xf32>, vector<8x64xf32>, vector<4x64xf32> -> vector<4x64xf32>
    %631 = arith.maximumf %627, %630 : vector<4x64xf32>
    %c0_418 = arith.constant 0 : index
    %c0_419 = arith.constant 0 : index
    %c0_420 = arith.constant 0 : index
    %632 = vector.load %arg20[%c0_418, %c0_419, %c0_420] : memref<2x64x32xf32, #tpu.memory_space<vmem>>, vector<1x64x32xf32>
    %633 = vector.shape_cast %632 : vector<1x64x32xf32> to vector<64x32xf32>
    %cst_421 = arith.constant dense<0.000000e+00> : vector<4x32xf32>
    %634 = tpu.matmul %631, %633, %cst_421 {dimension_numbers = #tpu.dot_dimension_numbers<[1], [0], [0], [1], [0, 0, 1, 1], [], []>} : vector<4x64xf32>, vector<64x32xf32>, vector<4x32xf32> -> vector<4x32xf32>
    %c1_422 = arith.constant 1 : index
    %c0_423 = arith.constant 0 : index
    %c0_424 = arith.constant 0 : index
    %635 = vector.load %arg20[%c1_422, %c0_423, %c0_424] : memref<2x64x32xf32, #tpu.memory_space<vmem>>, vector<1x64x32xf32>
    %636 = vector.shape_cast %635 : vector<1x64x32xf32> to vector<64x32xf32>
    %cst_425 = arith.constant dense<0.000000e+00> : vector<4x32xf32>
    %637 = tpu.matmul %631, %636, %cst_425 {dimension_numbers = #tpu.dot_dimension_numbers<[1], [0], [0], [1], [0, 0, 1, 1], [], []>} : vector<4x64xf32>, vector<64x32xf32>, vector<4x32xf32> -> vector<4x32xf32>
    %638 = arith.maximumf %634, %637 : vector<4x32xf32>
    %c0_426 = arith.constant 0 : index
    %c0_427 = arith.constant 0 : index
    %c0_428 = arith.constant 0 : index
    %639 = vector.load %arg15[%c0_426, %c0_427, %c0_428] : memref<3x2x4xf32, #tpu.memory_space<vmem>>, vector<1x2x4xf32>
    %640 = vector.shape_cast %639 : vector<1x2x4xf32> to vector<2x4xf32>
    %cst_429 = arith.constant dense<0.000000e+00> : vector<2x32xf32>
    %641 = tpu.matmul %640, %638, %cst_429 {dimension_numbers = #tpu.dot_dimension_numbers<[1], [0], [0], [1], [0, 0, 1, 1], [], []>} : vector<2x4xf32>, vector<4x32xf32>, vector<2x32xf32> -> vector<2x32xf32>
    %c1_430 = arith.constant 1 : index
    %c0_431 = arith.constant 0 : index
    %c0_432 = arith.constant 0 : index
    %642 = vector.load %arg15[%c1_430, %c0_431, %c0_432] : memref<3x2x4xf32, #tpu.memory_space<vmem>>, vector<1x2x4xf32>
    %643 = vector.shape_cast %642 : vector<1x2x4xf32> to vector<2x4xf32>
    %cst_433 = arith.constant dense<0.000000e+00> : vector<2x32xf32>
    %644 = tpu.matmul %643, %638, %cst_433 {dimension_numbers = #tpu.dot_dimension_numbers<[1], [0], [0], [1], [0, 0, 1, 1], [], []>} : vector<2x4xf32>, vector<4x32xf32>, vector<2x32xf32> -> vector<2x32xf32>
    %645 = arith.maximumf %641, %644 : vector<2x32xf32>
    %c0_434 = arith.constant 0 : index
    %c0_435 = arith.constant 0 : index
    %c0_436 = arith.constant 0 : index
    %646 = vector.load %arg21[%c0_434, %c0_435, %c0_436] : memref<2x32x16xf32, #tpu.memory_space<vmem>>, vector<1x32x16xf32>
    %647 = vector.shape_cast %646 : vector<1x32x16xf32> to vector<32x16xf32>
    %cst_437 = arith.constant dense<0.000000e+00> : vector<2x16xf32>
    %648 = tpu.matmul %645, %647, %cst_437 {dimension_numbers = #tpu.dot_dimension_numbers<[1], [0], [0], [1], [0, 0, 1, 1], [], []>} : vector<2x32xf32>, vector<32x16xf32>, vector<2x16xf32> -> vector<2x16xf32>
    %c1_438 = arith.constant 1 : index
    %c0_439 = arith.constant 0 : index
    %c0_440 = arith.constant 0 : index
    %649 = vector.load %arg21[%c1_438, %c0_439, %c0_440] : memref<2x32x16xf32, #tpu.memory_space<vmem>>, vector<1x32x16xf32>
    %650 = vector.shape_cast %649 : vector<1x32x16xf32> to vector<32x16xf32>
    %cst_441 = arith.constant dense<0.000000e+00> : vector<2x16xf32>
    %651 = tpu.matmul %645, %650, %cst_441 {dimension_numbers = #tpu.dot_dimension_numbers<[1], [0], [0], [1], [0, 0, 1, 1], [], []>} : vector<2x32xf32>, vector<32x16xf32>, vector<2x16xf32> -> vector<2x16xf32>
    %652 = arith.maximumf %648, %651 : vector<2x16xf32>
    %653 = arith.mulf %493, %652 : vector<2x16xf32>
    %cst_442 = arith.constant 1.000000e+00 : f32
    %654 = vector.broadcast %cst_442 : f32 to vector<2x16xf32>
    %655 = arith.subf %654, %652 : vector<2x16xf32>
    %656 = arith.mulf %571, %655 : vector<2x16xf32>
    %657 = arith.addf %653, %656 : vector<2x16xf32>
    %658 = arith.mulf %506, %638 : vector<4x32xf32>
    %cst_443 = arith.constant 1.000000e+00 : f32
    %659 = vector.broadcast %cst_443 : f32 to vector<4x32xf32>
    %660 = arith.subf %659, %638 : vector<4x32xf32>
    %661 = arith.mulf %584, %660 : vector<4x32xf32>
    %662 = arith.addf %658, %661 : vector<4x32xf32>
    %663 = arith.mulf %519, %624 : vector<8x64xf32>
    %cst_444 = arith.constant 1.000000e+00 : f32
    %664 = vector.broadcast %cst_444 : f32 to vector<8x64xf32>
    %665 = arith.subf %664, %624 : vector<8x64xf32>
    %666 = arith.mulf %597, %665 : vector<8x64xf32>
    %667 = arith.addf %663, %666 : vector<8x64xf32>
    %668 = arith.mulf %532, %454 : vector<16x128xf32>
    %cst_445 = arith.constant 1.000000e+00 : f32
    %669 = vector.broadcast %cst_445 : f32 to vector<16x128xf32>
    %670 = arith.subf %669, %454 : vector<16x128xf32>
    %671 = arith.mulf %610, %670 : vector<16x128xf32>
    %672 = arith.addf %668, %671 : vector<16x128xf32>
    %c0_446 = arith.constant 0 : index
    %c0_447 = arith.constant 0 : index
    %673 = vector.load %arg10[%c0_446, %c0_447] : memref<16x64xbf16, #tpu.memory_space<vmem>>, vector<16x64xbf16>
    %674 = arith.truncf %657 : vector<2x16xf32> to vector<2x16xbf16>
    %cst_448 = arith.constant dense<0.000000e+00> : vector<2x64xf32>
    %675 = tpu.matmul %674, %673, %cst_448 {dimension_numbers = #tpu.dot_dimension_numbers<[1], [0], [0], [1], [0, 0, 1, 1], [], []>} : vector<2x16xbf16>, vector<16x64xbf16>, vector<2x64xf32> -> vector<2x64xf32>
    %c0_449 = arith.constant 0 : index
    %c0_450 = arith.constant 0 : index
    %c0_451 = arith.constant 0 : index
    %676 = vector.load %arg16[%c0_449, %c0_450, %c0_451] : memref<2x4x2xf32, #tpu.memory_space<vmem>>, vector<1x4x2xf32>
    %677 = vector.shape_cast %676 : vector<1x4x2xf32> to vector<4x2xf32>
    %678 = vector.extract_strided_slice %675 {offsets = [0, 0], sizes = [2, 32], strides = [1, 1]} : vector<2x64xf32> to vector<2x32xf32>
    %cst_452 = arith.constant dense<0.000000e+00> : vector<4x32xf32>
    %679 = tpu.matmul %677, %678, %cst_452 {dimension_numbers = #tpu.dot_dimension_numbers<[1], [0], [0], [1], [0, 0, 1, 1], [], []>} : vector<4x2xf32>, vector<2x32xf32>, vector<4x32xf32> -> vector<4x32xf32>
    %c1_453 = arith.constant 1 : index
    %c0_454 = arith.constant 0 : index
    %c0_455 = arith.constant 0 : index
    %680 = vector.load %arg16[%c1_453, %c0_454, %c0_455] : memref<2x4x2xf32, #tpu.memory_space<vmem>>, vector<1x4x2xf32>
    %681 = vector.shape_cast %680 : vector<1x4x2xf32> to vector<4x2xf32>
    %682 = vector.extract_strided_slice %675 {offsets = [0, 32], sizes = [2, 32], strides = [1, 1]} : vector<2x64xf32> to vector<2x32xf32>
    %cst_456 = arith.constant dense<0.000000e+00> : vector<4x32xf32>
    %683 = tpu.matmul %681, %682, %cst_456 {dimension_numbers = #tpu.dot_dimension_numbers<[1], [0], [0], [1], [0, 0, 1, 1], [], []>} : vector<4x2xf32>, vector<2x32xf32>, vector<4x32xf32> -> vector<4x32xf32>
    %684 = arith.addf %679, %683 : vector<4x32xf32>
    %685 = arith.addf %684, %662 : vector<4x32xf32>
    %c0_457 = arith.constant 0 : index
    %c0_458 = arith.constant 0 : index
    %686 = vector.load %arg11[%c0_457, %c0_458] : memref<32x128xbf16, #tpu.memory_space<vmem>>, vector<32x128xbf16>
    %687 = arith.truncf %685 : vector<4x32xf32> to vector<4x32xbf16>
    %cst_459 = arith.constant dense<0.000000e+00> : vector<4x128xf32>
    %688 = tpu.matmul %687, %686, %cst_459 {dimension_numbers = #tpu.dot_dimension_numbers<[1], [0], [0], [1], [0, 0, 1, 1], [], []>} : vector<4x32xbf16>, vector<32x128xbf16>, vector<4x128xf32> -> vector<4x128xf32>
    %c0_460 = arith.constant 0 : index
    %c0_461 = arith.constant 0 : index
    %c0_462 = arith.constant 0 : index
    %689 = vector.load %arg17[%c0_460, %c0_461, %c0_462] : memref<2x8x4xf32, #tpu.memory_space<vmem>>, vector<1x8x4xf32>
    %690 = vector.shape_cast %689 : vector<1x8x4xf32> to vector<8x4xf32>
    %691 = vector.extract_strided_slice %688 {offsets = [0, 0], sizes = [4, 64], strides = [1, 1]} : vector<4x128xf32> to vector<4x64xf32>
    %cst_463 = arith.constant dense<0.000000e+00> : vector<8x64xf32>
    %692 = tpu.matmul %690, %691, %cst_463 {dimension_numbers = #tpu.dot_dimension_numbers<[1], [0], [0], [1], [0, 0, 1, 1], [], []>} : vector<8x4xf32>, vector<4x64xf32>, vector<8x64xf32> -> vector<8x64xf32>
    %c1_464 = arith.constant 1 : index
    %c0_465 = arith.constant 0 : index
    %c0_466 = arith.constant 0 : index
    %693 = vector.load %arg17[%c1_464, %c0_465, %c0_466] : memref<2x8x4xf32, #tpu.memory_space<vmem>>, vector<1x8x4xf32>
    %694 = vector.shape_cast %693 : vector<1x8x4xf32> to vector<8x4xf32>
    %695 = vector.extract_strided_slice %688 {offsets = [0, 64], sizes = [4, 64], strides = [1, 1]} : vector<4x128xf32> to vector<4x64xf32>
    %cst_467 = arith.constant dense<0.000000e+00> : vector<8x64xf32>
    %696 = tpu.matmul %694, %695, %cst_467 {dimension_numbers = #tpu.dot_dimension_numbers<[1], [0], [0], [1], [0, 0, 1, 1], [], []>} : vector<8x4xf32>, vector<4x64xf32>, vector<8x64xf32> -> vector<8x64xf32>
    %697 = arith.addf %692, %696 : vector<8x64xf32>
    %698 = arith.addf %697, %667 : vector<8x64xf32>
    %c0_468 = arith.constant 0 : index
    %c0_469 = arith.constant 0 : index
    %699 = vector.load %arg12[%c0_468, %c0_469] : memref<64x256xbf16, #tpu.memory_space<vmem>>, vector<64x256xbf16>
    %700 = arith.truncf %698 : vector<8x64xf32> to vector<8x64xbf16>
    %cst_470 = arith.constant dense<0.000000e+00> : vector<8x256xf32>
    %701 = tpu.matmul %700, %699, %cst_470 {dimension_numbers = #tpu.dot_dimension_numbers<[1], [0], [0], [1], [0, 0, 1, 1], [], []>} : vector<8x64xbf16>, vector<64x256xbf16>, vector<8x256xf32> -> vector<8x256xf32>
    %c0_471 = arith.constant 0 : index
    %c0_472 = arith.constant 0 : index
    %c0_473 = arith.constant 0 : index
    %702 = vector.load %arg18[%c0_471, %c0_472, %c0_473] : memref<2x16x8xf32, #tpu.memory_space<vmem>>, vector<1x16x8xf32>
    %703 = vector.shape_cast %702 : vector<1x16x8xf32> to vector<16x8xf32>
    %704 = vector.extract_strided_slice %701 {offsets = [0, 0], sizes = [8, 128], strides = [1, 1]} : vector<8x256xf32> to vector<8x128xf32>
    %cst_474 = arith.constant dense<0.000000e+00> : vector<16x128xf32>
    %705 = tpu.matmul %703, %704, %cst_474 {dimension_numbers = #tpu.dot_dimension_numbers<[1], [0], [0], [1], [0, 0, 1, 1], [], []>} : vector<16x8xf32>, vector<8x128xf32>, vector<16x128xf32> -> vector<16x128xf32>
    %c1_475 = arith.constant 1 : index
    %c0_476 = arith.constant 0 : index
    %c0_477 = arith.constant 0 : index
    %706 = vector.load %arg18[%c1_475, %c0_476, %c0_477] : memref<2x16x8xf32, #tpu.memory_space<vmem>>, vector<1x16x8xf32>
    %707 = vector.shape_cast %706 : vector<1x16x8xf32> to vector<16x8xf32>
    %708 = vector.extract_strided_slice %701 {offsets = [0, 128], sizes = [8, 128], strides = [1, 1]} : vector<8x256xf32> to vector<8x128xf32>
    %cst_478 = arith.constant dense<0.000000e+00> : vector<16x128xf32>
    %709 = tpu.matmul %707, %708, %cst_478 {dimension_numbers = #tpu.dot_dimension_numbers<[1], [0], [0], [1], [0, 0, 1, 1], [], []>} : vector<16x8xf32>, vector<8x128xf32>, vector<16x128xf32> -> vector<16x128xf32>
    %710 = arith.addf %705, %709 : vector<16x128xf32>
    %711 = arith.addf %710, %672 : vector<16x128xf32>
    %c0_479 = arith.constant 0 : index
    %c0_480 = arith.constant 0 : index
    %712 = vector.load %arg23[%c0_479, %c0_480] : memref<16x128xf32, #tpu.memory_space<vmem>>, vector<16x128xf32>
    tpu.vector_store %arg23[%c0_479, %c0_480], %711 {strides = array<i32>} : memref<16x128xf32, #tpu.memory_space<vmem>>, vector<16x128xf32>,
    return
  }
}

</mosaic_0001>

<llo_original>
// kernel: merge_layer_c_forward.1
$region0: #{merge_layer_c_forward.1}
  #allocation0 [shape = 'u32[]', space=smem, size = 0x4, offset = 0x4, fixed_abs, tag = 'smem constant byte address 0x4 - core index']
  #allocation1 [shape = 'u32[144,128]{1,0:T(1,128)}', space=vmem, size = 0x12000, scoped, tag = 'internal scratch']
  %s0 = inlined_call_operand.vmem [shape: f32[2,8,16,16], index: 0, kind: input, shape index: {}]
  %s1 = inlined_call_operand.vmem [shape: f32[2,2,256], index: 1, kind: input, shape index: {}]
  %s2 = inlined_call_operand.vmem [shape: f32[2,256], index: 2, kind: input, shape index: {}]
  %s3 = inlined_call_operand.vmem [shape: f32[16,256], index: 3, kind: input, shape index: {}]
  %s4 = inlined_call_operand.vmem [shape: f32[4,256,64], index: 4, kind: input, shape index: {}]
  %s5 = inlined_call_operand.vmem [shape: f32[4,16,64], index: 5, kind: input, shape index: {}]
  %s6 = inlined_call_operand.vmem [shape: bf16[3840,128], index: 6, kind: input, shape index: {}]
  %s7 = inlined_call_operand.vmem [shape: bf16[384,64], index: 7, kind: input, shape index: {}]
  %s8 = inlined_call_operand.vmem [shape: bf16[192,32], index: 8, kind: input, shape index: {}]
  %s9 = inlined_call_operand.vmem [shape: bf16[96,16], index: 9, kind: input, shape index: {}]
  %s10 = inlined_call_operand.vmem [shape: bf16[16,64], index: 10, kind: input, shape index: {}]
  %s11 = inlined_call_operand.vmem [shape: bf16[32,128], index: 11, kind: input, shape index: {}]
  %s12 = inlined_call_operand.vmem [shape: bf16[64,256], index: 12, kind: input, shape index: {}]
  %s13 = inlined_call_operand.vmem [shape: f32[3,8,16], index: 13, kind: input, shape index: {}]
  %s14 = inlined_call_operand.vmem [shape: f32[3,4,8], index: 14, kind: input, shape index: {}]
  %s15 = inlined_call_operand.vmem [shape: f32[3,2,4], index: 15, kind: input, shape index: {}]
  %s16 = inlined_call_operand.vmem [shape: f32[2,4,2], index: 16, kind: input, shape index: {}]
  %s17 = inlined_call_operand.vmem [shape: f32[2,8,4], index: 17, kind: input, shape index: {}]
  %s18 = inlined_call_operand.vmem [shape: f32[2,16,8], index: 18, kind: input, shape index: {}]
  %s19 = inlined_call_operand.vmem [shape: f32[2,128,64], index: 19, kind: input, shape index: {}]
  %s20 = inlined_call_operand.vmem [shape: f32[2,64,32], index: 20, kind: input, shape index: {}]
  %s21 = inlined_call_operand.vmem [shape: f32[2,32,16], index: 21, kind: input, shape index: {}]
  %s22 = inlined_call_operand.vmem [shape: f32[128,128], index: 22, kind: input, shape index: {}]
  %s23 = inlined_call_operand.vmem [shape: f32[16,128], index: 23, kind: output, shape index: {}]
  %s24 = sld [smem:[#allocation0]]
  $region102: #{merge_layer_c_forward.1} parent=0
    _
  %s26 = ssub.s32 1, %s24
  %s27 = scalar_select 0, %s26, %s24
  // Predicated region
  $region2: #{merge_layer_c_forward.1} parent=0 // pred_check
    _
  $region3: #{merge_layer_c_forward.1} parent=0 // pred_check_branch
    %29 = sbr.rel (0) target = $region5
  $region4: #{merge_layer_c_forward.1} parent=0 // pred_region
    _
  $region5: #{merge_layer_c_forward.1} parent=0 // pred_fallthru
    _
  // Predicated region
  $region6: #{merge_layer_c_forward.1} parent=0 // pred_check
    _
  $region7: #{merge_layer_c_forward.1} parent=0 // pred_check_branch
    %31 = sbr.rel (0) target = $region9
  $region8: #{merge_layer_c_forward.1} parent=0 // pred_region
    _
  $region9: #{merge_layer_c_forward.1} parent=0 // pred_fallthru
    _
  // Predicated region
  $region10: #{merge_layer_c_forward.1} parent=0 // pred_check
    _
  $region11: #{merge_layer_c_forward.1} parent=0 // pred_check_branch
    %33 = sbr.rel (0) target = $region13
  $region12: #{merge_layer_c_forward.1} parent=0 // pred_region
    _
  $region13: #{merge_layer_c_forward.1} parent=0 // pred_fallthru
    _
  // Predicated region
  $region14: #{merge_layer_c_forward.1} parent=0 // pred_check
    _
  $region15: #{merge_layer_c_forward.1} parent=0 // pred_check_branch
    %35 = sbr.rel (0) target = $region17
  $region16: #{merge_layer_c_forward.1} parent=0 // pred_region
    _
  $region17: #{merge_layer_c_forward.1} parent=0 // pred_fallthru
    _
  // Predicated region
  $region18: #{merge_layer_c_forward.1} parent=0 // pred_check
    _
  $region19: #{merge_layer_c_forward.1} parent=0 // pred_check_branch
    %37 = sbr.rel (0) target = $region21
  $region20: #{merge_layer_c_forward.1} parent=0 // pred_region
    _
  $region21: #{merge_layer_c_forward.1} parent=0 // pred_fallthru
    _
  // Predicated region
  $region22: #{merge_layer_c_forward.1} parent=0 // pred_check
    _
  $region23: #{merge_layer_c_forward.1} parent=0 // pred_check_branch
    %39 = sbr.rel (0) target = $region25
  $region24: #{merge_layer_c_forward.1} parent=0 // pred_region
    _
  $region25: #{merge_layer_c_forward.1} parent=0 // pred_fallthru
    _
  // Predicated region
  $region26: #{merge_layer_c_forward.1} parent=0 // pred_check
    _
  $region27: #{merge_layer_c_forward.1} parent=0 // pred_check_branch
    %41 = sbr.rel (0) target = $region29
  $region28: #{merge_layer_c_forward.1} parent=0 // pred_region
    _
  $region29: #{merge_layer_c_forward.1} parent=0 // pred_fallthru
    _
  // Predicated region
  $region30: #{merge_layer_c_forward.1} parent=0 // pred_check
    _
  $region31: #{merge_layer_c_forward.1} parent=0 // pred_check_branch
    %43 = sbr.rel (0) target = $region33
  $region32: #{merge_layer_c_forward.1} parent=0 // pred_region
    _
  $region33: #{merge_layer_c_forward.1} parent=0 // pred_fallthru
    _
  // Predicated region
  $region34: #{merge_layer_c_forward.1} parent=0 // pred_check
    _
  $region35: #{merge_layer_c_forward.1} parent=0 // pred_check_branch
    %45 = sbr.rel (0) target = $region37
  $region36: #{merge_layer_c_forward.1} parent=0 // pred_region
    _
  $region37: #{merge_layer_c_forward.1} parent=0 // pred_fallthru
    _
  // Predicated region
  $region38: #{merge_layer_c_forward.1} parent=0 // pred_check
    _
  $region39: #{merge_layer_c_forward.1} parent=0 // pred_check_branch
    %47 = sbr.rel (0) target = $region41
  $region40: #{merge_layer_c_forward.1} parent=0 // pred_region
    _
  $region41: #{merge_layer_c_forward.1} parent=0 // pred_fallthru
    _
  // Predicated region
  $region42: #{merge_layer_c_forward.1} parent=0 // pred_check
    _
  $region43: #{merge_layer_c_forward.1} parent=0 // pred_check_branch
    %49 = sbr.rel (0) target = $region45
  $region44: #{merge_layer_c_forward.1} parent=0 // pred_region
    _
  $region45: #{merge_layer_c_forward.1} parent=0 // pred_fallthru
    _
  // Predicated region
  $region46: #{merge_layer_c_forward.1} parent=0 // pred_check
    _
  $region47: #{merge_layer_c_forward.1} parent=0 // pred_check_branch
    %51 = sbr.rel (0) target = $region49
  $region48: #{merge_layer_c_forward.1} parent=0 // pred_region
    _
  $region49: #{merge_layer_c_forward.1} parent=0 // pred_fallthru
    _
  // Predicated region
  $region50: #{merge_layer_c_forward.1} parent=0 // pred_check
    _
  $region51: #{merge_layer_c_forward.1} parent=0 // pred_check_branch
    %53 = sbr.rel (0) target = $region53
  $region52: #{merge_layer_c_forward.1} parent=0 // pred_region
    _
  $region53: #{merge_layer_c_forward.1} parent=0 // pred_fallthru
    _
  // Predicated region
  $region54: #{merge_layer_c_forward.1} parent=0 // pred_check
    _
  $region55: #{merge_layer_c_forward.1} parent=0 // pred_check_branch
    %55 = sbr.rel (0) target = $region57
  $region56: #{merge_layer_c_forward.1} parent=0 // pred_region
    _
  $region57: #{merge_layer_c_forward.1} parent=0 // pred_fallthru
    _
  // Predicated region
  $region58: #{merge_layer_c_forward.1} parent=0 // pred_check
    _
  $region59: #{merge_layer_c_forward.1} parent=0 // pred_check_branch
    %57 = sbr.rel (0) target = $region61
  $region60: #{merge_layer_c_forward.1} parent=0 // pred_region
    _
  $region61: #{merge_layer_c_forward.1} parent=0 // pred_fallthru
    _
  // Predicated region
  $region62: #{merge_layer_c_forward.1} parent=0 // pred_check
    _
  $region63: #{merge_layer_c_forward.1} parent=0 // pred_check_branch
    %59 = sbr.rel (0) target = $region65
  $region64: #{merge_layer_c_forward.1} parent=0 // pred_region
    _
  $region65: #{merge_layer_c_forward.1} parent=0 // pred_fallthru
    _
  // Predicated region
  $region66: #{merge_layer_c_forward.1} parent=0 // pred_check
    _
  $region67: #{merge_layer_c_forward.1} parent=0 // pred_check_branch
    %61 = sbr.rel (0) target = $region69
  $region68: #{merge_layer_c_forward.1} parent=0 // pred_region
    _
  $region69: #{merge_layer_c_forward.1} parent=0 // pred_fallthru
    _
  // Predicated region
  $region70: #{merge_layer_c_forward.1} parent=0 // pred_check
    _
  $region71: #{merge_layer_c_forward.1} parent=0 // pred_check_branch
    %63 = sbr.rel (0) target = $region73
  $region72: #{merge_layer_c_forward.1} parent=0 // pred_region
    _
  $region73: #{merge_layer_c_forward.1} parent=0 // pred_fallthru
    _
  // Predicated region
  $region74: #{merge_layer_c_forward.1} parent=0 // pred_check
    _
  $region75: #{merge_layer_c_forward.1} parent=0 // pred_check_branch
    %65 = sbr.rel (0) target = $region77
  $region76: #{merge_layer_c_forward.1} parent=0 // pred_region
    _
  $region77: #{merge_layer_c_forward.1} parent=0 // pred_fallthru
    _
  // Predicated region
  $region78: #{merge_layer_c_forward.1} parent=0 // pred_check
    _
  $region79: #{merge_layer_c_forward.1} parent=0 // pred_check_branch
    %67 = sbr.rel (0) target = $region81
  $region80: #{merge_layer_c_forward.1} parent=0 // pred_region
    _
  $region81: #{merge_layer_c_forward.1} parent=0 // pred_fallthru
    _
  // Predicated region
  $region82: #{merge_layer_c_forward.1} parent=0 // pred_check
    _
  $region83: #{merge_layer_c_forward.1} parent=0 // pred_check_branch
    %69 = sbr.rel (0) target = $region85
  $region84: #{merge_layer_c_forward.1} parent=0 // pred_region
    _
  $region85: #{merge_layer_c_forward.1} parent=0 // pred_fallthru
    _
  // Predicated region
  $region86: #{merge_layer_c_forward.1} parent=0 // pred_check
    _
  $region87: #{merge_layer_c_forward.1} parent=0 // pred_check_branch
    %71 = sbr.rel (0) target = $region89
  $region88: #{merge_layer_c_forward.1} parent=0 // pred_region
    _
  $region89: #{merge_layer_c_forward.1} parent=0 // pred_fallthru
    _
  // Predicated region
  $region90: #{merge_layer_c_forward.1} parent=0 // pred_check
    _
  $region91: #{merge_layer_c_forward.1} parent=0 // pred_check_branch
    %73 = sbr.rel (0) target = $region93
  $region92: #{merge_layer_c_forward.1} parent=0 // pred_region
    _
  $region93: #{merge_layer_c_forward.1} parent=0 // pred_fallthru
    _
  %v75 = vld [vmem:[%s3] sm:$0xff]
  %v76 = vld [vmem:[%s3 + $0x8] sm:$0xff]
  %v77 = vld [vmem:[%s3 + $0x10] sm:$0xff]
  %v78 = vld [vmem:[%s3 + $0x18] sm:$0xff]
  %v79 = vld [vmem:[%s2] ss:$2 sm:$0x3]
  %s80 = scalar_lea.vmem %s2, 1
  %v81 = vld [vmem:[%s80] ss:$2 sm:$0x3]
  %v82 = vld [vmem:[%s0] sm:$0xff]
  %v83 = vld [vmem:[%s0 + $0x8] sm:$0xff]
  %v84 = vld [vmem:[%s5] sm:$0xff]
  %v85 = vld [vmem:[%s5 + $0x8] sm:$0xff]
  %s86 = scalar_lea.vmem %s0, 16
  %v87 = vld [vmem:[%s86] sm:$0xff]
  %v88 = vld [vmem:[%s86 + $0x8] sm:$0xff]
  %s89 = scalar_lea.vmem %s5, 16
  %v90 = vld [vmem:[%s89] sm:$0xff]
  %v91 = vld [vmem:[%s89 + $0x8] sm:$0xff]
  %vm92 = vcmask 130048
  %v94 = vsel %vm92, %v87, 0
  %v97 = vsel %vm92, %v88, 0
  %99 = vmatprep.subr.mxu0 0.0
  %100 = vmatpush1.msra.mxu0 0.0
  %101 = vmatprep.subr.mxu0 0.0
  %102 = vmatpush1.msra.mxu0 0.0
  %103 = vmatprep.subr.mxu0 0.0
  %104 = vmatpush1.msra.mxu0 0.0
  %105 = vmatprep.subr.mxu0 0.0
  %106 = vmatpush1.msra.mxu0 0.0
  %107 = vmatprep.subr.mxu0 0.0
  %108 = vmatpush1.msra.mxu0 0.0
  %109 = vmatprep.subr.mxu0 0.0
  %110 = vmatpush1.msra.mxu0 0.0
  %111 = vmatprep.subr.mxu0 0.0
  %112 = vmatpush1.msra.mxu0 0.0
  %113 = vmatprep.subr.mxu0 0.0
  %114 = vmatpush1.msra.mxu0 0.0
  %115 = vmatprep.subr.mxu0 0.0
  %116 = vmatpush1.msra.mxu0 0.0
  %117 = vmatprep.subr.mxu0 0.0
  %118 = vmatpush1.msra.mxu0 0.0
  %119 = vmatprep.subr.mxu0 0.0
  %120 = vmatpush1.msra.mxu0 0.0
  %121 = vmatprep.subr.mxu0 0.0
  %122 = vmatpush1.msra.mxu0 0.0
  %123 = vmatprep.subr.mxu0 0.0
  %124 = vmatpush1.msra.mxu0 0.0
  %125 = vmatprep.subr.mxu0 0.0
  %126 = vmatpush1.msra.mxu0 0.0
  %127 = vmatprep.subr.mxu0 0.0
  %128 = vmatpush1.msra.mxu0 %v91
  %129 = vmatprep.subr.mxu0 0.0
  %130 = vmatpush1.msra.mxu0 %v90
  %131 = vmatprep.subr.mxu0 0.0
  %132 = vmatpush2.msra.mxu0 0.0
  %133 = vmatprep.subr.mxu0 0.0
  %134 = vmatpush2.msra.mxu0 0.0
  %135 = vmatprep.subr.mxu0 0.0
  %136 = vmatpush2.msra.mxu0 0.0
  %137 = vmatprep.subr.mxu0 0.0
  %138 = vmatpush2.msra.mxu0 0.0
  %139 = vmatprep.subr.mxu0 0.0
  %140 = vmatpush2.msra.mxu0 0.0
  %141 = vmatprep.subr.mxu0 0.0
  %142 = vmatpush2.msra.mxu0 0.0
  %143 = vmatprep.subr.mxu0 0.0
  %144 = vmatpush2.msra.mxu0 0.0
  %145 = vmatprep.subr.mxu0 0.0
  %146 = vmatpush2.msra.mxu0 0.0
  %147 = vmatprep.subr.mxu0 0.0
  %148 = vmatpush2.msra.mxu0 0.0
  %149 = vmatprep.subr.mxu0 0.0
  %150 = vmatpush2.msra.mxu0 0.0
  %151 = vmatprep.subr.mxu0 0.0
  %152 = vmatpush2.msra.mxu0 0.0
  %153 = vmatprep.subr.mxu0 0.0
  %154 = vmatpush2.msra.mxu0 0.0
  %155 = vmatprep.subr.mxu0 0.0
  %156 = vmatpush2.msra.mxu0 0.0
  %157 = vmatprep.subr.mxu0 0.0
  %158 = vmatpush2.msra.mxu0 0.0
  %159 = vmatprep.subr.mxu0 0.0
  %160 = vmatpush2.msra.mxu0 0.0
  %161 = vmatprep.subr.mxu0 0.0
  %162 = vmatpush2.msra.mxu0 0.0
  %163 = vmatprep.mubr.f32.mxu0 0.0
  %164 = vmatmul.mubr.f32.gmra.mxu0 %v94
  %v165 = vpop.f32.mrf.mxu0
  %v166 = vadd.f32 0.0, %v165
  %v167 = vpop.f32.mrf.mxu0
  %168 = vmatprep.mubr.f32.mxu0 0.0
  %169 = vmatmul.mubr.f32.gmra.mxu0 %v97
  %v170 = vpop.f32.mrf.mxu0
  %v171 = vadd.f32 0.0, %v170
  %v172 = vpop.f32.mrf.mxu0
  %173 = vdwg.mxu0
  %v175 = vsel %vm92, %v82, 0
  %v178 = vsel %vm92, %v83, 0
  %180 = vmatprep.subr.mxu0 0.0
  %181 = vmatpush1.msra.mxu0 0.0
  %182 = vmatprep.subr.mxu0 0.0
  %183 = vmatpush1.msra.mxu0 0.0
  %184 = vmatprep.subr.mxu0 0.0
  %185 = vmatpush1.msra.mxu0 0.0
  %186 = vmatprep.subr.mxu0 0.0
  %187 = vmatpush1.msra.mxu0 0.0
  %188 = vmatprep.subr.mxu0 0.0
  %189 = vmatpush1.msra.mxu0 0.0
  %190 = vmatprep.subr.mxu0 0.0
  %191 = vmatpush1.msra.mxu0 0.0
  %192 = vmatprep.subr.mxu0 0.0
  %193 = vmatpush1.msra.mxu0 0.0
  %194 = vmatprep.subr.mxu0 0.0
  %195 = vmatpush1.msra.mxu0 0.0
  %196 = vmatprep.subr.mxu0 0.0
  %197 = vmatpush1.msra.mxu0 0.0
  %198 = vmatprep.subr.mxu0 0.0
  %199 = vmatpush1.msra.mxu0 0.0
  %200 = vmatprep.subr.mxu0 0.0
  %201 = vmatpush1.msra.mxu0 0.0
  %202 = vmatprep.subr.mxu0 0.0
  %203 = vmatpush1.msra.mxu0 0.0
  %204 = vmatprep.subr.mxu0 0.0
  %205 = vmatpush1.msra.mxu0 0.0
  %206 = vmatprep.subr.mxu0 0.0
  %207 = vmatpush1.msra.mxu0 0.0
  %208 = vmatprep.subr.mxu0 0.0
  %209 = vmatpush1.msra.mxu0 %v85
  %210 = vmatprep.subr.mxu0 0.0
  %211 = vmatpush1.msra.mxu0 %v84
  %212 = vmatprep.subr.mxu0 0.0
  %213 = vmatpush2.msra.mxu0 0.0
  %214 = vmatprep.subr.mxu0 0.0
  %215 = vmatpush2.msra.mxu0 0.0
  %216 = vmatprep.subr.mxu0 0.0
  %217 = vmatpush2.msra.mxu0 0.0
  %218 = vmatprep.subr.mxu0 0.0
  %219 = vmatpush2.msra.mxu0 0.0
  %220 = vmatprep.subr.mxu0 0.0
  %221 = vmatpush2.msra.mxu0 0.0
  %222 = vmatprep.subr.mxu0 0.0
  %223 = vmatpush2.msra.mxu0 0.0
  %224 = vmatprep.subr.mxu0 0.0
  %225 = vmatpush2.msra.mxu0 0.0
  %226 = vmatprep.subr.mxu0 0.0
  %227 = vmatpush2.msra.mxu0 0.0
  %228 = vmatprep.subr.mxu0 0.0
  %229 = vmatpush2.msra.mxu0 0.0
  %230 = vmatprep.subr.mxu0 0.0
  %231 = vmatpush2.msra.mxu0 0.0
  %232 = vmatprep.subr.mxu0 0.0
  %233 = vmatpush2.msra.mxu0 0.0
  %234 = vmatprep.subr.mxu0 0.0
  %235 = vmatpush2.msra.mxu0 0.0
  %236 = vmatprep.subr.mxu0 0.0
  %237 = vmatpush2.msra.mxu0 0.0
  %238 = vmatprep.subr.mxu0 0.0
  %239 = vmatpush2.msra.mxu0 0.0
  %240 = vmatprep.subr.mxu0 0.0
  %241 = vmatpush2.msra.mxu0 0.0
  %242 = vmatprep.subr.mxu0 0.0
  %243 = vmatpush2.msra.mxu0 0.0
  %244 = vmatprep.mubr.f32.mxu0 0.0
  %245 = vmatmul.mubr.f32.gmra.mxu0 %v175
  %v246 = vpop.f32.mrf.mxu0
  %v247 = vadd.f32 %v166, %v246
  %v248 = vpop.f32.mrf.mxu0
  %249 = vmatprep.mubr.f32.mxu0 0.0
  %250 = vmatmul.mubr.f32.gmra.mxu0 %v178
  %v251 = vpop.f32.mrf.mxu0
  %v252 = vadd.f32 %v171, %v251
  %v253 = vpop.f32.mrf.mxu0
  %254 = vdwg.mxu0
  %s255 = scalar_lea.vmem %s0, 32
  %v256 = vld [vmem:[%s255] sm:$0xff]
  %v257 = vld [vmem:[%s255 + $0x8] sm:$0xff]
  %s258 = scalar_lea.vmem %s5, 32
  %v259 = vld [vmem:[%s258] sm:$0xff]
  %v260 = vld [vmem:[%s258 + $0x8] sm:$0xff]
  %v262 = vsel %vm92, %v256, 0
  %v265 = vsel %vm92, %v257, 0
  %267 = vmatprep.subr.mxu0 0.0
  %268 = vmatpush1.msra.mxu0 0.0
  %269 = vmatprep.subr.mxu0 0.0
  %270 = vmatpush1.msra.mxu0 0.0
  %271 = vmatprep.subr.mxu0 0.0
  %272 = vmatpush1.msra.mxu0 0.0
  %273 = vmatprep.subr.mxu0 0.0
  %274 = vmatpush1.msra.mxu0 0.0
  %275 = vmatprep.subr.mxu0 0.0
  %276 = vmatpush1.msra.mxu0 0.0
  %277 = vmatprep.subr.mxu0 0.0
  %278 = vmatpush1.msra.mxu0 0.0
  %279 = vmatprep.subr.mxu0 0.0
  %280 = vmatpush1.msra.mxu0 0.0
  %281 = vmatprep.subr.mxu0 0.0
  %282 = vmatpush1.msra.mxu0 0.0
  %283 = vmatprep.subr.mxu0 0.0
  %284 = vmatpush1.msra.mxu0 0.0
  %285 = vmatprep.subr.mxu0 0.0
  %286 = vmatpush1.msra.mxu0 0.0
  %287 = vmatprep.subr.mxu0 0.0
  %288 = vmatpush1.msra.mxu0 0.0
  %289 = vmatprep.subr.mxu0 0.0
  %290 = vmatpush1.msra.mxu0 0.0
  %291 = vmatprep.subr.mxu0 0.0
  %292 = vmatpush1.msra.mxu0 0.0
  %293 = vmatprep.subr.mxu0 0.0
  %294 = vmatpush1.msra.mxu0 0.0
  %295 = vmatprep.subr.mxu0 0.0
  %296 = vmatpush1.msra.mxu0 %v260
  %297 = vmatprep.subr.mxu0 0.0
  %298 = vmatpush1.msra.mxu0 %v259
  %299 = vmatprep.subr.mxu0 0.0
  %300 = vmatpush2.msra.mxu0 0.0
  %301 = vmatprep.subr.mxu0 0.0
  %302 = vmatpush2.msra.mxu0 0.0
  %303 = vmatprep.subr.mxu0 0.0
  %304 = vmatpush2.msra.mxu0 0.0
  %305 = vmatprep.subr.mxu0 0.0
  %306 = vmatpush2.msra.mxu0 0.0
  %307 = vmatprep.subr.mxu0 0.0
  %308 = vmatpush2.msra.mxu0 0.0
  %309 = vmatprep.subr.mxu0 0.0
  %310 = vmatpush2.msra.mxu0 0.0
  %311 = vmatprep.subr.mxu0 0.0
  %312 = vmatpush2.msra.mxu0 0.0
  %313 = vmatprep.subr.mxu0 0.0
  %314 = vmatpush2.msra.mxu0 0.0
  %315 = vmatprep.subr.mxu0 0.0
  %316 = vmatpush2.msra.mxu0 0.0
  %317 = vmatprep.subr.mxu0 0.0
  %318 = vmatpush2.msra.mxu0 0.0
  %319 = vmatprep.subr.mxu0 0.0
  %320 = vmatpush2.msra.mxu0 0.0
  %321 = vmatprep.subr.mxu0 0.0
  %322 = vmatpush2.msra.mxu0 0.0
  %323 = vmatprep.subr.mxu0 0.0
  %324 = vmatpush2.msra.mxu0 0.0
  %325 = vmatprep.subr.mxu0 0.0
  %326 = vmatpush2.msra.mxu0 0.0
  %327 = vmatprep.subr.mxu0 0.0
  %328 = vmatpush2.msra.mxu0 0.0
  %329 = vmatprep.subr.mxu0 0.0
  %330 = vmatpush2.msra.mxu0 0.0
  %331 = vmatprep.mubr.f32.mxu0 0.0
  %332 = vmatmul.mubr.f32.gmra.mxu0 %v262
  %v333 = vpop.f32.mrf.mxu0
  %v334 = vadd.f32 0.0, %v333
  %v335 = vpop.f32.mrf.mxu0
  %336 = vmatprep.mubr.f32.mxu0 0.0
  %337 = vmatmul.mubr.f32.gmra.mxu0 %v265
  %v338 = vpop.f32.mrf.mxu0
  %v339 = vadd.f32 0.0, %v338
  %v340 = vpop.f32.mrf.mxu0
  %341 = vdwg.mxu0
  %v342 = vadd.f32 %v247, %v334
  %v343 = vadd.f32 %v252, %v339
  %s344 = scalar_lea.vmem %s0, 48
  %v345 = vld [vmem:[%s344] sm:$0xff]
  %v346 = vld [vmem:[%s344 + $0x8] sm:$0xff]
  %s347 = scalar_lea.vmem %s5, 48
  %v348 = vld [vmem:[%s347] sm:$0xff]
  %v349 = vld [vmem:[%s347 + $0x8] sm:$0xff]
  %v351 = vsel %vm92, %v345, 0
  %v354 = vsel %vm92, %v346, 0
  %356 = vmatprep.subr.mxu0 0.0
  %357 = vmatpush1.msra.mxu0 0.0
  %358 = vmatprep.subr.mxu0 0.0
  %359 = vmatpush1.msra.mxu0 0.0
  %360 = vmatprep.subr.mxu0 0.0
  %361 = vmatpush1.msra.mxu0 0.0
  %362 = vmatprep.subr.mxu0 0.0
  %363 = vmatpush1.msra.mxu0 0.0
  %364 = vmatprep.subr.mxu0 0.0
  %365 = vmatpush1.msra.mxu0 0.0
  %366 = vmatprep.subr.mxu0 0.0
  %367 = vmatpush1.msra.mxu0 0.0
  %368 = vmatprep.subr.mxu0 0.0
  %369 = vmatpush1.msra.mxu0 0.0
  %370 = vmatprep.subr.mxu0 0.0
  %371 = vmatpush1.msra.mxu0 0.0
  %372 = vmatprep.subr.mxu0 0.0
  %373 = vmatpush1.msra.mxu0 0.0
  %374 = vmatprep.subr.mxu0 0.0
  %375 = vmatpush1.msra.mxu0 0.0
  %376 = vmatprep.subr.mxu0 0.0
  %377 = vmatpush1.msra.mxu0 0.0
  %378 = vmatprep.subr.mxu0 0.0
  %379 = vmatpush1.msra.mxu0 0.0
  %380 = vmatprep.subr.mxu0 0.0
  %381 = vmatpush1.msra.mxu0 0.0
  %382 = vmatprep.subr.mxu0 0.0
  %383 = vmatpush1.msra.mxu0 0.0
  %384 = vmatprep.subr.mxu0 0.0
  %385 = vmatpush1.msra.mxu0 %v349
  %386 = vmatprep.subr.mxu0 0.0
  %387 = vmatpush1.msra.mxu0 %v348
  %388 = vmatprep.subr.mxu0 0.0
  %389 = vmatpush2.msra.mxu0 0.0
  %390 = vmatprep.subr.mxu0 0.0
  %391 = vmatpush2.msra.mxu0 0.0
  %392 = vmatprep.subr.mxu0 0.0
  %393 = vmatpush2.msra.mxu0 0.0
  %394 = vmatprep.subr.mxu0 0.0
  %395 = vmatpush2.msra.mxu0 0.0
  %396 = vmatprep.subr.mxu0 0.0
  %397 = vmatpush2.msra.mxu0 0.0
  %398 = vmatprep.subr.mxu0 0.0
  %399 = vmatpush2.msra.mxu0 0.0
  %400 = vmatprep.subr.mxu0 0.0
  %401 = vmatpush2.msra.mxu0 0.0
  %402 = vmatprep.subr.mxu0 0.0
  %403 = vmatpush2.msra.mxu0 0.0
  %404 = vmatprep.subr.mxu0 0.0
  %405 = vmatpush2.msra.mxu0 0.0
  %406 = vmatprep.subr.mxu0 0.0
  %407 = vmatpush2.msra.mxu0 0.0
  %408 = vmatprep.subr.mxu0 0.0
  %409 = vmatpush2.msra.mxu0 0.0
  %410 = vmatprep.subr.mxu0 0.0
  %411 = vmatpush2.msra.mxu0 0.0
  %412 = vmatprep.subr.mxu0 0.0
  %413 = vmatpush2.msra.mxu0 0.0
  %414 = vmatprep.subr.mxu0 0.0
  %415 = vmatpush2.msra.mxu0 0.0
  %416 = vmatprep.subr.mxu0 0.0
  %417 = vmatpush2.msra.mxu0 0.0
  %418 = vmatprep.subr.mxu0 0.0
  %419 = vmatpush2.msra.mxu0 0.0
  %420 = vmatprep.mubr.f32.mxu0 0.0
  %421 = vmatmul.mubr.f32.gmra.mxu0 %v351
  %v422 = vpop.f32.mrf.mxu0
  %v423 = vadd.f32 0.0, %v422
  %v424 = vpop.f32.mrf.mxu0
  %425 = vmatprep.mubr.f32.mxu0 0.0
  %426 = vmatmul.mubr.f32.gmra.mxu0 %v354
  %v427 = vpop.f32.mrf.mxu0
  %v428 = vadd.f32 0.0, %v427
  %v429 = vpop.f32.mrf.mxu0
  %430 = vdwg.mxu0
  %v431 = vadd.f32 %v342, %v423
  %v432 = vadd.f32 %v343, %v428
  %v433 = vld [vmem:[%s1] sm:$0xf]
  %v436 = vunpack.c.l.s4 1966171168
  %v437 = vunpack.c.0.s8 %v436
  %v438 = vlaneseq
  %v439 = vshrl.u32 %v438, 7
  %v440 = vsub.s32 %v437, %v439
  %v441 = vrot.slane %v433, %v440
  %v443 = vadd.f32 %v79, %v441
  %v444 = vcombine.high %v441, %v441
  %v446 = vadd.f32 %v81, %v444
  %v447 = vmul.f32 %v443, 2.0
  %v448 = vrcp.pop 15.0
  %v449 = vmul.f32 %v447, %v448
  %v450 = vsub.f32 %v449, 1.0
  %v451 = vmul.f32 %v446, 2.0
  %v452 = vmul.f32 %v451, %v448
  %v453 = vsub.f32 %v452, 1.0
  %v454 = vadd.f32 %v450, 1.0
  %v455 = vmul.f32 %v454, 16.0
  %v456 = vsub.f32 %v455, 1.0
  %v457 = vmul.f32 %v456, 0.5
  %v458 = vadd.f32 %v453, 1.0
  %v459 = vmul.f32 %v458, 16.0
  %v460 = vsub.f32 %v459, 1.0
  %v461 = vmul.f32 %v460, 0.5
  %v462 = vfloor.f32 %v457
  %v463 = vfloor.f32 %v461
  %v464 = vadd.f32 %v462, 1.0
  %v465 = vadd.f32 %v463, 1.0
  %v466 = vsub.f32 %v457, %v462
  %v467 = vsub.f32 1.0, %v466
  %v468 = vsub.f32 %v461, %v463
  %v469 = vsub.f32 1.0, %v468
  %vm470 = vcmp.ge.f32.partialorder %v462, 0.0
  %vm471 = vcmp.le.f32.partialorder %v462, 15.0
  %vm472 = vmand %vm470, %vm471
  %v473 = vsel %vm472, 1, 0
  %v474 = vcvt.s32.f32 %v473
  %vm475 = vcmp.ge.f32.partialorder %v464, 0.0
  %vm476 = vcmp.le.f32.partialorder %v464, 15.0
  %vm477 = vmand %vm475, %vm476
  %v478 = vsel %vm477, 1, 0
  %v479 = vcvt.s32.f32 %v478
  %v480 = vmax.f32 %v462, 0.0
  %v481 = vmin.f32 %v480, 15.0
  %v482 = vcvt.f32.s32.to.zero.pseudo %v481
  %v483 = vmax.f32 %v464, 0.0
  %v484 = vmin.f32 %v483, 15.0
  %v485 = vcvt.f32.s32.to.zero.pseudo %v484
  %v486 = vmul.f32 %v467, %v474
  %v487 = vmul.f32 %v466, %v479
  %vm488 = vcmp.ge.f32.partialorder %v463, 0.0
  %vm489 = vcmp.le.f32.partialorder %v463, 15.0
  %vm490 = vmand %vm488, %vm489
  %v491 = vsel %vm490, 1, 0
  %v492 = vcvt.s32.f32 %v491
  %vm493 = vcmp.ge.f32.partialorder %v465, 0.0
  %vm494 = vcmp.le.f32.partialorder %v465, 15.0
  %vm495 = vmand %vm493, %vm494
  %v496 = vsel %vm495, 1, 0
  %v497 = vcvt.s32.f32 %v496
  %v498 = vmax.f32 %v463, 0.0
  %v499 = vmin.f32 %v498, 15.0
  %v500 = vcvt.f32.s32.to.zero.pseudo %v499
  %v501 = vmax.f32 %v465, 0.0
  %v502 = vmin.f32 %v501, 15.0
  %v503 = vcvt.f32.s32.to.zero.pseudo %v502
  %v504 = vmul.f32 %v469, %v492
  %v505 = vmul.f32 %v468, %v497
  %v506 = vlaneseq
  %v507 = vshrl.u32 %v506, 7
  %v508 = vadd.s32 %v507, 8
  %v509 = vlaneseq
  %v510 = vshrl.u32 %v509, 7
  %v511 = vsub.s32 0, %v510
  %v512 = vrot.slane %v482, %v511
  %v513 = vlaneseq
  %v514 = vshrl.u32 %v513, 7
  %v515 = vsub.s32 1, %v514
  %v516 = vrot.slane %v482, %v515
  %vm517 = vcmp.eq.s32.totalorder %v507, %v512
  %vm518 = vcmp.eq.s32.totalorder %v507, %v516
  %vm519 = vcmp.eq.s32.totalorder %v508, %v512
  %vm520 = vcmp.eq.s32.totalorder %v508, %v516
  %v522 = vlaneseq
  %v523 = vshrl.u32 %v522, 7
  %v524 = vsub.s32 0, %v523
  %v525 = vrot.slane %v486, %v524
  %v526 = vlaneseq
  %v527 = vshrl.u32 %v526, 7
  %v528 = vsub.s32 1, %v527
  %v529 = vrot.slane %v486, %v528
  %v532 = vsel %vm517, %v525, 0.0
  %v533 = vsel %vm518, %v529, 0.0
  %v534 = vsel %vm519, %v525, 0.0
  %v535 = vsel %vm520, %v529, 0.0
  %v536 = vlaneseq
  %v537 = vshrl.u32 %v536, 7
  %v538 = vsub.s32 0, %v537
  %v539 = vrot.slane %v485, %v538
  %v540 = vlaneseq
  %v541 = vshrl.u32 %v540, 7
  %v542 = vsub.s32 1, %v541
  %v543 = vrot.slane %v485, %v542
  %vm544 = vcmp.eq.s32.totalorder %v507, %v539
  %vm545 = vcmp.eq.s32.totalorder %v507, %v543
  %vm546 = vcmp.eq.s32.totalorder %v508, %v539
  %vm547 = vcmp.eq.s32.totalorder %v508, %v543
  %v549 = vlaneseq
  %v550 = vshrl.u32 %v549, 7
  %v551 = vsub.s32 0, %v550
  %v552 = vrot.slane %v487, %v551
  %v553 = vlaneseq
  %v554 = vshrl.u32 %v553, 7
  %v555 = vsub.s32 1, %v554
  %v556 = vrot.slane %v487, %v555
  %v559 = vsel %vm544, %v552, 0.0
  %v560 = vsel %vm545, %v556, 0.0
  %v561 = vsel %vm546, %v552, 0.0
  %v562 = vsel %vm547, %v556, 0.0
  %v563 = vadd.f32 %v532, %v559
  %v564 = vadd.f32 %v533, %v560
  %v565 = vadd.f32 %v534, %v561
  %v566 = vadd.f32 %v535, %v562
  %v567 = vlaneseq
  %v568 = vshrl.u32 %v567, 7
  %v569 = vsub.s32 0, %v568
  %v570 = vrot.slane %v500, %v569
  %v571 = vlaneseq
  %v572 = vshrl.u32 %v571, 7
  %v573 = vsub.s32 1, %v572
  %v574 = vrot.slane %v500, %v573
  %vm575 = vcmp.eq.s32.totalorder %v507, %v570
  %vm576 = vcmp.eq.s32.totalorder %v507, %v574
  %vm577 = vcmp.eq.s32.totalorder %v508, %v570
  %vm578 = vcmp.eq.s32.totalorder %v508, %v574
  %v580 = vlaneseq
  %v581 = vshrl.u32 %v580, 7
  %v582 = vsub.s32 0, %v581
  %v583 = vrot.slane %v504, %v582
  %v584 = vlaneseq
  %v585 = vshrl.u32 %v584, 7
  %v586 = vsub.s32 1, %v585
  %v587 = vrot.slane %v504, %v586
  %v590 = vsel %vm575, %v583, 0.0
  %v591 = vsel %vm576, %v587, 0.0
  %v592 = vsel %vm577, %v583, 0.0
  %v593 = vsel %vm578, %v587, 0.0
  %v594 = vlaneseq
  %v595 = vshrl.u32 %v594, 7
  %v596 = vsub.s32 0, %v595
  %v597 = vrot.slane %v503, %v596
  %v598 = vlaneseq
  %v599 = vshrl.u32 %v598, 7
  %v600 = vsub.s32 1, %v599
  %v601 = vrot.slane %v503, %v600
  %vm602 = vcmp.eq.s32.totalorder %v507, %v597
  %vm603 = vcmp.eq.s32.totalorder %v507, %v601
  %vm604 = vcmp.eq.s32.totalorder %v508, %v597
  %vm605 = vcmp.eq.s32.totalorder %v508, %v601
  %v607 = vlaneseq
  %v608 = vshrl.u32 %v607, 7
  %v609 = vsub.s32 0, %v608
  %v610 = vrot.slane %v505, %v609
  %v611 = vlaneseq
  %v612 = vshrl.u32 %v611, 7
  %v613 = vsub.s32 1, %v612
  %v614 = vrot.slane %v505, %v613
  %v617 = vsel %vm602, %v610, 0.0
  %v618 = vsel %vm603, %v614, 0.0
  %v619 = vsel %vm604, %v610, 0.0
  %v620 = vsel %vm605, %v614, 0.0
  %v621 = vadd.f32 %v590, %v617
  %v622 = vadd.f32 %v591, %v618
  %v623 = vadd.f32 %v592, %v619
  %v624 = vadd.f32 %v593, %v620
  %v625 = vadd.f32 %v563, %v565
  %v626 = vrot.slane %v625, 4
  %v627 = vadd.f32 %v625, %v626
  %v628 = vrot.slane %v627, 2
  %v629 = vadd.f32 %v627, %v628
  %v630 = vrot.slane %v629, 1
  %v631 = vadd.f32 %v629, %v630
  %v632 = vadd.f32 %v564, %v566
  %v633 = vrot.slane %v632, 4
  %v634 = vadd.f32 %v632, %v633
  %v635 = vrot.slane %v634, 2
  %v636 = vadd.f32 %v634, %v635
  %v637 = vrot.slane %v636, 1
  %v638 = vadd.f32 %v636, %v637
  %v639 = vadd.f32 %v621, %v623
  %v640 = vrot.slane %v639, 4
  %v641 = vadd.f32 %v639, %v640
  %v642 = vrot.slane %v641, 2
  %v643 = vadd.f32 %v641, %v642
  %v644 = vrot.slane %v643, 1
  %v645 = vadd.f32 %v643, %v644
  %v646 = vadd.f32 %v622, %v624
  %v647 = vrot.slane %v646, 4
  %v648 = vadd.f32 %v646, %v647
  %v649 = vrot.slane %v648, 2
  %v650 = vadd.f32 %v648, %v649
  %v651 = vrot.slane %v650, 1
  %v652 = vadd.f32 %v650, %v651
  %v653 = vmul.f32 %v631, %v645
  %v654 = vmul.f32 %v638, %v652
  %vm655 = vcmp.ge.f32.partialorder %v653, 0.9999
  %vm656 = vcmp.ge.f32.partialorder %v654, 0.9999
  %v657 = vsel %vm655, 1, 0
  %v658 = vsel %vm656, 1, 0
  %v659 = vcvt.s32.f32 %v657
  %v660 = vcvt.s32.f32 %v658
  %s661 = scalar_lea.vmem %s0, 64
  %v662 = vld [vmem:[%s661] sm:$0xff]
  %v663 = vld [vmem:[%s661 + $0x8] sm:$0xff]
  %v665 = vsel %vm92, %v662, 0
  %v668 = vsel %vm92, %v663, 0
  %670 = vmatprep.subr.mxu0 0.0
  %671 = vmatpush1.msra.mxu0 0.0
  %672 = vmatprep.subr.mxu0 0.0
  %673 = vmatpush1.msra.mxu0 0.0
  %674 = vmatprep.subr.mxu0 0.0
  %675 = vmatpush1.msra.mxu0 0.0
  %676 = vmatprep.subr.mxu0 0.0
  %677 = vmatpush1.msra.mxu0 0.0
  %678 = vmatprep.subr.mxu0 0.0
  %679 = vmatpush1.msra.mxu0 0.0
  %680 = vmatprep.subr.mxu0 0.0
  %681 = vmatpush1.msra.mxu0 0.0
  %682 = vmatprep.subr.mxu0 0.0
  %683 = vmatpush1.msra.mxu0 0.0
  %684 = vmatprep.subr.mxu0 0.0
  %685 = vmatpush1.msra.mxu0 0.0
  %686 = vmatprep.subr.mxu0 0.0
  %687 = vmatpush1.msra.mxu0 0.0
  %688 = vmatprep.subr.mxu0 0.0
  %689 = vmatpush1.msra.mxu0 0.0
  %690 = vmatprep.subr.mxu0 0.0
  %691 = vmatpush1.msra.mxu0 0.0
  %692 = vmatprep.subr.mxu0 0.0
  %693 = vmatpush1.msra.mxu0 0.0
  %694 = vmatprep.subr.mxu0 0.0
  %695 = vmatpush1.msra.mxu0 0.0
  %696 = vmatprep.subr.mxu0 0.0
  %697 = vmatpush1.msra.mxu0 0.0
  %698 = vmatprep.subr.mxu0 %v566
  %699 = vmatpush1.msra.mxu0 %v565
  %700 = vmatprep.subr.mxu0 %v564
  %701 = vmatpush1.msra.mxu0 %v563
  %702 = vmatprep.subr.mxu0 0.0
  %703 = vmatpush2.msra.mxu0 0.0
  %704 = vmatprep.subr.mxu0 0.0
  %705 = vmatpush2.msra.mxu0 0.0
  %706 = vmatprep.subr.mxu0 0.0
  %707 = vmatpush2.msra.mxu0 0.0
  %708 = vmatprep.subr.mxu0 0.0
  %709 = vmatpush2.msra.mxu0 0.0
  %710 = vmatprep.subr.mxu0 0.0
  %711 = vmatpush2.msra.mxu0 0.0
  %712 = vmatprep.subr.mxu0 0.0
  %713 = vmatpush2.msra.mxu0 0.0
  %714 = vmatprep.subr.mxu0 0.0
  %715 = vmatpush2.msra.mxu0 0.0
  %716 = vmatprep.subr.mxu0 0.0
  %717 = vmatpush2.msra.mxu0 0.0
  %718 = vmatprep.subr.mxu0 0.0
  %719 = vmatpush2.msra.mxu0 0.0
  %720 = vmatprep.subr.mxu0 0.0
  %721 = vmatpush2.msra.mxu0 0.0
  %722 = vmatprep.subr.mxu0 0.0
  %723 = vmatpush2.msra.mxu0 0.0
  %724 = vmatprep.subr.mxu0 0.0
  %725 = vmatpush2.msra.mxu0 0.0
  %726 = vmatprep.subr.mxu0 0.0
  %727 = vmatpush2.msra.mxu0 0.0
  %728 = vmatprep.subr.mxu0 0.0
  %729 = vmatpush2.msra.mxu0 0.0
  %730 = vmatprep.subr.mxu0 0.0
  %731 = vmatpush2.msra.mxu0 0.0
  %732 = vmatprep.subr.mxu0 0.0
  %733 = vmatpush2.msra.mxu0 0.0
  %734 = vmatprep.mubr.f32.mxu0 0.0
  %735 = vmatmul.mubr.f32.gmra.mxu0 %v665
  %v736 = vpop.f32.mrf.mxu0
  %v737 = vadd.f32 0.0, %v736
  %v738 = vpop.f32.mrf.mxu0
  %v739 = vadd.f32 0.0, %v738
  %740 = vmatprep.mubr.f32.mxu0 0.0
  %741 = vmatmul.mubr.f32.gmra.mxu0 %v668
  %v742 = vpop.f32.mrf.mxu0
  %v743 = vadd.f32 0.0, %v742
  %v744 = vpop.f32.mrf.mxu0
  %v745 = vadd.f32 0.0, %v744
  %746 = vdwg.mxu0
  %v747 = vmul.f32 %v621, %v737
  %v748 = vmul.f32 %v622, %v739
  %v749 = vmul.f32 %v623, %v743
  %v750 = vmul.f32 %v624, %v745
  %v751 = vadd.f32 %v747, %v749
  %v752 = vrot.slane %v751, 4
  %v753 = vadd.f32 %v751, %v752
  %v754 = vrot.slane %v753, 2
  %v755 = vadd.f32 %v753, %v754
  %v756 = vrot.slane %v755, 1
  %v757 = vadd.f32 %v755, %v756
  %v758 = vadd.f32 %v748, %v750
  %v759 = vrot.slane %v758, 4
  %v760 = vadd.f32 %v758, %v759
  %v761 = vrot.slane %v760, 2
  %v762 = vadd.f32 %v760, %v761
  %v763 = vrot.slane %v762, 1
  %v764 = vadd.f32 %v762, %v763
  %v765 = vmul.f32 %v757, %v659
  %v766 = vmul.f32 %v764, %v660
  %v767 = vmul.f32 %v75, %v765
  %v768 = vmul.f32 %v76, %v766
  %v769 = vmul.f32 %v77, %v765
  %v770 = vmul.f32 %v78, %v766
  %v771 = vld [vmem:[%s4] sm:$0xff]
  %v772 = vld [vmem:[%s4 + $0x8] sm:$0xff]
  %v773 = vld [vmem:[%s4 + $0x10] sm:$0xff]
  %v774 = vld [vmem:[%s4 + $0x18] sm:$0xff]
  %v775 = vld [vmem:[%s4 + $0x20] sm:$0xff]
  %v776 = vld [vmem:[%s4 + $0x28] sm:$0xff]
  %v777 = vld [vmem:[%s4 + $0x30] sm:$0xff]
  %v778 = vld [vmem:[%s4 + $0x38] sm:$0xff]
  %v779 = vld [vmem:[%s4 + $0x40] sm:$0xff]
  %v780 = vld [vmem:[%s4 + $0x48] sm:$0xff]
  %v781 = vld [vmem:[%s4 + $0x50] sm:$0xff]
  %v782 = vld [vmem:[%s4 + $0x58] sm:$0xff]
  %v783 = vld [vmem:[%s4 + $0x60] sm:$0xff]
  %v784 = vld [vmem:[%s4 + $0x68] sm:$0xff]
  %v785 = vld [vmem:[%s4 + $0x70] sm:$0xff]
  %v786 = vld [vmem:[%s4 + $0x78] sm:$0xff]
  %v787 = vld [vmem:[%s4 + $0x80] sm:$0xff]
  %v788 = vld [vmem:[%s4 + $0x88] sm:$0xff]
  %v789 = vld [vmem:[%s4 + $0x90] sm:$0xff]
  %v790 = vld [vmem:[%s4 + $0x98] sm:$0xff]
  %v791 = vld [vmem:[%s4 + $0xa0] sm:$0xff]
  %v792 = vld [vmem:[%s4 + $0xa8] sm:$0xff]
  %v793 = vld [vmem:[%s4 + $0xb0] sm:$0xff]
  %v794 = vld [vmem:[%s4 + $0xb8] sm:$0xff]
  %v795 = vld [vmem:[%s4 + $0xc0] sm:$0xff]
  %v796 = vld [vmem:[%s4 + $0xc8] sm:$0xff]
  %v797 = vld [vmem:[%s4 + $0xd0] sm:$0xff]
  %v798 = vld [vmem:[%s4 + $0xd8] sm:$0xff]
  %v799 = vld [vmem:[%s4 + $0xe0] sm:$0xff]
  %v800 = vld [vmem:[%s4 + $0xe8] sm:$0xff]
  %v801 = vld [vmem:[%s4 + $0xf0] sm:$0xff]
  %v802 = vld [vmem:[%s4 + $0xf8] sm:$0xff]
  %s803 = scalar_lea.vmem %s0, 80
  %v804 = vld [vmem:[%s803] sm:$0xff]
  %v805 = vld [vmem:[%s803 + $0x8] sm:$0xff]
  %v807 = vsel %vm92, %v804, 0
  %v810 = vsel %vm92, %v805, 0
  %812 = vmatprep.subr.mxu0 0.0
  %813 = vmatpush1.msra.mxu0 0.0
  %814 = vmatprep.subr.mxu0 0.0
  %815 = vmatpush1.msra.mxu0 0.0
  %816 = vmatprep.subr.mxu0 0.0
  %817 = vmatpush1.msra.mxu0 0.0
  %818 = vmatprep.subr.mxu0 0.0
  %819 = vmatpush1.msra.mxu0 0.0
  %820 = vmatprep.subr.mxu0 0.0
  %821 = vmatpush1.msra.mxu0 0.0
  %822 = vmatprep.subr.mxu0 0.0
  %823 = vmatpush1.msra.mxu0 0.0
  %824 = vmatprep.subr.mxu0 0.0
  %825 = vmatpush1.msra.mxu0 0.0
  %826 = vmatprep.subr.mxu0 0.0
  %827 = vmatpush1.msra.mxu0 0.0
  %828 = vmatprep.subr.mxu0 0.0
  %829 = vmatpush1.msra.mxu0 0.0
  %830 = vmatprep.subr.mxu0 0.0
  %831 = vmatpush1.msra.mxu0 0.0
  %832 = vmatprep.subr.mxu0 0.0
  %833 = vmatpush1.msra.mxu0 0.0
  %834 = vmatprep.subr.mxu0 0.0
  %835 = vmatpush1.msra.mxu0 0.0
  %836 = vmatprep.subr.mxu0 0.0
  %837 = vmatpush1.msra.mxu0 0.0
  %838 = vmatprep.subr.mxu0 0.0
  %839 = vmatpush1.msra.mxu0 0.0
  %840 = vmatprep.subr.mxu0 %v566
  %841 = vmatpush1.msra.mxu0 %v565
  %842 = vmatprep.subr.mxu0 %v564
  %843 = vmatpush1.msra.mxu0 %v563
  %844 = vmatprep.subr.mxu0 0.0
  %845 = vmatpush2.msra.mxu0 0.0
  %846 = vmatprep.subr.mxu0 0.0
  %847 = vmatpush2.msra.mxu0 0.0
  %848 = vmatprep.subr.mxu0 0.0
  %849 = vmatpush2.msra.mxu0 0.0
  %850 = vmatprep.subr.mxu0 0.0
  %851 = vmatpush2.msra.mxu0 0.0
  %852 = vmatprep.subr.mxu0 0.0
  %853 = vmatpush2.msra.mxu0 0.0
  %854 = vmatprep.subr.mxu0 0.0
  %855 = vmatpush2.msra.mxu0 0.0
  %856 = vmatprep.subr.mxu0 0.0
  %857 = vmatpush2.msra.mxu0 0.0
  %858 = vmatprep.subr.mxu0 0.0
  %859 = vmatpush2.msra.mxu0 0.0
  %860 = vmatprep.subr.mxu0 0.0
  %861 = vmatpush2.msra.mxu0 0.0
  %862 = vmatprep.subr.mxu0 0.0
  %863 = vmatpush2.msra.mxu0 0.0
  %864 = vmatprep.subr.mxu0 0.0
  %865 = vmatpush2.msra.mxu0 0.0
  %866 = vmatprep.subr.mxu0 0.0
  %867 = vmatpush2.msra.mxu0 0.0
  %868 = vmatprep.subr.mxu0 0.0
  %869 = vmatpush2.msra.mxu0 0.0
  %870 = vmatprep.subr.mxu0 0.0
  %871 = vmatpush2.msra.mxu0 0.0
  %872 = vmatprep.subr.mxu0 0.0
  %873 = vmatpush2.msra.mxu0 0.0
  %874 = vmatprep.subr.mxu0 0.0
  %875 = vmatpush2.msra.mxu0 0.0
  %876 = vmatprep.mubr.f32.mxu0 0.0
  %877 = vmatmul.mubr.f32.gmra.mxu0 %v807
  %v878 = vpop.f32.mrf.mxu0
  %v879 = vadd.f32 0.0, %v878
  %v880 = vpop.f32.mrf.mxu0
  %v881 = vadd.f32 0.0, %v880
  %882 = vmatprep.mubr.f32.mxu0 0.0
  %883 = vmatmul.mubr.f32.gmra.mxu0 %v810
  %v884 = vpop.f32.mrf.mxu0
  %v885 = vadd.f32 0.0, %v884
  %v886 = vpop.f32.mrf.mxu0
  %v887 = vadd.f32 0.0, %v886
  %888 = vdwg.mxu0
  %v889 = vmul.f32 %v621, %v879
  %v890 = vmul.f32 %v622, %v881
  %v891 = vmul.f32 %v623, %v885
  %v892 = vmul.f32 %v624, %v887
  %v893 = vadd.f32 %v889, %v891
  %v894 = vrot.slane %v893, 4
  %v895 = vadd.f32 %v893, %v894
  %v896 = vrot.slane %v895, 2
  %v897 = vadd.f32 %v895, %v896
  %v898 = vrot.slane %v897, 1
  %v899 = vadd.f32 %v897, %v898
  %v900 = vadd.f32 %v890, %v892
  %v901 = vrot.slane %v900, 4
  %v902 = vadd.f32 %v900, %v901
  %v903 = vrot.slane %v902, 2
  %v904 = vadd.f32 %v902, %v903
  %v905 = vrot.slane %v904, 1
  %v906 = vadd.f32 %v904, %v905
  %v907 = vmul.f32 %v899, %v659
  %v908 = vmul.f32 %v906, %v660
  %v909 = vmul.f32 %v75, %v907
  %v910 = vmul.f32 %v76, %v908
  %v911 = vmul.f32 %v77, %v907
  %v912 = vmul.f32 %v78, %v908
  %s913 = scalar_lea.vmem %s4, 256
  %v914 = vld [vmem:[%s913] sm:$0xff]
  %v915 = vld [vmem:[%s913 + $0x8] sm:$0xff]
  %v916 = vld [vmem:[%s913 + $0x10] sm:$0xff]
  %v917 = vld [vmem:[%s913 + $0x18] sm:$0xff]
  %v918 = vld [vmem:[%s913 + $0x20] sm:$0xff]
  %v919 = vld [vmem:[%s913 + $0x28] sm:$0xff]
  %v920 = vld [vmem:[%s913 + $0x30] sm:$0xff]
  %v921 = vld [vmem:[%s913 + $0x38] sm:$0xff]
  %v922 = vld [vmem:[%s913 + $0x40] sm:$0xff]
  %v923 = vld [vmem:[%s913 + $0x48] sm:$0xff]
  %v924 = vld [vmem:[%s913 + $0x50] sm:$0xff]
  %v925 = vld [vmem:[%s913 + $0x58] sm:$0xff]
  %v926 = vld [vmem:[%s913 + $0x60] sm:$0xff]
  %v927 = vld [vmem:[%s913 + $0x68] sm:$0xff]
  %v928 = vld [vmem:[%s913 + $0x70] sm:$0xff]
  %v929 = vld [vmem:[%s913 + $0x78] sm:$0xff]
  %v930 = vld [vmem:[%s913 + $0x80] sm:$0xff]
  %v931 = vld [vmem:[%s913 + $0x88] sm:$0xff]
  %v932 = vld [vmem:[%s913 + $0x90] sm:$0xff]
  %v933 = vld [vmem:[%s913 + $0x98] sm:$0xff]
  %v934 = vld [vmem:[%s913 + $0xa0] sm:$0xff]
  %v935 = vld [vmem:[%s913 + $0xa8] sm:$0xff]
  %v936 = vld [vmem:[%s913 + $0xb0] sm:$0xff]
  %v937 = vld [vmem:[%s913 + $0xb8] sm:$0xff]
  %v938 = vld [vmem:[%s913 + $0xc0] sm:$0xff]
  %v939 = vld [vmem:[%s913 + $0xc8] sm:$0xff]
  %v940 = vld [vmem:[%s913 + $0xd0] sm:$0xff]
  %v941 = vld [vmem:[%s913 + $0xd8] sm:$0xff]
  %v942 = vld [vmem:[%s913 + $0xe0] sm:$0xff]
  %v943 = vld [vmem:[%s913 + $0xe8] sm:$0xff]
  %v944 = vld [vmem:[%s913 + $0xf0] sm:$0xff]
  %v945 = vld [vmem:[%s913 + $0xf8] sm:$0xff]
  %946 = vmatprep.subr.mxu0 0.0
  %947 = vmatpush1.msra.mxu0 %v929
  %948 = vmatprep.subr.mxu0 0.0
  %949 = vmatpush1.msra.mxu0 %v928
  %950 = vmatprep.subr.mxu0 0.0
  %951 = vmatpush1.msra.mxu0 %v927
  %952 = vmatprep.subr.mxu0 0.0
  %953 = vmatpush1.msra.mxu0 %v926
  %954 = vmatprep.subr.mxu0 0.0
  %955 = vmatpush1.msra.mxu0 %v925
  %956 = vmatprep.subr.mxu0 0.0
  %957 = vmatpush1.msra.mxu0 %v924
  %958 = vmatprep.subr.mxu0 0.0
  %959 = vmatpush1.msra.mxu0 %v923
  %960 = vmatprep.subr.mxu0 0.0
  %961 = vmatpush1.msra.mxu0 %v922
  %962 = vmatprep.subr.mxu0 0.0
  %963 = vmatpush1.msra.mxu0 %v921
  %964 = vmatprep.subr.mxu0 0.0
  %965 = vmatpush1.msra.mxu0 %v920
  %966 = vmatprep.subr.mxu0 0.0
  %967 = vmatpush1.msra.mxu0 %v919
  %968 = vmatprep.subr.mxu0 0.0
  %969 = vmatpush1.msra.mxu0 %v918
  %970 = vmatprep.subr.mxu0 0.0
  %971 = vmatpush1.msra.mxu0 %v917
  %972 = vmatprep.subr.mxu0 0.0
  %973 = vmatpush1.msra.mxu0 %v916
  %974 = vmatprep.subr.mxu0 0.0
  %975 = vmatpush1.msra.mxu0 %v915
  %976 = vmatprep.subr.mxu0 0.0
  %977 = vmatpush1.msra.mxu0 %v914
  %978 = vmatprep.subr.mxu0 0.0
  %979 = vmatpush2.msra.mxu0 %v945
  %980 = vmatprep.subr.mxu0 0.0
  %981 = vmatpush2.msra.mxu0 %v944
  %982 = vmatprep.subr.mxu0 0.0
  %983 = vmatpush2.msra.mxu0 %v943
  %984 = vmatprep.subr.mxu0 0.0
  %985 = vmatpush2.msra.mxu0 %v942
  %986 = vmatprep.subr.mxu0 0.0
  %987 = vmatpush2.msra.mxu0 %v941
  %988 = vmatprep.subr.mxu0 0.0
  %989 = vmatpush2.msra.mxu0 %v940
  %990 = vmatprep.subr.mxu0 0.0
  %991 = vmatpush2.msra.mxu0 %v939
  %992 = vmatprep.subr.mxu0 0.0
  %993 = vmatpush2.msra.mxu0 %v938
  %994 = vmatprep.subr.mxu0 0.0
  %995 = vmatpush2.msra.mxu0 %v937
  %996 = vmatprep.subr.mxu0 0.0
  %997 = vmatpush2.msra.mxu0 %v936
  %998 = vmatprep.subr.mxu0 0.0
  %999 = vmatpush2.msra.mxu0 %v935
  %1000 = vmatprep.subr.mxu0 0.0
  %1001 = vmatpush2.msra.mxu0 %v934
  %1002 = vmatprep.subr.mxu0 0.0
  %1003 = vmatpush2.msra.mxu0 %v933
  %1004 = vmatprep.subr.mxu0 0.0
  %1005 = vmatpush2.msra.mxu0 %v932
  %1006 = vmatprep.subr.mxu0 0.0
  %1007 = vmatpush2.msra.mxu0 %v931
  %1008 = vmatprep.subr.mxu0 0.0
  %1009 = vmatpush2.msra.mxu0 %v930
  %1010 = vmatprep.mubr.f32.mxu0 %v910
  %1011 = vmatmul.mubr.f32.gmra.mxu0 %v909
  %v1012 = vpop.f32.mrf.mxu0
  %v1013 = vadd.f32 0.0, %v1012
  %v1014 = vpop.f32.mrf.mxu0
  %1015 = vmatprep.mubr.f32.mxu0 %v912
  %1016 = vmatmul.mubr.f32.gmra.mxu0 %v911
  %v1017 = vpop.f32.mrf.mxu0
  %v1018 = vadd.f32 0.0, %v1017
  %v1019 = vpop.f32.mrf.mxu0
  %1020 = vdwg.mxu0
  %1021 = vmatprep.subr.mxu0 0.0
  %1022 = vmatpush1.msra.mxu0 %v786
  %1023 = vmatprep.subr.mxu0 0.0
  %1024 = vmatpush1.msra.mxu0 %v785
  %1025 = vmatprep.subr.mxu0 0.0
  %1026 = vmatpush1.msra.mxu0 %v784
  %1027 = vmatprep.subr.mxu0 0.0
  %1028 = vmatpush1.msra.mxu0 %v783
  %1029 = vmatprep.subr.mxu0 0.0
  %1030 = vmatpush1.msra.mxu0 %v782
  %1031 = vmatprep.subr.mxu0 0.0
  %1032 = vmatpush1.msra.mxu0 %v781
  %1033 = vmatprep.subr.mxu0 0.0
  %1034 = vmatpush1.msra.mxu0 %v780
  %1035 = vmatprep.subr.mxu0 0.0
  %1036 = vmatpush1.msra.mxu0 %v779
  %1037 = vmatprep.subr.mxu0 0.0
  %1038 = vmatpush1.msra.mxu0 %v778
  %1039 = vmatprep.subr.mxu0 0.0
  %1040 = vmatpush1.msra.mxu0 %v777
  %1041 = vmatprep.subr.mxu0 0.0
  %1042 = vmatpush1.msra.mxu0 %v776
  %1043 = vmatprep.subr.mxu0 0.0
  %1044 = vmatpush1.msra.mxu0 %v775
  %1045 = vmatprep.subr.mxu0 0.0
  %1046 = vmatpush1.msra.mxu0 %v774
  %1047 = vmatprep.subr.mxu0 0.0
  %1048 = vmatpush1.msra.mxu0 %v773
  %1049 = vmatprep.subr.mxu0 0.0
  %1050 = vmatpush1.msra.mxu0 %v772
  %1051 = vmatprep.subr.mxu0 0.0
  %1052 = vmatpush1.msra.mxu0 %v771
  %1053 = vmatprep.subr.mxu0 0.0
  %1054 = vmatpush2.msra.mxu0 %v802
  %1055 = vmatprep.subr.mxu0 0.0
  %1056 = vmatpush2.msra.mxu0 %v801
  %1057 = vmatprep.subr.mxu0 0.0
  %1058 = vmatpush2.msra.mxu0 %v800
  %1059 = vmatprep.subr.mxu0 0.0
  %1060 = vmatpush2.msra.mxu0 %v799
  %1061 = vmatprep.subr.mxu0 0.0
  %1062 = vmatpush2.msra.mxu0 %v798
  %1063 = vmatprep.subr.mxu0 0.0
  %1064 = vmatpush2.msra.mxu0 %v797
  %1065 = vmatprep.subr.mxu0 0.0
  %1066 = vmatpush2.msra.mxu0 %v796
  %1067 = vmatprep.subr.mxu0 0.0
  %1068 = vmatpush2.msra.mxu0 %v795
  %1069 = vmatprep.subr.mxu0 0.0
  %1070 = vmatpush2.msra.mxu0 %v794
  %1071 = vmatprep.subr.mxu0 0.0
  %1072 = vmatpush2.msra.mxu0 %v793
  %1073 = vmatprep.subr.mxu0 0.0
  %1074 = vmatpush2.msra.mxu0 %v792
  %1075 = vmatprep.subr.mxu0 0.0
  %1076 = vmatpush2.msra.mxu0 %v791
  %1077 = vmatprep.subr.mxu0 0.0
  %1078 = vmatpush2.msra.mxu0 %v790
  %1079 = vmatprep.subr.mxu0 0.0
  %1080 = vmatpush2.msra.mxu0 %v789
  %1081 = vmatprep.subr.mxu0 0.0
  %1082 = vmatpush2.msra.mxu0 %v788
  %1083 = vmatprep.subr.mxu0 0.0
  %1084 = vmatpush2.msra.mxu0 %v787
  %1085 = vmatprep.mubr.f32.mxu0 %v768
  %1086 = vmatmul.mubr.f32.gmra.mxu0 %v767
  %v1087 = vpop.f32.mrf.mxu0
  %v1088 = vadd.f32 %v1013, %v1087
  %v1089 = vpop.f32.mrf.mxu0
  %1090 = vmatprep.mubr.f32.mxu0 %v770
  %1091 = vmatmul.mubr.f32.gmra.mxu0 %v769
  %v1092 = vpop.f32.mrf.mxu0
  %v1093 = vadd.f32 %v1018, %v1092
  %v1094 = vpop.f32.mrf.mxu0
  %1095 = vdwg.mxu0
  %s1096 = scalar_lea.vmem %s0, 96
  %v1097 = vld [vmem:[%s1096] sm:$0xff]
  %v1098 = vld [vmem:[%s1096 + $0x8] sm:$0xff]
  %v1100 = vsel %vm92, %v1097, 0
  %v1103 = vsel %vm92, %v1098, 0
  %1105 = vmatprep.subr.mxu0 0.0
  %1106 = vmatpush1.msra.mxu0 0.0
  %1107 = vmatprep.subr.mxu0 0.0
  %1108 = vmatpush1.msra.mxu0 0.0
  %1109 = vmatprep.subr.mxu0 0.0
  %1110 = vmatpush1.msra.mxu0 0.0
  %1111 = vmatprep.subr.mxu0 0.0
  %1112 = vmatpush1.msra.mxu0 0.0
  %1113 = vmatprep.subr.mxu0 0.0
  %1114 = vmatpush1.msra.mxu0 0.0
  %1115 = vmatprep.subr.mxu0 0.0
  %1116 = vmatpush1.msra.mxu0 0.0
  %1117 = vmatprep.subr.mxu0 0.0
  %1118 = vmatpush1.msra.mxu0 0.0
  %1119 = vmatprep.subr.mxu0 0.0
  %1120 = vmatpush1.msra.mxu0 0.0
  %1121 = vmatprep.subr.mxu0 0.0
  %1122 = vmatpush1.msra.mxu0 0.0
  %1123 = vmatprep.subr.mxu0 0.0
  %1124 = vmatpush1.msra.mxu0 0.0
  %1125 = vmatprep.subr.mxu0 0.0
  %1126 = vmatpush1.msra.mxu0 0.0
  %1127 = vmatprep.subr.mxu0 0.0
  %1128 = vmatpush1.msra.mxu0 0.0
  %1129 = vmatprep.subr.mxu0 0.0
  %1130 = vmatpush1.msra.mxu0 0.0
  %1131 = vmatprep.subr.mxu0 0.0
  %1132 = vmatpush1.msra.mxu0 0.0
  %1133 = vmatprep.subr.mxu0 %v566
  %1134 = vmatpush1.msra.mxu0 %v565
  %1135 = vmatprep.subr.mxu0 %v564
  %1136 = vmatpush1.msra.mxu0 %v563
  %1137 = vmatprep.subr.mxu0 0.0
  %1138 = vmatpush2.msra.mxu0 0.0
  %1139 = vmatprep.subr.mxu0 0.0
  %1140 = vmatpush2.msra.mxu0 0.0
  %1141 = vmatprep.subr.mxu0 0.0
  %1142 = vmatpush2.msra.mxu0 0.0
  %1143 = vmatprep.subr.mxu0 0.0
  %1144 = vmatpush2.msra.mxu0 0.0
  %1145 = vmatprep.subr.mxu0 0.0
  %1146 = vmatpush2.msra.mxu0 0.0
  %1147 = vmatprep.subr.mxu0 0.0
  %1148 = vmatpush2.msra.mxu0 0.0
  %1149 = vmatprep.subr.mxu0 0.0
  %1150 = vmatpush2.msra.mxu0 0.0
  %1151 = vmatprep.subr.mxu0 0.0
  %1152 = vmatpush2.msra.mxu0 0.0
  %1153 = vmatprep.subr.mxu0 0.0
  %1154 = vmatpush2.msra.mxu0 0.0
  %1155 = vmatprep.subr.mxu0 0.0
  %1156 = vmatpush2.msra.mxu0 0.0
  %1157 = vmatprep.subr.mxu0 0.0
  %1158 = vmatpush2.msra.mxu0 0.0
  %1159 = vmatprep.subr.mxu0 0.0
  %1160 = vmatpush2.msra.mxu0 0.0
  %1161 = vmatprep.subr.mxu0 0.0
  %1162 = vmatpush2.msra.mxu0 0.0
  %1163 = vmatprep.subr.mxu0 0.0
  %1164 = vmatpush2.msra.mxu0 0.0
  %1165 = vmatprep.subr.mxu0 0.0
  %1166 = vmatpush2.msra.mxu0 0.0
  %1167 = vmatprep.subr.mxu0 0.0
  %1168 = vmatpush2.msra.mxu0 0.0
  %1169 = vmatprep.mubr.f32.mxu0 0.0
  %1170 = vmatmul.mubr.f32.gmra.mxu0 %v1100
  %v1171 = vpop.f32.mrf.mxu0
  %v1172 = vadd.f32 0.0, %v1171
  %v1173 = vpop.f32.mrf.mxu0
  %v1174 = vadd.f32 0.0, %v1173
  %1175 = vmatprep.mubr.f32.mxu0 0.0
  %1176 = vmatmul.mubr.f32.gmra.mxu0 %v1103
  %v1177 = vpop.f32.mrf.mxu0
  %v1178 = vadd.f32 0.0, %v1177
  %v1179 = vpop.f32.mrf.mxu0
  %v1180 = vadd.f32 0.0, %v1179
  %1181 = vdwg.mxu0
  %v1182 = vmul.f32 %v621, %v1172
  %v1183 = vmul.f32 %v622, %v1174
  %v1184 = vmul.f32 %v623, %v1178
  %v1185 = vmul.f32 %v624, %v1180
  %v1186 = vadd.f32 %v1182, %v1184
  %v1187 = vrot.slane %v1186, 4
  %v1188 = vadd.f32 %v1186, %v1187
  %v1189 = vrot.slane %v1188, 2
  %v1190 = vadd.f32 %v1188, %v1189
  %v1191 = vrot.slane %v1190, 1
  %v1192 = vadd.f32 %v1190, %v1191
  %v1193 = vadd.f32 %v1183, %v1185
  %v1194 = vrot.slane %v1193, 4
  %v1195 = vadd.f32 %v1193, %v1194
  %v1196 = vrot.slane %v1195, 2
  %v1197 = vadd.f32 %v1195, %v1196
  %v1198 = vrot.slane %v1197, 1
  %v1199 = vadd.f32 %v1197, %v1198
  %v1200 = vmul.f32 %v1192, %v659
  %v1201 = vmul.f32 %v1199, %v660
  %v1202 = vmul.f32 %v75, %v1200
  %v1203 = vmul.f32 %v76, %v1201
  %v1204 = vmul.f32 %v77, %v1200
  %v1205 = vmul.f32 %v78, %v1201
  %s1206 = scalar_lea.vmem %s4, 512
  %v1207 = vld [vmem:[%s1206] sm:$0xff]
  %v1208 = vld [vmem:[%s1206 + $0x8] sm:$0xff]
  %v1209 = vld [vmem:[%s1206 + $0x10] sm:$0xff]
  %v1210 = vld [vmem:[%s1206 + $0x18] sm:$0xff]
  %v1211 = vld [vmem:[%s1206 + $0x20] sm:$0xff]
  %v1212 = vld [vmem:[%s1206 + $0x28] sm:$0xff]
  %v1213 = vld [vmem:[%s1206 + $0x30] sm:$0xff]
  %v1214 = vld [vmem:[%s1206 + $0x38] sm:$0xff]
  %v1215 = vld [vmem:[%s1206 + $0x40] sm:$0xff]
  %v1216 = vld [vmem:[%s1206 + $0x48] sm:$0xff]
  %v1217 = vld [vmem:[%s1206 + $0x50] sm:$0xff]
  %v1218 = vld [vmem:[%s1206 + $0x58] sm:$0xff]
  %v1219 = vld [vmem:[%s1206 + $0x60] sm:$0xff]
  %v1220 = vld [vmem:[%s1206 + $0x68] sm:$0xff]
  %v1221 = vld [vmem:[%s1206 + $0x70] sm:$0xff]
  %v1222 = vld [vmem:[%s1206 + $0x78] sm:$0xff]
  %v1223 = vld [vmem:[%s1206 + $0x80] sm:$0xff]
  %v1224 = vld [vmem:[%s1206 + $0x88] sm:$0xff]
  %v1225 = vld [vmem:[%s1206 + $0x90] sm:$0xff]
  %v1226 = vld [vmem:[%s1206 + $0x98] sm:$0xff]
  %v1227 = vld [vmem:[%s1206 + $0xa0] sm:$0xff]
  %v1228 = vld [vmem:[%s1206 + $0xa8] sm:$0xff]
  %v1229 = vld [vmem:[%s1206 + $0xb0] sm:$0xff]
  %v1230 = vld [vmem:[%s1206 + $0xb8] sm:$0xff]
  %v1231 = vld [vmem:[%s1206 + $0xc0] sm:$0xff]
  %v1232 = vld [vmem:[%s1206 + $0xc8] sm:$0xff]
  %v1233 = vld [vmem:[%s1206 + $0xd0] sm:$0xff]
  %v1234 = vld [vmem:[%s1206 + $0xd8] sm:$0xff]
  %v1235 = vld [vmem:[%s1206 + $0xe0] sm:$0xff]
  %v1236 = vld [vmem:[%s1206 + $0xe8] sm:$0xff]
  %v1237 = vld [vmem:[%s1206 + $0xf0] sm:$0xff]
  %v1238 = vld [vmem:[%s1206 + $0xf8] sm:$0xff]
  %1239 = vmatprep.subr.mxu0 0.0
  %1240 = vmatpush1.msra.mxu0 %v1222
  %1241 = vmatprep.subr.mxu0 0.0
  %1242 = vmatpush1.msra.mxu0 %v1221
  %1243 = vmatprep.subr.mxu0 0.0
  %1244 = vmatpush1.msra.mxu0 %v1220
  %1245 = vmatprep.subr.mxu0 0.0
  %1246 = vmatpush1.msra.mxu0 %v1219
  %1247 = vmatprep.subr.mxu0 0.0
  %1248 = vmatpush1.msra.mxu0 %v1218
  %1249 = vmatprep.subr.mxu0 0.0
  %1250 = vmatpush1.msra.mxu0 %v1217
  %1251 = vmatprep.subr.mxu0 0.0
  %1252 = vmatpush1.msra.mxu0 %v1216
  %1253 = vmatprep.subr.mxu0 0.0
  %1254 = vmatpush1.msra.mxu0 %v1215
  %1255 = vmatprep.subr.mxu0 0.0
  %1256 = vmatpush1.msra.mxu0 %v1214
  %1257 = vmatprep.subr.mxu0 0.0
  %1258 = vmatpush1.msra.mxu0 %v1213
  %1259 = vmatprep.subr.mxu0 0.0
  %1260 = vmatpush1.msra.mxu0 %v1212
  %1261 = vmatprep.subr.mxu0 0.0
  %1262 = vmatpush1.msra.mxu0 %v1211
  %1263 = vmatprep.subr.mxu0 0.0
  %1264 = vmatpush1.msra.mxu0 %v1210
  %1265 = vmatprep.subr.mxu0 0.0
  %1266 = vmatpush1.msra.mxu0 %v1209
  %1267 = vmatprep.subr.mxu0 0.0
  %1268 = vmatpush1.msra.mxu0 %v1208
  %1269 = vmatprep.subr.mxu0 0.0
  %1270 = vmatpush1.msra.mxu0 %v1207
  %1271 = vmatprep.subr.mxu0 0.0
  %1272 = vmatpush2.msra.mxu0 %v1238
  %1273 = vmatprep.subr.mxu0 0.0
  %1274 = vmatpush2.msra.mxu0 %v1237
  %1275 = vmatprep.subr.mxu0 0.0
  %1276 = vmatpush2.msra.mxu0 %v1236
  %1277 = vmatprep.subr.mxu0 0.0
  %1278 = vmatpush2.msra.mxu0 %v1235
  %1279 = vmatprep.subr.mxu0 0.0
  %1280 = vmatpush2.msra.mxu0 %v1234
  %1281 = vmatprep.subr.mxu0 0.0
  %1282 = vmatpush2.msra.mxu0 %v1233
  %1283 = vmatprep.subr.mxu0 0.0
  %1284 = vmatpush2.msra.mxu0 %v1232
  %1285 = vmatprep.subr.mxu0 0.0
  %1286 = vmatpush2.msra.mxu0 %v1231
  %1287 = vmatprep.subr.mxu0 0.0
  %1288 = vmatpush2.msra.mxu0 %v1230
  %1289 = vmatprep.subr.mxu0 0.0
  %1290 = vmatpush2.msra.mxu0 %v1229
  %1291 = vmatprep.subr.mxu0 0.0
  %1292 = vmatpush2.msra.mxu0 %v1228
  %1293 = vmatprep.subr.mxu0 0.0
  %1294 = vmatpush2.msra.mxu0 %v1227
  %1295 = vmatprep.subr.mxu0 0.0
  %1296 = vmatpush2.msra.mxu0 %v1226
  %1297 = vmatprep.subr.mxu0 0.0
  %1298 = vmatpush2.msra.mxu0 %v1225
  %1299 = vmatprep.subr.mxu0 0.0
  %1300 = vmatpush2.msra.mxu0 %v1224
  %1301 = vmatprep.subr.mxu0 0.0
  %1302 = vmatpush2.msra.mxu0 %v1223
  %1303 = vmatprep.mubr.f32.mxu0 %v1203
  %1304 = vmatmul.mubr.f32.gmra.mxu0 %v1202
  %v1305 = vpop.f32.mrf.mxu0
  %v1306 = vadd.f32 0.0, %v1305
  %v1307 = vpop.f32.mrf.mxu0
  %1308 = vmatprep.mubr.f32.mxu0 %v1205
  %1309 = vmatmul.mubr.f32.gmra.mxu0 %v1204
  %v1310 = vpop.f32.mrf.mxu0
  %v1311 = vadd.f32 0.0, %v1310
  %v1312 = vpop.f32.mrf.mxu0
  %1313 = vdwg.mxu0
  %v1314 = vadd.f32 %v1088, %v1306
  %v1315 = vadd.f32 %v1093, %v1311
  %s1316 = scalar_lea.vmem %s0, 112
  %v1317 = vld [vmem:[%s1316] sm:$0xff]
  %v1318 = vld [vmem:[%s1316 + $0x8] sm:$0xff]
  %v1320 = vsel %vm92, %v1317, 0
  %v1323 = vsel %vm92, %v1318, 0
  %1325 = vmatprep.subr.mxu0 0.0
  %1326 = vmatpush1.msra.mxu0 0.0
  %1327 = vmatprep.subr.mxu0 0.0
  %1328 = vmatpush1.msra.mxu0 0.0
  %1329 = vmatprep.subr.mxu0 0.0
  %1330 = vmatpush1.msra.mxu0 0.0
  %1331 = vmatprep.subr.mxu0 0.0
  %1332 = vmatpush1.msra.mxu0 0.0
  %1333 = vmatprep.subr.mxu0 0.0
  %1334 = vmatpush1.msra.mxu0 0.0
  %1335 = vmatprep.subr.mxu0 0.0
  %1336 = vmatpush1.msra.mxu0 0.0
  %1337 = vmatprep.subr.mxu0 0.0
  %1338 = vmatpush1.msra.mxu0 0.0
  %1339 = vmatprep.subr.mxu0 0.0
  %1340 = vmatpush1.msra.mxu0 0.0
  %1341 = vmatprep.subr.mxu0 0.0
  %1342 = vmatpush1.msra.mxu0 0.0
  %1343 = vmatprep.subr.mxu0 0.0
  %1344 = vmatpush1.msra.mxu0 0.0
  %1345 = vmatprep.subr.mxu0 0.0
  %1346 = vmatpush1.msra.mxu0 0.0
  %1347 = vmatprep.subr.mxu0 0.0
  %1348 = vmatpush1.msra.mxu0 0.0
  %1349 = vmatprep.subr.mxu0 0.0
  %1350 = vmatpush1.msra.mxu0 0.0
  %1351 = vmatprep.subr.mxu0 0.0
  %1352 = vmatpush1.msra.mxu0 0.0
  %1353 = vmatprep.subr.mxu0 %v566
  %1354 = vmatpush1.msra.mxu0 %v565
  %1355 = vmatprep.subr.mxu0 %v564
  %1356 = vmatpush1.msra.mxu0 %v563
  %1357 = vmatprep.subr.mxu0 0.0
  %1358 = vmatpush2.msra.mxu0 0.0
  %1359 = vmatprep.subr.mxu0 0.0
  %1360 = vmatpush2.msra.mxu0 0.0
  %1361 = vmatprep.subr.mxu0 0.0
  %1362 = vmatpush2.msra.mxu0 0.0
  %1363 = vmatprep.subr.mxu0 0.0
  %1364 = vmatpush2.msra.mxu0 0.0
  %1365 = vmatprep.subr.mxu0 0.0
  %1366 = vmatpush2.msra.mxu0 0.0
  %1367 = vmatprep.subr.mxu0 0.0
  %1368 = vmatpush2.msra.mxu0 0.0
  %1369 = vmatprep.subr.mxu0 0.0
  %1370 = vmatpush2.msra.mxu0 0.0
  %1371 = vmatprep.subr.mxu0 0.0
  %1372 = vmatpush2.msra.mxu0 0.0
  %1373 = vmatprep.subr.mxu0 0.0
  %1374 = vmatpush2.msra.mxu0 0.0
  %1375 = vmatprep.subr.mxu0 0.0
  %1376 = vmatpush2.msra.mxu0 0.0
  %1377 = vmatprep.subr.mxu0 0.0
  %1378 = vmatpush2.msra.mxu0 0.0
  %1379 = vmatprep.subr.mxu0 0.0
  %1380 = vmatpush2.msra.mxu0 0.0
  %1381 = vmatprep.subr.mxu0 0.0
  %1382 = vmatpush2.msra.mxu0 0.0
  %1383 = vmatprep.subr.mxu0 0.0
  %1384 = vmatpush2.msra.mxu0 0.0
  %1385 = vmatprep.subr.mxu0 0.0
  %1386 = vmatpush2.msra.mxu0 0.0
  %1387 = vmatprep.subr.mxu0 0.0
  %1388 = vmatpush2.msra.mxu0 0.0
  %1389 = vmatprep.mubr.f32.mxu0 0.0
  %1390 = vmatmul.mubr.f32.gmra.mxu0 %v1320
  %v1391 = vpop.f32.mrf.mxu0
  %v1392 = vadd.f32 0.0, %v1391
  %v1393 = vpop.f32.mrf.mxu0
  %v1394 = vadd.f32 0.0, %v1393
  %1395 = vmatprep.mubr.f32.mxu0 0.0
  %1396 = vmatmul.mubr.f32.gmra.mxu0 %v1323
  %v1397 = vpop.f32.mrf.mxu0
  %v1398 = vadd.f32 0.0, %v1397
  %v1399 = vpop.f32.mrf.mxu0
  %v1400 = vadd.f32 0.0, %v1399
  %1401 = vdwg.mxu0
  %v1402 = vmul.f32 %v621, %v1392
  %v1403 = vmul.f32 %v622, %v1394
  %v1404 = vmul.f32 %v623, %v1398
  %v1405 = vmul.f32 %v624, %v1400
  %v1406 = vadd.f32 %v1402, %v1404
  %v1407 = vrot.slane %v1406, 4
  %v1408 = vadd.f32 %v1406, %v1407
  %v1409 = vrot.slane %v1408, 2
  %v1410 = vadd.f32 %v1408, %v1409
  %v1411 = vrot.slane %v1410, 1
  %v1412 = vadd.f32 %v1410, %v1411
  %v1413 = vadd.f32 %v1403, %v1405
  %v1414 = vrot.slane %v1413, 4
  %v1415 = vadd.f32 %v1413, %v1414
  %v1416 = vrot.slane %v1415, 2
  %v1417 = vadd.f32 %v1415, %v1416
  %v1418 = vrot.slane %v1417, 1
  %v1419 = vadd.f32 %v1417, %v1418
  %v1420 = vmul.f32 %v1412, %v659
  %v1421 = vmul.f32 %v1419, %v660
  %v1422 = vmul.f32 %v75, %v1420
  %v1423 = vmul.f32 %v76, %v1421
  %v1424 = vmul.f32 %v77, %v1420
  %v1425 = vmul.f32 %v78, %v1421
  %s1426 = scalar_lea.vmem %s4, 768
  %v1427 = vld [vmem:[%s1426] sm:$0xff]
  %v1428 = vld [vmem:[%s1426 + $0x8] sm:$0xff]
  %v1429 = vld [vmem:[%s1426 + $0x10] sm:$0xff]
  %v1430 = vld [vmem:[%s1426 + $0x18] sm:$0xff]
  %v1431 = vld [vmem:[%s1426 + $0x20] sm:$0xff]
  %v1432 = vld [vmem:[%s1426 + $0x28] sm:$0xff]
  %v1433 = vld [vmem:[%s1426 + $0x30] sm:$0xff]
  %v1434 = vld [vmem:[%s1426 + $0x38] sm:$0xff]
  %v1435 = vld [vmem:[%s1426 + $0x40] sm:$0xff]
  %v1436 = vld [vmem:[%s1426 + $0x48] sm:$0xff]
  %v1437 = vld [vmem:[%s1426 + $0x50] sm:$0xff]
  %v1438 = vld [vmem:[%s1426 + $0x58] sm:$0xff]
  %v1439 = vld [vmem:[%s1426 + $0x60] sm:$0xff]
  %v1440 = vld [vmem:[%s1426 + $0x68] sm:$0xff]
  %v1441 = vld [vmem:[%s1426 + $0x70] sm:$0xff]
  %v1442 = vld [vmem:[%s1426 + $0x78] sm:$0xff]
  %v1443 = vld [vmem:[%s1426 + $0x80] sm:$0xff]
  %v1444 = vld [vmem:[%s1426 + $0x88] sm:$0xff]
  %v1445 = vld [vmem:[%s1426 + $0x90] sm:$0xff]
  %v1446 = vld [vmem:[%s1426 + $0x98] sm:$0xff]
  %v1447 = vld [vmem:[%s1426 + $0xa0] sm:$0xff]
  %v1448 = vld [vmem:[%s1426 + $0xa8] sm:$0xff]
  %v1449 = vld [vmem:[%s1426 + $0xb0] sm:$0xff]
  %v1450 = vld [vmem:[%s1426 + $0xb8] sm:$0xff]
  %v1451 = vld [vmem:[%s1426 + $0xc0] sm:$0xff]
  %v1452 = vld [vmem:[%s1426 + $0xc8] sm:$0xff]
  %v1453 = vld [vmem:[%s1426 + $0xd0] sm:$0xff]
  %v1454 = vld [vmem:[%s1426 + $0xd8] sm:$0xff]
  %v1455 = vld [vmem:[%s1426 + $0xe0] sm:$0xff]
  %v1456 = vld [vmem:[%s1426 + $0xe8] sm:$0xff]
  %v1457 = vld [vmem:[%s1426 + $0xf0] sm:$0xff]
  %v1458 = vld [vmem:[%s1426 + $0xf8] sm:$0xff]
  %1459 = vmatprep.subr.mxu0 0.0
  %1460 = vmatpush1.msra.mxu0 %v1442
  %1461 = vmatprep.subr.mxu0 0.0
  %1462 = vmatpush1.msra.mxu0 %v1441
  %1463 = vmatprep.subr.mxu0 0.0
  %1464 = vmatpush1.msra.mxu0 %v1440
  %1465 = vmatprep.subr.mxu0 0.0
  %1466 = vmatpush1.msra.mxu0 %v1439
  %1467 = vmatprep.subr.mxu0 0.0
  %1468 = vmatpush1.msra.mxu0 %v1438
  %1469 = vmatprep.subr.mxu0 0.0
  %1470 = vmatpush1.msra.mxu0 %v1437
  %1471 = vmatprep.subr.mxu0 0.0
  %1472 = vmatpush1.msra.mxu0 %v1436
  %1473 = vmatprep.subr.mxu0 0.0
  %1474 = vmatpush1.msra.mxu0 %v1435
  %1475 = vmatprep.subr.mxu0 0.0
  %1476 = vmatpush1.msra.mxu0 %v1434
  %1477 = vmatprep.subr.mxu0 0.0
  %1478 = vmatpush1.msra.mxu0 %v1433
  %1479 = vmatprep.subr.mxu0 0.0
  %1480 = vmatpush1.msra.mxu0 %v1432
  %1481 = vmatprep.subr.mxu0 0.0
  %1482 = vmatpush1.msra.mxu0 %v1431
  %1483 = vmatprep.subr.mxu0 0.0
  %1484 = vmatpush1.msra.mxu0 %v1430
  %1485 = vmatprep.subr.mxu0 0.0
  %1486 = vmatpush1.msra.mxu0 %v1429
  %1487 = vmatprep.subr.mxu0 0.0
  %1488 = vmatpush1.msra.mxu0 %v1428
  %1489 = vmatprep.subr.mxu0 0.0
  %1490 = vmatpush1.msra.mxu0 %v1427
  %1491 = vmatprep.subr.mxu0 0.0
  %1492 = vmatpush2.msra.mxu0 %v1458
  %1493 = vmatprep.subr.mxu0 0.0
  %1494 = vmatpush2.msra.mxu0 %v1457
  %1495 = vmatprep.subr.mxu0 0.0
  %1496 = vmatpush2.msra.mxu0 %v1456
  %1497 = vmatprep.subr.mxu0 0.0
  %1498 = vmatpush2.msra.mxu0 %v1455
  %1499 = vmatprep.subr.mxu0 0.0
  %1500 = vmatpush2.msra.mxu0 %v1454
  %1501 = vmatprep.subr.mxu0 0.0
  %1502 = vmatpush2.msra.mxu0 %v1453
  %1503 = vmatprep.subr.mxu0 0.0
  %1504 = vmatpush2.msra.mxu0 %v1452
  %1505 = vmatprep.subr.mxu0 0.0
  %1506 = vmatpush2.msra.mxu0 %v1451
  %1507 = vmatprep.subr.mxu0 0.0
  %1508 = vmatpush2.msra.mxu0 %v1450
  %1509 = vmatprep.subr.mxu0 0.0
  %1510 = vmatpush2.msra.mxu0 %v1449
  %1511 = vmatprep.subr.mxu0 0.0
  %1512 = vmatpush2.msra.mxu0 %v1448
  %1513 = vmatprep.subr.mxu0 0.0
  %1514 = vmatpush2.msra.mxu0 %v1447
  %1515 = vmatprep.subr.mxu0 0.0
  %1516 = vmatpush2.msra.mxu0 %v1446
  %1517 = vmatprep.subr.mxu0 0.0
  %1518 = vmatpush2.msra.mxu0 %v1445
  %1519 = vmatprep.subr.mxu0 0.0
  %1520 = vmatpush2.msra.mxu0 %v1444
  %1521 = vmatprep.subr.mxu0 0.0
  %1522 = vmatpush2.msra.mxu0 %v1443
  %1523 = vmatprep.mubr.f32.mxu0 %v1423
  %1524 = vmatmul.mubr.f32.gmra.mxu0 %v1422
  %v1525 = vpop.f32.mrf.mxu0
  %v1526 = vadd.f32 0.0, %v1525
  %v1527 = vpop.f32.mrf.mxu0
  %1528 = vmatprep.mubr.f32.mxu0 %v1425
  %1529 = vmatmul.mubr.f32.gmra.mxu0 %v1424
  %v1530 = vpop.f32.mrf.mxu0
  %v1531 = vadd.f32 0.0, %v1530
  %v1532 = vpop.f32.mrf.mxu0
  %1533 = vdwg.mxu0
  %v1534 = vadd.f32 %v1314, %v1526
  %v1535 = vadd.f32 %v1315, %v1531
  %s1536 = scalar_lea.vmem %s0, 128
  %v1537 = vld [vmem:[%s1536] sm:$0xff]
  %v1538 = vld [vmem:[%s1536 + $0x8] sm:$0xff]
  %s1539 = scalar_lea.vmem %s0, 144
  %v1540 = vld [vmem:[%s1539] sm:$0xff]
  %v1541 = vld [vmem:[%s1539 + $0x8] sm:$0xff]
  %v1543 = vsel %vm92, %v1540, 0
  %v1546 = vsel %vm92, %v1541, 0
  %1548 = vmatprep.subr.mxu0 0.0
  %1549 = vmatpush1.msra.mxu0 0.0
  %1550 = vmatprep.subr.mxu0 0.0
  %1551 = vmatpush1.msra.mxu0 0.0
  %1552 = vmatprep.subr.mxu0 0.0
  %1553 = vmatpush1.msra.mxu0 0.0
  %1554 = vmatprep.subr.mxu0 0.0
  %1555 = vmatpush1.msra.mxu0 0.0
  %1556 = vmatprep.subr.mxu0 0.0
  %1557 = vmatpush1.msra.mxu0 0.0
  %1558 = vmatprep.subr.mxu0 0.0
  %1559 = vmatpush1.msra.mxu0 0.0
  %1560 = vmatprep.subr.mxu0 0.0
  %1561 = vmatpush1.msra.mxu0 0.0
  %1562 = vmatprep.subr.mxu0 0.0
  %1563 = vmatpush1.msra.mxu0 0.0
  %1564 = vmatprep.subr.mxu0 0.0
  %1565 = vmatpush1.msra.mxu0 0.0
  %1566 = vmatprep.subr.mxu0 0.0
  %1567 = vmatpush1.msra.mxu0 0.0
  %1568 = vmatprep.subr.mxu0 0.0
  %1569 = vmatpush1.msra.mxu0 0.0
  %1570 = vmatprep.subr.mxu0 0.0
  %1571 = vmatpush1.msra.mxu0 0.0
  %1572 = vmatprep.subr.mxu0 0.0
  %1573 = vmatpush1.msra.mxu0 0.0
  %1574 = vmatprep.subr.mxu0 0.0
  %1575 = vmatpush1.msra.mxu0 0.0
  %1576 = vmatprep.subr.mxu0 0.0
  %1577 = vmatpush1.msra.mxu0 %v91
  %1578 = vmatprep.subr.mxu0 0.0
  %1579 = vmatpush1.msra.mxu0 %v90
  %1580 = vmatprep.subr.mxu0 0.0
  %1581 = vmatpush2.msra.mxu0 0.0
  %1582 = vmatprep.subr.mxu0 0.0
  %1583 = vmatpush2.msra.mxu0 0.0
  %1584 = vmatprep.subr.mxu0 0.0
  %1585 = vmatpush2.msra.mxu0 0.0
  %1586 = vmatprep.subr.mxu0 0.0
  %1587 = vmatpush2.msra.mxu0 0.0
  %1588 = vmatprep.subr.mxu0 0.0
  %1589 = vmatpush2.msra.mxu0 0.0
  %1590 = vmatprep.subr.mxu0 0.0
  %1591 = vmatpush2.msra.mxu0 0.0
  %1592 = vmatprep.subr.mxu0 0.0
  %1593 = vmatpush2.msra.mxu0 0.0
  %1594 = vmatprep.subr.mxu0 0.0
  %1595 = vmatpush2.msra.mxu0 0.0
  %1596 = vmatprep.subr.mxu0 0.0
  %1597 = vmatpush2.msra.mxu0 0.0
  %1598 = vmatprep.subr.mxu0 0.0
  %1599 = vmatpush2.msra.mxu0 0.0
  %1600 = vmatprep.subr.mxu0 0.0
  %1601 = vmatpush2.msra.mxu0 0.0
  %1602 = vmatprep.subr.mxu0 0.0
  %1603 = vmatpush2.msra.mxu0 0.0
  %1604 = vmatprep.subr.mxu0 0.0
  %1605 = vmatpush2.msra.mxu0 0.0
  %1606 = vmatprep.subr.mxu0 0.0
  %1607 = vmatpush2.msra.mxu0 0.0
  %1608 = vmatprep.subr.mxu0 0.0
  %1609 = vmatpush2.msra.mxu0 0.0
  %1610 = vmatprep.subr.mxu0 0.0
  %1611 = vmatpush2.msra.mxu0 0.0
  %1612 = vmatprep.mubr.f32.mxu0 0.0
  %1613 = vmatmul.mubr.f32.gmra.mxu0 %v1543
  %v1614 = vpop.f32.mrf.mxu0
  %v1615 = vadd.f32 0.0, %v1614
  %v1616 = vpop.f32.mrf.mxu0
  %1617 = vmatprep.mubr.f32.mxu0 0.0
  %1618 = vmatmul.mubr.f32.gmra.mxu0 %v1546
  %v1619 = vpop.f32.mrf.mxu0
  %v1620 = vadd.f32 0.0, %v1619
  %v1621 = vpop.f32.mrf.mxu0
  %1622 = vdwg.mxu0
  %v1624 = vsel %vm92, %v1537, 0
  %v1627 = vsel %vm92, %v1538, 0
  %1629 = vmatprep.subr.mxu0 0.0
  %1630 = vmatpush1.msra.mxu0 0.0
  %1631 = vmatprep.subr.mxu0 0.0
  %1632 = vmatpush1.msra.mxu0 0.0
  %1633 = vmatprep.subr.mxu0 0.0
  %1634 = vmatpush1.msra.mxu0 0.0
  %1635 = vmatprep.subr.mxu0 0.0
  %1636 = vmatpush1.msra.mxu0 0.0
  %1637 = vmatprep.subr.mxu0 0.0
  %1638 = vmatpush1.msra.mxu0 0.0
  %1639 = vmatprep.subr.mxu0 0.0
  %1640 = vmatpush1.msra.mxu0 0.0
  %1641 = vmatprep.subr.mxu0 0.0
  %1642 = vmatpush1.msra.mxu0 0.0
  %1643 = vmatprep.subr.mxu0 0.0
  %1644 = vmatpush1.msra.mxu0 0.0
  %1645 = vmatprep.subr.mxu0 0.0
  %1646 = vmatpush1.msra.mxu0 0.0
  %1647 = vmatprep.subr.mxu0 0.0
  %1648 = vmatpush1.msra.mxu0 0.0
  %1649 = vmatprep.subr.mxu0 0.0
  %1650 = vmatpush1.msra.mxu0 0.0
  %1651 = vmatprep.subr.mxu0 0.0
  %1652 = vmatpush1.msra.mxu0 0.0
  %1653 = vmatprep.subr.mxu0 0.0
  %1654 = vmatpush1.msra.mxu0 0.0
  %1655 = vmatprep.subr.mxu0 0.0
  %1656 = vmatpush1.msra.mxu0 0.0
  %1657 = vmatprep.subr.mxu0 0.0
  %1658 = vmatpush1.msra.mxu0 %v85
  %1659 = vmatprep.subr.mxu0 0.0
  %1660 = vmatpush1.msra.mxu0 %v84
  %1661 = vmatprep.subr.mxu0 0.0
  %1662 = vmatpush2.msra.mxu0 0.0
  %1663 = vmatprep.subr.mxu0 0.0
  %1664 = vmatpush2.msra.mxu0 0.0
  %1665 = vmatprep.subr.mxu0 0.0
  %1666 = vmatpush2.msra.mxu0 0.0
  %1667 = vmatprep.subr.mxu0 0.0
  %1668 = vmatpush2.msra.mxu0 0.0
  %1669 = vmatprep.subr.mxu0 0.0
  %1670 = vmatpush2.msra.mxu0 0.0
  %1671 = vmatprep.subr.mxu0 0.0
  %1672 = vmatpush2.msra.mxu0 0.0
  %1673 = vmatprep.subr.mxu0 0.0
  %1674 = vmatpush2.msra.mxu0 0.0
  %1675 = vmatprep.subr.mxu0 0.0
  %1676 = vmatpush2.msra.mxu0 0.0
  %1677 = vmatprep.subr.mxu0 0.0
  %1678 = vmatpush2.msra.mxu0 0.0
  %1679 = vmatprep.subr.mxu0 0.0
  %1680 = vmatpush2.msra.mxu0 0.0
  %1681 = vmatprep.subr.mxu0 0.0
  %1682 = vmatpush2.msra.mxu0 0.0
  %1683 = vmatprep.subr.mxu0 0.0
  %1684 = vmatpush2.msra.mxu0 0.0
  %1685 = vmatprep.subr.mxu0 0.0
  %1686 = vmatpush2.msra.mxu0 0.0
  %1687 = vmatprep.subr.mxu0 0.0
  %1688 = vmatpush2.msra.mxu0 0.0
  %1689 = vmatprep.subr.mxu0 0.0
  %1690 = vmatpush2.msra.mxu0 0.0
  %1691 = vmatprep.subr.mxu0 0.0
  %1692 = vmatpush2.msra.mxu0 0.0
  %1693 = vmatprep.mubr.f32.mxu0 0.0
  %1694 = vmatmul.mubr.f32.gmra.mxu0 %v1624
  %v1695 = vpop.f32.mrf.mxu0
  %v1696 = vadd.f32 %v1615, %v1695
  %v1697 = vpop.f32.mrf.mxu0
  %1698 = vmatprep.mubr.f32.mxu0 0.0
  %1699 = vmatmul.mubr.f32.gmra.mxu0 %v1627
  %v1700 = vpop.f32.mrf.mxu0
  %v1701 = vadd.f32 %v1620, %v1700
  %v1702 = vpop.f32.mrf.mxu0
  %1703 = vdwg.mxu0
  %s1704 = scalar_lea.vmem %s0, 160
  %v1705 = vld [vmem:[%s1704] sm:$0xff]
  %v1706 = vld [vmem:[%s1704 + $0x8] sm:$0xff]
  %v1708 = vsel %vm92, %v1705, 0
  %v1711 = vsel %vm92, %v1706, 0
  %1713 = vmatprep.subr.mxu0 0.0
  %1714 = vmatpush1.msra.mxu0 0.0
  %1715 = vmatprep.subr.mxu0 0.0
  %1716 = vmatpush1.msra.mxu0 0.0
  %1717 = vmatprep.subr.mxu0 0.0
  %1718 = vmatpush1.msra.mxu0 0.0
  %1719 = vmatprep.subr.mxu0 0.0
  %1720 = vmatpush1.msra.mxu0 0.0
  %1721 = vmatprep.subr.mxu0 0.0
  %1722 = vmatpush1.msra.mxu0 0.0
  %1723 = vmatprep.subr.mxu0 0.0
  %1724 = vmatpush1.msra.mxu0 0.0
  %1725 = vmatprep.subr.mxu0 0.0
  %1726 = vmatpush1.msra.mxu0 0.0
  %1727 = vmatprep.subr.mxu0 0.0
  %1728 = vmatpush1.msra.mxu0 0.0
  %1729 = vmatprep.subr.mxu0 0.0
  %1730 = vmatpush1.msra.mxu0 0.0
  %1731 = vmatprep.subr.mxu0 0.0
  %1732 = vmatpush1.msra.mxu0 0.0
  %1733 = vmatprep.subr.mxu0 0.0
  %1734 = vmatpush1.msra.mxu0 0.0
  %1735 = vmatprep.subr.mxu0 0.0
  %1736 = vmatpush1.msra.mxu0 0.0
  %1737 = vmatprep.subr.mxu0 0.0
  %1738 = vmatpush1.msra.mxu0 0.0
  %1739 = vmatprep.subr.mxu0 0.0
  %1740 = vmatpush1.msra.mxu0 0.0
  %1741 = vmatprep.subr.mxu0 0.0
  %1742 = vmatpush1.msra.mxu0 %v260
  %1743 = vmatprep.subr.mxu0 0.0
  %1744 = vmatpush1.msra.mxu0 %v259
  %1745 = vmatprep.subr.mxu0 0.0
  %1746 = vmatpush2.msra.mxu0 0.0
  %1747 = vmatprep.subr.mxu0 0.0
  %1748 = vmatpush2.msra.mxu0 0.0
  %1749 = vmatprep.subr.mxu0 0.0
  %1750 = vmatpush2.msra.mxu0 0.0
  %1751 = vmatprep.subr.mxu0 0.0
  %1752 = vmatpush2.msra.mxu0 0.0
  %1753 = vmatprep.subr.mxu0 0.0
  %1754 = vmatpush2.msra.mxu0 0.0
  %1755 = vmatprep.subr.mxu0 0.0
  %1756 = vmatpush2.msra.mxu0 0.0
  %1757 = vmatprep.subr.mxu0 0.0
  %1758 = vmatpush2.msra.mxu0 0.0
  %1759 = vmatprep.subr.mxu0 0.0
  %1760 = vmatpush2.msra.mxu0 0.0
  %1761 = vmatprep.subr.mxu0 0.0
  %1762 = vmatpush2.msra.mxu0 0.0
  %1763 = vmatprep.subr.mxu0 0.0
  %1764 = vmatpush2.msra.mxu0 0.0
  %1765 = vmatprep.subr.mxu0 0.0
  %1766 = vmatpush2.msra.mxu0 0.0
  %1767 = vmatprep.subr.mxu0 0.0
  %1768 = vmatpush2.msra.mxu0 0.0
  %1769 = vmatprep.subr.mxu0 0.0
  %1770 = vmatpush2.msra.mxu0 0.0
  %1771 = vmatprep.subr.mxu0 0.0
  %1772 = vmatpush2.msra.mxu0 0.0
  %1773 = vmatprep.subr.mxu0 0.0
  %1774 = vmatpush2.msra.mxu0 0.0
  %1775 = vmatprep.subr.mxu0 0.0
  %1776 = vmatpush2.msra.mxu0 0.0
  %1777 = vmatprep.mubr.f32.mxu0 0.0
  %1778 = vmatmul.mubr.f32.gmra.mxu0 %v1708
  %v1779 = vpop.f32.mrf.mxu0
  %v1780 = vadd.f32 0.0, %v1779
  %v1781 = vpop.f32.mrf.mxu0
  %1782 = vmatprep.mubr.f32.mxu0 0.0
  %1783 = vmatmul.mubr.f32.gmra.mxu0 %v1711
  %v1784 = vpop.f32.mrf.mxu0
  %v1785 = vadd.f32 0.0, %v1784
  %v1786 = vpop.f32.mrf.mxu0
  %1787 = vdwg.mxu0
  %v1788 = vadd.f32 %v1696, %v1780
  %v1789 = vadd.f32 %v1701, %v1785
  %s1790 = scalar_lea.vmem %s0, 176
  %v1791 = vld [vmem:[%s1790] sm:$0xff]
  %v1792 = vld [vmem:[%s1790 + $0x8] sm:$0xff]
  %v1794 = vsel %vm92, %v1791, 0
  %v1797 = vsel %vm92, %v1792, 0
  %1799 = vmatprep.subr.mxu0 0.0
  %1800 = vmatpush1.msra.mxu0 0.0
  %1801 = vmatprep.subr.mxu0 0.0
  %1802 = vmatpush1.msra.mxu0 0.0
  %1803 = vmatprep.subr.mxu0 0.0
  %1804 = vmatpush1.msra.mxu0 0.0
  %1805 = vmatprep.subr.mxu0 0.0
  %1806 = vmatpush1.msra.mxu0 0.0
  %1807 = vmatprep.subr.mxu0 0.0
  %1808 = vmatpush1.msra.mxu0 0.0
  %1809 = vmatprep.subr.mxu0 0.0
  %1810 = vmatpush1.msra.mxu0 0.0
  %1811 = vmatprep.subr.mxu0 0.0
  %1812 = vmatpush1.msra.mxu0 0.0
  %1813 = vmatprep.subr.mxu0 0.0
  %1814 = vmatpush1.msra.mxu0 0.0
  %1815 = vmatprep.subr.mxu0 0.0
  %1816 = vmatpush1.msra.mxu0 0.0
  %1817 = vmatprep.subr.mxu0 0.0
  %1818 = vmatpush1.msra.mxu0 0.0
  %1819 = vmatprep.subr.mxu0 0.0
  %1820 = vmatpush1.msra.mxu0 0.0
  %1821 = vmatprep.subr.mxu0 0.0
  %1822 = vmatpush1.msra.mxu0 0.0
  %1823 = vmatprep.subr.mxu0 0.0
  %1824 = vmatpush1.msra.mxu0 0.0
  %1825 = vmatprep.subr.mxu0 0.0
  %1826 = vmatpush1.msra.mxu0 0.0
  %1827 = vmatprep.subr.mxu0 0.0
  %1828 = vmatpush1.msra.mxu0 %v349
  %1829 = vmatprep.subr.mxu0 0.0
  %1830 = vmatpush1.msra.mxu0 %v348
  %1831 = vmatprep.subr.mxu0 0.0
  %1832 = vmatpush2.msra.mxu0 0.0
  %1833 = vmatprep.subr.mxu0 0.0
  %1834 = vmatpush2.msra.mxu0 0.0
  %1835 = vmatprep.subr.mxu0 0.0
  %1836 = vmatpush2.msra.mxu0 0.0
  %1837 = vmatprep.subr.mxu0 0.0
  %1838 = vmatpush2.msra.mxu0 0.0
  %1839 = vmatprep.subr.mxu0 0.0
  %1840 = vmatpush2.msra.mxu0 0.0
  %1841 = vmatprep.subr.mxu0 0.0
  %1842 = vmatpush2.msra.mxu0 0.0
  %1843 = vmatprep.subr.mxu0 0.0
  %1844 = vmatpush2.msra.mxu0 0.0
  %1845 = vmatprep.subr.mxu0 0.0
  %1846 = vmatpush2.msra.mxu0 0.0
  %1847 = vmatprep.subr.mxu0 0.0
  %1848 = vmatpush2.msra.mxu0 0.0
  %1849 = vmatprep.subr.mxu0 0.0
  %1850 = vmatpush2.msra.mxu0 0.0
  %1851 = vmatprep.subr.mxu0 0.0
  %1852 = vmatpush2.msra.mxu0 0.0
  %1853 = vmatprep.subr.mxu0 0.0
  %1854 = vmatpush2.msra.mxu0 0.0
  %1855 = vmatprep.subr.mxu0 0.0
  %1856 = vmatpush2.msra.mxu0 0.0
  %1857 = vmatprep.subr.mxu0 0.0
  %1858 = vmatpush2.msra.mxu0 0.0
  %1859 = vmatprep.subr.mxu0 0.0
  %1860 = vmatpush2.msra.mxu0 0.0
  %1861 = vmatprep.subr.mxu0 0.0
  %1862 = vmatpush2.msra.mxu0 0.0
  %1863 = vmatprep.mubr.f32.mxu0 0.0
  %1864 = vmatmul.mubr.f32.gmra.mxu0 %v1794
  %v1865 = vpop.f32.mrf.mxu0
  %v1866 = vadd.f32 0.0, %v1865
  %v1867 = vpop.f32.mrf.mxu0
  %1868 = vmatprep.mubr.f32.mxu0 0.0
  %1869 = vmatmul.mubr.f32.gmra.mxu0 %v1797
  %v1870 = vpop.f32.mrf.mxu0
  %v1871 = vadd.f32 0.0, %v1870
  %v1872 = vpop.f32.mrf.mxu0
  %1873 = vdwg.mxu0
  %v1874 = vadd.f32 %v1788, %v1866
  %v1875 = vadd.f32 %v1789, %v1871
  %s1876 = scalar_lea.vmem %s1, 4
  %v1877 = vld [vmem:[%s1876] sm:$0xf]
  %v1880 = vunpack.c.l.s4 1966171168
  %v1881 = vunpack.c.0.s8 %v1880
  %v1882 = vlaneseq
  %v1883 = vshrl.u32 %v1882, 7
  %v1884 = vsub.s32 %v1881, %v1883
  %v1885 = vrot.slane %v1877, %v1884
  %v1887 = vadd.f32 %v79, %v1885
  %v1888 = vcombine.high %v1885, %v1885
  %v1890 = vadd.f32 %v81, %v1888
  %v1891 = vmul.f32 %v1887, 2.0
  %v1892 = vmul.f32 %v1891, %v448
  %v1893 = vsub.f32 %v1892, 1.0
  %v1894 = vmul.f32 %v1890, 2.0
  %v1895 = vmul.f32 %v1894, %v448
  %v1896 = vsub.f32 %v1895, 1.0
  %v1897 = vadd.f32 %v1893, 1.0
  %v1898 = vmul.f32 %v1897, 16.0
  %v1899 = vsub.f32 %v1898, 1.0
  %v1900 = vmul.f32 %v1899, 0.5
  %v1901 = vadd.f32 %v1896, 1.0
  %v1902 = vmul.f32 %v1901, 16.0
  %v1903 = vsub.f32 %v1902, 1.0
  %v1904 = vmul.f32 %v1903, 0.5
  %v1905 = vfloor.f32 %v1900
  %v1906 = vfloor.f32 %v1904
  %v1907 = vadd.f32 %v1905, 1.0
  %v1908 = vadd.f32 %v1906, 1.0
  %v1909 = vsub.f32 %v1900, %v1905
  %v1910 = vsub.f32 1.0, %v1909
  %v1911 = vsub.f32 %v1904, %v1906
  %v1912 = vsub.f32 1.0, %v1911
  %vm1913 = vcmp.ge.f32.partialorder %v1905, 0.0
  %vm1914 = vcmp.le.f32.partialorder %v1905, 15.0
  %vm1915 = vmand %vm1913, %vm1914
  %v1916 = vsel %vm1915, 1, 0
  %v1917 = vcvt.s32.f32 %v1916
  %vm1918 = vcmp.ge.f32.partialorder %v1907, 0.0
  %vm1919 = vcmp.le.f32.partialorder %v1907, 15.0
  %vm1920 = vmand %vm1918, %vm1919
  %v1921 = vsel %vm1920, 1, 0
  %v1922 = vcvt.s32.f32 %v1921
  %v1923 = vmax.f32 %v1905, 0.0
  %v1924 = vmin.f32 %v1923, 15.0
  %v1925 = vcvt.f32.s32.to.zero.pseudo %v1924
  %v1926 = vmax.f32 %v1907, 0.0
  %v1927 = vmin.f32 %v1926, 15.0
  %v1928 = vcvt.f32.s32.to.zero.pseudo %v1927
  %v1929 = vmul.f32 %v1910, %v1917
  %v1930 = vmul.f32 %v1909, %v1922
  %vm1931 = vcmp.ge.f32.partialorder %v1906, 0.0
  %vm1932 = vcmp.le.f32.partialorder %v1906, 15.0
  %vm1933 = vmand %vm1931, %vm1932
  %v1934 = vsel %vm1933, 1, 0
  %v1935 = vcvt.s32.f32 %v1934
  %vm1936 = vcmp.ge.f32.partialorder %v1908, 0.0
  %vm1937 = vcmp.le.f32.partialorder %v1908, 15.0
  %vm1938 = vmand %vm1936, %vm1937
  %v1939 = vsel %vm1938, 1, 0
  %v1940 = vcvt.s32.f32 %v1939
  %v1941 = vmax.f32 %v1906, 0.0
  %v1942 = vmin.f32 %v1941, 15.0
  %v1943 = vcvt.f32.s32.to.zero.pseudo %v1942
  %v1944 = vmax.f32 %v1908, 0.0
  %v1945 = vmin.f32 %v1944, 15.0
  %v1946 = vcvt.f32.s32.to.zero.pseudo %v1945
  %v1947 = vmul.f32 %v1912, %v1935
  %v1948 = vmul.f32 %v1911, %v1940
  %v1949 = vlaneseq
  %v1950 = vshrl.u32 %v1949, 7
  %v1951 = vsub.s32 0, %v1950
  %v1952 = vrot.slane %v1925, %v1951
  %v1953 = vlaneseq
  %v1954 = vshrl.u32 %v1953, 7
  %v1955 = vsub.s32 1, %v1954
  %v1956 = vrot.slane %v1925, %v1955
  %vm1957 = vcmp.eq.s32.totalorder %v507, %v1952
  %vm1958 = vcmp.eq.s32.totalorder %v507, %v1956
  %vm1959 = vcmp.eq.s32.totalorder %v508, %v1952
  %vm1960 = vcmp.eq.s32.totalorder %v508, %v1956
  %v1962 = vlaneseq
  %v1963 = vshrl.u32 %v1962, 7
  %v1964 = vsub.s32 0, %v1963
  %v1965 = vrot.slane %v1929, %v1964
  %v1966 = vlaneseq
  %v1967 = vshrl.u32 %v1966, 7
  %v1968 = vsub.s32 1, %v1967
  %v1969 = vrot.slane %v1929, %v1968
  %v1972 = vsel %vm1957, %v1965, 0.0
  %v1973 = vsel %vm1958, %v1969, 0.0
  %v1974 = vsel %vm1959, %v1965, 0.0
  %v1975 = vsel %vm1960, %v1969, 0.0
  %v1976 = vlaneseq
  %v1977 = vshrl.u32 %v1976, 7
  %v1978 = vsub.s32 0, %v1977
  %v1979 = vrot.slane %v1928, %v1978
  %v1980 = vlaneseq
  %v1981 = vshrl.u32 %v1980, 7
  %v1982 = vsub.s32 1, %v1981
  %v1983 = vrot.slane %v1928, %v1982
  %vm1984 = vcmp.eq.s32.totalorder %v507, %v1979
  %vm1985 = vcmp.eq.s32.totalorder %v507, %v1983
  %vm1986 = vcmp.eq.s32.totalorder %v508, %v1979
  %vm1987 = vcmp.eq.s32.totalorder %v508, %v1983
  %v1989 = vlaneseq
  %v1990 = vshrl.u32 %v1989, 7
  %v1991 = vsub.s32 0, %v1990
  %v1992 = vrot.slane %v1930, %v1991
  %v1993 = vlaneseq
  %v1994 = vshrl.u32 %v1993, 7
  %v1995 = vsub.s32 1, %v1994
  %v1996 = vrot.slane %v1930, %v1995
  %v1999 = vsel %vm1984, %v1992, 0.0
  %v2000 = vsel %vm1985, %v1996, 0.0
  %v2001 = vsel %vm1986, %v1992, 0.0
  %v2002 = vsel %vm1987, %v1996, 0.0
  %v2003 = vadd.f32 %v1972, %v1999
  %v2004 = vadd.f32 %v1973, %v2000
  %v2005 = vadd.f32 %v1974, %v2001
  %v2006 = vadd.f32 %v1975, %v2002
  %v2007 = vlaneseq
  %v2008 = vshrl.u32 %v2007, 7
  %v2009 = vsub.s32 0, %v2008
  %v2010 = vrot.slane %v1943, %v2009
  %v2011 = vlaneseq
  %v2012 = vshrl.u32 %v2011, 7
  %v2013 = vsub.s32 1, %v2012
  %v2014 = vrot.slane %v1943, %v2013
  %vm2015 = vcmp.eq.s32.totalorder %v507, %v2010
  %vm2016 = vcmp.eq.s32.totalorder %v507, %v2014
  %vm2017 = vcmp.eq.s32.totalorder %v508, %v2010
  %vm2018 = vcmp.eq.s32.totalorder %v508, %v2014
  %v2020 = vlaneseq
  %v2021 = vshrl.u32 %v2020, 7
  %v2022 = vsub.s32 0, %v2021
  %v2023 = vrot.slane %v1947, %v2022
  %v2024 = vlaneseq
  %v2025 = vshrl.u32 %v2024, 7
  %v2026 = vsub.s32 1, %v2025
  %v2027 = vrot.slane %v1947, %v2026
  %v2030 = vsel %vm2015, %v2023, 0.0
  %v2031 = vsel %vm2016, %v2027, 0.0
  %v2032 = vsel %vm2017, %v2023, 0.0
  %v2033 = vsel %vm2018, %v2027, 0.0
  %v2034 = vlaneseq
  %v2035 = vshrl.u32 %v2034, 7
  %v2036 = vsub.s32 0, %v2035
  %v2037 = vrot.slane %v1946, %v2036
  %v2038 = vlaneseq
  %v2039 = vshrl.u32 %v2038, 7
  %v2040 = vsub.s32 1, %v2039
  %v2041 = vrot.slane %v1946, %v2040
  %vm2042 = vcmp.eq.s32.totalorder %v507, %v2037
  %vm2043 = vcmp.eq.s32.totalorder %v507, %v2041
  %vm2044 = vcmp.eq.s32.totalorder %v508, %v2037
  %vm2045 = vcmp.eq.s32.totalorder %v508, %v2041
  %v2047 = vlaneseq
  %v2048 = vshrl.u32 %v2047, 7
  %v2049 = vsub.s32 0, %v2048
  %v2050 = vrot.slane %v1948, %v2049
  %v2051 = vlaneseq
  %v2052 = vshrl.u32 %v2051, 7
  %v2053 = vsub.s32 1, %v2052
  %v2054 = vrot.slane %v1948, %v2053
  %v2057 = vsel %vm2042, %v2050, 0.0
  %v2058 = vsel %vm2043, %v2054, 0.0
  %v2059 = vsel %vm2044, %v2050, 0.0
  %v2060 = vsel %vm2045, %v2054, 0.0
  %v2061 = vadd.f32 %v2030, %v2057
  %v2062 = vadd.f32 %v2031, %v2058
  %v2063 = vadd.f32 %v2032, %v2059
  %v2064 = vadd.f32 %v2033, %v2060
  %v2065 = vadd.f32 %v2003, %v2005
  %v2066 = vrot.slane %v2065, 4
  %v2067 = vadd.f32 %v2065, %v2066
  %v2068 = vrot.slane %v2067, 2
  %v2069 = vadd.f32 %v2067, %v2068
  %v2070 = vrot.slane %v2069, 1
  %v2071 = vadd.f32 %v2069, %v2070
  %v2072 = vadd.f32 %v2004, %v2006
  %v2073 = vrot.slane %v2072, 4
  %v2074 = vadd.f32 %v2072, %v2073
  %v2075 = vrot.slane %v2074, 2
  %v2076 = vadd.f32 %v2074, %v2075
  %v2077 = vrot.slane %v2076, 1
  %v2078 = vadd.f32 %v2076, %v2077
  %v2079 = vadd.f32 %v2061, %v2063
  %v2080 = vrot.slane %v2079, 4
  %v2081 = vadd.f32 %v2079, %v2080
  %v2082 = vrot.slane %v2081, 2
  %v2083 = vadd.f32 %v2081, %v2082
  %v2084 = vrot.slane %v2083, 1
  %v2085 = vadd.f32 %v2083, %v2084
  %v2086 = vadd.f32 %v2062, %v2064
  %v2087 = vrot.slane %v2086, 4
  %v2088 = vadd.f32 %v2086, %v2087
  %v2089 = vrot.slane %v2088, 2
  %v2090 = vadd.f32 %v2088, %v2089
  %v2091 = vrot.slane %v2090, 1
  %v2092 = vadd.f32 %v2090, %v2091
  %v2093 = vmul.f32 %v2071, %v2085
  %v2094 = vmul.f32 %v2078, %v2092
  %vm2095 = vcmp.ge.f32.partialorder %v2093, 0.9999
  %vm2096 = vcmp.ge.f32.partialorder %v2094, 0.9999
  %v2097 = vsel %vm2095, 1, 0
  %v2098 = vsel %vm2096, 1, 0
  %v2099 = vcvt.s32.f32 %v2097
  %v2100 = vcvt.s32.f32 %v2098
  %s2101 = scalar_lea.vmem %s0, 192
  %v2102 = vld [vmem:[%s2101] sm:$0xff]
  %v2103 = vld [vmem:[%s2101 + $0x8] sm:$0xff]
  %v2105 = vsel %vm92, %v2102, 0
  %v2108 = vsel %vm92, %v2103, 0
  %2110 = vmatprep.subr.mxu0 0.0
  %2111 = vmatpush1.msra.mxu0 0.0
  %2112 = vmatprep.subr.mxu0 0.0
  %2113 = vmatpush1.msra.mxu0 0.0
  %2114 = vmatprep.subr.mxu0 0.0
  %2115 = vmatpush1.msra.mxu0 0.0
  %2116 = vmatprep.subr.mxu0 0.0
  %2117 = vmatpush1.msra.mxu0 0.0
  %2118 = vmatprep.subr.mxu0 0.0
  %2119 = vmatpush1.msra.mxu0 0.0
  %2120 = vmatprep.subr.mxu0 0.0
  %2121 = vmatpush1.msra.mxu0 0.0
  %2122 = vmatprep.subr.mxu0 0.0
  %2123 = vmatpush1.msra.mxu0 0.0
  %2124 = vmatprep.subr.mxu0 0.0
  %2125 = vmatpush1.msra.mxu0 0.0
  %2126 = vmatprep.subr.mxu0 0.0
  %2127 = vmatpush1.msra.mxu0 0.0
  %2128 = vmatprep.subr.mxu0 0.0
  %2129 = vmatpush1.msra.mxu0 0.0
  %2130 = vmatprep.subr.mxu0 0.0
  %2131 = vmatpush1.msra.mxu0 0.0
  %2132 = vmatprep.subr.mxu0 0.0
  %2133 = vmatpush1.msra.mxu0 0.0
  %2134 = vmatprep.subr.mxu0 0.0
  %2135 = vmatpush1.msra.mxu0 0.0
  %2136 = vmatprep.subr.mxu0 0.0
  %2137 = vmatpush1.msra.mxu0 0.0
  %2138 = vmatprep.subr.mxu0 %v2006
  %2139 = vmatpush1.msra.mxu0 %v2005
  %2140 = vmatprep.subr.mxu0 %v2004
  %2141 = vmatpush1.msra.mxu0 %v2003
  %2142 = vmatprep.subr.mxu0 0.0
  %2143 = vmatpush2.msra.mxu0 0.0
  %2144 = vmatprep.subr.mxu0 0.0
  %2145 = vmatpush2.msra.mxu0 0.0
  %2146 = vmatprep.subr.mxu0 0.0
  %2147 = vmatpush2.msra.mxu0 0.0
  %2148 = vmatprep.subr.mxu0 0.0
  %2149 = vmatpush2.msra.mxu0 0.0
  %2150 = vmatprep.subr.mxu0 0.0
  %2151 = vmatpush2.msra.mxu0 0.0
  %2152 = vmatprep.subr.mxu0 0.0
  %2153 = vmatpush2.msra.mxu0 0.0
  %2154 = vmatprep.subr.mxu0 0.0
  %2155 = vmatpush2.msra.mxu0 0.0
  %2156 = vmatprep.subr.mxu0 0.0
  %2157 = vmatpush2.msra.mxu0 0.0
  %2158 = vmatprep.subr.mxu0 0.0
  %2159 = vmatpush2.msra.mxu0 0.0
  %2160 = vmatprep.subr.mxu0 0.0
  %2161 = vmatpush2.msra.mxu0 0.0
  %2162 = vmatprep.subr.mxu0 0.0
  %2163 = vmatpush2.msra.mxu0 0.0
  %2164 = vmatprep.subr.mxu0 0.0
  %2165 = vmatpush2.msra.mxu0 0.0
  %2166 = vmatprep.subr.mxu0 0.0
  %2167 = vmatpush2.msra.mxu0 0.0
  %2168 = vmatprep.subr.mxu0 0.0
  %2169 = vmatpush2.msra.mxu0 0.0
  %2170 = vmatprep.subr.mxu0 0.0
  %2171 = vmatpush2.msra.mxu0 0.0
  %2172 = vmatprep.subr.mxu0 0.0
  %2173 = vmatpush2.msra.mxu0 0.0
  %2174 = vmatprep.mubr.f32.mxu0 0.0
  %2175 = vmatmul.mubr.f32.gmra.mxu0 %v2105
  %v2176 = vpop.f32.mrf.mxu0
  %v2177 = vadd.f32 0.0, %v2176
  %v2178 = vpop.f32.mrf.mxu0
  %v2179 = vadd.f32 0.0, %v2178
  %2180 = vmatprep.mubr.f32.mxu0 0.0
  %2181 = vmatmul.mubr.f32.gmra.mxu0 %v2108
  %v2182 = vpop.f32.mrf.mxu0
  %v2183 = vadd.f32 0.0, %v2182
  %v2184 = vpop.f32.mrf.mxu0
  %v2185 = vadd.f32 0.0, %v2184
  %2186 = vdwg.mxu0
  %v2187 = vmul.f32 %v2061, %v2177
  %v2188 = vmul.f32 %v2062, %v2179
  %v2189 = vmul.f32 %v2063, %v2183
  %v2190 = vmul.f32 %v2064, %v2185
  %v2191 = vadd.f32 %v2187, %v2189
  %v2192 = vrot.slane %v2191, 4
  %v2193 = vadd.f32 %v2191, %v2192
  %v2194 = vrot.slane %v2193, 2
  %v2195 = vadd.f32 %v2193, %v2194
  %v2196 = vrot.slane %v2195, 1
  %v2197 = vadd.f32 %v2195, %v2196
  %v2198 = vadd.f32 %v2188, %v2190
  %v2199 = vrot.slane %v2198, 4
  %v2200 = vadd.f32 %v2198, %v2199
  %v2201 = vrot.slane %v2200, 2
  %v2202 = vadd.f32 %v2200, %v2201
  %v2203 = vrot.slane %v2202, 1
  %v2204 = vadd.f32 %v2202, %v2203
  %v2205 = vmul.f32 %v2197, %v2099
  %v2206 = vmul.f32 %v2204, %v2100
  %v2207 = vmul.f32 %v75, %v2205
  %v2208 = vmul.f32 %v76, %v2206
  %v2209 = vmul.f32 %v77, %v2205
  %v2210 = vmul.f32 %v78, %v2206
  %s2211 = scalar_lea.vmem %s0, 208
  %v2212 = vld [vmem:[%s2211] sm:$0xff]
  %v2213 = vld [vmem:[%s2211 + $0x8] sm:$0xff]
  %v2215 = vsel %vm92, %v2212, 0
  %v2218 = vsel %vm92, %v2213, 0
  %2220 = vmatprep.subr.mxu0 0.0
  %2221 = vmatpush1.msra.mxu0 0.0
  %2222 = vmatprep.subr.mxu0 0.0
  %2223 = vmatpush1.msra.mxu0 0.0
  %2224 = vmatprep.subr.mxu0 0.0
  %2225 = vmatpush1.msra.mxu0 0.0
  %2226 = vmatprep.subr.mxu0 0.0
  %2227 = vmatpush1.msra.mxu0 0.0
  %2228 = vmatprep.subr.mxu0 0.0
  %2229 = vmatpush1.msra.mxu0 0.0
  %2230 = vmatprep.subr.mxu0 0.0
  %2231 = vmatpush1.msra.mxu0 0.0
  %2232 = vmatprep.subr.mxu0 0.0
  %2233 = vmatpush1.msra.mxu0 0.0
  %2234 = vmatprep.subr.mxu0 0.0
  %2235 = vmatpush1.msra.mxu0 0.0
  %2236 = vmatprep.subr.mxu0 0.0
  %2237 = vmatpush1.msra.mxu0 0.0
  %2238 = vmatprep.subr.mxu0 0.0
  %2239 = vmatpush1.msra.mxu0 0.0
  %2240 = vmatprep.subr.mxu0 0.0
  %2241 = vmatpush1.msra.mxu0 0.0
  %2242 = vmatprep.subr.mxu0 0.0
  %2243 = vmatpush1.msra.mxu0 0.0
  %2244 = vmatprep.subr.mxu0 0.0
  %2245 = vmatpush1.msra.mxu0 0.0
  %2246 = vmatprep.subr.mxu0 0.0
  %2247 = vmatpush1.msra.mxu0 0.0
  %2248 = vmatprep.subr.mxu0 %v2006
  %2249 = vmatpush1.msra.mxu0 %v2005
  %2250 = vmatprep.subr.mxu0 %v2004
  %2251 = vmatpush1.msra.mxu0 %v2003
  %2252 = vmatprep.subr.mxu0 0.0
  %2253 = vmatpush2.msra.mxu0 0.0
  %2254 = vmatprep.subr.mxu0 0.0
  %2255 = vmatpush2.msra.mxu0 0.0
  %2256 = vmatprep.subr.mxu0 0.0
  %2257 = vmatpush2.msra.mxu0 0.0
  %2258 = vmatprep.subr.mxu0 0.0
  %2259 = vmatpush2.msra.mxu0 0.0
  %2260 = vmatprep.subr.mxu0 0.0
  %2261 = vmatpush2.msra.mxu0 0.0
  %2262 = vmatprep.subr.mxu0 0.0
  %2263 = vmatpush2.msra.mxu0 0.0
  %2264 = vmatprep.subr.mxu0 0.0
  %2265 = vmatpush2.msra.mxu0 0.0
  %2266 = vmatprep.subr.mxu0 0.0
  %2267 = vmatpush2.msra.mxu0 0.0
  %2268 = vmatprep.subr.mxu0 0.0
  %2269 = vmatpush2.msra.mxu0 0.0
  %2270 = vmatprep.subr.mxu0 0.0
  %2271 = vmatpush2.msra.mxu0 0.0
  %2272 = vmatprep.subr.mxu0 0.0
  %2273 = vmatpush2.msra.mxu0 0.0
  %2274 = vmatprep.subr.mxu0 0.0
  %2275 = vmatpush2.msra.mxu0 0.0
  %2276 = vmatprep.subr.mxu0 0.0
  %2277 = vmatpush2.msra.mxu0 0.0
  %2278 = vmatprep.subr.mxu0 0.0
  %2279 = vmatpush2.msra.mxu0 0.0
  %2280 = vmatprep.subr.mxu0 0.0
  %2281 = vmatpush2.msra.mxu0 0.0
  %2282 = vmatprep.subr.mxu0 0.0
  %2283 = vmatpush2.msra.mxu0 0.0
  %2284 = vmatprep.mubr.f32.mxu0 0.0
  %2285 = vmatmul.mubr.f32.gmra.mxu0 %v2215
  %v2286 = vpop.f32.mrf.mxu0
  %v2287 = vadd.f32 0.0, %v2286
  %v2288 = vpop.f32.mrf.mxu0
  %v2289 = vadd.f32 0.0, %v2288
  %2290 = vmatprep.mubr.f32.mxu0 0.0
  %2291 = vmatmul.mubr.f32.gmra.mxu0 %v2218
  %v2292 = vpop.f32.mrf.mxu0
  %v2293 = vadd.f32 0.0, %v2292
  %v2294 = vpop.f32.mrf.mxu0
  %v2295 = vadd.f32 0.0, %v2294
  %2296 = vdwg.mxu0
  %v2297 = vmul.f32 %v2061, %v2287
  %v2298 = vmul.f32 %v2062, %v2289
  %v2299 = vmul.f32 %v2063, %v2293
  %v2300 = vmul.f32 %v2064, %v2295
  %v2301 = vadd.f32 %v2297, %v2299
  %v2302 = vrot.slane %v2301, 4
  %v2303 = vadd.f32 %v2301, %v2302
  %v2304 = vrot.slane %v2303, 2
  %v2305 = vadd.f32 %v2303, %v2304
  %v2306 = vrot.slane %v2305, 1
  %v2307 = vadd.f32 %v2305, %v2306
  %v2308 = vadd.f32 %v2298, %v2300
  %v2309 = vrot.slane %v2308, 4
  %v2310 = vadd.f32 %v2308, %v2309
  %v2311 = vrot.slane %v2310, 2
  %v2312 = vadd.f32 %v2310, %v2311
  %v2313 = vrot.slane %v2312, 1
  %v2314 = vadd.f32 %v2312, %v2313
  %v2315 = vmul.f32 %v2307, %v2099
  %v2316 = vmul.f32 %v2314, %v2100
  %v2317 = vmul.f32 %v75, %v2315
  %v2318 = vmul.f32 %v76, %v2316
  %v2319 = vmul.f32 %v77, %v2315
  %v2320 = vmul.f32 %v78, %v2316
  %2321 = vmatprep.subr.mxu0 0.0
  %2322 = vmatpush1.msra.mxu0 %v929
  %2323 = vmatprep.subr.mxu0 0.0
  %2324 = vmatpush1.msra.mxu0 %v928
  %2325 = vmatprep.subr.mxu0 0.0
  %2326 = vmatpush1.msra.mxu0 %v927
  %2327 = vmatprep.subr.mxu0 0.0
  %2328 = vmatpush1.msra.mxu0 %v926
  %2329 = vmatprep.subr.mxu0 0.0
  %2330 = vmatpush1.msra.mxu0 %v925
  %2331 = vmatprep.subr.mxu0 0.0
  %2332 = vmatpush1.msra.mxu0 %v924
  %2333 = vmatprep.subr.mxu0 0.0
  %2334 = vmatpush1.msra.mxu0 %v923
  %2335 = vmatprep.subr.mxu0 0.0
  %2336 = vmatpush1.msra.mxu0 %v922
  %2337 = vmatprep.subr.mxu0 0.0
  %2338 = vmatpush1.msra.mxu0 %v921
  %2339 = vmatprep.subr.mxu0 0.0
  %2340 = vmatpush1.msra.mxu0 %v920
  %2341 = vmatprep.subr.mxu0 0.0
  %2342 = vmatpush1.msra.mxu0 %v919
  %2343 = vmatprep.subr.mxu0 0.0
  %2344 = vmatpush1.msra.mxu0 %v918
  %2345 = vmatprep.subr.mxu0 0.0
  %2346 = vmatpush1.msra.mxu0 %v917
  %2347 = vmatprep.subr.mxu0 0.0
  %2348 = vmatpush1.msra.mxu0 %v916
  %2349 = vmatprep.subr.mxu0 0.0
  %2350 = vmatpush1.msra.mxu0 %v915
  %2351 = vmatprep.subr.mxu0 0.0
  %2352 = vmatpush1.msra.mxu0 %v914
  %2353 = vmatprep.subr.mxu0 0.0
  %2354 = vmatpush2.msra.mxu0 %v945
  %2355 = vmatprep.subr.mxu0 0.0
  %2356 = vmatpush2.msra.mxu0 %v944
  %2357 = vmatprep.subr.mxu0 0.0
  %2358 = vmatpush2.msra.mxu0 %v943
  %2359 = vmatprep.subr.mxu0 0.0
  %2360 = vmatpush2.msra.mxu0 %v942
  %2361 = vmatprep.subr.mxu0 0.0
  %2362 = vmatpush2.msra.mxu0 %v941
  %2363 = vmatprep.subr.mxu0 0.0
  %2364 = vmatpush2.msra.mxu0 %v940
  %2365 = vmatprep.subr.mxu0 0.0
  %2366 = vmatpush2.msra.mxu0 %v939
  %2367 = vmatprep.subr.mxu0 0.0
  %2368 = vmatpush2.msra.mxu0 %v938
  %2369 = vmatprep.subr.mxu0 0.0
  %2370 = vmatpush2.msra.mxu0 %v937
  %2371 = vmatprep.subr.mxu0 0.0
  %2372 = vmatpush2.msra.mxu0 %v936
  %2373 = vmatprep.subr.mxu0 0.0
  %2374 = vmatpush2.msra.mxu0 %v935
  %2375 = vmatprep.subr.mxu0 0.0
  %2376 = vmatpush2.msra.mxu0 %v934
  %2377 = vmatprep.subr.mxu0 0.0
  %2378 = vmatpush2.msra.mxu0 %v933
  %2379 = vmatprep.subr.mxu0 0.0
  %2380 = vmatpush2.msra.mxu0 %v932
  %2381 = vmatprep.subr.mxu0 0.0
  %2382 = vmatpush2.msra.mxu0 %v931
  %2383 = vmatprep.subr.mxu0 0.0
  %2384 = vmatpush2.msra.mxu0 %v930
  %2385 = vmatprep.mubr.f32.mxu0 %v2318
  %2386 = vmatmul.mubr.f32.gmra.mxu0 %v2317
  %v2387 = vpop.f32.mrf.mxu0
  %v2388 = vadd.f32 0.0, %v2387
  %v2389 = vpop.f32.mrf.mxu0
  %2390 = vmatprep.mubr.f32.mxu0 %v2320
  %2391 = vmatmul.mubr.f32.gmra.mxu0 %v2319
  %v2392 = vpop.f32.mrf.mxu0
  %v2393 = vadd.f32 0.0, %v2392
  %v2394 = vpop.f32.mrf.mxu0
  %2395 = vdwg.mxu0
  %2396 = vmatprep.subr.mxu0 0.0
  %2397 = vmatpush1.msra.mxu0 %v786
  %2398 = vmatprep.subr.mxu0 0.0
  %2399 = vmatpush1.msra.mxu0 %v785
  %2400 = vmatprep.subr.mxu0 0.0
  %2401 = vmatpush1.msra.mxu0 %v784
  %2402 = vmatprep.subr.mxu0 0.0
  %2403 = vmatpush1.msra.mxu0 %v783
  %2404 = vmatprep.subr.mxu0 0.0
  %2405 = vmatpush1.msra.mxu0 %v782
  %2406 = vmatprep.subr.mxu0 0.0
  %2407 = vmatpush1.msra.mxu0 %v781
  %2408 = vmatprep.subr.mxu0 0.0
  %2409 = vmatpush1.msra.mxu0 %v780
  %2410 = vmatprep.subr.mxu0 0.0
  %2411 = vmatpush1.msra.mxu0 %v779
  %2412 = vmatprep.subr.mxu0 0.0
  %2413 = vmatpush1.msra.mxu0 %v778
  %2414 = vmatprep.subr.mxu0 0.0
  %2415 = vmatpush1.msra.mxu0 %v777
  %2416 = vmatprep.subr.mxu0 0.0
  %2417 = vmatpush1.msra.mxu0 %v776
  %2418 = vmatprep.subr.mxu0 0.0
  %2419 = vmatpush1.msra.mxu0 %v775
  %2420 = vmatprep.subr.mxu0 0.0
  %2421 = vmatpush1.msra.mxu0 %v774
  %2422 = vmatprep.subr.mxu0 0.0
  %2423 = vmatpush1.msra.mxu0 %v773
  %2424 = vmatprep.subr.mxu0 0.0
  %2425 = vmatpush1.msra.mxu0 %v772
  %2426 = vmatprep.subr.mxu0 0.0
  %2427 = vmatpush1.msra.mxu0 %v771
  %2428 = vmatprep.subr.mxu0 0.0
  %2429 = vmatpush2.msra.mxu0 %v802
  %2430 = vmatprep.subr.mxu0 0.0
  %2431 = vmatpush2.msra.mxu0 %v801
  %2432 = vmatprep.subr.mxu0 0.0
  %2433 = vmatpush2.msra.mxu0 %v800
  %2434 = vmatprep.subr.mxu0 0.0
  %2435 = vmatpush2.msra.mxu0 %v799
  %2436 = vmatprep.subr.mxu0 0.0
  %2437 = vmatpush2.msra.mxu0 %v798
  %2438 = vmatprep.subr.mxu0 0.0
  %2439 = vmatpush2.msra.mxu0 %v797
  %2440 = vmatprep.subr.mxu0 0.0
  %2441 = vmatpush2.msra.mxu0 %v796
  %2442 = vmatprep.subr.mxu0 0.0
  %2443 = vmatpush2.msra.mxu0 %v795
  %2444 = vmatprep.subr.mxu0 0.0
  %2445 = vmatpush2.msra.mxu0 %v794
  %2446 = vmatprep.subr.mxu0 0.0
  %2447 = vmatpush2.msra.mxu0 %v793
  %2448 = vmatprep.subr.mxu0 0.0
  %2449 = vmatpush2.msra.mxu0 %v792
  %2450 = vmatprep.subr.mxu0 0.0
  %2451 = vmatpush2.msra.mxu0 %v791
  %2452 = vmatprep.subr.mxu0 0.0
  %2453 = vmatpush2.msra.mxu0 %v790
  %2454 = vmatprep.subr.mxu0 0.0
  %2455 = vmatpush2.msra.mxu0 %v789
  %2456 = vmatprep.subr.mxu0 0.0
  %2457 = vmatpush2.msra.mxu0 %v788
  %2458 = vmatprep.subr.mxu0 0.0
  %2459 = vmatpush2.msra.mxu0 %v787
  %2460 = vmatprep.mubr.f32.mxu0 %v2208
  %2461 = vmatmul.mubr.f32.gmra.mxu0 %v2207
  %v2462 = vpop.f32.mrf.mxu0
  %v2463 = vadd.f32 %v2388, %v2462
  %v2464 = vpop.f32.mrf.mxu0
  %2465 = vmatprep.mubr.f32.mxu0 %v2210
  %2466 = vmatmul.mubr.f32.gmra.mxu0 %v2209
  %v2467 = vpop.f32.mrf.mxu0
  %v2468 = vadd.f32 %v2393, %v2467
  %v2469 = vpop.f32.mrf.mxu0
  %2470 = vdwg.mxu0
  %s2471 = scalar_lea.vmem %s0, 224
  %v2472 = vld [vmem:[%s2471] sm:$0xff]
  %v2473 = vld [vmem:[%s2471 + $0x8] sm:$0xff]
  %v2475 = vsel %vm92, %v2472, 0
  %v2478 = vsel %vm92, %v2473, 0
  %2480 = vmatprep.subr.mxu0 0.0
  %2481 = vmatpush1.msra.mxu0 0.0
  %2482 = vmatprep.subr.mxu0 0.0
  %2483 = vmatpush1.msra.mxu0 0.0
  %2484 = vmatprep.subr.mxu0 0.0
  %2485 = vmatpush1.msra.mxu0 0.0
  %2486 = vmatprep.subr.mxu0 0.0
  %2487 = vmatpush1.msra.mxu0 0.0
  %2488 = vmatprep.subr.mxu0 0.0
  %2489 = vmatpush1.msra.mxu0 0.0
  %2490 = vmatprep.subr.mxu0 0.0
  %2491 = vmatpush1.msra.mxu0 0.0
  %2492 = vmatprep.subr.mxu0 0.0
  %2493 = vmatpush1.msra.mxu0 0.0
  %2494 = vmatprep.subr.mxu0 0.0
  %2495 = vmatpush1.msra.mxu0 0.0
  %2496 = vmatprep.subr.mxu0 0.0
  %2497 = vmatpush1.msra.mxu0 0.0
  %2498 = vmatprep.subr.mxu0 0.0
  %2499 = vmatpush1.msra.mxu0 0.0
  %2500 = vmatprep.subr.mxu0 0.0
  %2501 = vmatpush1.msra.mxu0 0.0
  %2502 = vmatprep.subr.mxu0 0.0
  %2503 = vmatpush1.msra.mxu0 0.0
  %2504 = vmatprep.subr.mxu0 0.0
  %2505 = vmatpush1.msra.mxu0 0.0
  %2506 = vmatprep.subr.mxu0 0.0
  %2507 = vmatpush1.msra.mxu0 0.0
  %2508 = vmatprep.subr.mxu0 %v2006
  %2509 = vmatpush1.msra.mxu0 %v2005
  %2510 = vmatprep.subr.mxu0 %v2004
  %2511 = vmatpush1.msra.mxu0 %v2003
  %2512 = vmatprep.subr.mxu0 0.0
  %2513 = vmatpush2.msra.mxu0 0.0
  %2514 = vmatprep.subr.mxu0 0.0
  %2515 = vmatpush2.msra.mxu0 0.0
  %2516 = vmatprep.subr.mxu0 0.0
  %2517 = vmatpush2.msra.mxu0 0.0
  %2518 = vmatprep.subr.mxu0 0.0
  %2519 = vmatpush2.msra.mxu0 0.0
  %2520 = vmatprep.subr.mxu0 0.0
  %2521 = vmatpush2.msra.mxu0 0.0
  %2522 = vmatprep.subr.mxu0 0.0
  %2523 = vmatpush2.msra.mxu0 0.0
  %2524 = vmatprep.subr.mxu0 0.0
  %2525 = vmatpush2.msra.mxu0 0.0
  %2526 = vmatprep.subr.mxu0 0.0
  %2527 = vmatpush2.msra.mxu0 0.0
  %2528 = vmatprep.subr.mxu0 0.0
  %2529 = vmatpush2.msra.mxu0 0.0
  %2530 = vmatprep.subr.mxu0 0.0
  %2531 = vmatpush2.msra.mxu0 0.0
  %2532 = vmatprep.subr.mxu0 0.0
  %2533 = vmatpush2.msra.mxu0 0.0
  %2534 = vmatprep.subr.mxu0 0.0
  %2535 = vmatpush2.msra.mxu0 0.0
  %2536 = vmatprep.subr.mxu0 0.0
  %2537 = vmatpush2.msra.mxu0 0.0
  %2538 = vmatprep.subr.mxu0 0.0
  %2539 = vmatpush2.msra.mxu0 0.0
  %2540 = vmatprep.subr.mxu0 0.0
  %2541 = vmatpush2.msra.mxu0 0.0
  %2542 = vmatprep.subr.mxu0 0.0
  %2543 = vmatpush2.msra.mxu0 0.0
  %2544 = vmatprep.mubr.f32.mxu0 0.0
  %2545 = vmatmul.mubr.f32.gmra.mxu0 %v2475
  %v2546 = vpop.f32.mrf.mxu0
  %v2547 = vadd.f32 0.0, %v2546
  %v2548 = vpop.f32.mrf.mxu0
  %v2549 = vadd.f32 0.0, %v2548
  %2550 = vmatprep.mubr.f32.mxu0 0.0
  %2551 = vmatmul.mubr.f32.gmra.mxu0 %v2478
  %v2552 = vpop.f32.mrf.mxu0
  %v2553 = vadd.f32 0.0, %v2552
  %v2554 = vpop.f32.mrf.mxu0
  %v2555 = vadd.f32 0.0, %v2554
  %2556 = vdwg.mxu0
  %v2557 = vmul.f32 %v2061, %v2547
  %v2558 = vmul.f32 %v2062, %v2549
  %v2559 = vmul.f32 %v2063, %v2553
  %v2560 = vmul.f32 %v2064, %v2555
  %v2561 = vadd.f32 %v2557, %v2559
  %v2562 = vrot.slane %v2561, 4
  %v2563 = vadd.f32 %v2561, %v2562
  %v2564 = vrot.slane %v2563, 2
  %v2565 = vadd.f32 %v2563, %v2564
  %v2566 = vrot.slane %v2565, 1
  %v2567 = vadd.f32 %v2565, %v2566
  %v2568 = vadd.f32 %v2558, %v2560
  %v2569 = vrot.slane %v2568, 4
  %v2570 = vadd.f32 %v2568, %v2569
  %v2571 = vrot.slane %v2570, 2
  %v2572 = vadd.f32 %v2570, %v2571
  %v2573 = vrot.slane %v2572, 1
  %v2574 = vadd.f32 %v2572, %v2573
  %v2575 = vmul.f32 %v2567, %v2099
  %v2576 = vmul.f32 %v2574, %v2100
  %v2577 = vmul.f32 %v75, %v2575
  %v2578 = vmul.f32 %v76, %v2576
  %v2579 = vmul.f32 %v77, %v2575
  %v2580 = vmul.f32 %v78, %v2576
  %2581 = vmatprep.subr.mxu0 0.0
  %2582 = vmatpush1.msra.mxu0 %v1222
  %2583 = vmatprep.subr.mxu0 0.0
  %2584 = vmatpush1.msra.mxu0 %v1221
  %2585 = vmatprep.subr.mxu0 0.0
  %2586 = vmatpush1.msra.mxu0 %v1220
  %2587 = vmatprep.subr.mxu0 0.0
  %2588 = vmatpush1.msra.mxu0 %v1219
  %2589 = vmatprep.subr.mxu0 0.0
  %2590 = vmatpush1.msra.mxu0 %v1218
  %2591 = vmatprep.subr.mxu0 0.0
  %2592 = vmatpush1.msra.mxu0 %v1217
  %2593 = vmatprep.subr.mxu0 0.0
  %2594 = vmatpush1.msra.mxu0 %v1216
  %2595 = vmatprep.subr.mxu0 0.0
  %2596 = vmatpush1.msra.mxu0 %v1215
  %2597 = vmatprep.subr.mxu0 0.0
  %2598 = vmatpush1.msra.mxu0 %v1214
  %2599 = vmatprep.subr.mxu0 0.0
  %2600 = vmatpush1.msra.mxu0 %v1213
  %2601 = vmatprep.subr.mxu0 0.0
  %2602 = vmatpush1.msra.mxu0 %v1212
  %2603 = vmatprep.subr.mxu0 0.0
  %2604 = vmatpush1.msra.mxu0 %v1211
  %2605 = vmatprep.subr.mxu0 0.0
  %2606 = vmatpush1.msra.mxu0 %v1210
  %2607 = vmatprep.subr.mxu0 0.0
  %2608 = vmatpush1.msra.mxu0 %v1209
  %2609 = vmatprep.subr.mxu0 0.0
  %2610 = vmatpush1.msra.mxu0 %v1208
  %2611 = vmatprep.subr.mxu0 0.0
  %2612 = vmatpush1.msra.mxu0 %v1207
  %2613 = vmatprep.subr.mxu0 0.0
  %2614 = vmatpush2.msra.mxu0 %v1238
  %2615 = vmatprep.subr.mxu0 0.0
  %2616 = vmatpush2.msra.mxu0 %v1237
  %2617 = vmatprep.subr.mxu0 0.0
  %2618 = vmatpush2.msra.mxu0 %v1236
  %2619 = vmatprep.subr.mxu0 0.0
  %2620 = vmatpush2.msra.mxu0 %v1235
  %2621 = vmatprep.subr.mxu0 0.0
  %2622 = vmatpush2.msra.mxu0 %v1234
  %2623 = vmatprep.subr.mxu0 0.0
  %2624 = vmatpush2.msra.mxu0 %v1233
  %2625 = vmatprep.subr.mxu0 0.0
  %2626 = vmatpush2.msra.mxu0 %v1232
  %2627 = vmatprep.subr.mxu0 0.0
  %2628 = vmatpush2.msra.mxu0 %v1231
  %2629 = vmatprep.subr.mxu0 0.0
  %2630 = vmatpush2.msra.mxu0 %v1230
  %2631 = vmatprep.subr.mxu0 0.0
  %2632 = vmatpush2.msra.mxu0 %v1229
  %2633 = vmatprep.subr.mxu0 0.0
  %2634 = vmatpush2.msra.mxu0 %v1228
  %2635 = vmatprep.subr.mxu0 0.0
  %2636 = vmatpush2.msra.mxu0 %v1227
  %2637 = vmatprep.subr.mxu0 0.0
  %2638 = vmatpush2.msra.mxu0 %v1226
  %2639 = vmatprep.subr.mxu0 0.0
  %2640 = vmatpush2.msra.mxu0 %v1225
  %2641 = vmatprep.subr.mxu0 0.0
  %2642 = vmatpush2.msra.mxu0 %v1224
  %2643 = vmatprep.subr.mxu0 0.0
  %2644 = vmatpush2.msra.mxu0 %v1223
  %2645 = vmatprep.mubr.f32.mxu0 %v2578
  %2646 = vmatmul.mubr.f32.gmra.mxu0 %v2577
  %v2647 = vpop.f32.mrf.mxu0
  %v2648 = vadd.f32 0.0, %v2647
  %v2649 = vpop.f32.mrf.mxu0
  %2650 = vmatprep.mubr.f32.mxu0 %v2580
  %2651 = vmatmul.mubr.f32.gmra.mxu0 %v2579
  %v2652 = vpop.f32.mrf.mxu0
  %v2653 = vadd.f32 0.0, %v2652
  %v2654 = vpop.f32.mrf.mxu0
  %2655 = vdwg.mxu0
  %v2656 = vadd.f32 %v2463, %v2648
  %v2657 = vadd.f32 %v2468, %v2653
  %s2658 = scalar_lea.vmem %s0, 240
  %v2659 = vld [vmem:[%s2658] sm:$0xff]
  %v2660 = vld [vmem:[%s2658 + $0x8] sm:$0xff]
  %v2662 = vsel %vm92, %v2659, 0
  %v2665 = vsel %vm92, %v2660, 0
  %2667 = vmatprep.subr.mxu0 0.0
  %2668 = vmatpush1.msra.mxu0 0.0
  %2669 = vmatprep.subr.mxu0 0.0
  %2670 = vmatpush1.msra.mxu0 0.0
  %2671 = vmatprep.subr.mxu0 0.0
  %2672 = vmatpush1.msra.mxu0 0.0
  %2673 = vmatprep.subr.mxu0 0.0
  %2674 = vmatpush1.msra.mxu0 0.0
  %2675 = vmatprep.subr.mxu0 0.0
  %2676 = vmatpush1.msra.mxu0 0.0
  %2677 = vmatprep.subr.mxu0 0.0
  %2678 = vmatpush1.msra.mxu0 0.0
  %2679 = vmatprep.subr.mxu0 0.0
  %2680 = vmatpush1.msra.mxu0 0.0
  %2681 = vmatprep.subr.mxu0 0.0
  %2682 = vmatpush1.msra.mxu0 0.0
  %2683 = vmatprep.subr.mxu0 0.0
  %2684 = vmatpush1.msra.mxu0 0.0
  %2685 = vmatprep.subr.mxu0 0.0
  %2686 = vmatpush1.msra.mxu0 0.0
  %2687 = vmatprep.subr.mxu0 0.0
  %2688 = vmatpush1.msra.mxu0 0.0
  %2689 = vmatprep.subr.mxu0 0.0
  %2690 = vmatpush1.msra.mxu0 0.0
  %2691 = vmatprep.subr.mxu0 0.0
  %2692 = vmatpush1.msra.mxu0 0.0
  %2693 = vmatprep.subr.mxu0 0.0
  %2694 = vmatpush1.msra.mxu0 0.0
  %2695 = vmatprep.subr.mxu0 %v2006
  %2696 = vmatpush1.msra.mxu0 %v2005
  %2697 = vmatprep.subr.mxu0 %v2004
  %2698 = vmatpush1.msra.mxu0 %v2003
  %2699 = vmatprep.subr.mxu0 0.0
  %2700 = vmatpush2.msra.mxu0 0.0
  %2701 = vmatprep.subr.mxu0 0.0
  %2702 = vmatpush2.msra.mxu0 0.0
  %2703 = vmatprep.subr.mxu0 0.0
  %2704 = vmatpush2.msra.mxu0 0.0
  %2705 = vmatprep.subr.mxu0 0.0
  %2706 = vmatpush2.msra.mxu0 0.0
  %2707 = vmatprep.subr.mxu0 0.0
  %2708 = vmatpush2.msra.mxu0 0.0
  %2709 = vmatprep.subr.mxu0 0.0
  %2710 = vmatpush2.msra.mxu0 0.0
  %2711 = vmatprep.subr.mxu0 0.0
  %2712 = vmatpush2.msra.mxu0 0.0
  %2713 = vmatprep.subr.mxu0 0.0
  %2714 = vmatpush2.msra.mxu0 0.0
  %2715 = vmatprep.subr.mxu0 0.0
  %2716 = vmatpush2.msra.mxu0 0.0
  %2717 = vmatprep.subr.mxu0 0.0
  %2718 = vmatpush2.msra.mxu0 0.0
  %2719 = vmatprep.subr.mxu0 0.0
  %2720 = vmatpush2.msra.mxu0 0.0
  %2721 = vmatprep.subr.mxu0 0.0
  %2722 = vmatpush2.msra.mxu0 0.0
  %2723 = vmatprep.subr.mxu0 0.0
  %2724 = vmatpush2.msra.mxu0 0.0
  %2725 = vmatprep.subr.mxu0 0.0
  %2726 = vmatpush2.msra.mxu0 0.0
  %2727 = vmatprep.subr.mxu0 0.0
  %2728 = vmatpush2.msra.mxu0 0.0
  %2729 = vmatprep.subr.mxu0 0.0
  %2730 = vmatpush2.msra.mxu0 0.0
  %2731 = vmatprep.mubr.f32.mxu0 0.0
  %2732 = vmatmul.mubr.f32.gmra.mxu0 %v2662
  %v2733 = vpop.f32.mrf.mxu0
  %v2734 = vadd.f32 0.0, %v2733
  %v2735 = vpop.f32.mrf.mxu0
  %v2736 = vadd.f32 0.0, %v2735
  %2737 = vmatprep.mubr.f32.mxu0 0.0
  %2738 = vmatmul.mubr.f32.gmra.mxu0 %v2665
  %v2739 = vpop.f32.mrf.mxu0
  %v2740 = vadd.f32 0.0, %v2739
  %v2741 = vpop.f32.mrf.mxu0
  %v2742 = vadd.f32 0.0, %v2741
  %2743 = vdwg.mxu0
  %v2744 = vmul.f32 %v2061, %v2734
  %v2745 = vmul.f32 %v2062, %v2736
  %v2746 = vmul.f32 %v2063, %v2740
  %v2747 = vmul.f32 %v2064, %v2742
  %v2748 = vadd.f32 %v2744, %v2746
  %v2749 = vrot.slane %v2748, 4
  %v2750 = vadd.f32 %v2748, %v2749
  %v2751 = vrot.slane %v2750, 2
  %v2752 = vadd.f32 %v2750, %v2751
  %v2753 = vrot.slane %v2752, 1
  %v2754 = vadd.f32 %v2752, %v2753
  %v2755 = vadd.f32 %v2745, %v2747
  %v2756 = vrot.slane %v2755, 4
  %v2757 = vadd.f32 %v2755, %v2756
  %v2758 = vrot.slane %v2757, 2
  %v2759 = vadd.f32 %v2757, %v2758
  %v2760 = vrot.slane %v2759, 1
  %v2761 = vadd.f32 %v2759, %v2760
  %v2762 = vmul.f32 %v2754, %v2099
  %v2763 = vmul.f32 %v2761, %v2100
  %v2764 = vmul.f32 %v75, %v2762
  %v2765 = vmul.f32 %v76, %v2763
  %v2766 = vmul.f32 %v77, %v2762
  %v2767 = vmul.f32 %v78, %v2763
  %2768 = vmatprep.subr.mxu0 0.0
  %2769 = vmatpush1.msra.mxu0 %v1442
  %2770 = vmatprep.subr.mxu0 0.0
  %2771 = vmatpush1.msra.mxu0 %v1441
  %2772 = vmatprep.subr.mxu0 0.0
  %2773 = vmatpush1.msra.mxu0 %v1440
  %2774 = vmatprep.subr.mxu0 0.0
  %2775 = vmatpush1.msra.mxu0 %v1439
  %2776 = vmatprep.subr.mxu0 0.0
  %2777 = vmatpush1.msra.mxu0 %v1438
  %2778 = vmatprep.subr.mxu0 0.0
  %2779 = vmatpush1.msra.mxu0 %v1437
  %2780 = vmatprep.subr.mxu0 0.0
  %2781 = vmatpush1.msra.mxu0 %v1436
  %2782 = vmatprep.subr.mxu0 0.0
  %2783 = vmatpush1.msra.mxu0 %v1435
  %2784 = vmatprep.subr.mxu0 0.0
  %2785 = vmatpush1.msra.mxu0 %v1434
  %2786 = vmatprep.subr.mxu0 0.0
  %2787 = vmatpush1.msra.mxu0 %v1433
  %2788 = vmatprep.subr.mxu0 0.0
  %2789 = vmatpush1.msra.mxu0 %v1432
  %2790 = vmatprep.subr.mxu0 0.0
  %2791 = vmatpush1.msra.mxu0 %v1431
  %2792 = vmatprep.subr.mxu0 0.0
  %2793 = vmatpush1.msra.mxu0 %v1430
  %2794 = vmatprep.subr.mxu0 0.0
  %2795 = vmatpush1.msra.mxu0 %v1429
  %2796 = vmatprep.subr.mxu0 0.0
  %2797 = vmatpush1.msra.mxu0 %v1428
  %2798 = vmatprep.subr.mxu0 0.0
  %2799 = vmatpush1.msra.mxu0 %v1427
  %2800 = vmatprep.subr.mxu0 0.0
  %2801 = vmatpush2.msra.mxu0 %v1458
  %2802 = vmatprep.subr.mxu0 0.0
  %2803 = vmatpush2.msra.mxu0 %v1457
  %2804 = vmatprep.subr.mxu0 0.0
  %2805 = vmatpush2.msra.mxu0 %v1456
  %2806 = vmatprep.subr.mxu0 0.0
  %2807 = vmatpush2.msra.mxu0 %v1455
  %2808 = vmatprep.subr.mxu0 0.0
  %2809 = vmatpush2.msra.mxu0 %v1454
  %2810 = vmatprep.subr.mxu0 0.0
  %2811 = vmatpush2.msra.mxu0 %v1453
  %2812 = vmatprep.subr.mxu0 0.0
  %2813 = vmatpush2.msra.mxu0 %v1452
  %2814 = vmatprep.subr.mxu0 0.0
  %2815 = vmatpush2.msra.mxu0 %v1451
  %2816 = vmatprep.subr.mxu0 0.0
  %2817 = vmatpush2.msra.mxu0 %v1450
  %2818 = vmatprep.subr.mxu0 0.0
  %2819 = vmatpush2.msra.mxu0 %v1449
  %2820 = vmatprep.subr.mxu0 0.0
  %2821 = vmatpush2.msra.mxu0 %v1448
  %2822 = vmatprep.subr.mxu0 0.0
  %2823 = vmatpush2.msra.mxu0 %v1447
  %2824 = vmatprep.subr.mxu0 0.0
  %2825 = vmatpush2.msra.mxu0 %v1446
  %2826 = vmatprep.subr.mxu0 0.0
  %2827 = vmatpush2.msra.mxu0 %v1445
  %2828 = vmatprep.subr.mxu0 0.0
  %2829 = vmatpush2.msra.mxu0 %v1444
  %2830 = vmatprep.subr.mxu0 0.0
  %2831 = vmatpush2.msra.mxu0 %v1443
  %2832 = vmatprep.mubr.f32.mxu0 %v2765
  %2833 = vmatmul.mubr.f32.gmra.mxu0 %v2764
  %v2834 = vpop.f32.mrf.mxu0
  %v2835 = vadd.f32 0.0, %v2834
  %v2836 = vpop.f32.mrf.mxu0
  %2837 = vmatprep.mubr.f32.mxu0 %v2767
  %2838 = vmatmul.mubr.f32.gmra.mxu0 %v2766
  %v2839 = vpop.f32.mrf.mxu0
  %v2840 = vadd.f32 0.0, %v2839
  %v2841 = vpop.f32.mrf.mxu0
  %2842 = vdwg.mxu0
  %v2843 = vadd.f32 %v2656, %v2835
  %v2844 = vadd.f32 %v2657, %v2840
  %2847 = vrot.lane.b32.xlu0 %v1874, 64
  %v2848 = vpop.permute.xlu0 %2847
  %2849 = vrot.lane.b32.xlu0 %v1875, 64
  %v2850 = vpop.permute.xlu0 %2849
  %vm2853 = vcmask 523264
  %v2854 = vsel %vm2853, %v431, %v2848
  %v2855 = vsel %vm2853, %v432, %v2850
  %2858 = vrot.lane.b32.xlu0 %v2843, 64
  %v2859 = vpop.permute.xlu0 %2858
  %2860 = vrot.lane.b32.xlu0 %v2844, 64
  %v2861 = vpop.permute.xlu0 %2860
  %v2864 = vsel %vm2853, %v1534, %v2859
  %v2865 = vsel %vm2853, %v1535, %v2861
  %vm2870 = vcmask 1046528
  %v2871 = vrot.slane %v2854, 1
  %v2872 = vrot.slane %v2864, 1
  %v2873 = vrot.slane %v2855, 1
  %v2874 = vsel %vm2870, %v2871, %v2873
  %v2875 = vrot.slane %v2865, 1
  %v2876 = vsel %vm2870, %v2872, %v2875
  %v2883 = vsel %vm2870, 0.0, %v2871
  %v2884 = vsel %vm2870, 0.0, %v2872
  %v2885 = vsel %vm2870, %v2873, 0.0
  %v2886 = vsel %vm2870, %v2875, 0.0
  %v2891 = vrot.slane %v2883, 1
  %v2892 = vrot.slane %v2874, 1
  %v2893 = vsel %vm2870, %v2891, %v2892
  %v2894 = vrot.slane %v2884, 1
  %v2895 = vrot.slane %v2876, 1
  %v2896 = vsel %vm2870, %v2894, %v2895
  %v2897 = vrot.slane %v2885, 1
  %v2898 = vsel %vm2870, %v2892, %v2897
  %v2899 = vrot.slane %v2886, 1
  %v2900 = vsel %vm2870, %v2895, %v2899
  %vm2905 = vcmask 1045504
  %v2906 = vrot.slane %v2883, 2
  %v2907 = vrot.slane %v2874, 2
  %v2908 = vsel %vm2905, %v2906, %v2907
  %v2909 = vrot.slane %v2884, 2
  %v2910 = vrot.slane %v2876, 2
  %v2911 = vsel %vm2905, %v2909, %v2910
  %v2912 = vrot.slane %v2885, 2
  %v2913 = vsel %vm2905, %v2907, %v2912
  %v2914 = vrot.slane %v2886, 2
  %v2915 = vsel %vm2905, %v2910, %v2914
  %vm2920 = vcmask 1044480
  %v2921 = vrot.slane %v2883, 3
  %v2922 = vrot.slane %v2874, 3
  %v2923 = vsel %vm2920, %v2921, %v2922
  %v2924 = vrot.slane %v2884, 3
  %v2925 = vrot.slane %v2876, 3
  %v2926 = vsel %vm2920, %v2924, %v2925
  %v2927 = vrot.slane %v2885, 3
  %v2928 = vsel %vm2920, %v2922, %v2927
  %v2929 = vrot.slane %v2886, 3
  %v2930 = vsel %vm2920, %v2925, %v2929
  %vm2935 = vcmask 1043456
  %v2936 = vrot.slane %v2883, 4
  %v2937 = vrot.slane %v2874, 4
  %v2938 = vsel %vm2935, %v2936, %v2937
  %v2939 = vrot.slane %v2884, 4
  %v2940 = vrot.slane %v2876, 4
  %v2941 = vsel %vm2935, %v2939, %v2940
  %v2942 = vrot.slane %v2885, 4
  %v2943 = vsel %vm2935, %v2937, %v2942
  %v2944 = vrot.slane %v2886, 4
  %v2945 = vsel %vm2935, %v2940, %v2944
  %vm2950 = vcmask 1042432
  %v2951 = vrot.slane %v2883, 5
  %v2952 = vrot.slane %v2874, 5
  %v2953 = vsel %vm2950, %v2951, %v2952
  %v2954 = vrot.slane %v2884, 5
  %v2955 = vrot.slane %v2876, 5
  %v2956 = vsel %vm2950, %v2954, %v2955
  %v2957 = vrot.slane %v2885, 5
  %v2958 = vsel %vm2950, %v2952, %v2957
  %v2959 = vrot.slane %v2886, 5
  %v2960 = vsel %vm2950, %v2955, %v2959
  %vm2965 = vcmask 1041408
  %v2966 = vrot.slane %v2883, 6
  %v2967 = vrot.slane %v2874, 6
  %v2968 = vsel %vm2965, %v2966, %v2967
  %v2969 = vrot.slane %v2884, 6
  %v2970 = vrot.slane %v2876, 6
  %v2971 = vsel %vm2965, %v2969, %v2970
  %v2972 = vrot.slane %v2885, 6
  %v2973 = vsel %vm2965, %v2967, %v2972
  %v2974 = vrot.slane %v2886, 6
  %v2975 = vsel %vm2965, %v2970, %v2974
  %vm2980 = vcmask 1040384
  %v2981 = vrot.slane %v2883, 7
  %v2982 = vrot.slane %v2874, 7
  %v2983 = vsel %vm2980, %v2981, %v2982
  %v2984 = vrot.slane %v2884, 7
  %v2985 = vrot.slane %v2876, 7
  %v2986 = vsel %vm2980, %v2984, %v2985
  %v2987 = vrot.slane %v2885, 7
  %v2988 = vsel %vm2980, %v2982, %v2987
  %v2989 = vrot.slane %v2886, 7
  %v2990 = vsel %vm2980, %v2985, %v2989
  %v2996 = vrot.slane 0.0, 1
  %v2997 = vsel %vm2870, %v2897, %v2996
  %v2998 = vsel %vm2870, %v2899, %v2996
  %v3001 = vrot.slane 0.0, 2
  %v3002 = vsel %vm2905, %v2912, %v3001
  %v3003 = vsel %vm2905, %v2914, %v3001
  %v3006 = vrot.slane 0.0, 3
  %v3007 = vsel %vm2920, %v2927, %v3006
  %v3008 = vsel %vm2920, %v2929, %v3006
  %v3011 = vrot.slane 0.0, 4
  %v3012 = vsel %vm2935, %v2942, %v3011
  %v3013 = vsel %vm2935, %v2944, %v3011
  %v3016 = vrot.slane 0.0, 5
  %v3017 = vsel %vm2950, %v2957, %v3016
  %v3018 = vsel %vm2950, %v2959, %v3016
  %v3021 = vrot.slane 0.0, 6
  %v3022 = vsel %vm2965, %v2972, %v3021
  %v3023 = vsel %vm2965, %v2974, %v3021
  %v3026 = vld [vmem:[%s6] sm:$0xf]
  %v3027 = vld [vmem:[%s6 + $0x4] sm:$0xf]
  %v3028 = vld [vmem:[%s6 + $0x8] sm:$0xf]
  %v3029 = vld [vmem:[%s6 + $0xc] sm:$0xf]
  %v3030 = vld [vmem:[%s6 + $0x10] sm:$0xf]
  %v3031 = vld [vmem:[%s6 + $0x14] sm:$0xf]
  %v3032 = vld [vmem:[%s6 + $0x18] sm:$0xf]
  %v3033 = vld [vmem:[%s6 + $0x1c] sm:$0xf]
  %v3034 = vld [vmem:[%s6 + $0x20] sm:$0xf]
  %v3035 = vld [vmem:[%s6 + $0x24] sm:$0xf]
  %v3036 = vld [vmem:[%s6 + $0x28] sm:$0xf]
  %v3037 = vld [vmem:[%s6 + $0x2c] sm:$0xf]
  %v3038 = vld [vmem:[%s6 + $0x30] sm:$0xf]
  %v3039 = vld [vmem:[%s6 + $0x34] sm:$0xf]
  %v3040 = vld [vmem:[%s6 + $0x38] sm:$0xf]
  %v3041 = vld [vmem:[%s6 + $0x3c] sm:$0xf]
  %v3042 = vld [vmem:[%s6 + $0x40] sm:$0xf]
  %v3043 = vld [vmem:[%s6 + $0x44] sm:$0xf]
  %v3044 = vld [vmem:[%s6 + $0x48] sm:$0xf]
  %v3045 = vld [vmem:[%s6 + $0x4c] sm:$0xf]
  %v3046 = vld [vmem:[%s6 + $0x50] sm:$0xf]
  %v3047 = vld [vmem:[%s6 + $0x54] sm:$0xf]
  %v3048 = vld [vmem:[%s6 + $0x58] sm:$0xf]
  %v3049 = vld [vmem:[%s6 + $0x5c] sm:$0xf]
  %v3050 = vld [vmem:[%s6 + $0x60] sm:$0xf]
  %v3051 = vld [vmem:[%s6 + $0x64] sm:$0xf]
  %v3052 = vld [vmem:[%s6 + $0x68] sm:$0xf]
  %v3053 = vld [vmem:[%s6 + $0x6c] sm:$0xf]
  %v3054 = vld [vmem:[%s6 + $0x70] sm:$0xf]
  %v3055 = vld [vmem:[%s6 + $0x74] sm:$0xf]
  %v3056 = vld [vmem:[%s6 + $0x78] sm:$0xf]
  %v3057 = vld [vmem:[%s6 + $0x7c] sm:$0xf]
  %v3058 = vld [vmem:[%s6 + $0x80] sm:$0xf]
  %v3059 = vld [vmem:[%s6 + $0x84] sm:$0xf]
  %v3060 = vld [vmem:[%s6 + $0x88] sm:$0xf]
  %v3061 = vld [vmem:[%s6 + $0x8c] sm:$0xf]
  %v3062 = vld [vmem:[%s6 + $0x90] sm:$0xf]
  %v3063 = vld [vmem:[%s6 + $0x94] sm:$0xf]
  %v3064 = vld [vmem:[%s6 + $0x98] sm:$0xf]
  %v3065 = vld [vmem:[%s6 + $0x9c] sm:$0xf]
  %v3066 = vld [vmem:[%s6 + $0xa0] sm:$0xf]
  %v3067 = vld [vmem:[%s6 + $0xa4] sm:$0xf]
  %v3068 = vld [vmem:[%s6 + $0xa8] sm:$0xf]
  %v3069 = vld [vmem:[%s6 + $0xac] sm:$0xf]
  %v3070 = vld [vmem:[%s6 + $0xb0] sm:$0xf]
  %v3071 = vld [vmem:[%s6 + $0xb4] sm:$0xf]
  %v3072 = vld [vmem:[%s6 + $0xb8] sm:$0xf]
  %v3073 = vld [vmem:[%s6 + $0xbc] sm:$0xf]
  %v3074 = vld [vmem:[%s6 + $0xc0] sm:$0xf]
  %v3075 = vld [vmem:[%s6 + $0xc4] sm:$0xf]
  %v3076 = vld [vmem:[%s6 + $0xc8] sm:$0xf]
  %v3077 = vld [vmem:[%s6 + $0xcc] sm:$0xf]
  %v3078 = vld [vmem:[%s6 + $0xd0] sm:$0xf]
  %v3079 = vld [vmem:[%s6 + $0xd4] sm:$0xf]
  %v3080 = vld [vmem:[%s6 + $0xd8] sm:$0xf]
  %v3081 = vld [vmem:[%s6 + $0xdc] sm:$0xf]
  %v3082 = vld [vmem:[%s6 + $0xe0] sm:$0xf]
  %v3083 = vld [vmem:[%s6 + $0xe4] sm:$0xf]
  %v3084 = vld [vmem:[%s6 + $0xe8] sm:$0xf]
  %v3085 = vld [vmem:[%s6 + $0xec] sm:$0xf]
  %v3086 = vld [vmem:[%s6 + $0xf0] sm:$0xf]
  %v3087 = vld [vmem:[%s6 + $0xf4] sm:$0xf]
  %v3088 = vld [vmem:[%s6 + $0xf8] sm:$0xf]
  %v3089 = vld [vmem:[%s6 + $0xfc] sm:$0xf]
  %v3090 = vld [vmem:[%s6 + $0x100] sm:$0xf]
  %v3091 = vld [vmem:[%s6 + $0x104] sm:$0xf]
  %v3092 = vld [vmem:[%s6 + $0x108] sm:$0xf]
  %v3093 = vld [vmem:[%s6 + $0x10c] sm:$0xf]
  %v3094 = vld [vmem:[%s6 + $0x110] sm:$0xf]
  %v3095 = vld [vmem:[%s6 + $0x114] sm:$0xf]
  %v3096 = vld [vmem:[%s6 + $0x118] sm:$0xf]
  %v3097 = vld [vmem:[%s6 + $0x11c] sm:$0xf]
  %v3098 = vld [vmem:[%s6 + $0x120] sm:$0xf]
  %v3099 = vld [vmem:[%s6 + $0x124] sm:$0xf]
  %v3100 = vld [vmem:[%s6 + $0x128] sm:$0xf]
  %v3101 = vld [vmem:[%s6 + $0x12c] sm:$0xf]
  %v3102 = vld [vmem:[%s6 + $0x130] sm:$0xf]
  %v3103 = vld [vmem:[%s6 + $0x134] sm:$0xf]
  %v3104 = vld [vmem:[%s6 + $0x138] sm:$0xf]
  %v3105 = vld [vmem:[%s6 + $0x13c] sm:$0xf]
  %v3106 = vld [vmem:[%s6 + $0x140] sm:$0xf]
  %v3107 = vld [vmem:[%s6 + $0x144] sm:$0xf]
  %v3108 = vld [vmem:[%s6 + $0x148] sm:$0xf]
  %v3109 = vld [vmem:[%s6 + $0x14c] sm:$0xf]
  %v3110 = vld [vmem:[%s6 + $0x150] sm:$0xf]
  %v3111 = vld [vmem:[%s6 + $0x154] sm:$0xf]
  %v3112 = vld [vmem:[%s6 + $0x158] sm:$0xf]
  %v3113 = vld [vmem:[%s6 + $0x15c] sm:$0xf]
  %v3114 = vld [vmem:[%s6 + $0x160] sm:$0xf]
  %v3115 = vld [vmem:[%s6 + $0x164] sm:$0xf]
  %v3116 = vld [vmem:[%s6 + $0x168] sm:$0xf]
  %v3117 = vld [vmem:[%s6 + $0x16c] sm:$0xf]
  %v3118 = vld [vmem:[%s6 + $0x170] sm:$0xf]
  %v3119 = vld [vmem:[%s6 + $0x174] sm:$0xf]
  %v3120 = vld [vmem:[%s6 + $0x178] sm:$0xf]
  %v3121 = vld [vmem:[%s6 + $0x17c] sm:$0xf]
  %v3122 = vld [vmem:[%s6 + $0x180] sm:$0xf]
  %v3123 = vld [vmem:[%s6 + $0x184] sm:$0xf]
  %v3124 = vld [vmem:[%s6 + $0x188] sm:$0xf]
  %v3125 = vld [vmem:[%s6 + $0x18c] sm:$0xf]
  %v3126 = vld [vmem:[%s6 + $0x190] sm:$0xf]
  %v3127 = vld [vmem:[%s6 + $0x194] sm:$0xf]
  %v3128 = vld [vmem:[%s6 + $0x198] sm:$0xf]
  %v3129 = vld [vmem:[%s6 + $0x19c] sm:$0xf]
  %v3130 = vld [vmem:[%s6 + $0x1a0] sm:$0xf]
  %v3131 = vld [vmem:[%s6 + $0x1a4] sm:$0xf]
  %v3132 = vld [vmem:[%s6 + $0x1a8] sm:$0xf]
  %v3133 = vld [vmem:[%s6 + $0x1ac] sm:$0xf]
  %v3134 = vld [vmem:[%s6 + $0x1b0] sm:$0xf]
  %v3135 = vld [vmem:[%s6 + $0x1b4] sm:$0xf]
  %v3136 = vld [vmem:[%s6 + $0x1b8] sm:$0xf]
  %v3137 = vld [vmem:[%s6 + $0x1bc] sm:$0xf]
  %v3138 = vld [vmem:[%s6 + $0x1c0] sm:$0xf]
  %v3139 = vld [vmem:[%s6 + $0x1c4] sm:$0xf]
  %v3140 = vld [vmem:[%s6 + $0x1c8] sm:$0xf]
  %v3141 = vld [vmem:[%s6 + $0x1cc] sm:$0xf]
  %v3142 = vld [vmem:[%s6 + $0x1d0] sm:$0xf]
  %v3143 = vld [vmem:[%s6 + $0x1d4] sm:$0xf]
  %v3144 = vld [vmem:[%s6 + $0x1d8] sm:$0xf]
  %v3145 = vld [vmem:[%s6 + $0x1dc] sm:$0xf]
  %v3146 = vld [vmem:[%s6 + $0x1e0] sm:$0xf]
  %v3147 = vld [vmem:[%s6 + $0x1e4] sm:$0xf]
  %v3148 = vld [vmem:[%s6 + $0x1e8] sm:$0xf]
  %v3149 = vld [vmem:[%s6 + $0x1ec] sm:$0xf]
  %v3150 = vld [vmem:[%s6 + $0x1f0] sm:$0xf]
  %v3151 = vld [vmem:[%s6 + $0x1f4] sm:$0xf]
  %v3152 = vld [vmem:[%s6 + $0x1f8] sm:$0xf]
  %v3153 = vld [vmem:[%s6 + $0x1fc] sm:$0xf]
  %v3154 = vld [vmem:[%s6 + $0x200] sm:$0xf]
  %v3155 = vld [vmem:[%s6 + $0x204] sm:$0xf]
  %v3156 = vld [vmem:[%s6 + $0x208] sm:$0xf]
  %v3157 = vld [vmem:[%s6 + $0x20c] sm:$0xf]
  %v3158 = vld [vmem:[%s6 + $0x210] sm:$0xf]
  %v3159 = vld [vmem:[%s6 + $0x214] sm:$0xf]
  %v3160 = vld [vmem:[%s6 + $0x218] sm:$0xf]
  %v3161 = vld [vmem:[%s6 + $0x21c] sm:$0xf]
  %v3162 = vld [vmem:[%s6 + $0x220] sm:$0xf]
  %v3163 = vld [vmem:[%s6 + $0x224] sm:$0xf]
  %v3164 = vld [vmem:[%s6 + $0x228] sm:$0xf]
  %v3165 = vld [vmem:[%s6 + $0x22c] sm:$0xf]
  %v3166 = vld [vmem:[%s6 + $0x230] sm:$0xf]
  %v3167 = vld [vmem:[%s6 + $0x234] sm:$0xf]
  %v3168 = vld [vmem:[%s6 + $0x238] sm:$0xf]
  %v3169 = vld [vmem:[%s6 + $0x23c] sm:$0xf]
  %v3170 = vld [vmem:[%s6 + $0x240] sm:$0xf]
  %v3171 = vld [vmem:[%s6 + $0x244] sm:$0xf]
  %v3172 = vld [vmem:[%s6 + $0x248] sm:$0xf]
  %v3173 = vld [vmem:[%s6 + $0x24c] sm:$0xf]
  %v3174 = vld [vmem:[%s6 + $0x250] sm:$0xf]
  %v3175 = vld [vmem:[%s6 + $0x254] sm:$0xf]
  %v3176 = vld [vmem:[%s6 + $0x258] sm:$0xf]
  %v3177 = vld [vmem:[%s6 + $0x25c] sm:$0xf]
  %v3178 = vld [vmem:[%s6 + $0x260] sm:$0xf]
  %v3179 = vld [vmem:[%s6 + $0x264] sm:$0xf]
  %v3180 = vld [vmem:[%s6 + $0x268] sm:$0xf]
  %v3181 = vld [vmem:[%s6 + $0x26c] sm:$0xf]
  %v3182 = vld [vmem:[%s6 + $0x270] sm:$0xf]
  %v3183 = vld [vmem:[%s6 + $0x274] sm:$0xf]
  %v3184 = vld [vmem:[%s6 + $0x278] sm:$0xf]
  %v3185 = vld [vmem:[%s6 + $0x27c] sm:$0xf]
  %v3186 = vld [vmem:[%s6 + $0x280] sm:$0xf]
  %v3187 = vld [vmem:[%s6 + $0x284] sm:$0xf]
  %v3188 = vld [vmem:[%s6 + $0x288] sm:$0xf]
  %v3189 = vld [vmem:[%s6 + $0x28c] sm:$0xf]
  %v3190 = vld [vmem:[%s6 + $0x290] sm:$0xf]
  %v3191 = vld [vmem:[%s6 + $0x294] sm:$0xf]
  %v3192 = vld [vmem:[%s6 + $0x298] sm:$0xf]
  %v3193 = vld [vmem:[%s6 + $0x29c] sm:$0xf]
  %v3194 = vld [vmem:[%s6 + $0x2a0] sm:$0xf]
  %v3195 = vld [vmem:[%s6 + $0x2a4] sm:$0xf]
  %v3196 = vld [vmem:[%s6 + $0x2a8] sm:$0xf]
  %v3197 = vld [vmem:[%s6 + $0x2ac] sm:$0xf]
  %v3198 = vld [vmem:[%s6 + $0x2b0] sm:$0xf]
  %v3199 = vld [vmem:[%s6 + $0x2b4] sm:$0xf]
  %v3200 = vld [vmem:[%s6 + $0x2b8] sm:$0xf]
  %v3201 = vld [vmem:[%s6 + $0x2bc] sm:$0xf]
  %v3202 = vld [vmem:[%s6 + $0x2c0] sm:$0xf]
  %v3203 = vld [vmem:[%s6 + $0x2c4] sm:$0xf]
  %v3204 = vld [vmem:[%s6 + $0x2c8] sm:$0xf]
  %v3205 = vld [vmem:[%s6 + $0x2cc] sm:$0xf]
  %v3206 = vld [vmem:[%s6 + $0x2d0] sm:$0xf]
  %v3207 = vld [vmem:[%s6 + $0x2d4] sm:$0xf]
  %v3208 = vld [vmem:[%s6 + $0x2d8] sm:$0xf]
  %v3209 = vld [vmem:[%s6 + $0x2dc] sm:$0xf]
  %v3210 = vld [vmem:[%s6 + $0x2e0] sm:$0xf]
  %v3211 = vld [vmem:[%s6 + $0x2e4] sm:$0xf]
  %v3212 = vld [vmem:[%s6 + $0x2e8] sm:$0xf]
  %v3213 = vld [vmem:[%s6 + $0x2ec] sm:$0xf]
  %v3214 = vld [vmem:[%s6 + $0x2f0] sm:$0xf]
  %v3215 = vld [vmem:[%s6 + $0x2f4] sm:$0xf]
  %v3216 = vld [vmem:[%s6 + $0x2f8] sm:$0xf]
  %v3217 = vld [vmem:[%s6 + $0x2fc] sm:$0xf]
  %v3218 = vld [vmem:[%s6 + $0x300] sm:$0xf]
  %v3219 = vld [vmem:[%s6 + $0x304] sm:$0xf]
  %v3220 = vld [vmem:[%s6 + $0x308] sm:$0xf]
  %v3221 = vld [vmem:[%s6 + $0x30c] sm:$0xf]
  %v3222 = vld [vmem:[%s6 + $0x310] sm:$0xf]
  %v3223 = vld [vmem:[%s6 + $0x314] sm:$0xf]
  %v3224 = vld [vmem:[%s6 + $0x318] sm:$0xf]
  %v3225 = vld [vmem:[%s6 + $0x31c] sm:$0xf]
  %v3226 = vld [vmem:[%s6 + $0x320] sm:$0xf]
  %v3227 = vld [vmem:[%s6 + $0x324] sm:$0xf]
  %v3228 = vld [vmem:[%s6 + $0x328] sm:$0xf]
  %v3229 = vld [vmem:[%s6 + $0x32c] sm:$0xf]
  %v3230 = vld [vmem:[%s6 + $0x330] sm:$0xf]
  %v3231 = vld [vmem:[%s6 + $0x334] sm:$0xf]
  %v3232 = vld [vmem:[%s6 + $0x338] sm:$0xf]
  %v3233 = vld [vmem:[%s6 + $0x33c] sm:$0xf]
  %v3234 = vld [vmem:[%s6 + $0x340] sm:$0xf]
  %v3235 = vld [vmem:[%s6 + $0x344] sm:$0xf]
  %v3236 = vld [vmem:[%s6 + $0x348] sm:$0xf]
  %v3237 = vld [vmem:[%s6 + $0x34c] sm:$0xf]
  %v3238 = vld [vmem:[%s6 + $0x350] sm:$0xf]
  %v3239 = vld [vmem:[%s6 + $0x354] sm:$0xf]
  %v3240 = vld [vmem:[%s6 + $0x358] sm:$0xf]
  %v3241 = vld [vmem:[%s6 + $0x35c] sm:$0xf]
  %v3242 = vld [vmem:[%s6 + $0x360] sm:$0xf]
  %v3243 = vld [vmem:[%s6 + $0x364] sm:$0xf]
  %v3244 = vld [vmem:[%s6 + $0x368] sm:$0xf]
  %v3245 = vld [vmem:[%s6 + $0x36c] sm:$0xf]
  %v3246 = vld [vmem:[%s6 + $0x370] sm:$0xf]
  %v3247 = vld [vmem:[%s6 + $0x374] sm:$0xf]
  %v3248 = vld [vmem:[%s6 + $0x378] sm:$0xf]
  %v3249 = vld [vmem:[%s6 + $0x37c] sm:$0xf]
  %v3250 = vld [vmem:[%s6 + $0x380] sm:$0xf]
  %v3251 = vld [vmem:[%s6 + $0x384] sm:$0xf]
  %v3252 = vld [vmem:[%s6 + $0x388] sm:$0xf]
  %v3253 = vld [vmem:[%s6 + $0x38c] sm:$0xf]
  %v3254 = vld [vmem:[%s6 + $0x390] sm:$0xf]
  %v3255 = vld [vmem:[%s6 + $0x394] sm:$0xf]
  %v3256 = vld [vmem:[%s6 + $0x398] sm:$0xf]
  %v3257 = vld [vmem:[%s6 + $0x39c] sm:$0xf]
  %v3258 = vld [vmem:[%s6 + $0x3a0] sm:$0xf]
  %v3259 = vld [vmem:[%s6 + $0x3a4] sm:$0xf]
  %v3260 = vld [vmem:[%s6 + $0x3a8] sm:$0xf]
  %v3261 = vld [vmem:[%s6 + $0x3ac] sm:$0xf]
  %v3262 = vld [vmem:[%s6 + $0x3b0] sm:$0xf]
  %v3263 = vld [vmem:[%s6 + $0x3b4] sm:$0xf]
  %v3264 = vld [vmem:[%s6 + $0x3b8] sm:$0xf]
  %v3265 = vld [vmem:[%s6 + $0x3bc] sm:$0xf]
  %v3266 = vld [vmem:[%s6 + $0x3c0] sm:$0xf]
  %v3267 = vld [vmem:[%s6 + $0x3c4] sm:$0xf]
  %v3268 = vld [vmem:[%s6 + $0x3c8] sm:$0xf]
  %v3269 = vld [vmem:[%s6 + $0x3cc] sm:$0xf]
  %v3270 = vld [vmem:[%s6 + $0x3d0] sm:$0xf]
  %v3271 = vld [vmem:[%s6 + $0x3d4] sm:$0xf]
  %v3272 = vld [vmem:[%s6 + $0x3d8] sm:$0xf]
  %v3273 = vld [vmem:[%s6 + $0x3dc] sm:$0xf]
  %v3274 = vld [vmem:[%s6 + $0x3e0] sm:$0xf]
  %v3275 = vld [vmem:[%s6 + $0x3e4] sm:$0xf]
  %v3276 = vld [vmem:[%s6 + $0x3e8] sm:$0xf]
  %v3277 = vld [vmem:[%s6 + $0x3ec] sm:$0xf]
  %v3278 = vld [vmem:[%s6 + $0x3f0] sm:$0xf]
  %v3279 = vld [vmem:[%s6 + $0x3f4] sm:$0xf]
  %v3280 = vld [vmem:[%s6 + $0x3f8] sm:$0xf]
  %v3281 = vld [vmem:[%s6 + $0x3fc] sm:$0xf]
  %v3282 = vld [vmem:[%s6 + $0x400] sm:$0xf]
  %v3283 = vld [vmem:[%s6 + $0x404] sm:$0xf]
  %v3284 = vld [vmem:[%s6 + $0x408] sm:$0xf]
  %v3285 = vld [vmem:[%s6 + $0x40c] sm:$0xf]
  %v3286 = vld [vmem:[%s6 + $0x410] sm:$0xf]
  %v3287 = vld [vmem:[%s6 + $0x414] sm:$0xf]
  %v3288 = vld [vmem:[%s6 + $0x418] sm:$0xf]
  %v3289 = vld [vmem:[%s6 + $0x41c] sm:$0xf]
  %v3290 = vld [vmem:[%s6 + $0x420] sm:$0xf]
  %v3291 = vld [vmem:[%s6 + $0x424] sm:$0xf]
  %v3292 = vld [vmem:[%s6 + $0x428] sm:$0xf]
  %v3293 = vld [vmem:[%s6 + $0x42c] sm:$0xf]
  %v3294 = vld [vmem:[%s6 + $0x430] sm:$0xf]
  %v3295 = vld [vmem:[%s6 + $0x434] sm:$0xf]
  %v3296 = vld [vmem:[%s6 + $0x438] sm:$0xf]
  %v3297 = vld [vmem:[%s6 + $0x43c] sm:$0xf]
  %v3298 = vld [vmem:[%s6 + $0x440] sm:$0xf]
  %v3299 = vld [vmem:[%s6 + $0x444] sm:$0xf]
  %v3300 = vld [vmem:[%s6 + $0x448] sm:$0xf]
  %v3301 = vld [vmem:[%s6 + $0x44c] sm:$0xf]
  %v3302 = vld [vmem:[%s6 + $0x450] sm:$0xf]
  %v3303 = vld [vmem:[%s6 + $0x454] sm:$0xf]
  %v3304 = vld [vmem:[%s6 + $0x458] sm:$0xf]
  %v3305 = vld [vmem:[%s6 + $0x45c] sm:$0xf]
  %v3306 = vld [vmem:[%s6 + $0x460] sm:$0xf]
  %v3307 = vld [vmem:[%s6 + $0x464] sm:$0xf]
  %v3308 = vld [vmem:[%s6 + $0x468] sm:$0xf]
  %v3309 = vld [vmem:[%s6 + $0x46c] sm:$0xf]
  %v3310 = vld [vmem:[%s6 + $0x470] sm:$0xf]
  %v3311 = vld [vmem:[%s6 + $0x474] sm:$0xf]
  %v3312 = vld [vmem:[%s6 + $0x478] sm:$0xf]
  %v3313 = vld [vmem:[%s6 + $0x47c] sm:$0xf]
  %v3314 = vld [vmem:[%s6 + $0x480] sm:$0xf]
  %v3315 = vld [vmem:[%s6 + $0x484] sm:$0xf]
  %v3316 = vld [vmem:[%s6 + $0x488] sm:$0xf]
  %v3317 = vld [vmem:[%s6 + $0x48c] sm:$0xf]
  %v3318 = vld [vmem:[%s6 + $0x490] sm:$0xf]
  %v3319 = vld [vmem:[%s6 + $0x494] sm:$0xf]
  %v3320 = vld [vmem:[%s6 + $0x498] sm:$0xf]
  %v3321 = vld [vmem:[%s6 + $0x49c] sm:$0xf]
  %v3322 = vld [vmem:[%s6 + $0x4a0] sm:$0xf]
  %v3323 = vld [vmem:[%s6 + $0x4a4] sm:$0xf]
  %v3324 = vld [vmem:[%s6 + $0x4a8] sm:$0xf]
  %v3325 = vld [vmem:[%s6 + $0x4ac] sm:$0xf]
  %v3326 = vld [vmem:[%s6 + $0x4b0] sm:$0xf]
  %v3327 = vld [vmem:[%s6 + $0x4b4] sm:$0xf]
  %v3328 = vld [vmem:[%s6 + $0x4b8] sm:$0xf]
  %v3329 = vld [vmem:[%s6 + $0x4bc] sm:$0xf]
  %v3330 = vld [vmem:[%s6 + $0x4c0] sm:$0xf]
  %v3331 = vld [vmem:[%s6 + $0x4c4] sm:$0xf]
  %v3332 = vld [vmem:[%s6 + $0x4c8] sm:$0xf]
  %v3333 = vld [vmem:[%s6 + $0x4cc] sm:$0xf]
  %v3334 = vld [vmem:[%s6 + $0x4d0] sm:$0xf]
  %v3335 = vld [vmem:[%s6 + $0x4d4] sm:$0xf]
  %v3336 = vld [vmem:[%s6 + $0x4d8] sm:$0xf]
  %v3337 = vld [vmem:[%s6 + $0x4dc] sm:$0xf]
  %v3338 = vld [vmem:[%s6 + $0x4e0] sm:$0xf]
  %v3339 = vld [vmem:[%s6 + $0x4e4] sm:$0xf]
  %v3340 = vld [vmem:[%s6 + $0x4e8] sm:$0xf]
  %v3341 = vld [vmem:[%s6 + $0x4ec] sm:$0xf]
  %v3342 = vld [vmem:[%s6 + $0x4f0] sm:$0xf]
  %v3343 = vld [vmem:[%s6 + $0x4f4] sm:$0xf]
  %v3344 = vld [vmem:[%s6 + $0x4f8] sm:$0xf]
  %v3345 = vld [vmem:[%s6 + $0x4fc] sm:$0xf]
  %v3346 = vld [vmem:[%s6 + $0x500] sm:$0xf]
  %v3347 = vld [vmem:[%s6 + $0x504] sm:$0xf]
  %v3348 = vld [vmem:[%s6 + $0x508] sm:$0xf]
  %v3349 = vld [vmem:[%s6 + $0x50c] sm:$0xf]
  %v3350 = vld [vmem:[%s6 + $0x510] sm:$0xf]
  %v3351 = vld [vmem:[%s6 + $0x514] sm:$0xf]
  %v3352 = vld [vmem:[%s6 + $0x518] sm:$0xf]
  %v3353 = vld [vmem:[%s6 + $0x51c] sm:$0xf]
  %v3354 = vld [vmem:[%s6 + $0x520] sm:$0xf]
  %v3355 = vld [vmem:[%s6 + $0x524] sm:$0xf]
  %v3356 = vld [vmem:[%s6 + $0x528] sm:$0xf]
  %v3357 = vld [vmem:[%s6 + $0x52c] sm:$0xf]
  %v3358 = vld [vmem:[%s6 + $0x530] sm:$0xf]
  %v3359 = vld [vmem:[%s6 + $0x534] sm:$0xf]
  %v3360 = vld [vmem:[%s6 + $0x538] sm:$0xf]
  %v3361 = vld [vmem:[%s6 + $0x53c] sm:$0xf]
  %v3362 = vld [vmem:[%s6 + $0x540] sm:$0xf]
  %v3363 = vld [vmem:[%s6 + $0x544] sm:$0xf]
  %v3364 = vld [vmem:[%s6 + $0x548] sm:$0xf]
  %v3365 = vld [vmem:[%s6 + $0x54c] sm:$0xf]
  %v3366 = vld [vmem:[%s6 + $0x550] sm:$0xf]
  %v3367 = vld [vmem:[%s6 + $0x554] sm:$0xf]
  %v3368 = vld [vmem:[%s6 + $0x558] sm:$0xf]
  %v3369 = vld [vmem:[%s6 + $0x55c] sm:$0xf]
  %v3370 = vld [vmem:[%s6 + $0x560] sm:$0xf]
  %v3371 = vld [vmem:[%s6 + $0x564] sm:$0xf]
  %v3372 = vld [vmem:[%s6 + $0x568] sm:$0xf]
  %v3373 = vld [vmem:[%s6 + $0x56c] sm:$0xf]
  %v3374 = vld [vmem:[%s6 + $0x570] sm:$0xf]
  %v3375 = vld [vmem:[%s6 + $0x574] sm:$0xf]
  %v3376 = vld [vmem:[%s6 + $0x578] sm:$0xf]
  %v3377 = vld [vmem:[%s6 + $0x57c] sm:$0xf]
  %v3378 = vld [vmem:[%s6 + $0x580] sm:$0xf]
  %v3379 = vld [vmem:[%s6 + $0x584] sm:$0xf]
  %v3380 = vld [vmem:[%s6 + $0x588] sm:$0xf]
  %v3381 = vld [vmem:[%s6 + $0x58c] sm:$0xf]
  %v3382 = vld [vmem:[%s6 + $0x590] sm:$0xf]
  %v3383 = vld [vmem:[%s6 + $0x594] sm:$0xf]
  %v3384 = vld [vmem:[%s6 + $0x598] sm:$0xf]
  %v3385 = vld [vmem:[%s6 + $0x59c] sm:$0xf]
  %v3386 = vld [vmem:[%s6 + $0x5a0] sm:$0xf]
  %v3387 = vld [vmem:[%s6 + $0x5a4] sm:$0xf]
  %v3388 = vld [vmem:[%s6 + $0x5a8] sm:$0xf]
  %v3389 = vld [vmem:[%s6 + $0x5ac] sm:$0xf]
  %v3390 = vld [vmem:[%s6 + $0x5b0] sm:$0xf]
  %v3391 = vld [vmem:[%s6 + $0x5b4] sm:$0xf]
  %v3392 = vld [vmem:[%s6 + $0x5b8] sm:$0xf]
  %v3393 = vld [vmem:[%s6 + $0x5bc] sm:$0xf]
  %v3394 = vld [vmem:[%s6 + $0x5c0] sm:$0xf]
  %v3395 = vld [vmem:[%s6 + $0x5c4] sm:$0xf]
  %v3396 = vld [vmem:[%s6 + $0x5c8] sm:$0xf]
  %v3397 = vld [vmem:[%s6 + $0x5cc] sm:$0xf]
  %v3398 = vld [vmem:[%s6 + $0x5d0] sm:$0xf]
  %v3399 = vld [vmem:[%s6 + $0x5d4] sm:$0xf]
  %v3400 = vld [vmem:[%s6 + $0x5d8] sm:$0xf]
  %v3401 = vld [vmem:[%s6 + $0x5dc] sm:$0xf]
  %v3402 = vld [vmem:[%s6 + $0x5e0] sm:$0xf]
  %v3403 = vld [vmem:[%s6 + $0x5e4] sm:$0xf]
  %v3404 = vld [vmem:[%s6 + $0x5e8] sm:$0xf]
  %v3405 = vld [vmem:[%s6 + $0x5ec] sm:$0xf]
  %v3406 = vld [vmem:[%s6 + $0x5f0] sm:$0xf]
  %v3407 = vld [vmem:[%s6 + $0x5f4] sm:$0xf]
  %v3408 = vld [vmem:[%s6 + $0x5f8] sm:$0xf]
  %v3409 = vld [vmem:[%s6 + $0x5fc] sm:$0xf]
  %v3410 = vld [vmem:[%s6 + $0x600] sm:$0xf]
  %v3411 = vld [vmem:[%s6 + $0x604] sm:$0xf]
  %v3412 = vld [vmem:[%s6 + $0x608] sm:$0xf]
  %v3413 = vld [vmem:[%s6 + $0x60c] sm:$0xf]
  %v3414 = vld [vmem:[%s6 + $0x610] sm:$0xf]
  %v3415 = vld [vmem:[%s6 + $0x614] sm:$0xf]
  %v3416 = vld [vmem:[%s6 + $0x618] sm:$0xf]
  %v3417 = vld [vmem:[%s6 + $0x61c] sm:$0xf]
  %v3418 = vld [vmem:[%s6 + $0x620] sm:$0xf]
  %v3419 = vld [vmem:[%s6 + $0x624] sm:$0xf]
  %v3420 = vld [vmem:[%s6 + $0x628] sm:$0xf]
  %v3421 = vld [vmem:[%s6 + $0x62c] sm:$0xf]
  %v3422 = vld [vmem:[%s6 + $0x630] sm:$0xf]
  %v3423 = vld [vmem:[%s6 + $0x634] sm:$0xf]
  %v3424 = vld [vmem:[%s6 + $0x638] sm:$0xf]
  %v3425 = vld [vmem:[%s6 + $0x63c] sm:$0xf]
  %v3426 = vld [vmem:[%s6 + $0x640] sm:$0xf]
  %v3427 = vld [vmem:[%s6 + $0x644] sm:$0xf]
  %v3428 = vld [vmem:[%s6 + $0x648] sm:$0xf]
  %v3429 = vld [vmem:[%s6 + $0x64c] sm:$0xf]
  %v3430 = vld [vmem:[%s6 + $0x650] sm:$0xf]
  %v3431 = vld [vmem:[%s6 + $0x654] sm:$0xf]
  %v3432 = vld [vmem:[%s6 + $0x658] sm:$0xf]
  %v3433 = vld [vmem:[%s6 + $0x65c] sm:$0xf]
  %v3434 = vld [vmem:[%s6 + $0x660] sm:$0xf]
  %v3435 = vld [vmem:[%s6 + $0x664] sm:$0xf]
  %v3436 = vld [vmem:[%s6 + $0x668] sm:$0xf]
  %v3437 = vld [vmem:[%s6 + $0x66c] sm:$0xf]
  %v3438 = vld [vmem:[%s6 + $0x670] sm:$0xf]
  %v3439 = vld [vmem:[%s6 + $0x674] sm:$0xf]
  %v3440 = vld [vmem:[%s6 + $0x678] sm:$0xf]
  %v3441 = vld [vmem:[%s6 + $0x67c] sm:$0xf]
  %v3442 = vld [vmem:[%s6 + $0x680] sm:$0xf]
  %v3443 = vld [vmem:[%s6 + $0x684] sm:$0xf]
  %v3444 = vld [vmem:[%s6 + $0x688] sm:$0xf]
  %v3445 = vld [vmem:[%s6 + $0x68c] sm:$0xf]
  %v3446 = vld [vmem:[%s6 + $0x690] sm:$0xf]
  %v3447 = vld [vmem:[%s6 + $0x694] sm:$0xf]
  %v3448 = vld [vmem:[%s6 + $0x698] sm:$0xf]
  %v3449 = vld [vmem:[%s6 + $0x69c] sm:$0xf]
  %v3450 = vld [vmem:[%s6 + $0x6a0] sm:$0xf]
  %v3451 = vld [vmem:[%s6 + $0x6a4] sm:$0xf]
  %v3452 = vld [vmem:[%s6 + $0x6a8] sm:$0xf]
  %v3453 = vld [vmem:[%s6 + $0x6ac] sm:$0xf]
  %v3454 = vld [vmem:[%s6 + $0x6b0] sm:$0xf]
  %v3455 = vld [vmem:[%s6 + $0x6b4] sm:$0xf]
  %v3456 = vld [vmem:[%s6 + $0x6b8] sm:$0xf]
  %v3457 = vld [vmem:[%s6 + $0x6bc] sm:$0xf]
  %v3458 = vld [vmem:[%s6 + $0x6c0] sm:$0xf]
  %v3459 = vld [vmem:[%s6 + $0x6c4] sm:$0xf]
  %v3460 = vld [vmem:[%s6 + $0x6c8] sm:$0xf]
  %v3461 = vld [vmem:[%s6 + $0x6cc] sm:$0xf]
  %v3462 = vld [vmem:[%s6 + $0x6d0] sm:$0xf]
  %v3463 = vld [vmem:[%s6 + $0x6d4] sm:$0xf]
  %v3464 = vld [vmem:[%s6 + $0x6d8] sm:$0xf]
  %v3465 = vld [vmem:[%s6 + $0x6dc] sm:$0xf]
  %v3466 = vld [vmem:[%s6 + $0x6e0] sm:$0xf]
  %v3467 = vld [vmem:[%s6 + $0x6e4] sm:$0xf]
  %v3468 = vld [vmem:[%s6 + $0x6e8] sm:$0xf]
  %v3469 = vld [vmem:[%s6 + $0x6ec] sm:$0xf]
  %v3470 = vld [vmem:[%s6 + $0x6f0] sm:$0xf]
  %v3471 = vld [vmem:[%s6 + $0x6f4] sm:$0xf]
  %v3472 = vld [vmem:[%s6 + $0x6f8] sm:$0xf]
  %v3473 = vld [vmem:[%s6 + $0x6fc] sm:$0xf]
  %v3474 = vld [vmem:[%s6 + $0x700] sm:$0xf]
  %v3475 = vld [vmem:[%s6 + $0x704] sm:$0xf]
  %v3476 = vld [vmem:[%s6 + $0x708] sm:$0xf]
  %v3477 = vld [vmem:[%s6 + $0x70c] sm:$0xf]
  %v3478 = vld [vmem:[%s6 + $0x710] sm:$0xf]
  %v3479 = vld [vmem:[%s6 + $0x714] sm:$0xf]
  %v3480 = vld [vmem:[%s6 + $0x718] sm:$0xf]
  %v3481 = vld [vmem:[%s6 + $0x71c] sm:$0xf]
  %v3482 = vld [vmem:[%s6 + $0x720] sm:$0xf]
  %v3483 = vld [vmem:[%s6 + $0x724] sm:$0xf]
  %v3484 = vld [vmem:[%s6 + $0x728] sm:$0xf]
  %v3485 = vld [vmem:[%s6 + $0x72c] sm:$0xf]
  %v3486 = vld [vmem:[%s6 + $0x730] sm:$0xf]
  %v3487 = vld [vmem:[%s6 + $0x734] sm:$0xf]
  %v3488 = vld [vmem:[%s6 + $0x738] sm:$0xf]
  %v3489 = vld [vmem:[%s6 + $0x73c] sm:$0xf]
  %v3490 = vld [vmem:[%s6 + $0x740] sm:$0xf]
  %v3491 = vld [vmem:[%s6 + $0x744] sm:$0xf]
  %v3492 = vld [vmem:[%s6 + $0x748] sm:$0xf]
  %v3493 = vld [vmem:[%s6 + $0x74c] sm:$0xf]
  %v3494 = vld [vmem:[%s6 + $0x750] sm:$0xf]
  %v3495 = vld [vmem:[%s6 + $0x754] sm:$0xf]
  %v3496 = vld [vmem:[%s6 + $0x758] sm:$0xf]
  %v3497 = vld [vmem:[%s6 + $0x75c] sm:$0xf]
  %v3498 = vld [vmem:[%s6 + $0x760] sm:$0xf]
  %v3499 = vld [vmem:[%s6 + $0x764] sm:$0xf]
  %v3500 = vld [vmem:[%s6 + $0x768] sm:$0xf]
  %v3501 = vld [vmem:[%s6 + $0x76c] sm:$0xf]
  %v3502 = vld [vmem:[%s6 + $0x770] sm:$0xf]
  %v3503 = vld [vmem:[%s6 + $0x774] sm:$0xf]
  %v3504 = vld [vmem:[%s6 + $0x778] sm:$0xf]
  %v3505 = vld [vmem:[%s6 + $0x77c] sm:$0xf]
  %v3506 = vpack.c.bf16 %v2874, %v2883
  %v3507 = vpack.c.bf16 %v2876, %v2884
  %v3508 = vpack.c.bf16 %v2898, %v2893
  %v3509 = vpack.c.bf16 %v2900, %v2896
  %v3510 = vpack.c.bf16 %v2913, %v2908
  %v3511 = vpack.c.bf16 %v2915, %v2911
  %v3512 = vpack.c.bf16 %v2928, %v2923
  %v3513 = vpack.c.bf16 %v2930, %v2926
  %v3514 = vpack.c.bf16 %v2943, %v2938
  %v3515 = vpack.c.bf16 %v2945, %v2941
  %v3516 = vpack.c.bf16 %v2958, %v2953
  %v3517 = vpack.c.bf16 %v2960, %v2956
  %v3518 = vpack.c.bf16 %v2973, %v2968
  %v3519 = vpack.c.bf16 %v2975, %v2971
  %v3520 = vpack.c.bf16 %v2988, %v2983
  %v3521 = vpack.c.bf16 %v2990, %v2986
  %v3522 = vpack.c.bf16 %v2885, %v2874
  %v3523 = vpack.c.bf16 %v2886, %v2876
  %v3524 = vpack.c.bf16 %v2997, %v2898
  %v3525 = vpack.c.bf16 %v2998, %v2900
  %v3526 = vpack.c.bf16 %v3002, %v2913
  %v3527 = vpack.c.bf16 %v3003, %v2915
  %v3528 = vpack.c.bf16 %v3007, %v2928
  %v3529 = vpack.c.bf16 %v3008, %v2930
  %v3530 = vpack.c.bf16 %v3012, %v2943
  %v3531 = vpack.c.bf16 %v3013, %v2945
  %v3532 = vpack.c.bf16 %v3017, %v2958
  %v3533 = vpack.c.bf16 %v3018, %v2960
  %v3534 = vpack.c.bf16 %v3022, %v2973
  %v3535 = vpack.c.bf16 %v3023, %v2975
  %v4016 = vunpack.c.l.b16 %v3026
  %v4017 = vunpack.c.l.b16 %v3027
  %v4018 = vunpack.c.l.b16 %v3028
  %v4019 = vunpack.c.l.b16 %v3029
  %v4020 = vunpack.c.l.b16 %v3030
  %v4021 = vunpack.c.l.b16 %v3031
  %v4022 = vunpack.c.l.b16 %v3032
  %v4023 = vunpack.c.l.b16 %v3033
  %v4024 = vunpack.c.l.b16 %v3034
  %v4025 = vunpack.c.l.b16 %v3035
  %v4026 = vunpack.c.l.b16 %v3036
  %v4027 = vunpack.c.l.b16 %v3037
  %v4028 = vunpack.c.l.b16 %v3038
  %v4029 = vunpack.c.l.b16 %v3039
  %v4030 = vunpack.c.l.b16 %v3040
  %v4031 = vunpack.c.l.b16 %v3041
  %v4032 = vunpack.c.l.b16 %v3042
  %v4033 = vunpack.c.l.b16 %v3043
  %v4034 = vunpack.c.l.b16 %v3044
  %v4035 = vunpack.c.l.b16 %v3045
  %v4036 = vunpack.c.l.b16 %v3046
  %v4037 = vunpack.c.l.b16 %v3047
  %v4038 = vunpack.c.l.b16 %v3048
  %v4039 = vunpack.c.l.b16 %v3049
  %v4040 = vunpack.c.l.b16 %v3050
  %v4041 = vunpack.c.l.b16 %v3051
  %v4042 = vunpack.c.l.b16 %v3052
  %v4043 = vunpack.c.l.b16 %v3053
  %v4044 = vunpack.c.l.b16 %v3054
  %v4045 = vunpack.c.l.b16 %v3055
  %v4046 = vunpack.c.l.b16 %v3056
  %v4047 = vunpack.c.l.b16 %v3057
  %v4048 = vunpack.c.l.b16 %v3058
  %v4049 = vunpack.c.l.b16 %v3059
  %v4050 = vunpack.c.l.b16 %v3060
  %v4051 = vunpack.c.l.b16 %v3061
  %v4052 = vunpack.c.l.b16 %v3062
  %v4053 = vunpack.c.l.b16 %v3063
  %v4054 = vunpack.c.l.b16 %v3064
  %v4055 = vunpack.c.l.b16 %v3065
  %v4056 = vunpack.c.l.b16 %v3066
  %v4057 = vunpack.c.l.b16 %v3067
  %v4058 = vunpack.c.l.b16 %v3068
  %v4059 = vunpack.c.l.b16 %v3069
  %v4060 = vunpack.c.l.b16 %v3070
  %v4061 = vunpack.c.l.b16 %v3071
  %v4062 = vunpack.c.l.b16 %v3072
  %v4063 = vunpack.c.l.b16 %v3073
  %v4064 = vunpack.c.l.b16 %v3074
  %v4065 = vunpack.c.l.b16 %v3075
  %v4066 = vunpack.c.l.b16 %v3076
  %v4067 = vunpack.c.l.b16 %v3077
  %v4068 = vunpack.c.l.b16 %v3078
  %v4069 = vunpack.c.l.b16 %v3079
  %v4070 = vunpack.c.l.b16 %v3080
  %v4071 = vunpack.c.l.b16 %v3081
  %v4072 = vunpack.c.l.b16 %v3082
  %v4073 = vunpack.c.l.b16 %v3083
  %v4074 = vunpack.c.l.b16 %v3084
  %v4075 = vunpack.c.l.b16 %v3085
  %v4076 = vunpack.c.l.b16 %v3086
  %v4077 = vunpack.c.l.b16 %v3087
  %v4078 = vunpack.c.l.b16 %v3088
  %v4079 = vunpack.c.l.b16 %v3089
  %v4080 = vunpack.c.l.b16 %v3090
  %v4081 = vunpack.c.l.b16 %v3091
  %v4082 = vunpack.c.l.b16 %v3092
  %v4083 = vunpack.c.l.b16 %v3093
  %v4084 = vunpack.c.l.b16 %v3094
  %v4085 = vunpack.c.l.b16 %v3095
  %v4086 = vunpack.c.l.b16 %v3096
  %v4087 = vunpack.c.l.b16 %v3097
  %v4088 = vunpack.c.l.b16 %v3098
  %v4089 = vunpack.c.l.b16 %v3099
  %v4090 = vunpack.c.l.b16 %v3100
  %v4091 = vunpack.c.l.b16 %v3101
  %v4092 = vunpack.c.l.b16 %v3102
  %v4093 = vunpack.c.l.b16 %v3103
  %v4094 = vunpack.c.l.b16 %v3104
  %v4095 = vunpack.c.l.b16 %v3105
  %v4096 = vunpack.c.l.b16 %v3106
  %v4097 = vunpack.c.l.b16 %v3107
  %v4098 = vunpack.c.l.b16 %v3108
  %v4099 = vunpack.c.l.b16 %v3109
  %v4100 = vunpack.c.l.b16 %v3110
  %v4101 = vunpack.c.l.b16 %v3111
  %v4102 = vunpack.c.l.b16 %v3112
  %v4103 = vunpack.c.l.b16 %v3113
  %v4104 = vunpack.c.l.b16 %v3114
  %v4105 = vunpack.c.l.b16 %v3115
  %v4106 = vunpack.c.l.b16 %v3116
  %v4107 = vunpack.c.l.b16 %v3117
  %v4108 = vunpack.c.l.b16 %v3118
  %v4109 = vunpack.c.l.b16 %v3119
  %v4110 = vunpack.c.l.b16 %v3120
  %v4111 = vunpack.c.l.b16 %v3121
  %v4112 = vunpack.c.l.b16 %v3122
  %v4113 = vunpack.c.l.b16 %v3123
  %v4114 = vunpack.c.l.b16 %v3124
  %v4115 = vunpack.c.l.b16 %v3125
  %v4116 = vunpack.c.l.b16 %v3126
  %v4117 = vunpack.c.l.b16 %v3127
  %v4118 = vunpack.c.l.b16 %v3128
  %v4119 = vunpack.c.l.b16 %v3129
  %v4120 = vunpack.c.l.b16 %v3130
  %v4121 = vunpack.c.l.b16 %v3131
  %v4122 = vunpack.c.l.b16 %v3132
  %v4123 = vunpack.c.l.b16 %v3133
  %v4124 = vunpack.c.l.b16 %v3134
  %v4125 = vunpack.c.l.b16 %v3135
  %v4126 = vunpack.c.l.b16 %v3136
  %v4127 = vunpack.c.l.b16 %v3137
  %v4128 = vunpack.c.l.b16 %v3138
  %v4129 = vunpack.c.l.b16 %v3139
  %v4130 = vunpack.c.l.b16 %v3140
  %v4131 = vunpack.c.l.b16 %v3141
  %v4132 = vunpack.c.l.b16 %v3142
  %v4133 = vunpack.c.l.b16 %v3143
  %v4134 = vunpack.c.l.b16 %v3144
  %v4135 = vunpack.c.l.b16 %v3145
  %v4136 = vunpack.c.l.b16 %v3146
  %v4137 = vunpack.c.l.b16 %v3147
  %v4138 = vunpack.c.l.b16 %v3148
  %v4139 = vunpack.c.l.b16 %v3149
  %v4140 = vunpack.c.l.b16 %v3150
  %v4141 = vunpack.c.l.b16 %v3151
  %v4142 = vunpack.c.l.b16 %v3152
  %v4143 = vunpack.c.l.b16 %v3153
  %v4144 = vunpack.c.l.b16 %v3154
  %v4145 = vunpack.c.l.b16 %v3155
  %v4146 = vunpack.c.l.b16 %v3156
  %v4147 = vunpack.c.l.b16 %v3157
  %v4148 = vunpack.c.l.b16 %v3158
  %v4149 = vunpack.c.l.b16 %v3159
  %v4150 = vunpack.c.l.b16 %v3160
  %v4151 = vunpack.c.l.b16 %v3161
  %v4152 = vunpack.c.l.b16 %v3162
  %v4153 = vunpack.c.l.b16 %v3163
  %v4154 = vunpack.c.l.b16 %v3164
  %v4155 = vunpack.c.l.b16 %v3165
  %v4156 = vunpack.c.l.b16 %v3166
  %v4157 = vunpack.c.l.b16 %v3167
  %v4158 = vunpack.c.l.b16 %v3168
  %v4159 = vunpack.c.l.b16 %v3169
  %v4160 = vunpack.c.l.b16 %v3170
  %v4161 = vunpack.c.l.b16 %v3171
  %v4162 = vunpack.c.l.b16 %v3172
  %v4163 = vunpack.c.l.b16 %v3173
  %v4164 = vunpack.c.l.b16 %v3174
  %v4165 = vunpack.c.l.b16 %v3175
  %v4166 = vunpack.c.l.b16 %v3176
  %v4167 = vunpack.c.l.b16 %v3177
  %v4168 = vunpack.c.l.b16 %v3178
  %v4169 = vunpack.c.l.b16 %v3179
  %v4170 = vunpack.c.l.b16 %v3180
  %v4171 = vunpack.c.l.b16 %v3181
  %v4172 = vunpack.c.l.b16 %v3182
  %v4173 = vunpack.c.l.b16 %v3183
  %v4174 = vunpack.c.l.b16 %v3184
  %v4175 = vunpack.c.l.b16 %v3185
  %v4176 = vunpack.c.l.b16 %v3186
  %v4177 = vunpack.c.l.b16 %v3187
  %v4178 = vunpack.c.l.b16 %v3188
  %v4179 = vunpack.c.l.b16 %v3189
  %v4180 = vunpack.c.l.b16 %v3190
  %v4181 = vunpack.c.l.b16 %v3191
  %v4182 = vunpack.c.l.b16 %v3192
  %v4183 = vunpack.c.l.b16 %v3193
  %v4184 = vunpack.c.l.b16 %v3194
  %v4185 = vunpack.c.l.b16 %v3195
  %v4186 = vunpack.c.l.b16 %v3196
  %v4187 = vunpack.c.l.b16 %v3197
  %v4188 = vunpack.c.l.b16 %v3198
  %v4189 = vunpack.c.l.b16 %v3199
  %v4190 = vunpack.c.l.b16 %v3200
  %v4191 = vunpack.c.l.b16 %v3201
  %v4192 = vunpack.c.l.b16 %v3202
  %v4193 = vunpack.c.l.b16 %v3203
  %v4194 = vunpack.c.l.b16 %v3204
  %v4195 = vunpack.c.l.b16 %v3205
  %v4196 = vunpack.c.l.b16 %v3206
  %v4197 = vunpack.c.l.b16 %v3207
  %v4198 = vunpack.c.l.b16 %v3208
  %v4199 = vunpack.c.l.b16 %v3209
  %v4200 = vunpack.c.l.b16 %v3210
  %v4201 = vunpack.c.l.b16 %v3211
  %v4202 = vunpack.c.l.b16 %v3212
  %v4203 = vunpack.c.l.b16 %v3213
  %v4204 = vunpack.c.l.b16 %v3214
  %v4205 = vunpack.c.l.b16 %v3215
  %v4206 = vunpack.c.l.b16 %v3216
  %v4207 = vunpack.c.l.b16 %v3217
  %v4208 = vunpack.c.l.b16 %v3218
  %v4209 = vunpack.c.l.b16 %v3219
  %v4210 = vunpack.c.l.b16 %v3220
  %v4211 = vunpack.c.l.b16 %v3221
  %v4212 = vunpack.c.l.b16 %v3222
  %v4213 = vunpack.c.l.b16 %v3223
  %v4214 = vunpack.c.l.b16 %v3224
  %v4215 = vunpack.c.l.b16 %v3225
  %v4216 = vunpack.c.l.b16 %v3226
  %v4217 = vunpack.c.l.b16 %v3227
  %v4218 = vunpack.c.l.b16 %v3228
  %v4219 = vunpack.c.l.b16 %v3229
  %v4220 = vunpack.c.l.b16 %v3230
  %v4221 = vunpack.c.l.b16 %v3231
  %v4222 = vunpack.c.l.b16 %v3232
  %v4223 = vunpack.c.l.b16 %v3233
  %v4224 = vunpack.c.l.b16 %v3234
  %v4225 = vunpack.c.l.b16 %v3235
  %v4226 = vunpack.c.l.b16 %v3236
  %v4227 = vunpack.c.l.b16 %v3237
  %v4228 = vunpack.c.l.b16 %v3238
  %v4229 = vunpack.c.l.b16 %v3239
  %v4230 = vunpack.c.l.b16 %v3240
  %v4231 = vunpack.c.l.b16 %v3241
  %v4232 = vunpack.c.l.b16 %v3242
  %v4233 = vunpack.c.l.b16 %v3243
  %v4234 = vunpack.c.l.b16 %v3244
  %v4235 = vunpack.c.l.b16 %v3245
  %v4236 = vunpack.c.l.b16 %v3246
  %v4237 = vunpack.c.l.b16 %v3247
  %v4238 = vunpack.c.l.b16 %v3248
  %v4239 = vunpack.c.l.b16 %v3249
  %v4240 = vunpack.c.l.b16 %v3250
  %v4241 = vunpack.c.l.b16 %v3251
  %v4242 = vunpack.c.l.b16 %v3252
  %v4243 = vunpack.c.l.b16 %v3253
  %v4244 = vunpack.c.l.b16 %v3254
  %v4245 = vunpack.c.l.b16 %v3255
  %v4246 = vunpack.c.l.b16 %v3256
  %v4247 = vunpack.c.l.b16 %v3257
  %v4248 = vunpack.c.l.b16 %v3258
  %v4249 = vunpack.c.l.b16 %v3259
  %v4250 = vunpack.c.l.b16 %v3260
  %v4251 = vunpack.c.l.b16 %v3261
  %v4252 = vunpack.c.l.b16 %v3262
  %v4253 = vunpack.c.l.b16 %v3263
  %v4254 = vunpack.c.l.b16 %v3264
  %v4255 = vunpack.c.l.b16 %v3265
  %v4256 = vunpack.c.l.b16 %v3266
  %v4257 = vunpack.c.l.b16 %v3267
  %v4258 = vunpack.c.l.b16 %v3268
  %v4259 = vunpack.c.l.b16 %v3269
  %v4260 = vunpack.c.l.b16 %v3270
  %v4261 = vunpack.c.l.b16 %v3271
  %v4262 = vunpack.c.l.b16 %v3272
  %v4263 = vunpack.c.l.b16 %v3273
  %v4264 = vunpack.c.l.b16 %v3274
  %v4265 = vunpack.c.l.b16 %v3275
  %v4266 = vunpack.c.l.b16 %v3276
  %v4267 = vunpack.c.l.b16 %v3277
  %v4268 = vunpack.c.l.b16 %v3278
  %v4269 = vunpack.c.l.b16 %v3279
  %v4270 = vunpack.c.l.b16 %v3280
  %v4271 = vunpack.c.l.b16 %v3281
  %v4272 = vunpack.c.l.b16 %v3282
  %v4273 = vunpack.c.l.b16 %v3283
  %v4274 = vunpack.c.l.b16 %v3284
  %v4275 = vunpack.c.l.b16 %v3285
  %v4276 = vunpack.c.l.b16 %v3286
  %v4277 = vunpack.c.l.b16 %v3287
  %v4278 = vunpack.c.l.b16 %v3288
  %v4279 = vunpack.c.l.b16 %v3289
  %v4280 = vunpack.c.l.b16 %v3290
  %v4281 = vunpack.c.l.b16 %v3291
  %v4282 = vunpack.c.l.b16 %v3292
  %v4283 = vunpack.c.l.b16 %v3293
  %v4284 = vunpack.c.l.b16 %v3294
  %v4285 = vunpack.c.l.b16 %v3295
  %v4286 = vunpack.c.l.b16 %v3296
  %v4287 = vunpack.c.l.b16 %v3297
  %v4288 = vunpack.c.l.b16 %v3298
  %v4289 = vunpack.c.l.b16 %v3299
  %v4290 = vunpack.c.l.b16 %v3300
  %v4291 = vunpack.c.l.b16 %v3301
  %v4292 = vunpack.c.l.b16 %v3302
  %v4293 = vunpack.c.l.b16 %v3303
  %v4294 = vunpack.c.l.b16 %v3304
  %v4295 = vunpack.c.l.b16 %v3305
  %v4296 = vunpack.c.l.b16 %v3306
  %v4297 = vunpack.c.l.b16 %v3307
  %v4298 = vunpack.c.l.b16 %v3308
  %v4299 = vunpack.c.l.b16 %v3309
  %v4300 = vunpack.c.l.b16 %v3310
  %v4301 = vunpack.c.l.b16 %v3311
  %v4302 = vunpack.c.l.b16 %v3312
  %v4303 = vunpack.c.l.b16 %v3313
  %v4304 = vunpack.c.l.b16 %v3314
  %v4305 = vunpack.c.l.b16 %v3315
  %v4306 = vunpack.c.l.b16 %v3316
  %v4307 = vunpack.c.l.b16 %v3317
  %v4308 = vunpack.c.l.b16 %v3318
  %v4309 = vunpack.c.l.b16 %v3319
  %v4310 = vunpack.c.l.b16 %v3320
  %v4311 = vunpack.c.l.b16 %v3321
  %v4312 = vunpack.c.l.b16 %v3322
  %v4313 = vunpack.c.l.b16 %v3323
  %v4314 = vunpack.c.l.b16 %v3324
  %v4315 = vunpack.c.l.b16 %v3325
  %v4316 = vunpack.c.l.b16 %v3326
  %v4317 = vunpack.c.l.b16 %v3327
  %v4318 = vunpack.c.l.b16 %v3328
  %v4319 = vunpack.c.l.b16 %v3329
  %v4320 = vunpack.c.l.b16 %v3330
  %v4321 = vunpack.c.l.b16 %v3331
  %v4322 = vunpack.c.l.b16 %v3332
  %v4323 = vunpack.c.l.b16 %v3333
  %v4324 = vunpack.c.l.b16 %v3334
  %v4325 = vunpack.c.l.b16 %v3335
  %v4326 = vunpack.c.l.b16 %v3336
  %v4327 = vunpack.c.l.b16 %v3337
  %v4328 = vunpack.c.l.b16 %v3338
  %v4329 = vunpack.c.l.b16 %v3339
  %v4330 = vunpack.c.l.b16 %v3340
  %v4331 = vunpack.c.l.b16 %v3341
  %v4332 = vunpack.c.l.b16 %v3342
  %v4333 = vunpack.c.l.b16 %v3343
  %v4334 = vunpack.c.l.b16 %v3344
  %v4335 = vunpack.c.l.b16 %v3345
  %v4336 = vunpack.c.l.b16 %v3346
  %v4337 = vunpack.c.l.b16 %v3347
  %v4338 = vunpack.c.l.b16 %v3348
  %v4339 = vunpack.c.l.b16 %v3349
  %v4340 = vunpack.c.l.b16 %v3350
  %v4341 = vunpack.c.l.b16 %v3351
  %v4342 = vunpack.c.l.b16 %v3352
  %v4343 = vunpack.c.l.b16 %v3353
  %v4344 = vunpack.c.l.b16 %v3354
  %v4345 = vunpack.c.l.b16 %v3355
  %v4346 = vunpack.c.l.b16 %v3356
  %v4347 = vunpack.c.l.b16 %v3357
  %v4348 = vunpack.c.l.b16 %v3358
  %v4349 = vunpack.c.l.b16 %v3359
  %v4350 = vunpack.c.l.b16 %v3360
  %v4351 = vunpack.c.l.b16 %v3361
  %v4352 = vunpack.c.l.b16 %v3362
  %v4353 = vunpack.c.l.b16 %v3363
  %v4354 = vunpack.c.l.b16 %v3364
  %v4355 = vunpack.c.l.b16 %v3365
  %v4356 = vunpack.c.l.b16 %v3366
  %v4357 = vunpack.c.l.b16 %v3367
  %v4358 = vunpack.c.l.b16 %v3368
  %v4359 = vunpack.c.l.b16 %v3369
  %v4360 = vunpack.c.l.b16 %v3370
  %v4361 = vunpack.c.l.b16 %v3371
  %v4362 = vunpack.c.l.b16 %v3372
  %v4363 = vunpack.c.l.b16 %v3373
  %v4364 = vunpack.c.l.b16 %v3374
  %v4365 = vunpack.c.l.b16 %v3375
  %v4366 = vunpack.c.l.b16 %v3376
  %v4367 = vunpack.c.l.b16 %v3377
  %v4368 = vunpack.c.l.b16 %v3378
  %v4369 = vunpack.c.l.b16 %v3379
  %v4370 = vunpack.c.l.b16 %v3380
  %v4371 = vunpack.c.l.b16 %v3381
  %v4372 = vunpack.c.l.b16 %v3382
  %v4373 = vunpack.c.l.b16 %v3383
  %v4374 = vunpack.c.l.b16 %v3384
  %v4375 = vunpack.c.l.b16 %v3385
  %v4376 = vunpack.c.l.b16 %v3386
  %v4377 = vunpack.c.l.b16 %v3387
  %v4378 = vunpack.c.l.b16 %v3388
  %v4379 = vunpack.c.l.b16 %v3389
  %v4380 = vunpack.c.l.b16 %v3390
  %v4381 = vunpack.c.l.b16 %v3391
  %v4382 = vunpack.c.l.b16 %v3392
  %v4383 = vunpack.c.l.b16 %v3393
  %v4384 = vunpack.c.l.b16 %v3394
  %v4385 = vunpack.c.l.b16 %v3395
  %v4386 = vunpack.c.l.b16 %v3396
  %v4387 = vunpack.c.l.b16 %v3397
  %v4388 = vunpack.c.l.b16 %v3398
  %v4389 = vunpack.c.l.b16 %v3399
  %v4390 = vunpack.c.l.b16 %v3400
  %v4391 = vunpack.c.l.b16 %v3401
  %v4392 = vunpack.c.l.b16 %v3402
  %v4393 = vunpack.c.l.b16 %v3403
  %v4394 = vunpack.c.l.b16 %v3404
  %v4395 = vunpack.c.l.b16 %v3405
  %v4396 = vunpack.c.l.b16 %v3406
  %v4397 = vunpack.c.l.b16 %v3407
  %v4398 = vunpack.c.l.b16 %v3408
  %v4399 = vunpack.c.l.b16 %v3409
  %v4400 = vunpack.c.l.b16 %v3410
  %v4401 = vunpack.c.l.b16 %v3411
  %v4402 = vunpack.c.l.b16 %v3412
  %v4403 = vunpack.c.l.b16 %v3413
  %v4404 = vunpack.c.l.b16 %v3414
  %v4405 = vunpack.c.l.b16 %v3415
  %v4406 = vunpack.c.l.b16 %v3416
  %v4407 = vunpack.c.l.b16 %v3417
  %v4408 = vunpack.c.l.b16 %v3418
  %v4409 = vunpack.c.l.b16 %v3419
  %v4410 = vunpack.c.l.b16 %v3420
  %v4411 = vunpack.c.l.b16 %v3421
  %v4412 = vunpack.c.l.b16 %v3422
  %v4413 = vunpack.c.l.b16 %v3423
  %v4414 = vunpack.c.l.b16 %v3424
  %v4415 = vunpack.c.l.b16 %v3425
  %v4416 = vunpack.c.l.b16 %v3426
  %v4417 = vunpack.c.l.b16 %v3427
  %v4418 = vunpack.c.l.b16 %v3428
  %v4419 = vunpack.c.l.b16 %v3429
  %v4420 = vunpack.c.l.b16 %v3430
  %v4421 = vunpack.c.l.b16 %v3431
  %v4422 = vunpack.c.l.b16 %v3432
  %v4423 = vunpack.c.l.b16 %v3433
  %v4424 = vunpack.c.l.b16 %v3434
  %v4425 = vunpack.c.l.b16 %v3435
  %v4426 = vunpack.c.l.b16 %v3436
  %v4427 = vunpack.c.l.b16 %v3437
  %v4428 = vunpack.c.l.b16 %v3438
  %v4429 = vunpack.c.l.b16 %v3439
  %v4430 = vunpack.c.l.b16 %v3440
  %v4431 = vunpack.c.l.b16 %v3441
  %v4432 = vunpack.c.l.b16 %v3442
  %v4433 = vunpack.c.l.b16 %v3443
  %v4434 = vunpack.c.l.b16 %v3444
  %v4435 = vunpack.c.l.b16 %v3445
  %v4436 = vunpack.c.l.b16 %v3446
  %v4437 = vunpack.c.l.b16 %v3447
  %v4438 = vunpack.c.l.b16 %v3448
  %v4439 = vunpack.c.l.b16 %v3449
  %v4440 = vunpack.c.l.b16 %v3450
  %v4441 = vunpack.c.l.b16 %v3451
  %v4442 = vunpack.c.l.b16 %v3452
  %v4443 = vunpack.c.l.b16 %v3453
  %v4444 = vunpack.c.l.b16 %v3454
  %v4445 = vunpack.c.l.b16 %v3455
  %v4446 = vunpack.c.l.b16 %v3456
  %v4447 = vunpack.c.l.b16 %v3457
  %v4448 = vunpack.c.l.b16 %v3458
  %v4449 = vunpack.c.l.b16 %v3459
  %v4450 = vunpack.c.l.b16 %v3460
  %v4451 = vunpack.c.l.b16 %v3461
  %v4452 = vunpack.c.l.b16 %v3462
  %v4453 = vunpack.c.l.b16 %v3463
  %v4454 = vunpack.c.l.b16 %v3464
  %v4455 = vunpack.c.l.b16 %v3465
  %v4456 = vunpack.c.l.b16 %v3466
  %v4457 = vunpack.c.l.b16 %v3467
  %v4458 = vunpack.c.l.b16 %v3468
  %v4459 = vunpack.c.l.b16 %v3469
  %v4460 = vunpack.c.l.b16 %v3470
  %v4461 = vunpack.c.l.b16 %v3471
  %v4462 = vunpack.c.l.b16 %v3472
  %v4463 = vunpack.c.l.b16 %v3473
  %v4464 = vunpack.c.l.b16 %v3474
  %v4465 = vunpack.c.l.b16 %v3475
  %v4466 = vunpack.c.l.b16 %v3476
  %v4467 = vunpack.c.l.b16 %v3477
  %v4468 = vunpack.c.l.b16 %v3478
  %v4469 = vunpack.c.l.b16 %v3479
  %v4470 = vunpack.c.l.b16 %v3480
  %v4471 = vunpack.c.l.b16 %v3481
  %v4472 = vunpack.c.l.b16 %v3482
  %v4473 = vunpack.c.l.b16 %v3483
  %v4474 = vunpack.c.l.b16 %v3484
  %v4475 = vunpack.c.l.b16 %v3485
  %v4476 = vunpack.c.l.b16 %v3486
  %v4477 = vunpack.c.l.b16 %v3487
  %v4478 = vunpack.c.l.b16 %v3488
  %v4479 = vunpack.c.l.b16 %v3489
  %v4480 = vunpack.c.l.b16 %v3490
  %v4481 = vunpack.c.l.b16 %v3491
  %v4482 = vunpack.c.l.b16 %v3492
  %v4483 = vunpack.c.l.b16 %v3493
  %v4484 = vunpack.c.l.b16 %v3494
  %v4485 = vunpack.c.l.b16 %v3495
  %v4486 = vunpack.c.l.b16 %v3496
  %v4487 = vunpack.c.l.b16 %v3497
  %v4488 = vunpack.c.l.b16 %v3498
  %v4489 = vunpack.c.l.b16 %v3499
  %v4490 = vunpack.c.l.b16 %v3500
  %v4491 = vunpack.c.l.b16 %v3501
  %v4492 = vunpack.c.l.b16 %v3502
  %v4493 = vunpack.c.l.b16 %v3503
  %v4494 = vunpack.c.l.b16 %v3504
  %v4495 = vunpack.c.l.b16 %v3505
  %v4496 = vpack.c.b16 %v4017, %v4016
  %v4497 = vpack.c.b16 %v4019, %v4018
  %v4498 = vpack.c.b16 %v4021, %v4020
  %v4499 = vpack.c.b16 %v4023, %v4022
  %v4500 = vpack.c.b16 %v4025, %v4024
  %v4501 = vpack.c.b16 %v4027, %v4026
  %v4502 = vpack.c.b16 %v4029, %v4028
  %v4503 = vpack.c.b16 %v4031, %v4030
  %v4504 = vpack.c.b16 %v4033, %v4032
  %v4505 = vpack.c.b16 %v4035, %v4034
  %v4506 = vpack.c.b16 %v4037, %v4036
  %v4507 = vpack.c.b16 %v4039, %v4038
  %v4508 = vpack.c.b16 %v4041, %v4040
  %v4509 = vpack.c.b16 %v4043, %v4042
  %v4510 = vpack.c.b16 %v4045, %v4044
  %v4511 = vpack.c.b16 %v4047, %v4046
  %v4512 = vpack.c.b16 %v4049, %v4048
  %v4513 = vpack.c.b16 %v4051, %v4050
  %v4514 = vpack.c.b16 %v4053, %v4052
  %v4515 = vpack.c.b16 %v4055, %v4054
  %v4516 = vpack.c.b16 %v4057, %v4056
  %v4517 = vpack.c.b16 %v4059, %v4058
  %v4518 = vpack.c.b16 %v4061, %v4060
  %v4519 = vpack.c.b16 %v4063, %v4062
  %v4520 = vpack.c.b16 %v4065, %v4064
  %v4521 = vpack.c.b16 %v4067, %v4066
  %v4522 = vpack.c.b16 %v4069, %v4068
  %v4523 = vpack.c.b16 %v4071, %v4070
  %v4524 = vpack.c.b16 %v4073, %v4072
  %v4525 = vpack.c.b16 %v4075, %v4074
  %v4526 = vpack.c.b16 %v4077, %v4076
  %v4527 = vpack.c.b16 %v4079, %v4078
  %v4528 = vpack.c.b16 %v4081, %v4080
  %v4529 = vpack.c.b16 %v4083, %v4082
  %v4530 = vpack.c.b16 %v4085, %v4084
  %v4531 = vpack.c.b16 %v4087, %v4086
  %v4532 = vpack.c.b16 %v4089, %v4088
  %v4533 = vpack.c.b16 %v4091, %v4090
  %v4534 = vpack.c.b16 %v4093, %v4092
  %v4535 = vpack.c.b16 %v4095, %v4094
  %v4536 = vpack.c.b16 %v4097, %v4096
  %v4537 = vpack.c.b16 %v4099, %v4098
  %v4538 = vpack.c.b16 %v4101, %v4100
  %v4539 = vpack.c.b16 %v4103, %v4102
  %v4540 = vpack.c.b16 %v4105, %v4104
  %v4541 = vpack.c.b16 %v4107, %v4106
  %v4542 = vpack.c.b16 %v4109, %v4108
  %v4543 = vpack.c.b16 %v4111, %v4110
  %v4544 = vpack.c.b16 %v4113, %v4112
  %v4545 = vpack.c.b16 %v4115, %v4114
  %v4546 = vpack.c.b16 %v4117, %v4116
  %v4547 = vpack.c.b16 %v4119, %v4118
  %v4548 = vpack.c.b16 %v4121, %v4120
  %v4549 = vpack.c.b16 %v4123, %v4122
  %v4550 = vpack.c.b16 %v4125, %v4124
  %v4551 = vpack.c.b16 %v4127, %v4126
  %v4552 = vpack.c.b16 %v4129, %v4128
  %v4553 = vpack.c.b16 %v4131, %v4130
  %v4554 = vpack.c.b16 %v4133, %v4132
  %v4555 = vpack.c.b16 %v4135, %v4134
  %v4556 = vpack.c.b16 %v4137, %v4136
  %v4557 = vpack.c.b16 %v4139, %v4138
  %v4558 = vpack.c.b16 %v4141, %v4140
  %v4559 = vpack.c.b16 %v4143, %v4142
  %v4560 = vpack.c.b16 %v4145, %v4144
  %v4561 = vpack.c.b16 %v4147, %v4146
  %v4562 = vpack.c.b16 %v4149, %v4148
  %v4563 = vpack.c.b16 %v4151, %v4150
  %v4564 = vpack.c.b16 %v4153, %v4152
  %v4565 = vpack.c.b16 %v4155, %v4154
  %v4566 = vpack.c.b16 %v4157, %v4156
  %v4567 = vpack.c.b16 %v4159, %v4158
  %v4568 = vpack.c.b16 %v4161, %v4160
  %v4569 = vpack.c.b16 %v4163, %v4162
  %v4570 = vpack.c.b16 %v4165, %v4164
  %v4571 = vpack.c.b16 %v4167, %v4166
  %v4572 = vpack.c.b16 %v4169, %v4168
  %v4573 = vpack.c.b16 %v4171, %v4170
  %v4574 = vpack.c.b16 %v4173, %v4172
  %v4575 = vpack.c.b16 %v4175, %v4174
  %v4576 = vpack.c.b16 %v4177, %v4176
  %v4577 = vpack.c.b16 %v4179, %v4178
  %v4578 = vpack.c.b16 %v4181, %v4180
  %v4579 = vpack.c.b16 %v4183, %v4182
  %v4580 = vpack.c.b16 %v4185, %v4184
  %v4581 = vpack.c.b16 %v4187, %v4186
  %v4582 = vpack.c.b16 %v4189, %v4188
  %v4583 = vpack.c.b16 %v4191, %v4190
  %v4584 = vpack.c.b16 %v4193, %v4192
  %v4585 = vpack.c.b16 %v4195, %v4194
  %v4586 = vpack.c.b16 %v4197, %v4196
  %v4587 = vpack.c.b16 %v4199, %v4198
  %v4588 = vpack.c.b16 %v4201, %v4200
  %v4589 = vpack.c.b16 %v4203, %v4202
  %v4590 = vpack.c.b16 %v4205, %v4204
  %v4591 = vpack.c.b16 %v4207, %v4206
  %v4592 = vpack.c.b16 %v4209, %v4208
  %v4593 = vpack.c.b16 %v4211, %v4210
  %v4594 = vpack.c.b16 %v4213, %v4212
  %v4595 = vpack.c.b16 %v4215, %v4214
  %v4596 = vpack.c.b16 %v4217, %v4216
  %v4597 = vpack.c.b16 %v4219, %v4218
  %v4598 = vpack.c.b16 %v4221, %v4220
  %v4599 = vpack.c.b16 %v4223, %v4222
  %v4600 = vpack.c.b16 %v4225, %v4224
  %v4601 = vpack.c.b16 %v4227, %v4226
  %v4602 = vpack.c.b16 %v4229, %v4228
  %v4603 = vpack.c.b16 %v4231, %v4230
  %v4604 = vpack.c.b16 %v4233, %v4232
  %v4605 = vpack.c.b16 %v4235, %v4234
  %v4606 = vpack.c.b16 %v4237, %v4236
  %v4607 = vpack.c.b16 %v4239, %v4238
  %v4608 = vpack.c.b16 %v4241, %v4240
  %v4609 = vpack.c.b16 %v4243, %v4242
  %v4610 = vpack.c.b16 %v4245, %v4244
  %v4611 = vpack.c.b16 %v4247, %v4246
  %v4612 = vpack.c.b16 %v4249, %v4248
  %v4613 = vpack.c.b16 %v4251, %v4250
  %v4614 = vpack.c.b16 %v4253, %v4252
  %v4615 = vpack.c.b16 %v4255, %v4254
  %v4616 = vpack.c.b16 %v4257, %v4256
  %v4617 = vpack.c.b16 %v4259, %v4258
  %v4618 = vpack.c.b16 %v4261, %v4260
  %v4619 = vpack.c.b16 %v4263, %v4262
  %v4620 = vpack.c.b16 %v4265, %v4264
  %v4621 = vpack.c.b16 %v4267, %v4266
  %v4622 = vpack.c.b16 %v4269, %v4268
  %v4623 = vpack.c.b16 %v4271, %v4270
  %v4624 = vpack.c.b16 %v4273, %v4272
  %v4625 = vpack.c.b16 %v4275, %v4274
  %v4626 = vpack.c.b16 %v4277, %v4276
  %v4627 = vpack.c.b16 %v4279, %v4278
  %v4628 = vpack.c.b16 %v4281, %v4280
  %v4629 = vpack.c.b16 %v4283, %v4282
  %v4630 = vpack.c.b16 %v4285, %v4284
  %v4631 = vpack.c.b16 %v4287, %v4286
  %v4632 = vpack.c.b16 %v4289, %v4288
  %v4633 = vpack.c.b16 %v4291, %v4290
  %v4634 = vpack.c.b16 %v4293, %v4292
  %v4635 = vpack.c.b16 %v4295, %v4294
  %v4636 = vpack.c.b16 %v4297, %v4296
  %v4637 = vpack.c.b16 %v4299, %v4298
  %v4638 = vpack.c.b16 %v4301, %v4300
  %v4639 = vpack.c.b16 %v4303, %v4302
  %v4640 = vpack.c.b16 %v4305, %v4304
  %v4641 = vpack.c.b16 %v4307, %v4306
  %v4642 = vpack.c.b16 %v4309, %v4308
  %v4643 = vpack.c.b16 %v4311, %v4310
  %v4644 = vpack.c.b16 %v4313, %v4312
  %v4645 = vpack.c.b16 %v4315, %v4314
  %v4646 = vpack.c.b16 %v4317, %v4316
  %v4647 = vpack.c.b16 %v4319, %v4318
  %v4648 = vpack.c.b16 %v4321, %v4320
  %v4649 = vpack.c.b16 %v4323, %v4322
  %v4650 = vpack.c.b16 %v4325, %v4324
  %v4651 = vpack.c.b16 %v4327, %v4326
  %v4652 = vpack.c.b16 %v4329, %v4328
  %v4653 = vpack.c.b16 %v4331, %v4330
  %v4654 = vpack.c.b16 %v4333, %v4332
  %v4655 = vpack.c.b16 %v4335, %v4334
  %v4656 = vpack.c.b16 %v4337, %v4336
  %v4657 = vpack.c.b16 %v4339, %v4338
  %v4658 = vpack.c.b16 %v4341, %v4340
  %v4659 = vpack.c.b16 %v4343, %v4342
  %v4660 = vpack.c.b16 %v4345, %v4344
  %v4661 = vpack.c.b16 %v4347, %v4346
  %v4662 = vpack.c.b16 %v4349, %v4348
  %v4663 = vpack.c.b16 %v4351, %v4350
  %v4664 = vpack.c.b16 %v4353, %v4352
  %v4665 = vpack.c.b16 %v4355, %v4354
  %v4666 = vpack.c.b16 %v4357, %v4356
  %v4667 = vpack.c.b16 %v4359, %v4358
  %v4668 = vpack.c.b16 %v4361, %v4360
  %v4669 = vpack.c.b16 %v4363, %v4362
  %v4670 = vpack.c.b16 %v4365, %v4364
  %v4671 = vpack.c.b16 %v4367, %v4366
  %v4672 = vpack.c.b16 %v4369, %v4368
  %v4673 = vpack.c.b16 %v4371, %v4370
  %v4674 = vpack.c.b16 %v4373, %v4372
  %v4675 = vpack.c.b16 %v4375, %v4374
  %v4676 = vpack.c.b16 %v4377, %v4376
  %v4677 = vpack.c.b16 %v4379, %v4378
  %v4678 = vpack.c.b16 %v4381, %v4380
  %v4679 = vpack.c.b16 %v4383, %v4382
  %v4680 = vpack.c.b16 %v4385, %v4384
  %v4681 = vpack.c.b16 %v4387, %v4386
  %v4682 = vpack.c.b16 %v4389, %v4388
  %v4683 = vpack.c.b16 %v4391, %v4390
  %v4684 = vpack.c.b16 %v4393, %v4392
  %v4685 = vpack.c.b16 %v4395, %v4394
  %v4686 = vpack.c.b16 %v4397, %v4396
  %v4687 = vpack.c.b16 %v4399, %v4398
  %v4688 = vpack.c.b16 %v4401, %v4400
  %v4689 = vpack.c.b16 %v4403, %v4402
  %v4690 = vpack.c.b16 %v4405, %v4404
  %v4691 = vpack.c.b16 %v4407, %v4406
  %v4692 = vpack.c.b16 %v4409, %v4408
  %v4693 = vpack.c.b16 %v4411, %v4410
  %v4694 = vpack.c.b16 %v4413, %v4412
  %v4695 = vpack.c.b16 %v4415, %v4414
  %v4696 = vpack.c.b16 %v4417, %v4416
  %v4697 = vpack.c.b16 %v4419, %v4418
  %v4698 = vpack.c.b16 %v4421, %v4420
  %v4699 = vpack.c.b16 %v4423, %v4422
  %v4700 = vpack.c.b16 %v4425, %v4424
  %v4701 = vpack.c.b16 %v4427, %v4426
  %v4702 = vpack.c.b16 %v4429, %v4428
  %v4703 = vpack.c.b16 %v4431, %v4430
  %v4704 = vpack.c.b16 %v4433, %v4432
  %v4705 = vpack.c.b16 %v4435, %v4434
  %v4706 = vpack.c.b16 %v4437, %v4436
  %v4707 = vpack.c.b16 %v4439, %v4438
  %v4708 = vpack.c.b16 %v4441, %v4440
  %v4709 = vpack.c.b16 %v4443, %v4442
  %v4710 = vpack.c.b16 %v4445, %v4444
  %v4711 = vpack.c.b16 %v4447, %v4446
  %v4712 = vpack.c.b16 %v4449, %v4448
  %v4713 = vpack.c.b16 %v4451, %v4450
  %v4714 = vpack.c.b16 %v4453, %v4452
  %v4715 = vpack.c.b16 %v4455, %v4454
  %v4716 = vpack.c.b16 %v4457, %v4456
  %v4717 = vpack.c.b16 %v4459, %v4458
  %v4718 = vpack.c.b16 %v4461, %v4460
  %v4719 = vpack.c.b16 %v4463, %v4462
  %v4720 = vpack.c.b16 %v4465, %v4464
  %v4721 = vpack.c.b16 %v4467, %v4466
  %v4722 = vpack.c.b16 %v4469, %v4468
  %v4723 = vpack.c.b16 %v4471, %v4470
  %v4724 = vpack.c.b16 %v4473, %v4472
  %v4725 = vpack.c.b16 %v4475, %v4474
  %v4726 = vpack.c.b16 %v4477, %v4476
  %v4727 = vpack.c.b16 %v4479, %v4478
  %v4728 = vpack.c.b16 %v4481, %v4480
  %v4729 = vpack.c.b16 %v4483, %v4482
  %v4730 = vpack.c.b16 %v4485, %v4484
  %v4731 = vpack.c.b16 %v4487, %v4486
  %v4732 = vpack.c.b16 %v4489, %v4488
  %v4733 = vpack.c.b16 %v4491, %v4490
  %v4734 = vpack.c.b16 %v4493, %v4492
  %v4735 = vpack.c.b16 %v4495, %v4494
  %4976 = vmatprep.subr.bf16.mxu0 0
  %4977 = vmatpush1.bf16.msra.mxu0 %v4503
  %4978 = vmatprep.subr.bf16.mxu0 0
  %4979 = vmatpush1.bf16.msra.mxu0 %v4502
  %4980 = vmatprep.subr.bf16.mxu0 0
  %4981 = vmatpush1.bf16.msra.mxu0 %v4501
  %4982 = vmatprep.subr.bf16.mxu0 0
  %4983 = vmatpush1.bf16.msra.mxu0 %v4500
  %4984 = vmatprep.subr.bf16.mxu0 0
  %4985 = vmatpush1.bf16.msra.mxu0 %v4499
  %4986 = vmatprep.subr.bf16.mxu0 0
  %4987 = vmatpush1.bf16.msra.mxu0 %v4498
  %4988 = vmatprep.subr.bf16.mxu0 0
  %4989 = vmatpush1.bf16.msra.mxu0 %v4497
  %4990 = vmatprep.subr.bf16.mxu0 0
  %4991 = vmatpush1.bf16.msra.mxu0 %v4496
  %4992 = vmatprep.subr.bf16.mxu0 0
  %4993 = vmatpush2.bf16.msra.mxu0 %v4511
  %4994 = vmatprep.subr.bf16.mxu0 0
  %4995 = vmatpush2.bf16.msra.mxu0 %v4510
  %4996 = vmatprep.subr.bf16.mxu0 0
  %4997 = vmatpush2.bf16.msra.mxu0 %v4509
  %4998 = vmatprep.subr.bf16.mxu0 0
  %4999 = vmatpush2.bf16.msra.mxu0 %v4508
  %5000 = vmatprep.subr.bf16.mxu0 0
  %5001 = vmatpush2.bf16.msra.mxu0 %v4507
  %5002 = vmatprep.subr.bf16.mxu0 0
  %5003 = vmatpush2.bf16.msra.mxu0 %v4506
  %5004 = vmatprep.subr.bf16.mxu0 0
  %5005 = vmatpush2.bf16.msra.mxu0 %v4505
  %5006 = vmatprep.subr.bf16.mxu0 0
  %5007 = vmatpush2.bf16.msra.mxu0 %v4504
  %5008 = vmatprep.mubr.bf16.mxu0 %v3507
  %5009 = vmatmul.mubr.bf16.gmra.mxu0 %v3506
  %v5010 = vpop.f32.mrf.mxu0
  %v5011 = vadd.f32 0.0, %v5010
  %v5012 = vpop.f32.mrf.mxu0
  %v5013 = vpop.f32.mrf.mxu0
  %v5014 = vadd.f32 0.0, %v5013
  %v5015 = vpop.f32.mrf.mxu0
  %5016 = vdwg.mxu0
  %5017 = vmatprep.subr.bf16.mxu0 0
  %5018 = vmatpush1.bf16.msra.mxu0 %v4519
  %5019 = vmatprep.subr.bf16.mxu0 0
  %5020 = vmatpush1.bf16.msra.mxu0 %v4518
  %5021 = vmatprep.subr.bf16.mxu0 0
  %5022 = vmatpush1.bf16.msra.mxu0 %v4517
  %5023 = vmatprep.subr.bf16.mxu0 0
  %5024 = vmatpush1.bf16.msra.mxu0 %v4516
  %5025 = vmatprep.subr.bf16.mxu0 0
  %5026 = vmatpush1.bf16.msra.mxu0 %v4515
  %5027 = vmatprep.subr.bf16.mxu0 0
  %5028 = vmatpush1.bf16.msra.mxu0 %v4514
  %5029 = vmatprep.subr.bf16.mxu0 0
  %5030 = vmatpush1.bf16.msra.mxu0 %v4513
  %5031 = vmatprep.subr.bf16.mxu0 0
  %5032 = vmatpush1.bf16.msra.mxu0 %v4512
  %5033 = vmatprep.subr.bf16.mxu0 0
  %5034 = vmatpush2.bf16.msra.mxu0 %v4527
  %5035 = vmatprep.subr.bf16.mxu0 0
  %5036 = vmatpush2.bf16.msra.mxu0 %v4526
  %5037 = vmatprep.subr.bf16.mxu0 0
  %5038 = vmatpush2.bf16.msra.mxu0 %v4525
  %5039 = vmatprep.subr.bf16.mxu0 0
  %5040 = vmatpush2.bf16.msra.mxu0 %v4524
  %5041 = vmatprep.subr.bf16.mxu0 0
  %5042 = vmatpush2.bf16.msra.mxu0 %v4523
  %5043 = vmatprep.subr.bf16.mxu0 0
  %5044 = vmatpush2.bf16.msra.mxu0 %v4522
  %5045 = vmatprep.subr.bf16.mxu0 0
  %5046 = vmatpush2.bf16.msra.mxu0 %v4521
  %5047 = vmatprep.subr.bf16.mxu0 0
  %5048 = vmatpush2.bf16.msra.mxu0 %v4520
  %5049 = vmatprep.mubr.bf16.mxu0 %v3509
  %5050 = vmatmul.mubr.bf16.gmra.mxu0 %v3508
  %v5051 = vpop.f32.mrf.mxu0
  %v5052 = vadd.f32 %v5011, %v5051
  %v5053 = vpop.f32.mrf.mxu0
  %v5054 = vpop.f32.mrf.mxu0
  %v5055 = vadd.f32 %v5014, %v5054
  %v5056 = vpop.f32.mrf.mxu0
  %5057 = vdwg.mxu0
  %5058 = vmatprep.subr.bf16.mxu0 0
  %5059 = vmatpush1.bf16.msra.mxu0 %v4535
  %5060 = vmatprep.subr.bf16.mxu0 0
  %5061 = vmatpush1.bf16.msra.mxu0 %v4534
  %5062 = vmatprep.subr.bf16.mxu0 0
  %5063 = vmatpush1.bf16.msra.mxu0 %v4533
  %5064 = vmatprep.subr.bf16.mxu0 0
  %5065 = vmatpush1.bf16.msra.mxu0 %v4532
  %5066 = vmatprep.subr.bf16.mxu0 0
  %5067 = vmatpush1.bf16.msra.mxu0 %v4531
  %5068 = vmatprep.subr.bf16.mxu0 0
  %5069 = vmatpush1.bf16.msra.mxu0 %v4530
  %5070 = vmatprep.subr.bf16.mxu0 0
  %5071 = vmatpush1.bf16.msra.mxu0 %v4529
  %5072 = vmatprep.subr.bf16.mxu0 0
  %5073 = vmatpush1.bf16.msra.mxu0 %v4528
  %5074 = vmatprep.subr.bf16.mxu0 0
  %5075 = vmatpush2.bf16.msra.mxu0 %v4543
  %5076 = vmatprep.subr.bf16.mxu0 0
  %5077 = vmatpush2.bf16.msra.mxu0 %v4542
  %5078 = vmatprep.subr.bf16.mxu0 0
  %5079 = vmatpush2.bf16.msra.mxu0 %v4541
  %5080 = vmatprep.subr.bf16.mxu0 0
  %5081 = vmatpush2.bf16.msra.mxu0 %v4540
  %5082 = vmatprep.subr.bf16.mxu0 0
  %5083 = vmatpush2.bf16.msra.mxu0 %v4539
  %5084 = vmatprep.subr.bf16.mxu0 0
  %5085 = vmatpush2.bf16.msra.mxu0 %v4538
  %5086 = vmatprep.subr.bf16.mxu0 0
  %5087 = vmatpush2.bf16.msra.mxu0 %v4537
  %5088 = vmatprep.subr.bf16.mxu0 0
  %5089 = vmatpush2.bf16.msra.mxu0 %v4536
  %5090 = vmatprep.mubr.bf16.mxu0 %v3511
  %5091 = vmatmul.mubr.bf16.gmra.mxu0 %v3510
  %v5092 = vpop.f32.mrf.mxu0
  %v5093 = vadd.f32 %v5052, %v5092
  %v5094 = vpop.f32.mrf.mxu0
  %v5095 = vpop.f32.mrf.mxu0
  %v5096 = vadd.f32 %v5055, %v5095
  %v5097 = vpop.f32.mrf.mxu0
  %5098 = vdwg.mxu0
  %5099 = vmatprep.subr.bf16.mxu0 0
  %5100 = vmatpush1.bf16.msra.mxu0 %v4551
  %5101 = vmatprep.subr.bf16.mxu0 0
  %5102 = vmatpush1.bf16.msra.mxu0 %v4550
  %5103 = vmatprep.subr.bf16.mxu0 0
  %5104 = vmatpush1.bf16.msra.mxu0 %v4549
  %5105 = vmatprep.subr.bf16.mxu0 0
  %5106 = vmatpush1.bf16.msra.mxu0 %v4548
  %5107 = vmatprep.subr.bf16.mxu0 0
  %5108 = vmatpush1.bf16.msra.mxu0 %v4547
  %5109 = vmatprep.subr.bf16.mxu0 0
  %5110 = vmatpush1.bf16.msra.mxu0 %v4546
  %5111 = vmatprep.subr.bf16.mxu0 0
  %5112 = vmatpush1.bf16.msra.mxu0 %v4545
  %5113 = vmatprep.subr.bf16.mxu0 0
  %5114 = vmatpush1.bf16.msra.mxu0 %v4544
  %5115 = vmatprep.subr.bf16.mxu0 0
  %5116 = vmatpush2.bf16.msra.mxu0 %v4559
  %5117 = vmatprep.subr.bf16.mxu0 0
  %5118 = vmatpush2.bf16.msra.mxu0 %v4558
  %5119 = vmatprep.subr.bf16.mxu0 0
  %5120 = vmatpush2.bf16.msra.mxu0 %v4557
  %5121 = vmatprep.subr.bf16.mxu0 0
  %5122 = vmatpush2.bf16.msra.mxu0 %v4556
  %5123 = vmatprep.subr.bf16.mxu0 0
  %5124 = vmatpush2.bf16.msra.mxu0 %v4555
  %5125 = vmatprep.subr.bf16.mxu0 0
  %5126 = vmatpush2.bf16.msra.mxu0 %v4554
  %5127 = vmatprep.subr.bf16.mxu0 0
  %5128 = vmatpush2.bf16.msra.mxu0 %v4553
  %5129 = vmatprep.subr.bf16.mxu0 0
  %5130 = vmatpush2.bf16.msra.mxu0 %v4552
  %5131 = vmatprep.mubr.bf16.mxu0 %v3513
  %5132 = vmatmul.mubr.bf16.gmra.mxu0 %v3512
  %v5133 = vpop.f32.mrf.mxu0
  %v5134 = vadd.f32 %v5093, %v5133
  %v5135 = vpop.f32.mrf.mxu0
  %v5136 = vpop.f32.mrf.mxu0
  %v5137 = vadd.f32 %v5096, %v5136
  %v5138 = vpop.f32.mrf.mxu0
  %5139 = vdwg.mxu0
  %5140 = vmatprep.subr.bf16.mxu0 0
  %5141 = vmatpush1.bf16.msra.mxu0 %v4567
  %5142 = vmatprep.subr.bf16.mxu0 0
  %5143 = vmatpush1.bf16.msra.mxu0 %v4566
  %5144 = vmatprep.subr.bf16.mxu0 0
  %5145 = vmatpush1.bf16.msra.mxu0 %v4565
  %5146 = vmatprep.subr.bf16.mxu0 0
  %5147 = vmatpush1.bf16.msra.mxu0 %v4564
  %5148 = vmatprep.subr.bf16.mxu0 0
  %5149 = vmatpush1.bf16.msra.mxu0 %v4563
  %5150 = vmatprep.subr.bf16.mxu0 0
  %5151 = vmatpush1.bf16.msra.mxu0 %v4562
  %5152 = vmatprep.subr.bf16.mxu0 0
  %5153 = vmatpush1.bf16.msra.mxu0 %v4561
  %5154 = vmatprep.subr.bf16.mxu0 0
  %5155 = vmatpush1.bf16.msra.mxu0 %v4560
  %5156 = vmatprep.subr.bf16.mxu0 0
  %5157 = vmatpush2.bf16.msra.mxu0 %v4575
  %5158 = vmatprep.subr.bf16.mxu0 0
  %5159 = vmatpush2.bf16.msra.mxu0 %v4574
  %5160 = vmatprep.subr.bf16.mxu0 0
  %5161 = vmatpush2.bf16.msra.mxu0 %v4573
  %5162 = vmatprep.subr.bf16.mxu0 0
  %5163 = vmatpush2.bf16.msra.mxu0 %v4572
  %5164 = vmatprep.subr.bf16.mxu0 0
  %5165 = vmatpush2.bf16.msra.mxu0 %v4571
  %5166 = vmatprep.subr.bf16.mxu0 0
  %5167 = vmatpush2.bf16.msra.mxu0 %v4570
  %5168 = vmatprep.subr.bf16.mxu0 0
  %5169 = vmatpush2.bf16.msra.mxu0 %v4569
  %5170 = vmatprep.subr.bf16.mxu0 0
  %5171 = vmatpush2.bf16.msra.mxu0 %v4568
  %5172 = vmatprep.mubr.bf16.mxu0 %v3515
  %5173 = vmatmul.mubr.bf16.gmra.mxu0 %v3514
  %v5174 = vpop.f32.mrf.mxu0
  %v5175 = vadd.f32 %v5134, %v5174
  %v5176 = vpop.f32.mrf.mxu0
  %v5177 = vpop.f32.mrf.mxu0
  %v5178 = vadd.f32 %v5137, %v5177
  %v5179 = vpop.f32.mrf.mxu0
  %5180 = vdwg.mxu0
  %5181 = vmatprep.subr.bf16.mxu0 0
  %5182 = vmatpush1.bf16.msra.mxu0 %v4583
  %5183 = vmatprep.subr.bf16.mxu0 0
  %5184 = vmatpush1.bf16.msra.mxu0 %v4582
  %5185 = vmatprep.subr.bf16.mxu0 0
  %5186 = vmatpush1.bf16.msra.mxu0 %v4581
  %5187 = vmatprep.subr.bf16.mxu0 0
  %5188 = vmatpush1.bf16.msra.mxu0 %v4580
  %5189 = vmatprep.subr.bf16.mxu0 0
  %5190 = vmatpush1.bf16.msra.mxu0 %v4579
  %5191 = vmatprep.subr.bf16.mxu0 0
  %5192 = vmatpush1.bf16.msra.mxu0 %v4578
  %5193 = vmatprep.subr.bf16.mxu0 0
  %5194 = vmatpush1.bf16.msra.mxu0 %v4577
  %5195 = vmatprep.subr.bf16.mxu0 0
  %5196 = vmatpush1.bf16.msra.mxu0 %v4576
  %5197 = vmatprep.subr.bf16.mxu0 0
  %5198 = vmatpush2.bf16.msra.mxu0 %v4591
  %5199 = vmatprep.subr.bf16.mxu0 0
  %5200 = vmatpush2.bf16.msra.mxu0 %v4590
  %5201 = vmatprep.subr.bf16.mxu0 0
  %5202 = vmatpush2.bf16.msra.mxu0 %v4589
  %5203 = vmatprep.subr.bf16.mxu0 0
  %5204 = vmatpush2.bf16.msra.mxu0 %v4588
  %5205 = vmatprep.subr.bf16.mxu0 0
  %5206 = vmatpush2.bf16.msra.mxu0 %v4587
  %5207 = vmatprep.subr.bf16.mxu0 0
  %5208 = vmatpush2.bf16.msra.mxu0 %v4586
  %5209 = vmatprep.subr.bf16.mxu0 0
  %5210 = vmatpush2.bf16.msra.mxu0 %v4585
  %5211 = vmatprep.subr.bf16.mxu0 0
  %5212 = vmatpush2.bf16.msra.mxu0 %v4584
  %5213 = vmatprep.mubr.bf16.mxu0 %v3517
  %5214 = vmatmul.mubr.bf16.gmra.mxu0 %v3516
  %v5215 = vpop.f32.mrf.mxu0
  %v5216 = vadd.f32 %v5175, %v5215
  %v5217 = vpop.f32.mrf.mxu0
  %v5218 = vpop.f32.mrf.mxu0
  %v5219 = vadd.f32 %v5178, %v5218
  %v5220 = vpop.f32.mrf.mxu0
  %5221 = vdwg.mxu0
  %5222 = vmatprep.subr.bf16.mxu0 0
  %5223 = vmatpush1.bf16.msra.mxu0 %v4599
  %5224 = vmatprep.subr.bf16.mxu0 0
  %5225 = vmatpush1.bf16.msra.mxu0 %v4598
  %5226 = vmatprep.subr.bf16.mxu0 0
  %5227 = vmatpush1.bf16.msra.mxu0 %v4597
  %5228 = vmatprep.subr.bf16.mxu0 0
  %5229 = vmatpush1.bf16.msra.mxu0 %v4596
  %5230 = vmatprep.subr.bf16.mxu0 0
  %5231 = vmatpush1.bf16.msra.mxu0 %v4595
  %5232 = vmatprep.subr.bf16.mxu0 0
  %5233 = vmatpush1.bf16.msra.mxu0 %v4594
  %5234 = vmatprep.subr.bf16.mxu0 0
  %5235 = vmatpush1.bf16.msra.mxu0 %v4593
  %5236 = vmatprep.subr.bf16.mxu0 0
  %5237 = vmatpush1.bf16.msra.mxu0 %v4592
  %5238 = vmatprep.subr.bf16.mxu0 0
  %5239 = vmatpush2.bf16.msra.mxu0 %v4607
  %5240 = vmatprep.subr.bf16.mxu0 0
  %5241 = vmatpush2.bf16.msra.mxu0 %v4606
  %5242 = vmatprep.subr.bf16.mxu0 0
  %5243 = vmatpush2.bf16.msra.mxu0 %v4605
  %5244 = vmatprep.subr.bf16.mxu0 0
  %5245 = vmatpush2.bf16.msra.mxu0 %v4604
  %5246 = vmatprep.subr.bf16.mxu0 0
  %5247 = vmatpush2.bf16.msra.mxu0 %v4603
  %5248 = vmatprep.subr.bf16.mxu0 0
  %5249 = vmatpush2.bf16.msra.mxu0 %v4602
  %5250 = vmatprep.subr.bf16.mxu0 0
  %5251 = vmatpush2.bf16.msra.mxu0 %v4601
  %5252 = vmatprep.subr.bf16.mxu0 0
  %5253 = vmatpush2.bf16.msra.mxu0 %v4600
  %5254 = vmatprep.mubr.bf16.mxu0 %v3519
  %5255 = vmatmul.mubr.bf16.gmra.mxu0 %v3518
  %v5256 = vpop.f32.mrf.mxu0
  %v5257 = vadd.f32 %v5216, %v5256
  %v5258 = vpop.f32.mrf.mxu0
  %v5259 = vpop.f32.mrf.mxu0
  %v5260 = vadd.f32 %v5219, %v5259
  %v5261 = vpop.f32.mrf.mxu0
  %5262 = vdwg.mxu0
  %5263 = vmatprep.subr.bf16.mxu0 0
  %5264 = vmatpush1.bf16.msra.mxu0 %v4615
  %5265 = vmatprep.subr.bf16.mxu0 0
  %5266 = vmatpush1.bf16.msra.mxu0 %v4614
  %5267 = vmatprep.subr.bf16.mxu0 0
  %5268 = vmatpush1.bf16.msra.mxu0 %v4613
  %5269 = vmatprep.subr.bf16.mxu0 0
  %5270 = vmatpush1.bf16.msra.mxu0 %v4612
  %5271 = vmatprep.subr.bf16.mxu0 0
  %5272 = vmatpush1.bf16.msra.mxu0 %v4611
  %5273 = vmatprep.subr.bf16.mxu0 0
  %5274 = vmatpush1.bf16.msra.mxu0 %v4610
  %5275 = vmatprep.subr.bf16.mxu0 0
  %5276 = vmatpush1.bf16.msra.mxu0 %v4609
  %5277 = vmatprep.subr.bf16.mxu0 0
  %5278 = vmatpush1.bf16.msra.mxu0 %v4608
  %5279 = vmatprep.subr.bf16.mxu0 0
  %5280 = vmatpush2.bf16.msra.mxu0 %v4623
  %5281 = vmatprep.subr.bf16.mxu0 0
  %5282 = vmatpush2.bf16.msra.mxu0 %v4622
  %5283 = vmatprep.subr.bf16.mxu0 0
  %5284 = vmatpush2.bf16.msra.mxu0 %v4621
  %5285 = vmatprep.subr.bf16.mxu0 0
  %5286 = vmatpush2.bf16.msra.mxu0 %v4620
  %5287 = vmatprep.subr.bf16.mxu0 0
  %5288 = vmatpush2.bf16.msra.mxu0 %v4619
  %5289 = vmatprep.subr.bf16.mxu0 0
  %5290 = vmatpush2.bf16.msra.mxu0 %v4618
  %5291 = vmatprep.subr.bf16.mxu0 0
  %5292 = vmatpush2.bf16.msra.mxu0 %v4617
  %5293 = vmatprep.subr.bf16.mxu0 0
  %5294 = vmatpush2.bf16.msra.mxu0 %v4616
  %5295 = vmatprep.mubr.bf16.mxu0 %v3521
  %5296 = vmatmul.mubr.bf16.gmra.mxu0 %v3520
  %v5297 = vpop.f32.mrf.mxu0
  %v5298 = vadd.f32 %v5257, %v5297
  %v5299 = vpop.f32.mrf.mxu0
  %v5300 = vpop.f32.mrf.mxu0
  %v5301 = vadd.f32 %v5260, %v5300
  %v5302 = vpop.f32.mrf.mxu0
  %5303 = vdwg.mxu0
  %5304 = vmatprep.subr.bf16.mxu0 0
  %5305 = vmatpush1.bf16.msra.mxu0 %v4631
  %5306 = vmatprep.subr.bf16.mxu0 0
  %5307 = vmatpush1.bf16.msra.mxu0 %v4630
  %5308 = vmatprep.subr.bf16.mxu0 0
  %5309 = vmatpush1.bf16.msra.mxu0 %v4629
  %5310 = vmatprep.subr.bf16.mxu0 0
  %5311 = vmatpush1.bf16.msra.mxu0 %v4628
  %5312 = vmatprep.subr.bf16.mxu0 0
  %5313 = vmatpush1.bf16.msra.mxu0 %v4627
  %5314 = vmatprep.subr.bf16.mxu0 0
  %5315 = vmatpush1.bf16.msra.mxu0 %v4626
  %5316 = vmatprep.subr.bf16.mxu0 0
  %5317 = vmatpush1.bf16.msra.mxu0 %v4625
  %5318 = vmatprep.subr.bf16.mxu0 0
  %5319 = vmatpush1.bf16.msra.mxu0 %v4624
  %5320 = vmatprep.subr.bf16.mxu0 0
  %5321 = vmatpush2.bf16.msra.mxu0 %v4639
  %5322 = vmatprep.subr.bf16.mxu0 0
  %5323 = vmatpush2.bf16.msra.mxu0 %v4638
  %5324 = vmatprep.subr.bf16.mxu0 0
  %5325 = vmatpush2.bf16.msra.mxu0 %v4637
  %5326 = vmatprep.subr.bf16.mxu0 0
  %5327 = vmatpush2.bf16.msra.mxu0 %v4636
  %5328 = vmatprep.subr.bf16.mxu0 0
  %5329 = vmatpush2.bf16.msra.mxu0 %v4635
  %5330 = vmatprep.subr.bf16.mxu0 0
  %5331 = vmatpush2.bf16.msra.mxu0 %v4634
  %5332 = vmatprep.subr.bf16.mxu0 0
  %5333 = vmatpush2.bf16.msra.mxu0 %v4633
  %5334 = vmatprep.subr.bf16.mxu0 0
  %5335 = vmatpush2.bf16.msra.mxu0 %v4632
  %5336 = vmatprep.mubr.bf16.mxu0 %v3523
  %5337 = vmatmul.mubr.bf16.gmra.mxu0 %v3522
  %v5338 = vpop.f32.mrf.mxu0
  %v5339 = vadd.f32 %v5298, %v5338
  %v5340 = vpop.f32.mrf.mxu0
  %v5341 = vpop.f32.mrf.mxu0
  %v5342 = vadd.f32 %v5301, %v5341
  %v5343 = vpop.f32.mrf.mxu0
  %5344 = vdwg.mxu0
  %5345 = vmatprep.subr.bf16.mxu0 0
  %5346 = vmatpush1.bf16.msra.mxu0 %v4647
  %5347 = vmatprep.subr.bf16.mxu0 0
  %5348 = vmatpush1.bf16.msra.mxu0 %v4646
  %5349 = vmatprep.subr.bf16.mxu0 0
  %5350 = vmatpush1.bf16.msra.mxu0 %v4645
  %5351 = vmatprep.subr.bf16.mxu0 0
  %5352 = vmatpush1.bf16.msra.mxu0 %v4644
  %5353 = vmatprep.subr.bf16.mxu0 0
  %5354 = vmatpush1.bf16.msra.mxu0 %v4643
  %5355 = vmatprep.subr.bf16.mxu0 0
  %5356 = vmatpush1.bf16.msra.mxu0 %v4642
  %5357 = vmatprep.subr.bf16.mxu0 0
  %5358 = vmatpush1.bf16.msra.mxu0 %v4641
  %5359 = vmatprep.subr.bf16.mxu0 0
  %5360 = vmatpush1.bf16.msra.mxu0 %v4640
  %5361 = vmatprep.subr.bf16.mxu0 0
  %5362 = vmatpush2.bf16.msra.mxu0 %v4655
  %5363 = vmatprep.subr.bf16.mxu0 0
  %5364 = vmatpush2.bf16.msra.mxu0 %v4654
  %5365 = vmatprep.subr.bf16.mxu0 0
  %5366 = vmatpush2.bf16.msra.mxu0 %v4653
  %5367 = vmatprep.subr.bf16.mxu0 0
  %5368 = vmatpush2.bf16.msra.mxu0 %v4652
  %5369 = vmatprep.subr.bf16.mxu0 0
  %5370 = vmatpush2.bf16.msra.mxu0 %v4651
  %5371 = vmatprep.subr.bf16.mxu0 0
  %5372 = vmatpush2.bf16.msra.mxu0 %v4650
  %5373 = vmatprep.subr.bf16.mxu0 0
  %5374 = vmatpush2.bf16.msra.mxu0 %v4649
  %5375 = vmatprep.subr.bf16.mxu0 0
  %5376 = vmatpush2.bf16.msra.mxu0 %v4648
  %5377 = vmatprep.mubr.bf16.mxu0 %v3525
  %5378 = vmatmul.mubr.bf16.gmra.mxu0 %v3524
  %v5379 = vpop.f32.mrf.mxu0
  %v5380 = vadd.f32 %v5339, %v5379
  %v5381 = vpop.f32.mrf.mxu0
  %v5382 = vpop.f32.mrf.mxu0
  %v5383 = vadd.f32 %v5342, %v5382
  %v5384 = vpop.f32.mrf.mxu0
  %5385 = vdwg.mxu0
  %5386 = vmatprep.subr.bf16.mxu0 0
  %5387 = vmatpush1.bf16.msra.mxu0 %v4663
  %5388 = vmatprep.subr.bf16.mxu0 0
  %5389 = vmatpush1.bf16.msra.mxu0 %v4662
  %5390 = vmatprep.subr.bf16.mxu0 0
  %5391 = vmatpush1.bf16.msra.mxu0 %v4661
  %5392 = vmatprep.subr.bf16.mxu0 0
  %5393 = vmatpush1.bf16.msra.mxu0 %v4660
  %5394 = vmatprep.subr.bf16.mxu0 0
  %5395 = vmatpush1.bf16.msra.mxu0 %v4659
  %5396 = vmatprep.subr.bf16.mxu0 0
  %5397 = vmatpush1.bf16.msra.mxu0 %v4658
  %5398 = vmatprep.subr.bf16.mxu0 0
  %5399 = vmatpush1.bf16.msra.mxu0 %v4657
  %5400 = vmatprep.subr.bf16.mxu0 0
  %5401 = vmatpush1.bf16.msra.mxu0 %v4656
  %5402 = vmatprep.subr.bf16.mxu0 0
  %5403 = vmatpush2.bf16.msra.mxu0 %v4671
  %5404 = vmatprep.subr.bf16.mxu0 0
  %5405 = vmatpush2.bf16.msra.mxu0 %v4670
  %5406 = vmatprep.subr.bf16.mxu0 0
  %5407 = vmatpush2.bf16.msra.mxu0 %v4669
  %5408 = vmatprep.subr.bf16.mxu0 0
  %5409 = vmatpush2.bf16.msra.mxu0 %v4668
  %5410 = vmatprep.subr.bf16.mxu0 0
  %5411 = vmatpush2.bf16.msra.mxu0 %v4667
  %5412 = vmatprep.subr.bf16.mxu0 0
  %5413 = vmatpush2.bf16.msra.mxu0 %v4666
  %5414 = vmatprep.subr.bf16.mxu0 0
  %5415 = vmatpush2.bf16.msra.mxu0 %v4665
  %5416 = vmatprep.subr.bf16.mxu0 0
  %5417 = vmatpush2.bf16.msra.mxu0 %v4664
  %5418 = vmatprep.mubr.bf16.mxu0 %v3527
  %5419 = vmatmul.mubr.bf16.gmra.mxu0 %v3526
  %v5420 = vpop.f32.mrf.mxu0
  %v5421 = vadd.f32 %v5380, %v5420
  %v5422 = vpop.f32.mrf.mxu0
  %v5423 = vpop.f32.mrf.mxu0
  %v5424 = vadd.f32 %v5383, %v5423
  %v5425 = vpop.f32.mrf.mxu0
  %5426 = vdwg.mxu0
  %5427 = vmatprep.subr.bf16.mxu0 0
  %5428 = vmatpush1.bf16.msra.mxu0 %v4679
  %5429 = vmatprep.subr.bf16.mxu0 0
  %5430 = vmatpush1.bf16.msra.mxu0 %v4678
  %5431 = vmatprep.subr.bf16.mxu0 0
  %5432 = vmatpush1.bf16.msra.mxu0 %v4677
  %5433 = vmatprep.subr.bf16.mxu0 0
  %5434 = vmatpush1.bf16.msra.mxu0 %v4676
  %5435 = vmatprep.subr.bf16.mxu0 0
  %5436 = vmatpush1.bf16.msra.mxu0 %v4675
  %5437 = vmatprep.subr.bf16.mxu0 0
  %5438 = vmatpush1.bf16.msra.mxu0 %v4674
  %5439 = vmatprep.subr.bf16.mxu0 0
  %5440 = vmatpush1.bf16.msra.mxu0 %v4673
  %5441 = vmatprep.subr.bf16.mxu0 0
  %5442 = vmatpush1.bf16.msra.mxu0 %v4672
  %5443 = vmatprep.subr.bf16.mxu0 0
  %5444 = vmatpush2.bf16.msra.mxu0 %v4687
  %5445 = vmatprep.subr.bf16.mxu0 0
  %5446 = vmatpush2.bf16.msra.mxu0 %v4686
  %5447 = vmatprep.subr.bf16.mxu0 0
  %5448 = vmatpush2.bf16.msra.mxu0 %v4685
  %5449 = vmatprep.subr.bf16.mxu0 0
  %5450 = vmatpush2.bf16.msra.mxu0 %v4684
  %5451 = vmatprep.subr.bf16.mxu0 0
  %5452 = vmatpush2.bf16.msra.mxu0 %v4683
  %5453 = vmatprep.subr.bf16.mxu0 0
  %5454 = vmatpush2.bf16.msra.mxu0 %v4682
  %5455 = vmatprep.subr.bf16.mxu0 0
  %5456 = vmatpush2.bf16.msra.mxu0 %v4681
  %5457 = vmatprep.subr.bf16.mxu0 0
  %5458 = vmatpush2.bf16.msra.mxu0 %v4680
  %5459 = vmatprep.mubr.bf16.mxu0 %v3529
  %5460 = vmatmul.mubr.bf16.gmra.mxu0 %v3528
  %v5461 = vpop.f32.mrf.mxu0
  %v5462 = vadd.f32 %v5421, %v5461
  %v5463 = vpop.f32.mrf.mxu0
  %v5464 = vpop.f32.mrf.mxu0
  %v5465 = vadd.f32 %v5424, %v5464
  %v5466 = vpop.f32.mrf.mxu0
  %5467 = vdwg.mxu0
  %5468 = vmatprep.subr.bf16.mxu0 0
  %5469 = vmatpush1.bf16.msra.mxu0 %v4695
  %5470 = vmatprep.subr.bf16.mxu0 0
  %5471 = vmatpush1.bf16.msra.mxu0 %v4694
  %5472 = vmatprep.subr.bf16.mxu0 0
  %5473 = vmatpush1.bf16.msra.mxu0 %v4693
  %5474 = vmatprep.subr.bf16.mxu0 0
  %5475 = vmatpush1.bf16.msra.mxu0 %v4692
  %5476 = vmatprep.subr.bf16.mxu0 0
  %5477 = vmatpush1.bf16.msra.mxu0 %v4691
  %5478 = vmatprep.subr.bf16.mxu0 0
  %5479 = vmatpush1.bf16.msra.mxu0 %v4690
  %5480 = vmatprep.subr.bf16.mxu0 0
  %5481 = vmatpush1.bf16.msra.mxu0 %v4689
  %5482 = vmatprep.subr.bf16.mxu0 0
  %5483 = vmatpush1.bf16.msra.mxu0 %v4688
  %5484 = vmatprep.subr.bf16.mxu0 0
  %5485 = vmatpush2.bf16.msra.mxu0 %v4703
  %5486 = vmatprep.subr.bf16.mxu0 0
  %5487 = vmatpush2.bf16.msra.mxu0 %v4702
  %5488 = vmatprep.subr.bf16.mxu0 0
  %5489 = vmatpush2.bf16.msra.mxu0 %v4701
  %5490 = vmatprep.subr.bf16.mxu0 0
  %5491 = vmatpush2.bf16.msra.mxu0 %v4700
  %5492 = vmatprep.subr.bf16.mxu0 0
  %5493 = vmatpush2.bf16.msra.mxu0 %v4699
  %5494 = vmatprep.subr.bf16.mxu0 0
  %5495 = vmatpush2.bf16.msra.mxu0 %v4698
  %5496 = vmatprep.subr.bf16.mxu0 0
  %5497 = vmatpush2.bf16.msra.mxu0 %v4697
  %5498 = vmatprep.subr.bf16.mxu0 0
  %5499 = vmatpush2.bf16.msra.mxu0 %v4696
  %5500 = vmatprep.mubr.bf16.mxu0 %v3531
  %5501 = vmatmul.mubr.bf16.gmra.mxu0 %v3530
  %v5502 = vpop.f32.mrf.mxu0
  %v5503 = vadd.f32 %v5462, %v5502
  %v5504 = vpop.f32.mrf.mxu0
  %v5505 = vpop.f32.mrf.mxu0
  %v5506 = vadd.f32 %v5465, %v5505
  %v5507 = vpop.f32.mrf.mxu0
  %5508 = vdwg.mxu0
  %5509 = vmatprep.subr.bf16.mxu0 0
  %5510 = vmatpush1.bf16.msra.mxu0 %v4711
  %5511 = vmatprep.subr.bf16.mxu0 0
  %5512 = vmatpush1.bf16.msra.mxu0 %v4710
  %5513 = vmatprep.subr.bf16.mxu0 0
  %5514 = vmatpush1.bf16.msra.mxu0 %v4709
  %5515 = vmatprep.subr.bf16.mxu0 0
  %5516 = vmatpush1.bf16.msra.mxu0 %v4708
  %5517 = vmatprep.subr.bf16.mxu0 0
  %5518 = vmatpush1.bf16.msra.mxu0 %v4707
  %5519 = vmatprep.subr.bf16.mxu0 0
  %5520 = vmatpush1.bf16.msra.mxu0 %v4706
  %5521 = vmatprep.subr.bf16.mxu0 0
  %5522 = vmatpush1.bf16.msra.mxu0 %v4705
  %5523 = vmatprep.subr.bf16.mxu0 0
  %5524 = vmatpush1.bf16.msra.mxu0 %v4704
  %5525 = vmatprep.subr.bf16.mxu0 0
  %5526 = vmatpush2.bf16.msra.mxu0 %v4719
  %5527 = vmatprep.subr.bf16.mxu0 0
  %5528 = vmatpush2.bf16.msra.mxu0 %v4718
  %5529 = vmatprep.subr.bf16.mxu0 0
  %5530 = vmatpush2.bf16.msra.mxu0 %v4717
  %5531 = vmatprep.subr.bf16.mxu0 0
  %5532 = vmatpush2.bf16.msra.mxu0 %v4716
  %5533 = vmatprep.subr.bf16.mxu0 0
  %5534 = vmatpush2.bf16.msra.mxu0 %v4715
  %5535 = vmatprep.subr.bf16.mxu0 0
  %5536 = vmatpush2.bf16.msra.mxu0 %v4714
  %5537 = vmatprep.subr.bf16.mxu0 0
  %5538 = vmatpush2.bf16.msra.mxu0 %v4713
  %5539 = vmatprep.subr.bf16.mxu0 0
  %5540 = vmatpush2.bf16.msra.mxu0 %v4712
  %5541 = vmatprep.mubr.bf16.mxu0 %v3533
  %5542 = vmatmul.mubr.bf16.gmra.mxu0 %v3532
  %v5543 = vpop.f32.mrf.mxu0
  %v5544 = vadd.f32 %v5503, %v5543
  %v5545 = vpop.f32.mrf.mxu0
  %v5546 = vpop.f32.mrf.mxu0
  %v5547 = vadd.f32 %v5506, %v5546
  %v5548 = vpop.f32.mrf.mxu0
  %5549 = vdwg.mxu0
  %5550 = vmatprep.subr.bf16.mxu0 0
  %5551 = vmatpush1.bf16.msra.mxu0 %v4727
  %5552 = vmatprep.subr.bf16.mxu0 0
  %5553 = vmatpush1.bf16.msra.mxu0 %v4726
  %5554 = vmatprep.subr.bf16.mxu0 0
  %5555 = vmatpush1.bf16.msra.mxu0 %v4725
  %5556 = vmatprep.subr.bf16.mxu0 0
  %5557 = vmatpush1.bf16.msra.mxu0 %v4724
  %5558 = vmatprep.subr.bf16.mxu0 0
  %5559 = vmatpush1.bf16.msra.mxu0 %v4723
  %5560 = vmatprep.subr.bf16.mxu0 0
  %5561 = vmatpush1.bf16.msra.mxu0 %v4722
  %5562 = vmatprep.subr.bf16.mxu0 0
  %5563 = vmatpush1.bf16.msra.mxu0 %v4721
  %5564 = vmatprep.subr.bf16.mxu0 0
  %5565 = vmatpush1.bf16.msra.mxu0 %v4720
  %5566 = vmatprep.subr.bf16.mxu0 0
  %5567 = vmatpush2.bf16.msra.mxu0 %v4735
  %5568 = vmatprep.subr.bf16.mxu0 0
  %5569 = vmatpush2.bf16.msra.mxu0 %v4734
  %5570 = vmatprep.subr.bf16.mxu0 0
  %5571 = vmatpush2.bf16.msra.mxu0 %v4733
  %5572 = vmatprep.subr.bf16.mxu0 0
  %5573 = vmatpush2.bf16.msra.mxu0 %v4732
  %5574 = vmatprep.subr.bf16.mxu0 0
  %5575 = vmatpush2.bf16.msra.mxu0 %v4731
  %5576 = vmatprep.subr.bf16.mxu0 0
  %5577 = vmatpush2.bf16.msra.mxu0 %v4730
  %5578 = vmatprep.subr.bf16.mxu0 0
  %5579 = vmatpush2.bf16.msra.mxu0 %v4729
  %5580 = vmatprep.subr.bf16.mxu0 0
  %5581 = vmatpush2.bf16.msra.mxu0 %v4728
  %5582 = vmatprep.mubr.bf16.mxu0 %v3535
  %5583 = vmatmul.mubr.bf16.gmra.mxu0 %v3534
  %v5584 = vpop.f32.mrf.mxu0
  %v5585 = vadd.f32 %v5544, %v5584
  %v5586 = vpop.f32.mrf.mxu0
  %v5587 = vpop.f32.mrf.mxu0
  %v5588 = vadd.f32 %v5547, %v5587
  %v5589 = vpop.f32.mrf.mxu0
  %5590 = vdwg.mxu0
  %v5591 = vand.u32 2147483647, %v5585
  %v5592 = vand.u32 2147483647, %v5588
  %v5593 = vld [vmem:[%s22] sm:$0xff]
  %v5594 = vld [vmem:[%s22 + $0x8] sm:$0xff]
  %v5595 = vld [vmem:[%s22 + $0x10] sm:$0xff]
  %v5596 = vld [vmem:[%s22 + $0x18] sm:$0xff]
  %v5597 = vld [vmem:[%s22 + $0x20] sm:$0xff]
  %v5598 = vld [vmem:[%s22 + $0x28] sm:$0xff]
  %v5599 = vld [vmem:[%s22 + $0x30] sm:$0xff]
  %v5600 = vld [vmem:[%s22 + $0x38] sm:$0xff]
  %v5601 = vld [vmem:[%s22 + $0x40] sm:$0xff]
  %v5602 = vld [vmem:[%s22 + $0x48] sm:$0xff]
  %v5603 = vld [vmem:[%s22 + $0x50] sm:$0xff]
  %v5604 = vld [vmem:[%s22 + $0x58] sm:$0xff]
  %v5605 = vld [vmem:[%s22 + $0x60] sm:$0xff]
  %v5606 = vld [vmem:[%s22 + $0x68] sm:$0xff]
  %v5607 = vld [vmem:[%s22 + $0x70] sm:$0xff]
  %v5608 = vld [vmem:[%s22 + $0x78] sm:$0xff]
  %5609 = vmatprep.subr.mxu0 0.0
  %5610 = vmatpush1.msra.mxu0 %v5608
  %5611 = vmatprep.subr.mxu0 0.0
  %5612 = vmatpush1.msra.mxu0 %v5607
  %5613 = vmatprep.subr.mxu0 0.0
  %5614 = vmatpush1.msra.mxu0 %v5606
  %5615 = vmatprep.subr.mxu0 0.0
  %5616 = vmatpush1.msra.mxu0 %v5605
  %5617 = vmatprep.subr.mxu0 0.0
  %5618 = vmatpush1.msra.mxu0 %v5604
  %5619 = vmatprep.subr.mxu0 0.0
  %5620 = vmatpush1.msra.mxu0 %v5603
  %5621 = vmatprep.subr.mxu0 0.0
  %5622 = vmatpush1.msra.mxu0 %v5602
  %5623 = vmatprep.subr.mxu0 0.0
  %5624 = vmatpush1.msra.mxu0 %v5601
  %5625 = vmatprep.subr.mxu0 0.0
  %5626 = vmatpush1.msra.mxu0 %v5600
  %5627 = vmatprep.subr.mxu0 0.0
  %5628 = vmatpush1.msra.mxu0 %v5599
  %5629 = vmatprep.subr.mxu0 0.0
  %5630 = vmatpush1.msra.mxu0 %v5598
  %5631 = vmatprep.subr.mxu0 0.0
  %5632 = vmatpush1.msra.mxu0 %v5597
  %5633 = vmatprep.subr.mxu0 0.0
  %5634 = vmatpush1.msra.mxu0 %v5596
  %5635 = vmatprep.subr.mxu0 0.0
  %5636 = vmatpush1.msra.mxu0 %v5595
  %5637 = vmatprep.subr.mxu0 0.0
  %5638 = vmatpush1.msra.mxu0 %v5594
  %5639 = vmatprep.subr.mxu0 0.0
  %5640 = vmatpush1.msra.mxu0 %v5593
  %5641 = vmatprep.subr.mxu0 0.0
  %5642 = vmatpush2.msra.mxu0 0.0
  %5643 = vmatprep.subr.mxu0 0.0
  %5644 = vmatpush2.msra.mxu0 0.0
  %5645 = vmatprep.subr.mxu0 0.0
  %5646 = vmatpush2.msra.mxu0 0.0
  %5647 = vmatprep.subr.mxu0 0.0
  %5648 = vmatpush2.msra.mxu0 0.0
  %5649 = vmatprep.subr.mxu0 0.0
  %5650 = vmatpush2.msra.mxu0 0.0
  %5651 = vmatprep.subr.mxu0 0.0
  %5652 = vmatpush2.msra.mxu0 0.0
  %5653 = vmatprep.subr.mxu0 0.0
  %5654 = vmatpush2.msra.mxu0 0.0
  %5655 = vmatprep.subr.mxu0 0.0
  %5656 = vmatpush2.msra.mxu0 0.0
  %5657 = vmatprep.subr.mxu0 0.0
  %5658 = vmatpush2.msra.mxu0 0.0
  %5659 = vmatprep.subr.mxu0 0.0
  %5660 = vmatpush2.msra.mxu0 0.0
  %5661 = vmatprep.subr.mxu0 0.0
  %5662 = vmatpush2.msra.mxu0 0.0
  %5663 = vmatprep.subr.mxu0 0.0
  %5664 = vmatpush2.msra.mxu0 0.0
  %5665 = vmatprep.subr.mxu0 0.0
  %5666 = vmatpush2.msra.mxu0 0.0
  %5667 = vmatprep.subr.mxu0 0.0
  %5668 = vmatpush2.msra.mxu0 0.0
  %5669 = vmatprep.subr.mxu0 0.0
  %5670 = vmatpush2.msra.mxu0 0.0
  %5671 = vmatprep.subr.mxu0 0.0
  %5672 = vmatpush2.msra.mxu0 0.0
  %5673 = vmatprep.mubr.f32.mxu0 0.0
  %5674 = vmatmul.mubr.f32.gmra.mxu0 %v5591
  %v5675 = vpop.f32.mrf.mxu0
  %v5676 = vadd.f32 0.0, %v5675
  %v5677 = vpop.f32.mrf.mxu0
  %5678 = vmatprep.mubr.f32.mxu0 0.0
  %5679 = vmatmul.mubr.f32.gmra.mxu0 %v5592
  %v5680 = vpop.f32.mrf.mxu0
  %v5681 = vadd.f32 0.0, %v5680
  %v5682 = vpop.f32.mrf.mxu0
  %5683 = vdwg.mxu0
  %v5684 = vsub.f32 %v5676, 700.0
  %v5685 = vsub.f32 %v5681, 700.0
  %v5686 = vxor.u32 %v5684, 2147483648
  %v5687 = vxor.u32 %v5685, 2147483648
  %v5688 = vmul.f32 %v5686, 1.442695
  %v5689 = vpow.pop %v5688
  %v5690 = vmul.f32 %v5687, 1.442695
  %v5691 = vpow.pop %v5690
  %v5692 = vadd.f32 %v5689, 1.0
  %v5693 = vadd.f32 %v5691, 1.0
  %v5694 = vrcp.pop %v5692
  %v5695 = vmul.f32 1.0, %v5694
  %v5696 = vrcp.pop %v5693
  %v5697 = vmul.f32 1.0, %v5696
  %v5698 = vld [vmem:[%s13] sm:$0xff]
  %v5700 = vsel %vm92, %v5698, 0
  %5702 = vmatprep.subr.mxu0 0.0
  %5703 = vmatpush1.msra.mxu0 0.0
  %5704 = vmatprep.subr.mxu0 0.0
  %5705 = vmatpush1.msra.mxu0 0.0
  %5706 = vmatprep.subr.mxu0 0.0
  %5707 = vmatpush1.msra.mxu0 0.0
  %5708 = vmatprep.subr.mxu0 0.0
  %5709 = vmatpush1.msra.mxu0 0.0
  %5710 = vmatprep.subr.mxu0 0.0
  %5711 = vmatpush1.msra.mxu0 0.0
  %5712 = vmatprep.subr.mxu0 0.0
  %5713 = vmatpush1.msra.mxu0 0.0
  %5714 = vmatprep.subr.mxu0 0.0
  %5715 = vmatpush1.msra.mxu0 0.0
  %5716 = vmatprep.subr.mxu0 0.0
  %5717 = vmatpush1.msra.mxu0 0.0
  %5718 = vmatprep.subr.mxu0 0.0
  %5719 = vmatpush1.msra.mxu0 0.0
  %5720 = vmatprep.subr.mxu0 0.0
  %5721 = vmatpush1.msra.mxu0 0.0
  %5722 = vmatprep.subr.mxu0 0.0
  %5723 = vmatpush1.msra.mxu0 0.0
  %5724 = vmatprep.subr.mxu0 0.0
  %5725 = vmatpush1.msra.mxu0 0.0
  %5726 = vmatprep.subr.mxu0 0.0
  %5727 = vmatpush1.msra.mxu0 0.0
  %5728 = vmatprep.subr.mxu0 0.0
  %5729 = vmatpush1.msra.mxu0 0.0
  %5730 = vmatprep.subr.mxu0 0.0
  %5731 = vmatpush1.msra.mxu0 %v2855
  %5732 = vmatprep.subr.mxu0 0.0
  %5733 = vmatpush1.msra.mxu0 %v2854
  %5734 = vmatprep.subr.mxu0 0.0
  %5735 = vmatpush2.msra.mxu0 0.0
  %5736 = vmatprep.subr.mxu0 0.0
  %5737 = vmatpush2.msra.mxu0 0.0
  %5738 = vmatprep.subr.mxu0 0.0
  %5739 = vmatpush2.msra.mxu0 0.0
  %5740 = vmatprep.subr.mxu0 0.0
  %5741 = vmatpush2.msra.mxu0 0.0
  %5742 = vmatprep.subr.mxu0 0.0
  %5743 = vmatpush2.msra.mxu0 0.0
  %5744 = vmatprep.subr.mxu0 0.0
  %5745 = vmatpush2.msra.mxu0 0.0
  %5746 = vmatprep.subr.mxu0 0.0
  %5747 = vmatpush2.msra.mxu0 0.0
  %5748 = vmatprep.subr.mxu0 0.0
  %5749 = vmatpush2.msra.mxu0 0.0
  %5750 = vmatprep.subr.mxu0 0.0
  %5751 = vmatpush2.msra.mxu0 0.0
  %5752 = vmatprep.subr.mxu0 0.0
  %5753 = vmatpush2.msra.mxu0 0.0
  %5754 = vmatprep.subr.mxu0 0.0
  %5755 = vmatpush2.msra.mxu0 0.0
  %5756 = vmatprep.subr.mxu0 0.0
  %5757 = vmatpush2.msra.mxu0 0.0
  %5758 = vmatprep.subr.mxu0 0.0
  %5759 = vmatpush2.msra.mxu0 0.0
  %5760 = vmatprep.subr.mxu0 0.0
  %5761 = vmatpush2.msra.mxu0 0.0
  %5762 = vmatprep.subr.mxu0 0.0
  %5763 = vmatpush2.msra.mxu0 0.0
  %5764 = vmatprep.subr.mxu0 0.0
  %5765 = vmatpush2.msra.mxu0 0.0
  %5766 = vmatprep.mubr.f32.mxu0 0.0
  %5767 = vmatmul.mubr.f32.gmra.mxu0 %v5700
  %v5768 = vpop.f32.mrf.mxu0
  %v5769 = vadd.f32 0.0, %v5768
  %v5770 = vpop.f32.mrf.mxu0
  %5771 = vdwg.mxu0
  %s5772 = scalar_lea.vmem %s13, 8
  %v5773 = vld [vmem:[%s5772] sm:$0xff]
  %v5775 = vsel %vm92, %v5773, 0
  %5777 = vmatprep.subr.mxu0 0.0
  %5778 = vmatpush1.msra.mxu0 0.0
  %5779 = vmatprep.subr.mxu0 0.0
  %5780 = vmatpush1.msra.mxu0 0.0
  %5781 = vmatprep.subr.mxu0 0.0
  %5782 = vmatpush1.msra.mxu0 0.0
  %5783 = vmatprep.subr.mxu0 0.0
  %5784 = vmatpush1.msra.mxu0 0.0
  %5785 = vmatprep.subr.mxu0 0.0
  %5786 = vmatpush1.msra.mxu0 0.0
  %5787 = vmatprep.subr.mxu0 0.0
  %5788 = vmatpush1.msra.mxu0 0.0
  %5789 = vmatprep.subr.mxu0 0.0
  %5790 = vmatpush1.msra.mxu0 0.0
  %5791 = vmatprep.subr.mxu0 0.0
  %5792 = vmatpush1.msra.mxu0 0.0
  %5793 = vmatprep.subr.mxu0 0.0
  %5794 = vmatpush1.msra.mxu0 0.0
  %5795 = vmatprep.subr.mxu0 0.0
  %5796 = vmatpush1.msra.mxu0 0.0
  %5797 = vmatprep.subr.mxu0 0.0
  %5798 = vmatpush1.msra.mxu0 0.0
  %5799 = vmatprep.subr.mxu0 0.0
  %5800 = vmatpush1.msra.mxu0 0.0
  %5801 = vmatprep.subr.mxu0 0.0
  %5802 = vmatpush1.msra.mxu0 0.0
  %5803 = vmatprep.subr.mxu0 0.0
  %5804 = vmatpush1.msra.mxu0 0.0
  %5805 = vmatprep.subr.mxu0 0.0
  %5806 = vmatpush1.msra.mxu0 %v2855
  %5807 = vmatprep.subr.mxu0 0.0
  %5808 = vmatpush1.msra.mxu0 %v2854
  %5809 = vmatprep.subr.mxu0 0.0
  %5810 = vmatpush2.msra.mxu0 0.0
  %5811 = vmatprep.subr.mxu0 0.0
  %5812 = vmatpush2.msra.mxu0 0.0
  %5813 = vmatprep.subr.mxu0 0.0
  %5814 = vmatpush2.msra.mxu0 0.0
  %5815 = vmatprep.subr.mxu0 0.0
  %5816 = vmatpush2.msra.mxu0 0.0
  %5817 = vmatprep.subr.mxu0 0.0
  %5818 = vmatpush2.msra.mxu0 0.0
  %5819 = vmatprep.subr.mxu0 0.0
  %5820 = vmatpush2.msra.mxu0 0.0
  %5821 = vmatprep.subr.mxu0 0.0
  %5822 = vmatpush2.msra.mxu0 0.0
  %5823 = vmatprep.subr.mxu0 0.0
  %5824 = vmatpush2.msra.mxu0 0.0
  %5825 = vmatprep.subr.mxu0 0.0
  %5826 = vmatpush2.msra.mxu0 0.0
  %5827 = vmatprep.subr.mxu0 0.0
  %5828 = vmatpush2.msra.mxu0 0.0
  %5829 = vmatprep.subr.mxu0 0.0
  %5830 = vmatpush2.msra.mxu0 0.0
  %5831 = vmatprep.subr.mxu0 0.0
  %5832 = vmatpush2.msra.mxu0 0.0
  %5833 = vmatprep.subr.mxu0 0.0
  %5834 = vmatpush2.msra.mxu0 0.0
  %5835 = vmatprep.subr.mxu0 0.0
  %5836 = vmatpush2.msra.mxu0 0.0
  %5837 = vmatprep.subr.mxu0 0.0
  %5838 = vmatpush2.msra.mxu0 0.0
  %5839 = vmatprep.subr.mxu0 0.0
  %5840 = vmatpush2.msra.mxu0 0.0
  %5841 = vmatprep.mubr.f32.mxu0 0.0
  %5842 = vmatmul.mubr.f32.gmra.mxu0 %v5775
  %v5843 = vpop.f32.mrf.mxu0
  %v5844 = vadd.f32 0.0, %v5843
  %v5845 = vpop.f32.mrf.mxu0
  %5846 = vdwg.mxu0
  %s5847 = scalar_lea.vmem %s13, 16
  %v5848 = vld [vmem:[%s5847] sm:$0xff]
  %v5850 = vsel %vm92, %v5848, 0
  %5852 = vmatprep.subr.mxu0 0.0
  %5853 = vmatpush1.msra.mxu0 0.0
  %5854 = vmatprep.subr.mxu0 0.0
  %5855 = vmatpush1.msra.mxu0 0.0
  %5856 = vmatprep.subr.mxu0 0.0
  %5857 = vmatpush1.msra.mxu0 0.0
  %5858 = vmatprep.subr.mxu0 0.0
  %5859 = vmatpush1.msra.mxu0 0.0
  %5860 = vmatprep.subr.mxu0 0.0
  %5861 = vmatpush1.msra.mxu0 0.0
  %5862 = vmatprep.subr.mxu0 0.0
  %5863 = vmatpush1.msra.mxu0 0.0
  %5864 = vmatprep.subr.mxu0 0.0
  %5865 = vmatpush1.msra.mxu0 0.0
  %5866 = vmatprep.subr.mxu0 0.0
  %5867 = vmatpush1.msra.mxu0 0.0
  %5868 = vmatprep.subr.mxu0 0.0
  %5869 = vmatpush1.msra.mxu0 0.0
  %5870 = vmatprep.subr.mxu0 0.0
  %5871 = vmatpush1.msra.mxu0 0.0
  %5872 = vmatprep.subr.mxu0 0.0
  %5873 = vmatpush1.msra.mxu0 0.0
  %5874 = vmatprep.subr.mxu0 0.0
  %5875 = vmatpush1.msra.mxu0 0.0
  %5876 = vmatprep.subr.mxu0 0.0
  %5877 = vmatpush1.msra.mxu0 0.0
  %5878 = vmatprep.subr.mxu0 0.0
  %5879 = vmatpush1.msra.mxu0 0.0
  %5880 = vmatprep.subr.mxu0 0.0
  %5881 = vmatpush1.msra.mxu0 %v2855
  %5882 = vmatprep.subr.mxu0 0.0
  %5883 = vmatpush1.msra.mxu0 %v2854
  %5884 = vmatprep.subr.mxu0 0.0
  %5885 = vmatpush2.msra.mxu0 0.0
  %5886 = vmatprep.subr.mxu0 0.0
  %5887 = vmatpush2.msra.mxu0 0.0
  %5888 = vmatprep.subr.mxu0 0.0
  %5889 = vmatpush2.msra.mxu0 0.0
  %5890 = vmatprep.subr.mxu0 0.0
  %5891 = vmatpush2.msra.mxu0 0.0
  %5892 = vmatprep.subr.mxu0 0.0
  %5893 = vmatpush2.msra.mxu0 0.0
  %5894 = vmatprep.subr.mxu0 0.0
  %5895 = vmatpush2.msra.mxu0 0.0
  %5896 = vmatprep.subr.mxu0 0.0
  %5897 = vmatpush2.msra.mxu0 0.0
  %5898 = vmatprep.subr.mxu0 0.0
  %5899 = vmatpush2.msra.mxu0 0.0
  %5900 = vmatprep.subr.mxu0 0.0
  %5901 = vmatpush2.msra.mxu0 0.0
  %5902 = vmatprep.subr.mxu0 0.0
  %5903 = vmatpush2.msra.mxu0 0.0
  %5904 = vmatprep.subr.mxu0 0.0
  %5905 = vmatpush2.msra.mxu0 0.0
  %5906 = vmatprep.subr.mxu0 0.0
  %5907 = vmatpush2.msra.mxu0 0.0
  %5908 = vmatprep.subr.mxu0 0.0
  %5909 = vmatpush2.msra.mxu0 0.0
  %5910 = vmatprep.subr.mxu0 0.0
  %5911 = vmatpush2.msra.mxu0 0.0
  %5912 = vmatprep.subr.mxu0 0.0
  %5913 = vmatpush2.msra.mxu0 0.0
  %5914 = vmatprep.subr.mxu0 0.0
  %5915 = vmatpush2.msra.mxu0 0.0
  %5916 = vmatprep.mubr.f32.mxu0 0.0
  %5917 = vmatmul.mubr.f32.gmra.mxu0 %v5850
  %v5918 = vpop.f32.mrf.mxu0
  %v5919 = vadd.f32 0.0, %v5918
  %v5920 = vpop.f32.mrf.mxu0
  %5921 = vdwg.mxu0
  %v5922 = vld [vmem:[%s7] sm:$0xf]
  %v5923 = vld [vmem:[%s7 + $0x4] sm:$0xf]
  %v5924 = vld [vmem:[%s7 + $0x8] sm:$0xf]
  %v5925 = vld [vmem:[%s7 + $0xc] sm:$0xf]
  %v5926 = vld [vmem:[%s7 + $0x10] sm:$0xf]
  %v5927 = vld [vmem:[%s7 + $0x14] sm:$0xf]
  %v5928 = vld [vmem:[%s7 + $0x18] sm:$0xf]
  %v5929 = vld [vmem:[%s7 + $0x1c] sm:$0xf]
  %v5930 = vld [vmem:[%s7 + $0x20] sm:$0xf]
  %v5931 = vld [vmem:[%s7 + $0x24] sm:$0xf]
  %v5932 = vld [vmem:[%s7 + $0x28] sm:$0xf]
  %v5933 = vld [vmem:[%s7 + $0x2c] sm:$0xf]
  %v5934 = vld [vmem:[%s7 + $0x30] sm:$0xf]
  %v5935 = vld [vmem:[%s7 + $0x34] sm:$0xf]
  %v5936 = vld [vmem:[%s7 + $0x38] sm:$0xf]
  %v5937 = vld [vmem:[%s7 + $0x3c] sm:$0xf]
  %v5938 = vld [vmem:[%s7 + $0x40] sm:$0xf]
  %v5939 = vld [vmem:[%s7 + $0x44] sm:$0xf]
  %v5940 = vld [vmem:[%s7 + $0x48] sm:$0xf]
  %v5941 = vld [vmem:[%s7 + $0x4c] sm:$0xf]
  %v5942 = vld [vmem:[%s7 + $0x50] sm:$0xf]
  %v5943 = vld [vmem:[%s7 + $0x54] sm:$0xf]
  %v5944 = vld [vmem:[%s7 + $0x58] sm:$0xf]
  %v5945 = vld [vmem:[%s7 + $0x5c] sm:$0xf]
  %v5946 = vld [vmem:[%s7 + $0x60] sm:$0xf]
  %v5947 = vld [vmem:[%s7 + $0x64] sm:$0xf]
  %v5948 = vld [vmem:[%s7 + $0x68] sm:$0xf]
  %v5949 = vld [vmem:[%s7 + $0x6c] sm:$0xf]
  %v5950 = vld [vmem:[%s7 + $0x70] sm:$0xf]
  %v5951 = vld [vmem:[%s7 + $0x74] sm:$0xf]
  %v5952 = vld [vmem:[%s7 + $0x78] sm:$0xf]
  %v5953 = vld [vmem:[%s7 + $0x7c] sm:$0xf]
  %v5954 = vld [vmem:[%s7 + $0x80] sm:$0xf]
  %v5955 = vld [vmem:[%s7 + $0x84] sm:$0xf]
  %v5956 = vld [vmem:[%s7 + $0x88] sm:$0xf]
  %v5957 = vld [vmem:[%s7 + $0x8c] sm:$0xf]
  %v5958 = vld [vmem:[%s7 + $0x90] sm:$0xf]
  %v5959 = vld [vmem:[%s7 + $0x94] sm:$0xf]
  %v5960 = vld [vmem:[%s7 + $0x98] sm:$0xf]
  %v5961 = vld [vmem:[%s7 + $0x9c] sm:$0xf]
  %v5962 = vld [vmem:[%s7 + $0xa0] sm:$0xf]
  %v5963 = vld [vmem:[%s7 + $0xa4] sm:$0xf]
  %v5964 = vld [vmem:[%s7 + $0xa8] sm:$0xf]
  %v5965 = vld [vmem:[%s7 + $0xac] sm:$0xf]
  %v5966 = vld [vmem:[%s7 + $0xb0] sm:$0xf]
  %v5967 = vld [vmem:[%s7 + $0xb4] sm:$0xf]
  %v5968 = vld [vmem:[%s7 + $0xb8] sm:$0xf]
  %v5969 = vld [vmem:[%s7 + $0xbc] sm:$0xf]
  %v5970 = vpack.c.bf16 %v5769, %v5769
  %v5971 = vpack.c.bf16 %v5844, %v5844
  %v5972 = vpack.c.bf16 %v5919, %v5919
  %v6021 = vunpack.c.l.b16 %v5922
  %v6022 = vunpack.c.l.b16 %v5923
  %v6023 = vunpack.c.l.b16 %v5924
  %v6024 = vunpack.c.l.b16 %v5925
  %v6025 = vunpack.c.l.b16 %v5926
  %v6026 = vunpack.c.l.b16 %v5927
  %v6027 = vunpack.c.l.b16 %v5928
  %v6028 = vunpack.c.l.b16 %v5929
  %v6029 = vunpack.c.l.b16 %v5930
  %v6030 = vunpack.c.l.b16 %v5931
  %v6031 = vunpack.c.l.b16 %v5932
  %v6032 = vunpack.c.l.b16 %v5933
  %v6033 = vunpack.c.l.b16 %v5934
  %v6034 = vunpack.c.l.b16 %v5935
  %v6035 = vunpack.c.l.b16 %v5936
  %v6036 = vunpack.c.l.b16 %v5937
  %v6037 = vunpack.c.l.b16 %v5938
  %v6038 = vunpack.c.l.b16 %v5939
  %v6039 = vunpack.c.l.b16 %v5940
  %v6040 = vunpack.c.l.b16 %v5941
  %v6041 = vunpack.c.l.b16 %v5942
  %v6042 = vunpack.c.l.b16 %v5943
  %v6043 = vunpack.c.l.b16 %v5944
  %v6044 = vunpack.c.l.b16 %v5945
  %v6045 = vunpack.c.l.b16 %v5946
  %v6046 = vunpack.c.l.b16 %v5947
  %v6047 = vunpack.c.l.b16 %v5948
  %v6048 = vunpack.c.l.b16 %v5949
  %v6049 = vunpack.c.l.b16 %v5950
  %v6050 = vunpack.c.l.b16 %v5951
  %v6051 = vunpack.c.l.b16 %v5952
  %v6052 = vunpack.c.l.b16 %v5953
  %v6053 = vunpack.c.l.b16 %v5954
  %v6054 = vunpack.c.l.b16 %v5955
  %v6055 = vunpack.c.l.b16 %v5956
  %v6056 = vunpack.c.l.b16 %v5957
  %v6057 = vunpack.c.l.b16 %v5958
  %v6058 = vunpack.c.l.b16 %v5959
  %v6059 = vunpack.c.l.b16 %v5960
  %v6060 = vunpack.c.l.b16 %v5961
  %v6061 = vunpack.c.l.b16 %v5962
  %v6062 = vunpack.c.l.b16 %v5963
  %v6063 = vunpack.c.l.b16 %v5964
  %v6064 = vunpack.c.l.b16 %v5965
  %v6065 = vunpack.c.l.b16 %v5966
  %v6066 = vunpack.c.l.b16 %v5967
  %v6067 = vunpack.c.l.b16 %v5968
  %v6068 = vunpack.c.l.b16 %v5969
  %v6069 = vpack.c.b16 %v6022, %v6021
  %v6070 = vpack.c.b16 %v6024, %v6023
  %v6071 = vpack.c.b16 %v6026, %v6025
  %v6072 = vpack.c.b16 %v6028, %v6027
  %v6073 = vpack.c.b16 %v6030, %v6029
  %v6074 = vpack.c.b16 %v6032, %v6031
  %v6075 = vpack.c.b16 %v6034, %v6033
  %v6076 = vpack.c.b16 %v6036, %v6035
  %v6077 = vpack.c.b16 %v6038, %v6037
  %v6078 = vpack.c.b16 %v6040, %v6039
  %v6079 = vpack.c.b16 %v6042, %v6041
  %v6080 = vpack.c.b16 %v6044, %v6043
  %v6081 = vpack.c.b16 %v6046, %v6045
  %v6082 = vpack.c.b16 %v6048, %v6047
  %v6083 = vpack.c.b16 %v6050, %v6049
  %v6084 = vpack.c.b16 %v6052, %v6051
  %v6085 = vpack.c.b16 %v6054, %v6053
  %v6086 = vpack.c.b16 %v6056, %v6055
  %v6087 = vpack.c.b16 %v6058, %v6057
  %v6088 = vpack.c.b16 %v6060, %v6059
  %v6089 = vpack.c.b16 %v6062, %v6061
  %v6090 = vpack.c.b16 %v6064, %v6063
  %v6091 = vpack.c.b16 %v6066, %v6065
  %v6092 = vpack.c.b16 %v6068, %v6067
  %6117 = vmatprep.subr.bf16.mxu0 0
  %6118 = vmatpush1.bf16.msra.mxu0 %v6076
  %6119 = vmatprep.subr.bf16.mxu0 0
  %6120 = vmatpush1.bf16.msra.mxu0 %v6075
  %6121 = vmatprep.subr.bf16.mxu0 0
  %6122 = vmatpush1.bf16.msra.mxu0 %v6074
  %6123 = vmatprep.subr.bf16.mxu0 0
  %6124 = vmatpush1.bf16.msra.mxu0 %v6073
  %6125 = vmatprep.subr.bf16.mxu0 0
  %6126 = vmatpush1.bf16.msra.mxu0 %v6072
  %6127 = vmatprep.subr.bf16.mxu0 0
  %6128 = vmatpush1.bf16.msra.mxu0 %v6071
  %6129 = vmatprep.subr.bf16.mxu0 0
  %6130 = vmatpush1.bf16.msra.mxu0 %v6070
  %6131 = vmatprep.subr.bf16.mxu0 0
  %6132 = vmatpush1.bf16.msra.mxu0 %v6069
  %6133 = vmatprep.subr.bf16.mxu0 0
  %6134 = vmatpush2.bf16.msra.mxu0 %v6084
  %6135 = vmatprep.subr.bf16.mxu0 0
  %6136 = vmatpush2.bf16.msra.mxu0 %v6083
  %6137 = vmatprep.subr.bf16.mxu0 0
  %6138 = vmatpush2.bf16.msra.mxu0 %v6082
  %6139 = vmatprep.subr.bf16.mxu0 0
  %6140 = vmatpush2.bf16.msra.mxu0 %v6081
  %6141 = vmatprep.subr.bf16.mxu0 0
  %6142 = vmatpush2.bf16.msra.mxu0 %v6080
  %6143 = vmatprep.subr.bf16.mxu0 0
  %6144 = vmatpush2.bf16.msra.mxu0 %v6079
  %6145 = vmatprep.subr.bf16.mxu0 0
  %6146 = vmatpush2.bf16.msra.mxu0 %v6078
  %6147 = vmatprep.subr.bf16.mxu0 0
  %6148 = vmatpush2.bf16.msra.mxu0 %v6077
  %6149 = vmatprep.mubr.bf16.mxu0 %v5971
  %6150 = vmatmul.mubr.bf16.gmra.mxu0 %v5970
  %v6151 = vpop.f32.mrf.mxu0
  %v6152 = vadd.f32 0.0, %v6151
  %v6153 = vpop.f32.mrf.mxu0
  %v6154 = vpop.f32.mrf.mxu0
  %v6155 = vpop.f32.mrf.mxu0
  %6156 = vdwg.mxu0
  %6157 = vmatprep.subr.bf16.mxu0 0
  %6158 = vmatpush1.bf16.msra.mxu0 %v6092
  %6159 = vmatprep.subr.bf16.mxu0 0
  %6160 = vmatpush1.bf16.msra.mxu0 %v6091
  %6161 = vmatprep.subr.bf16.mxu0 0
  %6162 = vmatpush1.bf16.msra.mxu0 %v6090
  %6163 = vmatprep.subr.bf16.mxu0 0
  %6164 = vmatpush1.bf16.msra.mxu0 %v6089
  %6165 = vmatprep.subr.bf16.mxu0 0
  %6166 = vmatpush1.bf16.msra.mxu0 %v6088
  %6167 = vmatprep.subr.bf16.mxu0 0
  %6168 = vmatpush1.bf16.msra.mxu0 %v6087
  %6169 = vmatprep.subr.bf16.mxu0 0
  %6170 = vmatpush1.bf16.msra.mxu0 %v6086
  %6171 = vmatprep.subr.bf16.mxu0 0
  %6172 = vmatpush1.bf16.msra.mxu0 %v6085
  %6173 = vmatprep.subr.bf16.mxu0 0
  %6174 = vmatpush2.bf16.msra.mxu0 0
  %6175 = vmatprep.subr.bf16.mxu0 0
  %6176 = vmatpush2.bf16.msra.mxu0 0
  %6177 = vmatprep.subr.bf16.mxu0 0
  %6178 = vmatpush2.bf16.msra.mxu0 0
  %6179 = vmatprep.subr.bf16.mxu0 0
  %6180 = vmatpush2.bf16.msra.mxu0 0
  %6181 = vmatprep.subr.bf16.mxu0 0
  %6182 = vmatpush2.bf16.msra.mxu0 0
  %6183 = vmatprep.subr.bf16.mxu0 0
  %6184 = vmatpush2.bf16.msra.mxu0 0
  %6185 = vmatprep.subr.bf16.mxu0 0
  %6186 = vmatpush2.bf16.msra.mxu0 0
  %6187 = vmatprep.subr.bf16.mxu0 0
  %6188 = vmatpush2.bf16.msra.mxu0 0
  %6189 = vmatprep.mubr.bf16.mxu0 0
  %6190 = vmatmul.mubr.bf16.gmra.mxu0 %v5972
  %v6191 = vpop.f32.mrf.mxu0
  %v6192 = vadd.f32 %v6152, %v6191
  %v6193 = vpop.f32.mrf.mxu0
  %v6194 = vpop.f32.mrf.mxu0
  %v6195 = vpop.f32.mrf.mxu0
  %6196 = vdwg.mxu0
  %v6197 = vld [vmem:[%s14] sm:$0xf]
  %vm6198 = vcmask 64512
  %v6200 = vsel %vm6198, %v6197, 0
  %6202 = vmatprep.subr.mxu0 0.0
  %6203 = vmatpush1.msra.mxu0 0.0
  %6204 = vmatprep.subr.mxu0 0.0
  %6205 = vmatpush1.msra.mxu0 0.0
  %6206 = vmatprep.subr.mxu0 0.0
  %6207 = vmatpush1.msra.mxu0 0.0
  %6208 = vmatprep.subr.mxu0 0.0
  %6209 = vmatpush1.msra.mxu0 0.0
  %6210 = vmatprep.subr.mxu0 0.0
  %6211 = vmatpush1.msra.mxu0 0.0
  %6212 = vmatprep.subr.mxu0 0.0
  %6213 = vmatpush1.msra.mxu0 0.0
  %6214 = vmatprep.subr.mxu0 0.0
  %6215 = vmatpush1.msra.mxu0 0.0
  %6216 = vmatprep.subr.mxu0 0.0
  %6217 = vmatpush1.msra.mxu0 0.0
  %6218 = vmatprep.subr.mxu0 0.0
  %6219 = vmatpush1.msra.mxu0 0.0
  %6220 = vmatprep.subr.mxu0 0.0
  %6221 = vmatpush1.msra.mxu0 0.0
  %6222 = vmatprep.subr.mxu0 0.0
  %6223 = vmatpush1.msra.mxu0 0.0
  %6224 = vmatprep.subr.mxu0 0.0
  %6225 = vmatpush1.msra.mxu0 0.0
  %6226 = vmatprep.subr.mxu0 0.0
  %6227 = vmatpush1.msra.mxu0 0.0
  %6228 = vmatprep.subr.mxu0 0.0
  %6229 = vmatpush1.msra.mxu0 0.0
  %6230 = vmatprep.subr.mxu0 0.0
  %6231 = vmatpush1.msra.mxu0 0.0
  %6232 = vmatprep.subr.mxu0 0.0
  %6233 = vmatpush1.msra.mxu0 %v6192
  %6234 = vmatprep.subr.mxu0 0.0
  %6235 = vmatpush2.msra.mxu0 0.0
  %6236 = vmatprep.subr.mxu0 0.0
  %6237 = vmatpush2.msra.mxu0 0.0
  %6238 = vmatprep.subr.mxu0 0.0
  %6239 = vmatpush2.msra.mxu0 0.0
  %6240 = vmatprep.subr.mxu0 0.0
  %6241 = vmatpush2.msra.mxu0 0.0
  %6242 = vmatprep.subr.mxu0 0.0
  %6243 = vmatpush2.msra.mxu0 0.0
  %6244 = vmatprep.subr.mxu0 0.0
  %6245 = vmatpush2.msra.mxu0 0.0
  %6246 = vmatprep.subr.mxu0 0.0
  %6247 = vmatpush2.msra.mxu0 0.0
  %6248 = vmatprep.subr.mxu0 0.0
  %6249 = vmatpush2.msra.mxu0 0.0
  %6250 = vmatprep.subr.mxu0 0.0
  %6251 = vmatpush2.msra.mxu0 0.0
  %6252 = vmatprep.subr.mxu0 0.0
  %6253 = vmatpush2.msra.mxu0 0.0
  %6254 = vmatprep.subr.mxu0 0.0
  %6255 = vmatpush2.msra.mxu0 0.0
  %6256 = vmatprep.subr.mxu0 0.0
  %6257 = vmatpush2.msra.mxu0 0.0
  %6258 = vmatprep.subr.mxu0 0.0
  %6259 = vmatpush2.msra.mxu0 0.0
  %6260 = vmatprep.subr.mxu0 0.0
  %6261 = vmatpush2.msra.mxu0 0.0
  %6262 = vmatprep.subr.mxu0 0.0
  %6263 = vmatpush2.msra.mxu0 0.0
  %6264 = vmatprep.subr.mxu0 0.0
  %6265 = vmatpush2.msra.mxu0 0.0
  %6266 = vmatprep.mubr.f32.mxu0 0.0
  %6267 = vmatmul.mubr.f32.gmra.mxu0 %v6200
  %v6268 = vpop.f32.mrf.mxu0
  %v6269 = vadd.f32 0.0, %v6268
  %v6270 = vpop.f32.mrf.mxu0
  %6271 = vdwg.mxu0
  %s6272 = scalar_lea.vmem %s14, 4
  %v6273 = vld [vmem:[%s6272] sm:$0xf]
  %v6275 = vsel %vm6198, %v6273, 0
  %6277 = vmatprep.subr.mxu0 0.0
  %6278 = vmatpush1.msra.mxu0 0.0
  %6279 = vmatprep.subr.mxu0 0.0
  %6280 = vmatpush1.msra.mxu0 0.0
  %6281 = vmatprep.subr.mxu0 0.0
  %6282 = vmatpush1.msra.mxu0 0.0
  %6283 = vmatprep.subr.mxu0 0.0
  %6284 = vmatpush1.msra.mxu0 0.0
  %6285 = vmatprep.subr.mxu0 0.0
  %6286 = vmatpush1.msra.mxu0 0.0
  %6287 = vmatprep.subr.mxu0 0.0
  %6288 = vmatpush1.msra.mxu0 0.0
  %6289 = vmatprep.subr.mxu0 0.0
  %6290 = vmatpush1.msra.mxu0 0.0
  %6291 = vmatprep.subr.mxu0 0.0
  %6292 = vmatpush1.msra.mxu0 0.0
  %6293 = vmatprep.subr.mxu0 0.0
  %6294 = vmatpush1.msra.mxu0 0.0
  %6295 = vmatprep.subr.mxu0 0.0
  %6296 = vmatpush1.msra.mxu0 0.0
  %6297 = vmatprep.subr.mxu0 0.0
  %6298 = vmatpush1.msra.mxu0 0.0
  %6299 = vmatprep.subr.mxu0 0.0
  %6300 = vmatpush1.msra.mxu0 0.0
  %6301 = vmatprep.subr.mxu0 0.0
  %6302 = vmatpush1.msra.mxu0 0.0
  %6303 = vmatprep.subr.mxu0 0.0
  %6304 = vmatpush1.msra.mxu0 0.0
  %6305 = vmatprep.subr.mxu0 0.0
  %6306 = vmatpush1.msra.mxu0 0.0
  %6307 = vmatprep.subr.mxu0 0.0
  %6308 = vmatpush1.msra.mxu0 %v6192
  %6309 = vmatprep.subr.mxu0 0.0
  %6310 = vmatpush2.msra.mxu0 0.0
  %6311 = vmatprep.subr.mxu0 0.0
  %6312 = vmatpush2.msra.mxu0 0.0
  %6313 = vmatprep.subr.mxu0 0.0
  %6314 = vmatpush2.msra.mxu0 0.0
  %6315 = vmatprep.subr.mxu0 0.0
  %6316 = vmatpush2.msra.mxu0 0.0
  %6317 = vmatprep.subr.mxu0 0.0
  %6318 = vmatpush2.msra.mxu0 0.0
  %6319 = vmatprep.subr.mxu0 0.0
  %6320 = vmatpush2.msra.mxu0 0.0
  %6321 = vmatprep.subr.mxu0 0.0
  %6322 = vmatpush2.msra.mxu0 0.0
  %6323 = vmatprep.subr.mxu0 0.0
  %6324 = vmatpush2.msra.mxu0 0.0
  %6325 = vmatprep.subr.mxu0 0.0
  %6326 = vmatpush2.msra.mxu0 0.0
  %6327 = vmatprep.subr.mxu0 0.0
  %6328 = vmatpush2.msra.mxu0 0.0
  %6329 = vmatprep.subr.mxu0 0.0
  %6330 = vmatpush2.msra.mxu0 0.0
  %6331 = vmatprep.subr.mxu0 0.0
  %6332 = vmatpush2.msra.mxu0 0.0
  %6333 = vmatprep.subr.mxu0 0.0
  %6334 = vmatpush2.msra.mxu0 0.0
  %6335 = vmatprep.subr.mxu0 0.0
  %6336 = vmatpush2.msra.mxu0 0.0
  %6337 = vmatprep.subr.mxu0 0.0
  %6338 = vmatpush2.msra.mxu0 0.0
  %6339 = vmatprep.subr.mxu0 0.0
  %6340 = vmatpush2.msra.mxu0 0.0
  %6341 = vmatprep.mubr.f32.mxu0 0.0
  %6342 = vmatmul.mubr.f32.gmra.mxu0 %v6275
  %v6343 = vpop.f32.mrf.mxu0
  %v6344 = vadd.f32 0.0, %v6343
  %v6345 = vpop.f32.mrf.mxu0
  %6346 = vdwg.mxu0
  %s6347 = scalar_lea.vmem %s14, 8
  %v6348 = vld [vmem:[%s6347] sm:$0xf]
  %v6350 = vsel %vm6198, %v6348, 0
  %6352 = vmatprep.subr.mxu0 0.0
  %6353 = vmatpush1.msra.mxu0 0.0
  %6354 = vmatprep.subr.mxu0 0.0
  %6355 = vmatpush1.msra.mxu0 0.0
  %6356 = vmatprep.subr.mxu0 0.0
  %6357 = vmatpush1.msra.mxu0 0.0
  %6358 = vmatprep.subr.mxu0 0.0
  %6359 = vmatpush1.msra.mxu0 0.0
  %6360 = vmatprep.subr.mxu0 0.0
  %6361 = vmatpush1.msra.mxu0 0.0
  %6362 = vmatprep.subr.mxu0 0.0
  %6363 = vmatpush1.msra.mxu0 0.0
  %6364 = vmatprep.subr.mxu0 0.0
  %6365 = vmatpush1.msra.mxu0 0.0
  %6366 = vmatprep.subr.mxu0 0.0
  %6367 = vmatpush1.msra.mxu0 0.0
  %6368 = vmatprep.subr.mxu0 0.0
  %6369 = vmatpush1.msra.mxu0 0.0
  %6370 = vmatprep.subr.mxu0 0.0
  %6371 = vmatpush1.msra.mxu0 0.0
  %6372 = vmatprep.subr.mxu0 0.0
  %6373 = vmatpush1.msra.mxu0 0.0
  %6374 = vmatprep.subr.mxu0 0.0
  %6375 = vmatpush1.msra.mxu0 0.0
  %6376 = vmatprep.subr.mxu0 0.0
  %6377 = vmatpush1.msra.mxu0 0.0
  %6378 = vmatprep.subr.mxu0 0.0
  %6379 = vmatpush1.msra.mxu0 0.0
  %6380 = vmatprep.subr.mxu0 0.0
  %6381 = vmatpush1.msra.mxu0 0.0
  %6382 = vmatprep.subr.mxu0 0.0
  %6383 = vmatpush1.msra.mxu0 %v6192
  %6384 = vmatprep.subr.mxu0 0.0
  %6385 = vmatpush2.msra.mxu0 0.0
  %6386 = vmatprep.subr.mxu0 0.0
  %6387 = vmatpush2.msra.mxu0 0.0
  %6388 = vmatprep.subr.mxu0 0.0
  %6389 = vmatpush2.msra.mxu0 0.0
  %6390 = vmatprep.subr.mxu0 0.0
  %6391 = vmatpush2.msra.mxu0 0.0
  %6392 = vmatprep.subr.mxu0 0.0
  %6393 = vmatpush2.msra.mxu0 0.0
  %6394 = vmatprep.subr.mxu0 0.0
  %6395 = vmatpush2.msra.mxu0 0.0
  %6396 = vmatprep.subr.mxu0 0.0
  %6397 = vmatpush2.msra.mxu0 0.0
  %6398 = vmatprep.subr.mxu0 0.0
  %6399 = vmatpush2.msra.mxu0 0.0
  %6400 = vmatprep.subr.mxu0 0.0
  %6401 = vmatpush2.msra.mxu0 0.0
  %6402 = vmatprep.subr.mxu0 0.0
  %6403 = vmatpush2.msra.mxu0 0.0
  %6404 = vmatprep.subr.mxu0 0.0
  %6405 = vmatpush2.msra.mxu0 0.0
  %6406 = vmatprep.subr.mxu0 0.0
  %6407 = vmatpush2.msra.mxu0 0.0
  %6408 = vmatprep.subr.mxu0 0.0
  %6409 = vmatpush2.msra.mxu0 0.0
  %6410 = vmatprep.subr.mxu0 0.0
  %6411 = vmatpush2.msra.mxu0 0.0
  %6412 = vmatprep.subr.mxu0 0.0
  %6413 = vmatpush2.msra.mxu0 0.0
  %6414 = vmatprep.subr.mxu0 0.0
  %6415 = vmatpush2.msra.mxu0 0.0
  %6416 = vmatprep.mubr.f32.mxu0 0.0
  %6417 = vmatmul.mubr.f32.gmra.mxu0 %v6350
  %v6418 = vpop.f32.mrf.mxu0
  %v6419 = vadd.f32 0.0, %v6418
  %v6420 = vpop.f32.mrf.mxu0
  %6421 = vdwg.mxu0
  %6423 = vrot.lane.b32.xlu0 %v6344, 64
  %v6424 = vpop.permute.xlu0 %6423
  %v6426 = vsel %vm2853, %v6269, %v6424
  %v6427 = vld [vmem:[%s8] sm:$0xf]
  %v6428 = vld [vmem:[%s8 + $0x4] sm:$0xf]
  %v6429 = vld [vmem:[%s8 + $0x8] sm:$0xf]
  %v6430 = vld [vmem:[%s8 + $0xc] sm:$0xf]
  %v6431 = vld [vmem:[%s8 + $0x10] sm:$0xf]
  %v6432 = vld [vmem:[%s8 + $0x14] sm:$0xf]
  %v6433 = vld [vmem:[%s8 + $0x18] sm:$0xf]
  %v6434 = vld [vmem:[%s8 + $0x1c] sm:$0xf]
  %v6435 = vld [vmem:[%s8 + $0x20] sm:$0xf]
  %v6436 = vld [vmem:[%s8 + $0x24] sm:$0xf]
  %v6437 = vld [vmem:[%s8 + $0x28] sm:$0xf]
  %v6438 = vld [vmem:[%s8 + $0x2c] sm:$0xf]
  %v6439 = vld [vmem:[%s8 + $0x30] sm:$0xf]
  %v6440 = vld [vmem:[%s8 + $0x34] sm:$0xf]
  %v6441 = vld [vmem:[%s8 + $0x38] sm:$0xf]
  %v6442 = vld [vmem:[%s8 + $0x3c] sm:$0xf]
  %v6443 = vld [vmem:[%s8 + $0x40] sm:$0xf]
  %v6444 = vld [vmem:[%s8 + $0x44] sm:$0xf]
  %v6445 = vld [vmem:[%s8 + $0x48] sm:$0xf]
  %v6446 = vld [vmem:[%s8 + $0x4c] sm:$0xf]
  %v6447 = vld [vmem:[%s8 + $0x50] sm:$0xf]
  %v6448 = vld [vmem:[%s8 + $0x54] sm:$0xf]
  %v6449 = vld [vmem:[%s8 + $0x58] sm:$0xf]
  %v6450 = vld [vmem:[%s8 + $0x5c] sm:$0xf]
  %v6451 = vpack.c.bf16 %v6426, %v6426
  %v6452 = vpack.c.bf16 %v6419, %v6419
  %v6477 = vunpack.c.l.b16 %v6427
  %v6478 = vunpack.c.l.b16 %v6428
  %v6479 = vunpack.c.l.b16 %v6429
  %v6480 = vunpack.c.l.b16 %v6430
  %v6481 = vunpack.c.l.b16 %v6431
  %v6482 = vunpack.c.l.b16 %v6432
  %v6483 = vunpack.c.l.b16 %v6433
  %v6484 = vunpack.c.l.b16 %v6434
  %v6485 = vunpack.c.l.b16 %v6435
  %v6486 = vunpack.c.l.b16 %v6436
  %v6487 = vunpack.c.l.b16 %v6437
  %v6488 = vunpack.c.l.b16 %v6438
  %v6489 = vunpack.c.l.b16 %v6439
  %v6490 = vunpack.c.l.b16 %v6440
  %v6491 = vunpack.c.l.b16 %v6441
  %v6492 = vunpack.c.l.b16 %v6442
  %v6493 = vunpack.c.l.b16 %v6443
  %v6494 = vunpack.c.l.b16 %v6444
  %v6495 = vunpack.c.l.b16 %v6445
  %v6496 = vunpack.c.l.b16 %v6446
  %v6497 = vunpack.c.l.b16 %v6447
  %v6498 = vunpack.c.l.b16 %v6448
  %v6499 = vunpack.c.l.b16 %v6449
  %v6500 = vunpack.c.l.b16 %v6450
  %v6501 = vpack.c.b16 %v6478, %v6477
  %v6502 = vpack.c.b16 %v6480, %v6479
  %v6503 = vpack.c.b16 %v6482, %v6481
  %v6504 = vpack.c.b16 %v6484, %v6483
  %v6505 = vpack.c.b16 %v6486, %v6485
  %v6506 = vpack.c.b16 %v6488, %v6487
  %v6507 = vpack.c.b16 %v6490, %v6489
  %v6508 = vpack.c.b16 %v6492, %v6491
  %v6509 = vpack.c.b16 %v6494, %v6493
  %v6510 = vpack.c.b16 %v6496, %v6495
  %v6511 = vpack.c.b16 %v6498, %v6497
  %v6512 = vpack.c.b16 %v6500, %v6499
  %v6526 = vsel %vm2853, %v6452, 0
  %6528 = vmatprep.subr.bf16.mxu0 0
  %6529 = vmatpush1.bf16.msra.mxu0 %v6508
  %6530 = vmatprep.subr.bf16.mxu0 0
  %6531 = vmatpush1.bf16.msra.mxu0 %v6507
  %6532 = vmatprep.subr.bf16.mxu0 0
  %6533 = vmatpush1.bf16.msra.mxu0 %v6506
  %6534 = vmatprep.subr.bf16.mxu0 0
  %6535 = vmatpush1.bf16.msra.mxu0 %v6505
  %6536 = vmatprep.subr.bf16.mxu0 0
  %6537 = vmatpush1.bf16.msra.mxu0 %v6504
  %6538 = vmatprep.subr.bf16.mxu0 0
  %6539 = vmatpush1.bf16.msra.mxu0 %v6503
  %6540 = vmatprep.subr.bf16.mxu0 0
  %6541 = vmatpush1.bf16.msra.mxu0 %v6502
  %6542 = vmatprep.subr.bf16.mxu0 0
  %6543 = vmatpush1.bf16.msra.mxu0 %v6501
  %6544 = vmatprep.subr.bf16.mxu0 0
  %6545 = vmatpush2.bf16.msra.mxu0 0
  %6546 = vmatprep.subr.bf16.mxu0 0
  %6547 = vmatpush2.bf16.msra.mxu0 0
  %6548 = vmatprep.subr.bf16.mxu0 0
  %6549 = vmatpush2.bf16.msra.mxu0 0
  %6550 = vmatprep.subr.bf16.mxu0 0
  %6551 = vmatpush2.bf16.msra.mxu0 0
  %6552 = vmatprep.subr.bf16.mxu0 0
  %6553 = vmatpush2.bf16.msra.mxu0 %v6512
  %6554 = vmatprep.subr.bf16.mxu0 0
  %6555 = vmatpush2.bf16.msra.mxu0 %v6511
  %6556 = vmatprep.subr.bf16.mxu0 0
  %6557 = vmatpush2.bf16.msra.mxu0 %v6510
  %6558 = vmatprep.subr.bf16.mxu0 0
  %6559 = vmatpush2.bf16.msra.mxu0 %v6509
  %6560 = vmatprep.mubr.bf16.mxu0 %v6526
  %6561 = vmatmul.mubr.bf16.gmra.mxu0 %v6451
  %v6562 = vpop.f32.mrf.mxu0
  %v6563 = vadd.f32 0.0, %v6562
  %v6564 = vpop.f32.mrf.mxu0
  %v6565 = vpop.f32.mrf.mxu0
  %v6566 = vpop.f32.mrf.mxu0
  %6567 = vdwg.mxu0
  %v6568 = vld [vmem:[%s15] sm:$0x3]
  %vm6569 = vcmask 31744
  %v6571 = vsel %vm6569, %v6568, 0
  %v6574 = vsel %vm2935, %v6563, 0
  %6576 = vmatprep.subr.mxu0 0.0
  %6577 = vmatpush1.msra.mxu0 0.0
  %6578 = vmatprep.subr.mxu0 0.0
  %6579 = vmatpush1.msra.mxu0 0.0
  %6580 = vmatprep.subr.mxu0 0.0
  %6581 = vmatpush1.msra.mxu0 0.0
  %6582 = vmatprep.subr.mxu0 0.0
  %6583 = vmatpush1.msra.mxu0 0.0
  %6584 = vmatprep.subr.mxu0 0.0
  %6585 = vmatpush1.msra.mxu0 0.0
  %6586 = vmatprep.subr.mxu0 0.0
  %6587 = vmatpush1.msra.mxu0 0.0
  %6588 = vmatprep.subr.mxu0 0.0
  %6589 = vmatpush1.msra.mxu0 0.0
  %6590 = vmatprep.subr.mxu0 0.0
  %6591 = vmatpush1.msra.mxu0 0.0
  %6592 = vmatprep.subr.mxu0 0.0
  %6593 = vmatpush1.msra.mxu0 0.0
  %6594 = vmatprep.subr.mxu0 0.0
  %6595 = vmatpush1.msra.mxu0 0.0
  %6596 = vmatprep.subr.mxu0 0.0
  %6597 = vmatpush1.msra.mxu0 0.0
  %6598 = vmatprep.subr.mxu0 0.0
  %6599 = vmatpush1.msra.mxu0 0.0
  %6600 = vmatprep.subr.mxu0 0.0
  %6601 = vmatpush1.msra.mxu0 0.0
  %6602 = vmatprep.subr.mxu0 0.0
  %6603 = vmatpush1.msra.mxu0 0.0
  %6604 = vmatprep.subr.mxu0 0.0
  %6605 = vmatpush1.msra.mxu0 0.0
  %6606 = vmatprep.subr.mxu0 0.0
  %6607 = vmatpush1.msra.mxu0 %v6574
  %6608 = vmatprep.subr.mxu0 0.0
  %6609 = vmatpush2.msra.mxu0 0.0
  %6610 = vmatprep.subr.mxu0 0.0
  %6611 = vmatpush2.msra.mxu0 0.0
  %6612 = vmatprep.subr.mxu0 0.0
  %6613 = vmatpush2.msra.mxu0 0.0
  %6614 = vmatprep.subr.mxu0 0.0
  %6615 = vmatpush2.msra.mxu0 0.0
  %6616 = vmatprep.subr.mxu0 0.0
  %6617 = vmatpush2.msra.mxu0 0.0
  %6618 = vmatprep.subr.mxu0 0.0
  %6619 = vmatpush2.msra.mxu0 0.0
  %6620 = vmatprep.subr.mxu0 0.0
  %6621 = vmatpush2.msra.mxu0 0.0
  %6622 = vmatprep.subr.mxu0 0.0
  %6623 = vmatpush2.msra.mxu0 0.0
  %6624 = vmatprep.subr.mxu0 0.0
  %6625 = vmatpush2.msra.mxu0 0.0
  %6626 = vmatprep.subr.mxu0 0.0
  %6627 = vmatpush2.msra.mxu0 0.0
  %6628 = vmatprep.subr.mxu0 0.0
  %6629 = vmatpush2.msra.mxu0 0.0
  %6630 = vmatprep.subr.mxu0 0.0
  %6631 = vmatpush2.msra.mxu0 0.0
  %6632 = vmatprep.subr.mxu0 0.0
  %6633 = vmatpush2.msra.mxu0 0.0
  %6634 = vmatprep.subr.mxu0 0.0
  %6635 = vmatpush2.msra.mxu0 0.0
  %6636 = vmatprep.subr.mxu0 0.0
  %6637 = vmatpush2.msra.mxu0 0.0
  %6638 = vmatprep.subr.mxu0 0.0
  %6639 = vmatpush2.msra.mxu0 0.0
  %6640 = vmatprep.mubr.f32.mxu0 0.0
  %6641 = vmatmul.mubr.f32.gmra.mxu0 %v6571
  %v6642 = vpop.f32.mrf.mxu0
  %v6643 = vadd.f32 0.0, %v6642
  %v6644 = vpop.f32.mrf.mxu0
  %6645 = vdwg.mxu0
  %s6646 = scalar_lea.vmem %s15, 2
  %v6647 = vld [vmem:[%s6646] sm:$0x3]
  %v6649 = vsel %vm6569, %v6647, 0
  %6651 = vmatprep.subr.mxu0 0.0
  %6652 = vmatpush1.msra.mxu0 0.0
  %6653 = vmatprep.subr.mxu0 0.0
  %6654 = vmatpush1.msra.mxu0 0.0
  %6655 = vmatprep.subr.mxu0 0.0
  %6656 = vmatpush1.msra.mxu0 0.0
  %6657 = vmatprep.subr.mxu0 0.0
  %6658 = vmatpush1.msra.mxu0 0.0
  %6659 = vmatprep.subr.mxu0 0.0
  %6660 = vmatpush1.msra.mxu0 0.0
  %6661 = vmatprep.subr.mxu0 0.0
  %6662 = vmatpush1.msra.mxu0 0.0
  %6663 = vmatprep.subr.mxu0 0.0
  %6664 = vmatpush1.msra.mxu0 0.0
  %6665 = vmatprep.subr.mxu0 0.0
  %6666 = vmatpush1.msra.mxu0 0.0
  %6667 = vmatprep.subr.mxu0 0.0
  %6668 = vmatpush1.msra.mxu0 0.0
  %6669 = vmatprep.subr.mxu0 0.0
  %6670 = vmatpush1.msra.mxu0 0.0
  %6671 = vmatprep.subr.mxu0 0.0
  %6672 = vmatpush1.msra.mxu0 0.0
  %6673 = vmatprep.subr.mxu0 0.0
  %6674 = vmatpush1.msra.mxu0 0.0
  %6675 = vmatprep.subr.mxu0 0.0
  %6676 = vmatpush1.msra.mxu0 0.0
  %6677 = vmatprep.subr.mxu0 0.0
  %6678 = vmatpush1.msra.mxu0 0.0
  %6679 = vmatprep.subr.mxu0 0.0
  %6680 = vmatpush1.msra.mxu0 0.0
  %6681 = vmatprep.subr.mxu0 0.0
  %6682 = vmatpush1.msra.mxu0 %v6574
  %6683 = vmatprep.subr.mxu0 0.0
  %6684 = vmatpush2.msra.mxu0 0.0
  %6685 = vmatprep.subr.mxu0 0.0
  %6686 = vmatpush2.msra.mxu0 0.0
  %6687 = vmatprep.subr.mxu0 0.0
  %6688 = vmatpush2.msra.mxu0 0.0
  %6689 = vmatprep.subr.mxu0 0.0
  %6690 = vmatpush2.msra.mxu0 0.0
  %6691 = vmatprep.subr.mxu0 0.0
  %6692 = vmatpush2.msra.mxu0 0.0
  %6693 = vmatprep.subr.mxu0 0.0
  %6694 = vmatpush2.msra.mxu0 0.0
  %6695 = vmatprep.subr.mxu0 0.0
  %6696 = vmatpush2.msra.mxu0 0.0
  %6697 = vmatprep.subr.mxu0 0.0
  %6698 = vmatpush2.msra.mxu0 0.0
  %6699 = vmatprep.subr.mxu0 0.0
  %6700 = vmatpush2.msra.mxu0 0.0
  %6701 = vmatprep.subr.mxu0 0.0
  %6702 = vmatpush2.msra.mxu0 0.0
  %6703 = vmatprep.subr.mxu0 0.0
  %6704 = vmatpush2.msra.mxu0 0.0
  %6705 = vmatprep.subr.mxu0 0.0
  %6706 = vmatpush2.msra.mxu0 0.0
  %6707 = vmatprep.subr.mxu0 0.0
  %6708 = vmatpush2.msra.mxu0 0.0
  %6709 = vmatprep.subr.mxu0 0.0
  %6710 = vmatpush2.msra.mxu0 0.0
  %6711 = vmatprep.subr.mxu0 0.0
  %6712 = vmatpush2.msra.mxu0 0.0
  %6713 = vmatprep.subr.mxu0 0.0
  %6714 = vmatpush2.msra.mxu0 0.0
  %6715 = vmatprep.mubr.f32.mxu0 0.0
  %6716 = vmatmul.mubr.f32.gmra.mxu0 %v6649
  %v6717 = vpop.f32.mrf.mxu0
  %v6718 = vadd.f32 0.0, %v6717
  %v6719 = vpop.f32.mrf.mxu0
  %6720 = vdwg.mxu0
  %s6721 = scalar_lea.vmem %s15, 4
  %v6722 = vld [vmem:[%s6721] sm:$0x3]
  %v6724 = vsel %vm6569, %v6722, 0
  %6726 = vmatprep.subr.mxu0 0.0
  %6727 = vmatpush1.msra.mxu0 0.0
  %6728 = vmatprep.subr.mxu0 0.0
  %6729 = vmatpush1.msra.mxu0 0.0
  %6730 = vmatprep.subr.mxu0 0.0
  %6731 = vmatpush1.msra.mxu0 0.0
  %6732 = vmatprep.subr.mxu0 0.0
  %6733 = vmatpush1.msra.mxu0 0.0
  %6734 = vmatprep.subr.mxu0 0.0
  %6735 = vmatpush1.msra.mxu0 0.0
  %6736 = vmatprep.subr.mxu0 0.0
  %6737 = vmatpush1.msra.mxu0 0.0
  %6738 = vmatprep.subr.mxu0 0.0
  %6739 = vmatpush1.msra.mxu0 0.0
  %6740 = vmatprep.subr.mxu0 0.0
  %6741 = vmatpush1.msra.mxu0 0.0
  %6742 = vmatprep.subr.mxu0 0.0
  %6743 = vmatpush1.msra.mxu0 0.0
  %6744 = vmatprep.subr.mxu0 0.0
  %6745 = vmatpush1.msra.mxu0 0.0
  %6746 = vmatprep.subr.mxu0 0.0
  %6747 = vmatpush1.msra.mxu0 0.0
  %6748 = vmatprep.subr.mxu0 0.0
  %6749 = vmatpush1.msra.mxu0 0.0
  %6750 = vmatprep.subr.mxu0 0.0
  %6751 = vmatpush1.msra.mxu0 0.0
  %6752 = vmatprep.subr.mxu0 0.0
  %6753 = vmatpush1.msra.mxu0 0.0
  %6754 = vmatprep.subr.mxu0 0.0
  %6755 = vmatpush1.msra.mxu0 0.0
  %6756 = vmatprep.subr.mxu0 0.0
  %6757 = vmatpush1.msra.mxu0 %v6574
  %6758 = vmatprep.subr.mxu0 0.0
  %6759 = vmatpush2.msra.mxu0 0.0
  %6760 = vmatprep.subr.mxu0 0.0
  %6761 = vmatpush2.msra.mxu0 0.0
  %6762 = vmatprep.subr.mxu0 0.0
  %6763 = vmatpush2.msra.mxu0 0.0
  %6764 = vmatprep.subr.mxu0 0.0
  %6765 = vmatpush2.msra.mxu0 0.0
  %6766 = vmatprep.subr.mxu0 0.0
  %6767 = vmatpush2.msra.mxu0 0.0
  %6768 = vmatprep.subr.mxu0 0.0
  %6769 = vmatpush2.msra.mxu0 0.0
  %6770 = vmatprep.subr.mxu0 0.0
  %6771 = vmatpush2.msra.mxu0 0.0
  %6772 = vmatprep.subr.mxu0 0.0
  %6773 = vmatpush2.msra.mxu0 0.0
  %6774 = vmatprep.subr.mxu0 0.0
  %6775 = vmatpush2.msra.mxu0 0.0
  %6776 = vmatprep.subr.mxu0 0.0
  %6777 = vmatpush2.msra.mxu0 0.0
  %6778 = vmatprep.subr.mxu0 0.0
  %6779 = vmatpush2.msra.mxu0 0.0
  %6780 = vmatprep.subr.mxu0 0.0
  %6781 = vmatpush2.msra.mxu0 0.0
  %6782 = vmatprep.subr.mxu0 0.0
  %6783 = vmatpush2.msra.mxu0 0.0
  %6784 = vmatprep.subr.mxu0 0.0
  %6785 = vmatpush2.msra.mxu0 0.0
  %6786 = vmatprep.subr.mxu0 0.0
  %6787 = vmatpush2.msra.mxu0 0.0
  %6788 = vmatprep.subr.mxu0 0.0
  %6789 = vmatpush2.msra.mxu0 0.0
  %6790 = vmatprep.mubr.f32.mxu0 0.0
  %6791 = vmatmul.mubr.f32.gmra.mxu0 %v6724
  %v6792 = vpop.f32.mrf.mxu0
  %v6793 = vadd.f32 0.0, %v6792
  %v6794 = vpop.f32.mrf.mxu0
  %6795 = vdwg.mxu0
  %6797 = vrot.lane.b32.xlu0 %v6718, 32
  %v6798 = vpop.permute.xlu0 %6797
  %6801 = vrot.lane.b32.xlu0 %v6793, 64
  %v6802 = vpop.permute.xlu0 %6801
  %vm6804 = vcmask 261120
  %v6805 = vsel %vm6804, %v6643, %v6798
  %v6806 = vsel %vm2853, %v6805, %v6802
  %v6807 = vld [vmem:[%s9] sm:$0xf]
  %v6808 = vld [vmem:[%s9 + $0x4] sm:$0xf]
  %v6809 = vld [vmem:[%s9 + $0x8] sm:$0xf]
  %v6810 = vld [vmem:[%s9 + $0xc] sm:$0xf]
  %v6811 = vld [vmem:[%s9 + $0x10] sm:$0xf]
  %v6812 = vld [vmem:[%s9 + $0x14] sm:$0xf]
  %v6813 = vld [vmem:[%s9 + $0x18] sm:$0xf]
  %v6814 = vld [vmem:[%s9 + $0x1c] sm:$0xf]
  %v6815 = vld [vmem:[%s9 + $0x20] sm:$0xf]
  %v6816 = vld [vmem:[%s9 + $0x24] sm:$0xf]
  %v6817 = vld [vmem:[%s9 + $0x28] sm:$0xf]
  %v6818 = vld [vmem:[%s9 + $0x2c] sm:$0xf]
  %v6819 = vpack.c.bf16 %v6806, %v6806
  %v6832 = vunpack.c.l.b16 %v6807
  %v6833 = vunpack.c.l.b16 %v6808
  %v6834 = vunpack.c.l.b16 %v6809
  %v6835 = vunpack.c.l.b16 %v6810
  %v6836 = vunpack.c.l.b16 %v6811
  %v6837 = vunpack.c.l.b16 %v6812
  %v6838 = vunpack.c.l.b16 %v6813
  %v6839 = vunpack.c.l.b16 %v6814
  %v6840 = vunpack.c.l.b16 %v6815
  %v6841 = vunpack.c.l.b16 %v6816
  %v6842 = vunpack.c.l.b16 %v6817
  %v6843 = vunpack.c.l.b16 %v6818
  %v6844 = vpack.c.b16 %v6833, %v6832
  %v6845 = vpack.c.b16 %v6835, %v6834
  %v6846 = vpack.c.b16 %v6837, %v6836
  %v6847 = vpack.c.b16 %v6839, %v6838
  %v6848 = vpack.c.b16 %v6841, %v6840
  %v6849 = vpack.c.b16 %v6843, %v6842
  %vm6856 = vcmask 785408
  %v6858 = vsel %vm6856, %v6819, 0
  %6860 = vmatprep.subr.bf16.mxu0 0
  %6861 = vmatpush1.bf16.msra.mxu0 0
  %6862 = vmatprep.subr.bf16.mxu0 0
  %6863 = vmatpush1.bf16.msra.mxu0 0
  %6864 = vmatprep.subr.bf16.mxu0 0
  %6865 = vmatpush1.bf16.msra.mxu0 %v6849
  %6866 = vmatprep.subr.bf16.mxu0 0
  %6867 = vmatpush1.bf16.msra.mxu0 %v6848
  %6868 = vmatprep.subr.bf16.mxu0 0
  %6869 = vmatpush1.bf16.msra.mxu0 %v6847
  %6870 = vmatprep.subr.bf16.mxu0 0
  %6871 = vmatpush1.bf16.msra.mxu0 %v6846
  %6872 = vmatprep.subr.bf16.mxu0 0
  %6873 = vmatpush1.bf16.msra.mxu0 %v6845
  %6874 = vmatprep.subr.bf16.mxu0 0
  %6875 = vmatpush1.bf16.msra.mxu0 %v6844
  %6876 = vmatprep.subr.bf16.mxu0 0
  %6877 = vmatpush2.bf16.msra.mxu0 0
  %6878 = vmatprep.subr.bf16.mxu0 0
  %6879 = vmatpush2.bf16.msra.mxu0 0
  %6880 = vmatprep.subr.bf16.mxu0 0
  %6881 = vmatpush2.bf16.msra.mxu0 0
  %6882 = vmatprep.subr.bf16.mxu0 0
  %6883 = vmatpush2.bf16.msra.mxu0 0
  %6884 = vmatprep.subr.bf16.mxu0 0
  %6885 = vmatpush2.bf16.msra.mxu0 0
  %6886 = vmatprep.subr.bf16.mxu0 0
  %6887 = vmatpush2.bf16.msra.mxu0 0
  %6888 = vmatprep.subr.bf16.mxu0 0
  %6889 = vmatpush2.bf16.msra.mxu0 0
  %6890 = vmatprep.subr.bf16.mxu0 0
  %6891 = vmatpush2.bf16.msra.mxu0 0
  %6892 = vmatprep.mubr.bf16.mxu0 0
  %6893 = vmatmul.mubr.bf16.gmra.mxu0 %v6858
  %v6894 = vpop.f32.mrf.mxu0
  %v6895 = vadd.f32 0.0, %v6894
  %v6896 = vpop.f32.mrf.mxu0
  %v6897 = vpop.f32.mrf.mxu0
  %v6898 = vpop.f32.mrf.mxu0
  %6899 = vdwg.mxu0
  %v6900 = vld [vmem:[%s10] sm:$0xf]
  %v6901 = vld [vmem:[%s10 + $0x4] sm:$0xf]
  %v6902 = vpack.c.bf16 %v6895, %v6895
  %v6905 = vunpack.c.l.b16 %v6900
  %v6906 = vunpack.c.l.b16 %v6901
  %v6907 = vpack.c.b16 %v6906, %v6905
  %v6910 = vsel %vm92, %v6902, 0
  %6912 = vmatprep.subr.bf16.mxu0 0
  %6913 = vmatpush1.bf16.msra.mxu0 0
  %6914 = vmatprep.subr.bf16.mxu0 0
  %6915 = vmatpush1.bf16.msra.mxu0 0
  %6916 = vmatprep.subr.bf16.mxu0 0
  %6917 = vmatpush1.bf16.msra.mxu0 0
  %6918 = vmatprep.subr.bf16.mxu0 0
  %6919 = vmatpush1.bf16.msra.mxu0 0
  %6920 = vmatprep.subr.bf16.mxu0 0
  %6921 = vmatpush1.bf16.msra.mxu0 0
  %6922 = vmatprep.subr.bf16.mxu0 0
  %6923 = vmatpush1.bf16.msra.mxu0 0
  %6924 = vmatprep.subr.bf16.mxu0 0
  %6925 = vmatpush1.bf16.msra.mxu0 0
  %6926 = vmatprep.subr.bf16.mxu0 0
  %6927 = vmatpush1.bf16.msra.mxu0 %v6907
  %6928 = vmatprep.subr.bf16.mxu0 0
  %6929 = vmatpush2.bf16.msra.mxu0 0
  %6930 = vmatprep.subr.bf16.mxu0 0
  %6931 = vmatpush2.bf16.msra.mxu0 0
  %6932 = vmatprep.subr.bf16.mxu0 0
  %6933 = vmatpush2.bf16.msra.mxu0 0
  %6934 = vmatprep.subr.bf16.mxu0 0
  %6935 = vmatpush2.bf16.msra.mxu0 0
  %6936 = vmatprep.subr.bf16.mxu0 0
  %6937 = vmatpush2.bf16.msra.mxu0 0
  %6938 = vmatprep.subr.bf16.mxu0 0
  %6939 = vmatpush2.bf16.msra.mxu0 0
  %6940 = vmatprep.subr.bf16.mxu0 0
  %6941 = vmatpush2.bf16.msra.mxu0 0
  %6942 = vmatprep.subr.bf16.mxu0 0
  %6943 = vmatpush2.bf16.msra.mxu0 0
  %6944 = vmatprep.mubr.bf16.mxu0 0
  %6945 = vmatmul.mubr.bf16.gmra.mxu0 %v6910
  %v6946 = vpop.f32.mrf.mxu0
  %v6947 = vadd.f32 0.0, %v6946
  %v6948 = vpop.f32.mrf.mxu0
  %v6949 = vpop.f32.mrf.mxu0
  %v6950 = vpop.f32.mrf.mxu0
  %6951 = vdwg.mxu0
  %v6952 = vld [vmem:[%s16] sm:$0xf]
  %s6953 = scalar_lea.vmem %s16, 4
  %v6954 = vld [vmem:[%s6953] sm:$0xf]
  %6956 = vrot.lane.b32.xlu0 %v6947, 96
  %v6957 = vpop.permute.xlu0 %6956
  %vm6958 = vcmask 15360
  %v6960 = vsel %vm6958, %v6954, 0
  %v6962 = vsel %vm2965, %v6957, 0
  %6964 = vmatprep.subr.mxu0 0.0
  %6965 = vmatpush1.msra.mxu0 0.0
  %6966 = vmatprep.subr.mxu0 0.0
  %6967 = vmatpush1.msra.mxu0 0.0
  %6968 = vmatprep.subr.mxu0 0.0
  %6969 = vmatpush1.msra.mxu0 0.0
  %6970 = vmatprep.subr.mxu0 0.0
  %6971 = vmatpush1.msra.mxu0 0.0
  %6972 = vmatprep.subr.mxu0 0.0
  %6973 = vmatpush1.msra.mxu0 0.0
  %6974 = vmatprep.subr.mxu0 0.0
  %6975 = vmatpush1.msra.mxu0 0.0
  %6976 = vmatprep.subr.mxu0 0.0
  %6977 = vmatpush1.msra.mxu0 0.0
  %6978 = vmatprep.subr.mxu0 0.0
  %6979 = vmatpush1.msra.mxu0 0.0
  %6980 = vmatprep.subr.mxu0 0.0
  %6981 = vmatpush1.msra.mxu0 0.0
  %6982 = vmatprep.subr.mxu0 0.0
  %6983 = vmatpush1.msra.mxu0 0.0
  %6984 = vmatprep.subr.mxu0 0.0
  %6985 = vmatpush1.msra.mxu0 0.0
  %6986 = vmatprep.subr.mxu0 0.0
  %6987 = vmatpush1.msra.mxu0 0.0
  %6988 = vmatprep.subr.mxu0 0.0
  %6989 = vmatpush1.msra.mxu0 0.0
  %6990 = vmatprep.subr.mxu0 0.0
  %6991 = vmatpush1.msra.mxu0 0.0
  %6992 = vmatprep.subr.mxu0 0.0
  %6993 = vmatpush1.msra.mxu0 0.0
  %6994 = vmatprep.subr.mxu0 0.0
  %6995 = vmatpush1.msra.mxu0 %v6962
  %6996 = vmatprep.subr.mxu0 0.0
  %6997 = vmatpush2.msra.mxu0 0.0
  %6998 = vmatprep.subr.mxu0 0.0
  %6999 = vmatpush2.msra.mxu0 0.0
  %7000 = vmatprep.subr.mxu0 0.0
  %7001 = vmatpush2.msra.mxu0 0.0
  %7002 = vmatprep.subr.mxu0 0.0
  %7003 = vmatpush2.msra.mxu0 0.0
  %7004 = vmatprep.subr.mxu0 0.0
  %7005 = vmatpush2.msra.mxu0 0.0
  %7006 = vmatprep.subr.mxu0 0.0
  %7007 = vmatpush2.msra.mxu0 0.0
  %7008 = vmatprep.subr.mxu0 0.0
  %7009 = vmatpush2.msra.mxu0 0.0
  %7010 = vmatprep.subr.mxu0 0.0
  %7011 = vmatpush2.msra.mxu0 0.0
  %7012 = vmatprep.subr.mxu0 0.0
  %7013 = vmatpush2.msra.mxu0 0.0
  %7014 = vmatprep.subr.mxu0 0.0
  %7015 = vmatpush2.msra.mxu0 0.0
  %7016 = vmatprep.subr.mxu0 0.0
  %7017 = vmatpush2.msra.mxu0 0.0
  %7018 = vmatprep.subr.mxu0 0.0
  %7019 = vmatpush2.msra.mxu0 0.0
  %7020 = vmatprep.subr.mxu0 0.0
  %7021 = vmatpush2.msra.mxu0 0.0
  %7022 = vmatprep.subr.mxu0 0.0
  %7023 = vmatpush2.msra.mxu0 0.0
  %7024 = vmatprep.subr.mxu0 0.0
  %7025 = vmatpush2.msra.mxu0 0.0
  %7026 = vmatprep.subr.mxu0 0.0
  %7027 = vmatpush2.msra.mxu0 0.0
  %7028 = vmatprep.mubr.f32.mxu0 0.0
  %7029 = vmatmul.mubr.f32.gmra.mxu0 %v6960
  %v7030 = vpop.f32.mrf.mxu0
  %v7031 = vadd.f32 0.0, %v7030
  %v7032 = vpop.f32.mrf.mxu0
  %7033 = vdwg.mxu0
  %v7035 = vsel %vm6958, %v6952, 0
  %v7037 = vsel %vm2965, %v6947, 0
  %7039 = vmatprep.subr.mxu0 0.0
  %7040 = vmatpush1.msra.mxu0 0.0
  %7041 = vmatprep.subr.mxu0 0.0
  %7042 = vmatpush1.msra.mxu0 0.0
  %7043 = vmatprep.subr.mxu0 0.0
  %7044 = vmatpush1.msra.mxu0 0.0
  %7045 = vmatprep.subr.mxu0 0.0
  %7046 = vmatpush1.msra.mxu0 0.0
  %7047 = vmatprep.subr.mxu0 0.0
  %7048 = vmatpush1.msra.mxu0 0.0
  %7049 = vmatprep.subr.mxu0 0.0
  %7050 = vmatpush1.msra.mxu0 0.0
  %7051 = vmatprep.subr.mxu0 0.0
  %7052 = vmatpush1.msra.mxu0 0.0
  %7053 = vmatprep.subr.mxu0 0.0
  %7054 = vmatpush1.msra.mxu0 0.0
  %7055 = vmatprep.subr.mxu0 0.0
  %7056 = vmatpush1.msra.mxu0 0.0
  %7057 = vmatprep.subr.mxu0 0.0
  %7058 = vmatpush1.msra.mxu0 0.0
  %7059 = vmatprep.subr.mxu0 0.0
  %7060 = vmatpush1.msra.mxu0 0.0
  %7061 = vmatprep.subr.mxu0 0.0
  %7062 = vmatpush1.msra.mxu0 0.0
  %7063 = vmatprep.subr.mxu0 0.0
  %7064 = vmatpush1.msra.mxu0 0.0
  %7065 = vmatprep.subr.mxu0 0.0
  %7066 = vmatpush1.msra.mxu0 0.0
  %7067 = vmatprep.subr.mxu0 0.0
  %7068 = vmatpush1.msra.mxu0 0.0
  %7069 = vmatprep.subr.mxu0 0.0
  %7070 = vmatpush1.msra.mxu0 %v7037
  %7071 = vmatprep.subr.mxu0 0.0
  %7072 = vmatpush2.msra.mxu0 0.0
  %7073 = vmatprep.subr.mxu0 0.0
  %7074 = vmatpush2.msra.mxu0 0.0
  %7075 = vmatprep.subr.mxu0 0.0
  %7076 = vmatpush2.msra.mxu0 0.0
  %7077 = vmatprep.subr.mxu0 0.0
  %7078 = vmatpush2.msra.mxu0 0.0
  %7079 = vmatprep.subr.mxu0 0.0
  %7080 = vmatpush2.msra.mxu0 0.0
  %7081 = vmatprep.subr.mxu0 0.0
  %7082 = vmatpush2.msra.mxu0 0.0
  %7083 = vmatprep.subr.mxu0 0.0
  %7084 = vmatpush2.msra.mxu0 0.0
  %7085 = vmatprep.subr.mxu0 0.0
  %7086 = vmatpush2.msra.mxu0 0.0
  %7087 = vmatprep.subr.mxu0 0.0
  %7088 = vmatpush2.msra.mxu0 0.0
  %7089 = vmatprep.subr.mxu0 0.0
  %7090 = vmatpush2.msra.mxu0 0.0
  %7091 = vmatprep.subr.mxu0 0.0
  %7092 = vmatpush2.msra.mxu0 0.0
  %7093 = vmatprep.subr.mxu0 0.0
  %7094 = vmatpush2.msra.mxu0 0.0
  %7095 = vmatprep.subr.mxu0 0.0
  %7096 = vmatpush2.msra.mxu0 0.0
  %7097 = vmatprep.subr.mxu0 0.0
  %7098 = vmatpush2.msra.mxu0 0.0
  %7099 = vmatprep.subr.mxu0 0.0
  %7100 = vmatpush2.msra.mxu0 0.0
  %7101 = vmatprep.subr.mxu0 0.0
  %7102 = vmatpush2.msra.mxu0 0.0
  %7103 = vmatprep.mubr.f32.mxu0 0.0
  %7104 = vmatmul.mubr.f32.gmra.mxu0 %v7035
  %v7105 = vpop.f32.mrf.mxu0
  %v7106 = vadd.f32 %v7031, %v7105
  %v7107 = vpop.f32.mrf.mxu0
  %7108 = vdwg.mxu0
  %v7109 = vsub.f32 %v6563, %v7106
  %v7110 = vld [vmem:[%s11] sm:$0xf]
  %v7111 = vld [vmem:[%s11 + $0x4] sm:$0xf]
  %v7112 = vld [vmem:[%s11 + $0x8] sm:$0xf]
  %v7113 = vld [vmem:[%s11 + $0xc] sm:$0xf]
  %v7114 = vpack.c.bf16 %v6563, %v6563
  %v7119 = vunpack.c.l.b16 %v7110
  %v7120 = vunpack.c.l.b16 %v7111
  %v7121 = vunpack.c.l.b16 %v7112
  %v7122 = vunpack.c.l.b16 %v7113
  %v7123 = vpack.c.b16 %v7120, %v7119
  %v7124 = vpack.c.b16 %v7122, %v7121
  %v7128 = vsel %vm6804, %v7114, 0
  %7130 = vmatprep.subr.bf16.mxu0 0
  %7131 = vmatpush1.bf16.msra.mxu0 0
  %7132 = vmatprep.subr.bf16.mxu0 0
  %7133 = vmatpush1.bf16.msra.mxu0 0
  %7134 = vmatprep.subr.bf16.mxu0 0
  %7135 = vmatpush1.bf16.msra.mxu0 0
  %7136 = vmatprep.subr.bf16.mxu0 0
  %7137 = vmatpush1.bf16.msra.mxu0 0
  %7138 = vmatprep.subr.bf16.mxu0 0
  %7139 = vmatpush1.bf16.msra.mxu0 0
  %7140 = vmatprep.subr.bf16.mxu0 0
  %7141 = vmatpush1.bf16.msra.mxu0 0
  %7142 = vmatprep.subr.bf16.mxu0 0
  %7143 = vmatpush1.bf16.msra.mxu0 %v7124
  %7144 = vmatprep.subr.bf16.mxu0 0
  %7145 = vmatpush1.bf16.msra.mxu0 %v7123
  %7146 = vmatprep.subr.bf16.mxu0 0
  %7147 = vmatpush2.bf16.msra.mxu0 0
  %7148 = vmatprep.subr.bf16.mxu0 0
  %7149 = vmatpush2.bf16.msra.mxu0 0
  %7150 = vmatprep.subr.bf16.mxu0 0
  %7151 = vmatpush2.bf16.msra.mxu0 0
  %7152 = vmatprep.subr.bf16.mxu0 0
  %7153 = vmatpush2.bf16.msra.mxu0 0
  %7154 = vmatprep.subr.bf16.mxu0 0
  %7155 = vmatpush2.bf16.msra.mxu0 0
  %7156 = vmatprep.subr.bf16.mxu0 0
  %7157 = vmatpush2.bf16.msra.mxu0 0
  %7158 = vmatprep.subr.bf16.mxu0 0
  %7159 = vmatpush2.bf16.msra.mxu0 0
  %7160 = vmatprep.subr.bf16.mxu0 0
  %7161 = vmatpush2.bf16.msra.mxu0 0
  %7162 = vmatprep.mubr.bf16.mxu0 0
  %7163 = vmatmul.mubr.bf16.gmra.mxu0 %v7128
  %v7164 = vpop.f32.mrf.mxu0
  %v7165 = vadd.f32 0.0, %v7164
  %v7166 = vpop.f32.mrf.mxu0
  %v7167 = vpop.f32.mrf.mxu0
  %v7168 = vpop.f32.mrf.mxu0
  %7169 = vdwg.mxu0
  %v7170 = vld [vmem:[%s17] sm:$0xff]
  %s7171 = scalar_lea.vmem %s17, 8
  %v7172 = vld [vmem:[%s7171] sm:$0xff]
  %7174 = vrot.lane.b32.xlu0 %v7165, 64
  %v7175 = vpop.permute.xlu0 %7174
  %v7177 = vsel %vm6569, %v7172, 0
  %v7179 = vsel %vm2935, %v7175, 0
  %7181 = vmatprep.subr.mxu0 0.0
  %7182 = vmatpush1.msra.mxu0 0.0
  %7183 = vmatprep.subr.mxu0 0.0
  %7184 = vmatpush1.msra.mxu0 0.0
  %7185 = vmatprep.subr.mxu0 0.0
  %7186 = vmatpush1.msra.mxu0 0.0
  %7187 = vmatprep.subr.mxu0 0.0
  %7188 = vmatpush1.msra.mxu0 0.0
  %7189 = vmatprep.subr.mxu0 0.0
  %7190 = vmatpush1.msra.mxu0 0.0
  %7191 = vmatprep.subr.mxu0 0.0
  %7192 = vmatpush1.msra.mxu0 0.0
  %7193 = vmatprep.subr.mxu0 0.0
  %7194 = vmatpush1.msra.mxu0 0.0
  %7195 = vmatprep.subr.mxu0 0.0
  %7196 = vmatpush1.msra.mxu0 0.0
  %7197 = vmatprep.subr.mxu0 0.0
  %7198 = vmatpush1.msra.mxu0 0.0
  %7199 = vmatprep.subr.mxu0 0.0
  %7200 = vmatpush1.msra.mxu0 0.0
  %7201 = vmatprep.subr.mxu0 0.0
  %7202 = vmatpush1.msra.mxu0 0.0
  %7203 = vmatprep.subr.mxu0 0.0
  %7204 = vmatpush1.msra.mxu0 0.0
  %7205 = vmatprep.subr.mxu0 0.0
  %7206 = vmatpush1.msra.mxu0 0.0
  %7207 = vmatprep.subr.mxu0 0.0
  %7208 = vmatpush1.msra.mxu0 0.0
  %7209 = vmatprep.subr.mxu0 0.0
  %7210 = vmatpush1.msra.mxu0 0.0
  %7211 = vmatprep.subr.mxu0 0.0
  %7212 = vmatpush1.msra.mxu0 %v7179
  %7213 = vmatprep.subr.mxu0 0.0
  %7214 = vmatpush2.msra.mxu0 0.0
  %7215 = vmatprep.subr.mxu0 0.0
  %7216 = vmatpush2.msra.mxu0 0.0
  %7217 = vmatprep.subr.mxu0 0.0
  %7218 = vmatpush2.msra.mxu0 0.0
  %7219 = vmatprep.subr.mxu0 0.0
  %7220 = vmatpush2.msra.mxu0 0.0
  %7221 = vmatprep.subr.mxu0 0.0
  %7222 = vmatpush2.msra.mxu0 0.0
  %7223 = vmatprep.subr.mxu0 0.0
  %7224 = vmatpush2.msra.mxu0 0.0
  %7225 = vmatprep.subr.mxu0 0.0
  %7226 = vmatpush2.msra.mxu0 0.0
  %7227 = vmatprep.subr.mxu0 0.0
  %7228 = vmatpush2.msra.mxu0 0.0
  %7229 = vmatprep.subr.mxu0 0.0
  %7230 = vmatpush2.msra.mxu0 0.0
  %7231 = vmatprep.subr.mxu0 0.0
  %7232 = vmatpush2.msra.mxu0 0.0
  %7233 = vmatprep.subr.mxu0 0.0
  %7234 = vmatpush2.msra.mxu0 0.0
  %7235 = vmatprep.subr.mxu0 0.0
  %7236 = vmatpush2.msra.mxu0 0.0
  %7237 = vmatprep.subr.mxu0 0.0
  %7238 = vmatpush2.msra.mxu0 0.0
  %7239 = vmatprep.subr.mxu0 0.0
  %7240 = vmatpush2.msra.mxu0 0.0
  %7241 = vmatprep.subr.mxu0 0.0
  %7242 = vmatpush2.msra.mxu0 0.0
  %7243 = vmatprep.subr.mxu0 0.0
  %7244 = vmatpush2.msra.mxu0 0.0
  %7245 = vmatprep.mubr.f32.mxu0 0.0
  %7246 = vmatmul.mubr.f32.gmra.mxu0 %v7177
  %v7247 = vpop.f32.mrf.mxu0
  %v7248 = vadd.f32 0.0, %v7247
  %v7249 = vpop.f32.mrf.mxu0
  %7250 = vdwg.mxu0
  %v7252 = vsel %vm6569, %v7170, 0
  %v7254 = vsel %vm2935, %v7165, 0
  %7256 = vmatprep.subr.mxu0 0.0
  %7257 = vmatpush1.msra.mxu0 0.0
  %7258 = vmatprep.subr.mxu0 0.0
  %7259 = vmatpush1.msra.mxu0 0.0
  %7260 = vmatprep.subr.mxu0 0.0
  %7261 = vmatpush1.msra.mxu0 0.0
  %7262 = vmatprep.subr.mxu0 0.0
  %7263 = vmatpush1.msra.mxu0 0.0
  %7264 = vmatprep.subr.mxu0 0.0
  %7265 = vmatpush1.msra.mxu0 0.0
  %7266 = vmatprep.subr.mxu0 0.0
  %7267 = vmatpush1.msra.mxu0 0.0
  %7268 = vmatprep.subr.mxu0 0.0
  %7269 = vmatpush1.msra.mxu0 0.0
  %7270 = vmatprep.subr.mxu0 0.0
  %7271 = vmatpush1.msra.mxu0 0.0
  %7272 = vmatprep.subr.mxu0 0.0
  %7273 = vmatpush1.msra.mxu0 0.0
  %7274 = vmatprep.subr.mxu0 0.0
  %7275 = vmatpush1.msra.mxu0 0.0
  %7276 = vmatprep.subr.mxu0 0.0
  %7277 = vmatpush1.msra.mxu0 0.0
  %7278 = vmatprep.subr.mxu0 0.0
  %7279 = vmatpush1.msra.mxu0 0.0
  %7280 = vmatprep.subr.mxu0 0.0
  %7281 = vmatpush1.msra.mxu0 0.0
  %7282 = vmatprep.subr.mxu0 0.0
  %7283 = vmatpush1.msra.mxu0 0.0
  %7284 = vmatprep.subr.mxu0 0.0
  %7285 = vmatpush1.msra.mxu0 0.0
  %7286 = vmatprep.subr.mxu0 0.0
  %7287 = vmatpush1.msra.mxu0 %v7254
  %7288 = vmatprep.subr.mxu0 0.0
  %7289 = vmatpush2.msra.mxu0 0.0
  %7290 = vmatprep.subr.mxu0 0.0
  %7291 = vmatpush2.msra.mxu0 0.0
  %7292 = vmatprep.subr.mxu0 0.0
  %7293 = vmatpush2.msra.mxu0 0.0
  %7294 = vmatprep.subr.mxu0 0.0
  %7295 = vmatpush2.msra.mxu0 0.0
  %7296 = vmatprep.subr.mxu0 0.0
  %7297 = vmatpush2.msra.mxu0 0.0
  %7298 = vmatprep.subr.mxu0 0.0
  %7299 = vmatpush2.msra.mxu0 0.0
  %7300 = vmatprep.subr.mxu0 0.0
  %7301 = vmatpush2.msra.mxu0 0.0
  %7302 = vmatprep.subr.mxu0 0.0
  %7303 = vmatpush2.msra.mxu0 0.0
  %7304 = vmatprep.subr.mxu0 0.0
  %7305 = vmatpush2.msra.mxu0 0.0
  %7306 = vmatprep.subr.mxu0 0.0
  %7307 = vmatpush2.msra.mxu0 0.0
  %7308 = vmatprep.subr.mxu0 0.0
  %7309 = vmatpush2.msra.mxu0 0.0
  %7310 = vmatprep.subr.mxu0 0.0
  %7311 = vmatpush2.msra.mxu0 0.0
  %7312 = vmatprep.subr.mxu0 0.0
  %7313 = vmatpush2.msra.mxu0 0.0
  %7314 = vmatprep.subr.mxu0 0.0
  %7315 = vmatpush2.msra.mxu0 0.0
  %7316 = vmatprep.subr.mxu0 0.0
  %7317 = vmatpush2.msra.mxu0 0.0
  %7318 = vmatprep.subr.mxu0 0.0
  %7319 = vmatpush2.msra.mxu0 0.0
  %7320 = vmatprep.mubr.f32.mxu0 0.0
  %7321 = vmatmul.mubr.f32.gmra.mxu0 %v7252
  %v7322 = vpop.f32.mrf.mxu0
  %v7323 = vadd.f32 %v7248, %v7322
  %v7324 = vpop.f32.mrf.mxu0
  %7325 = vdwg.mxu0
  %v7326 = vsub.f32 %v6192, %v7323
  %v7327 = vld [vmem:[%s12] sm:$0xff]
  %v7328 = vld [vmem:[%s12 + $0x8] sm:$0xff]
  %v7329 = vld [vmem:[%s12 + $0x10] sm:$0xff]
  %v7330 = vld [vmem:[%s12 + $0x18] sm:$0xff]
  %v7331 = vld [vmem:[%s12 + $0x20] sm:$0xff]
  %v7332 = vld [vmem:[%s12 + $0x28] sm:$0xff]
  %v7333 = vld [vmem:[%s12 + $0x30] sm:$0xff]
  %v7334 = vld [vmem:[%s12 + $0x38] sm:$0xff]
  %v7335 = vpack.c.bf16 %v6192, %v6192
  %v7344 = vunpack.c.l.b16 %v7327
  %v7345 = vunpack.c.h.b16 %v7327
  %v7346 = vunpack.c.l.b16 %v7328
  %v7347 = vunpack.c.h.b16 %v7328
  %v7348 = vunpack.c.l.b16 %v7329
  %v7349 = vunpack.c.h.b16 %v7329
  %v7350 = vunpack.c.l.b16 %v7330
  %v7351 = vunpack.c.h.b16 %v7330
  %v7352 = vunpack.c.l.b16 %v7331
  %v7353 = vunpack.c.h.b16 %v7331
  %v7354 = vunpack.c.l.b16 %v7332
  %v7355 = vunpack.c.h.b16 %v7332
  %v7356 = vunpack.c.l.b16 %v7333
  %v7357 = vunpack.c.h.b16 %v7333
  %v7358 = vunpack.c.l.b16 %v7334
  %v7359 = vunpack.c.h.b16 %v7334
  %v7360 = vpack.c.b16 %v7346, %v7344
  %v7361 = vpack.c.b16 %v7347, %v7345
  %v7362 = vpack.c.b16 %v7350, %v7348
  %v7363 = vpack.c.b16 %v7351, %v7349
  %v7364 = vpack.c.b16 %v7354, %v7352
  %v7365 = vpack.c.b16 %v7355, %v7353
  %v7366 = vpack.c.b16 %v7358, %v7356
  %v7367 = vpack.c.b16 %v7359, %v7357
  %v7377 = vsel %vm2853, %v7335, 0
  %7379 = vmatprep.subr.bf16.mxu0 0
  %7380 = vmatpush1.bf16.msra.mxu0 0
  %7381 = vmatprep.subr.bf16.mxu0 0
  %7382 = vmatpush1.bf16.msra.mxu0 0
  %7383 = vmatprep.subr.bf16.mxu0 0
  %7384 = vmatpush1.bf16.msra.mxu0 0
  %7385 = vmatprep.subr.bf16.mxu0 0
  %7386 = vmatpush1.bf16.msra.mxu0 0
  %7387 = vmatprep.subr.bf16.mxu0 %v7367
  %7388 = vmatpush1.bf16.msra.mxu0 %v7366
  %7389 = vmatprep.subr.bf16.mxu0 %v7365
  %7390 = vmatpush1.bf16.msra.mxu0 %v7364
  %7391 = vmatprep.subr.bf16.mxu0 %v7363
  %7392 = vmatpush1.bf16.msra.mxu0 %v7362
  %7393 = vmatprep.subr.bf16.mxu0 %v7361
  %7394 = vmatpush1.bf16.msra.mxu0 %v7360
  %7395 = vmatprep.subr.bf16.mxu0 0
  %7396 = vmatpush2.bf16.msra.mxu0 0
  %7397 = vmatprep.subr.bf16.mxu0 0
  %7398 = vmatpush2.bf16.msra.mxu0 0
  %7399 = vmatprep.subr.bf16.mxu0 0
  %7400 = vmatpush2.bf16.msra.mxu0 0
  %7401 = vmatprep.subr.bf16.mxu0 0
  %7402 = vmatpush2.bf16.msra.mxu0 0
  %7403 = vmatprep.subr.bf16.mxu0 0
  %7404 = vmatpush2.bf16.msra.mxu0 0
  %7405 = vmatprep.subr.bf16.mxu0 0
  %7406 = vmatpush2.bf16.msra.mxu0 0
  %7407 = vmatprep.subr.bf16.mxu0 0
  %7408 = vmatpush2.bf16.msra.mxu0 0
  %7409 = vmatprep.subr.bf16.mxu0 0
  %7410 = vmatpush2.bf16.msra.mxu0 0
  %7411 = vmatprep.mubr.bf16.mxu0 0
  %7412 = vmatmul.mubr.bf16.gmra.mxu0 %v7377
  %v7413 = vpop.f32.mrf.mxu0
  %v7414 = vadd.f32 0.0, %v7413
  %v7415 = vpop.f32.mrf.mxu0
  %v7416 = vadd.f32 0.0, %v7415
  %v7417 = vpop.f32.mrf.mxu0
  %v7418 = vpop.f32.mrf.mxu0
  %7419 = vdwg.mxu0
  %v7420 = vld [vmem:[%s18] sm:$0xff]
  %v7421 = vld [vmem:[%s18 + $0x8] sm:$0xff]
  %s7422 = scalar_lea.vmem %s18, 16
  %v7423 = vld [vmem:[%s7422] sm:$0xff]
  %v7424 = vld [vmem:[%s7422 + $0x8] sm:$0xff]
  %v7426 = vsel %vm6198, %v7423, 0
  %v7429 = vsel %vm6198, %v7424, 0
  %7431 = vmatprep.subr.mxu0 0.0
  %7432 = vmatpush1.msra.mxu0 0.0
  %7433 = vmatprep.subr.mxu0 0.0
  %7434 = vmatpush1.msra.mxu0 0.0
  %7435 = vmatprep.subr.mxu0 0.0
  %7436 = vmatpush1.msra.mxu0 0.0
  %7437 = vmatprep.subr.mxu0 0.0
  %7438 = vmatpush1.msra.mxu0 0.0
  %7439 = vmatprep.subr.mxu0 0.0
  %7440 = vmatpush1.msra.mxu0 0.0
  %7441 = vmatprep.subr.mxu0 0.0
  %7442 = vmatpush1.msra.mxu0 0.0
  %7443 = vmatprep.subr.mxu0 0.0
  %7444 = vmatpush1.msra.mxu0 0.0
  %7445 = vmatprep.subr.mxu0 0.0
  %7446 = vmatpush1.msra.mxu0 0.0
  %7447 = vmatprep.subr.mxu0 0.0
  %7448 = vmatpush1.msra.mxu0 0.0
  %7449 = vmatprep.subr.mxu0 0.0
  %7450 = vmatpush1.msra.mxu0 0.0
  %7451 = vmatprep.subr.mxu0 0.0
  %7452 = vmatpush1.msra.mxu0 0.0
  %7453 = vmatprep.subr.mxu0 0.0
  %7454 = vmatpush1.msra.mxu0 0.0
  %7455 = vmatprep.subr.mxu0 0.0
  %7456 = vmatpush1.msra.mxu0 0.0
  %7457 = vmatprep.subr.mxu0 0.0
  %7458 = vmatpush1.msra.mxu0 0.0
  %7459 = vmatprep.subr.mxu0 0.0
  %7460 = vmatpush1.msra.mxu0 0.0
  %7461 = vmatprep.subr.mxu0 0.0
  %7462 = vmatpush1.msra.mxu0 %v7416
  %7463 = vmatprep.subr.mxu0 0.0
  %7464 = vmatpush2.msra.mxu0 0.0
  %7465 = vmatprep.subr.mxu0 0.0
  %7466 = vmatpush2.msra.mxu0 0.0
  %7467 = vmatprep.subr.mxu0 0.0
  %7468 = vmatpush2.msra.mxu0 0.0
  %7469 = vmatprep.subr.mxu0 0.0
  %7470 = vmatpush2.msra.mxu0 0.0
  %7471 = vmatprep.subr.mxu0 0.0
  %7472 = vmatpush2.msra.mxu0 0.0
  %7473 = vmatprep.subr.mxu0 0.0
  %7474 = vmatpush2.msra.mxu0 0.0
  %7475 = vmatprep.subr.mxu0 0.0
  %7476 = vmatpush2.msra.mxu0 0.0
  %7477 = vmatprep.subr.mxu0 0.0
  %7478 = vmatpush2.msra.mxu0 0.0
  %7479 = vmatprep.subr.mxu0 0.0
  %7480 = vmatpush2.msra.mxu0 0.0
  %7481 = vmatprep.subr.mxu0 0.0
  %7482 = vmatpush2.msra.mxu0 0.0
  %7483 = vmatprep.subr.mxu0 0.0
  %7484 = vmatpush2.msra.mxu0 0.0
  %7485 = vmatprep.subr.mxu0 0.0
  %7486 = vmatpush2.msra.mxu0 0.0
  %7487 = vmatprep.subr.mxu0 0.0
  %7488 = vmatpush2.msra.mxu0 0.0
  %7489 = vmatprep.subr.mxu0 0.0
  %7490 = vmatpush2.msra.mxu0 0.0
  %7491 = vmatprep.subr.mxu0 0.0
  %7492 = vmatpush2.msra.mxu0 0.0
  %7493 = vmatprep.subr.mxu0 0.0
  %7494 = vmatpush2.msra.mxu0 0.0
  %7495 = vmatprep.mubr.f32.mxu0 0.0
  %7496 = vmatmul.mubr.f32.gmra.mxu0 %v7426
  %v7497 = vpop.f32.mrf.mxu0
  %v7498 = vadd.f32 0.0, %v7497
  %v7499 = vpop.f32.mrf.mxu0
  %7500 = vmatprep.mubr.f32.mxu0 0.0
  %7501 = vmatmul.mubr.f32.gmra.mxu0 %v7429
  %v7502 = vpop.f32.mrf.mxu0
  %v7503 = vadd.f32 0.0, %v7502
  %v7504 = vpop.f32.mrf.mxu0
  %7505 = vdwg.mxu0
  %v7507 = vsel %vm6198, %v7420, 0
  %v7510 = vsel %vm6198, %v7421, 0
  %7512 = vmatprep.subr.mxu0 0.0
  %7513 = vmatpush1.msra.mxu0 0.0
  %7514 = vmatprep.subr.mxu0 0.0
  %7515 = vmatpush1.msra.mxu0 0.0
  %7516 = vmatprep.subr.mxu0 0.0
  %7517 = vmatpush1.msra.mxu0 0.0
  %7518 = vmatprep.subr.mxu0 0.0
  %7519 = vmatpush1.msra.mxu0 0.0
  %7520 = vmatprep.subr.mxu0 0.0
  %7521 = vmatpush1.msra.mxu0 0.0
  %7522 = vmatprep.subr.mxu0 0.0
  %7523 = vmatpush1.msra.mxu0 0.0
  %7524 = vmatprep.subr.mxu0 0.0
  %7525 = vmatpush1.msra.mxu0 0.0
  %7526 = vmatprep.subr.mxu0 0.0
  %7527 = vmatpush1.msra.mxu0 0.0
  %7528 = vmatprep.subr.mxu0 0.0
  %7529 = vmatpush1.msra.mxu0 0.0
  %7530 = vmatprep.subr.mxu0 0.0
  %7531 = vmatpush1.msra.mxu0 0.0
  %7532 = vmatprep.subr.mxu0 0.0
  %7533 = vmatpush1.msra.mxu0 0.0
  %7534 = vmatprep.subr.mxu0 0.0
  %7535 = vmatpush1.msra.mxu0 0.0
  %7536 = vmatprep.subr.mxu0 0.0
  %7537 = vmatpush1.msra.mxu0 0.0
  %7538 = vmatprep.subr.mxu0 0.0
  %7539 = vmatpush1.msra.mxu0 0.0
  %7540 = vmatprep.subr.mxu0 0.0
  %7541 = vmatpush1.msra.mxu0 0.0
  %7542 = vmatprep.subr.mxu0 0.0
  %7543 = vmatpush1.msra.mxu0 %v7414
  %7544 = vmatprep.subr.mxu0 0.0
  %7545 = vmatpush2.msra.mxu0 0.0
  %7546 = vmatprep.subr.mxu0 0.0
  %7547 = vmatpush2.msra.mxu0 0.0
  %7548 = vmatprep.subr.mxu0 0.0
  %7549 = vmatpush2.msra.mxu0 0.0
  %7550 = vmatprep.subr.mxu0 0.0
  %7551 = vmatpush2.msra.mxu0 0.0
  %7552 = vmatprep.subr.mxu0 0.0
  %7553 = vmatpush2.msra.mxu0 0.0
  %7554 = vmatprep.subr.mxu0 0.0
  %7555 = vmatpush2.msra.mxu0 0.0
  %7556 = vmatprep.subr.mxu0 0.0
  %7557 = vmatpush2.msra.mxu0 0.0
  %7558 = vmatprep.subr.mxu0 0.0
  %7559 = vmatpush2.msra.mxu0 0.0
  %7560 = vmatprep.subr.mxu0 0.0
  %7561 = vmatpush2.msra.mxu0 0.0
  %7562 = vmatprep.subr.mxu0 0.0
  %7563 = vmatpush2.msra.mxu0 0.0
  %7564 = vmatprep.subr.mxu0 0.0
  %7565 = vmatpush2.msra.mxu0 0.0
  %7566 = vmatprep.subr.mxu0 0.0
  %7567 = vmatpush2.msra.mxu0 0.0
  %7568 = vmatprep.subr.mxu0 0.0
  %7569 = vmatpush2.msra.mxu0 0.0
  %7570 = vmatprep.subr.mxu0 0.0
  %7571 = vmatpush2.msra.mxu0 0.0
  %7572 = vmatprep.subr.mxu0 0.0
  %7573 = vmatpush2.msra.mxu0 0.0
  %7574 = vmatprep.subr.mxu0 0.0
  %7575 = vmatpush2.msra.mxu0 0.0
  %7576 = vmatprep.mubr.f32.mxu0 0.0
  %7577 = vmatmul.mubr.f32.gmra.mxu0 %v7507
  %v7578 = vpop.f32.mrf.mxu0
  %v7579 = vadd.f32 %v7498, %v7578
  %v7580 = vpop.f32.mrf.mxu0
  %7581 = vmatprep.mubr.f32.mxu0 0.0
  %7582 = vmatmul.mubr.f32.gmra.mxu0 %v7510
  %v7583 = vpop.f32.mrf.mxu0
  %v7584 = vadd.f32 %v7503, %v7583
  %v7585 = vpop.f32.mrf.mxu0
  %7586 = vdwg.mxu0
  %v7587 = vsub.f32 %v2854, %v7579
  %v7588 = vsub.f32 %v2855, %v7584
  %7589 = vmatprep.subr.mxu0 0.0
  %7590 = vmatpush1.msra.mxu0 0.0
  %7591 = vmatprep.subr.mxu0 0.0
  %7592 = vmatpush1.msra.mxu0 0.0
  %7593 = vmatprep.subr.mxu0 0.0
  %7594 = vmatpush1.msra.mxu0 0.0
  %7595 = vmatprep.subr.mxu0 0.0
  %7596 = vmatpush1.msra.mxu0 0.0
  %7597 = vmatprep.subr.mxu0 0.0
  %7598 = vmatpush1.msra.mxu0 0.0
  %7599 = vmatprep.subr.mxu0 0.0
  %7600 = vmatpush1.msra.mxu0 0.0
  %7601 = vmatprep.subr.mxu0 0.0
  %7602 = vmatpush1.msra.mxu0 0.0
  %7603 = vmatprep.subr.mxu0 0.0
  %7604 = vmatpush1.msra.mxu0 0.0
  %7605 = vmatprep.subr.mxu0 0.0
  %7606 = vmatpush1.msra.mxu0 0.0
  %7607 = vmatprep.subr.mxu0 0.0
  %7608 = vmatpush1.msra.mxu0 0.0
  %7609 = vmatprep.subr.mxu0 0.0
  %7610 = vmatpush1.msra.mxu0 0.0
  %7611 = vmatprep.subr.mxu0 0.0
  %7612 = vmatpush1.msra.mxu0 0.0
  %7613 = vmatprep.subr.mxu0 0.0
  %7614 = vmatpush1.msra.mxu0 0.0
  %7615 = vmatprep.subr.mxu0 0.0
  %7616 = vmatpush1.msra.mxu0 0.0
  %7617 = vmatprep.subr.mxu0 0.0
  %7618 = vmatpush1.msra.mxu0 %v2865
  %7619 = vmatprep.subr.mxu0 0.0
  %7620 = vmatpush1.msra.mxu0 %v2864
  %7621 = vmatprep.subr.mxu0 0.0
  %7622 = vmatpush2.msra.mxu0 0.0
  %7623 = vmatprep.subr.mxu0 0.0
  %7624 = vmatpush2.msra.mxu0 0.0
  %7625 = vmatprep.subr.mxu0 0.0
  %7626 = vmatpush2.msra.mxu0 0.0
  %7627 = vmatprep.subr.mxu0 0.0
  %7628 = vmatpush2.msra.mxu0 0.0
  %7629 = vmatprep.subr.mxu0 0.0
  %7630 = vmatpush2.msra.mxu0 0.0
  %7631 = vmatprep.subr.mxu0 0.0
  %7632 = vmatpush2.msra.mxu0 0.0
  %7633 = vmatprep.subr.mxu0 0.0
  %7634 = vmatpush2.msra.mxu0 0.0
  %7635 = vmatprep.subr.mxu0 0.0
  %7636 = vmatpush2.msra.mxu0 0.0
  %7637 = vmatprep.subr.mxu0 0.0
  %7638 = vmatpush2.msra.mxu0 0.0
  %7639 = vmatprep.subr.mxu0 0.0
  %7640 = vmatpush2.msra.mxu0 0.0
  %7641 = vmatprep.subr.mxu0 0.0
  %7642 = vmatpush2.msra.mxu0 0.0
  %7643 = vmatprep.subr.mxu0 0.0
  %7644 = vmatpush2.msra.mxu0 0.0
  %7645 = vmatprep.subr.mxu0 0.0
  %7646 = vmatpush2.msra.mxu0 0.0
  %7647 = vmatprep.subr.mxu0 0.0
  %7648 = vmatpush2.msra.mxu0 0.0
  %7649 = vmatprep.subr.mxu0 0.0
  %7650 = vmatpush2.msra.mxu0 0.0
  %7651 = vmatprep.subr.mxu0 0.0
  %7652 = vmatpush2.msra.mxu0 0.0
  %7653 = vmatprep.mubr.f32.mxu0 0.0
  %7654 = vmatmul.mubr.f32.gmra.mxu0 %v5700
  %v7655 = vpop.f32.mrf.mxu0
  %v7656 = vadd.f32 0.0, %v7655
  %v7657 = vpop.f32.mrf.mxu0
  %7658 = vdwg.mxu0
  %7659 = vmatprep.subr.mxu0 0.0
  %7660 = vmatpush1.msra.mxu0 0.0
  %7661 = vmatprep.subr.mxu0 0.0
  %7662 = vmatpush1.msra.mxu0 0.0
  %7663 = vmatprep.subr.mxu0 0.0
  %7664 = vmatpush1.msra.mxu0 0.0
  %7665 = vmatprep.subr.mxu0 0.0
  %7666 = vmatpush1.msra.mxu0 0.0
  %7667 = vmatprep.subr.mxu0 0.0
  %7668 = vmatpush1.msra.mxu0 0.0
  %7669 = vmatprep.subr.mxu0 0.0
  %7670 = vmatpush1.msra.mxu0 0.0
  %7671 = vmatprep.subr.mxu0 0.0
  %7672 = vmatpush1.msra.mxu0 0.0
  %7673 = vmatprep.subr.mxu0 0.0
  %7674 = vmatpush1.msra.mxu0 0.0
  %7675 = vmatprep.subr.mxu0 0.0
  %7676 = vmatpush1.msra.mxu0 0.0
  %7677 = vmatprep.subr.mxu0 0.0
  %7678 = vmatpush1.msra.mxu0 0.0
  %7679 = vmatprep.subr.mxu0 0.0
  %7680 = vmatpush1.msra.mxu0 0.0
  %7681 = vmatprep.subr.mxu0 0.0
  %7682 = vmatpush1.msra.mxu0 0.0
  %7683 = vmatprep.subr.mxu0 0.0
  %7684 = vmatpush1.msra.mxu0 0.0
  %7685 = vmatprep.subr.mxu0 0.0
  %7686 = vmatpush1.msra.mxu0 0.0
  %7687 = vmatprep.subr.mxu0 0.0
  %7688 = vmatpush1.msra.mxu0 %v2865
  %7689 = vmatprep.subr.mxu0 0.0
  %7690 = vmatpush1.msra.mxu0 %v2864
  %7691 = vmatprep.subr.mxu0 0.0
  %7692 = vmatpush2.msra.mxu0 0.0
  %7693 = vmatprep.subr.mxu0 0.0
  %7694 = vmatpush2.msra.mxu0 0.0
  %7695 = vmatprep.subr.mxu0 0.0
  %7696 = vmatpush2.msra.mxu0 0.0
  %7697 = vmatprep.subr.mxu0 0.0
  %7698 = vmatpush2.msra.mxu0 0.0
  %7699 = vmatprep.subr.mxu0 0.0
  %7700 = vmatpush2.msra.mxu0 0.0
  %7701 = vmatprep.subr.mxu0 0.0
  %7702 = vmatpush2.msra.mxu0 0.0
  %7703 = vmatprep.subr.mxu0 0.0
  %7704 = vmatpush2.msra.mxu0 0.0
  %7705 = vmatprep.subr.mxu0 0.0
  %7706 = vmatpush2.msra.mxu0 0.0
  %7707 = vmatprep.subr.mxu0 0.0
  %7708 = vmatpush2.msra.mxu0 0.0
  %7709 = vmatprep.subr.mxu0 0.0
  %7710 = vmatpush2.msra.mxu0 0.0
  %7711 = vmatprep.subr.mxu0 0.0
  %7712 = vmatpush2.msra.mxu0 0.0
  %7713 = vmatprep.subr.mxu0 0.0
  %7714 = vmatpush2.msra.mxu0 0.0
  %7715 = vmatprep.subr.mxu0 0.0
  %7716 = vmatpush2.msra.mxu0 0.0
  %7717 = vmatprep.subr.mxu0 0.0
  %7718 = vmatpush2.msra.mxu0 0.0
  %7719 = vmatprep.subr.mxu0 0.0
  %7720 = vmatpush2.msra.mxu0 0.0
  %7721 = vmatprep.subr.mxu0 0.0
  %7722 = vmatpush2.msra.mxu0 0.0
  %7723 = vmatprep.mubr.f32.mxu0 0.0
  %7724 = vmatmul.mubr.f32.gmra.mxu0 %v5775
  %v7725 = vpop.f32.mrf.mxu0
  %v7726 = vadd.f32 0.0, %v7725
  %v7727 = vpop.f32.mrf.mxu0
  %7728 = vdwg.mxu0
  %7729 = vmatprep.subr.mxu0 0.0
  %7730 = vmatpush1.msra.mxu0 0.0
  %7731 = vmatprep.subr.mxu0 0.0
  %7732 = vmatpush1.msra.mxu0 0.0
  %7733 = vmatprep.subr.mxu0 0.0
  %7734 = vmatpush1.msra.mxu0 0.0
  %7735 = vmatprep.subr.mxu0 0.0
  %7736 = vmatpush1.msra.mxu0 0.0
  %7737 = vmatprep.subr.mxu0 0.0
  %7738 = vmatpush1.msra.mxu0 0.0
  %7739 = vmatprep.subr.mxu0 0.0
  %7740 = vmatpush1.msra.mxu0 0.0
  %7741 = vmatprep.subr.mxu0 0.0
  %7742 = vmatpush1.msra.mxu0 0.0
  %7743 = vmatprep.subr.mxu0 0.0
  %7744 = vmatpush1.msra.mxu0 0.0
  %7745 = vmatprep.subr.mxu0 0.0
  %7746 = vmatpush1.msra.mxu0 0.0
  %7747 = vmatprep.subr.mxu0 0.0
  %7748 = vmatpush1.msra.mxu0 0.0
  %7749 = vmatprep.subr.mxu0 0.0
  %7750 = vmatpush1.msra.mxu0 0.0
  %7751 = vmatprep.subr.mxu0 0.0
  %7752 = vmatpush1.msra.mxu0 0.0
  %7753 = vmatprep.subr.mxu0 0.0
  %7754 = vmatpush1.msra.mxu0 0.0
  %7755 = vmatprep.subr.mxu0 0.0
  %7756 = vmatpush1.msra.mxu0 0.0
  %7757 = vmatprep.subr.mxu0 0.0
  %7758 = vmatpush1.msra.mxu0 %v2865
  %7759 = vmatprep.subr.mxu0 0.0
  %7760 = vmatpush1.msra.mxu0 %v2864
  %7761 = vmatprep.subr.mxu0 0.0
  %7762 = vmatpush2.msra.mxu0 0.0
  %7763 = vmatprep.subr.mxu0 0.0
  %7764 = vmatpush2.msra.mxu0 0.0
  %7765 = vmatprep.subr.mxu0 0.0
  %7766 = vmatpush2.msra.mxu0 0.0
  %7767 = vmatprep.subr.mxu0 0.0
  %7768 = vmatpush2.msra.mxu0 0.0
  %7769 = vmatprep.subr.mxu0 0.0
  %7770 = vmatpush2.msra.mxu0 0.0
  %7771 = vmatprep.subr.mxu0 0.0
  %7772 = vmatpush2.msra.mxu0 0.0
  %7773 = vmatprep.subr.mxu0 0.0
  %7774 = vmatpush2.msra.mxu0 0.0
  %7775 = vmatprep.subr.mxu0 0.0
  %7776 = vmatpush2.msra.mxu0 0.0
  %7777 = vmatprep.subr.mxu0 0.0
  %7778 = vmatpush2.msra.mxu0 0.0
  %7779 = vmatprep.subr.mxu0 0.0
  %7780 = vmatpush2.msra.mxu0 0.0
  %7781 = vmatprep.subr.mxu0 0.0
  %7782 = vmatpush2.msra.mxu0 0.0
  %7783 = vmatprep.subr.mxu0 0.0
  %7784 = vmatpush2.msra.mxu0 0.0
  %7785 = vmatprep.subr.mxu0 0.0
  %7786 = vmatpush2.msra.mxu0 0.0
  %7787 = vmatprep.subr.mxu0 0.0
  %7788 = vmatpush2.msra.mxu0 0.0
  %7789 = vmatprep.subr.mxu0 0.0
  %7790 = vmatpush2.msra.mxu0 0.0
  %7791 = vmatprep.subr.mxu0 0.0
  %7792 = vmatpush2.msra.mxu0 0.0
  %7793 = vmatprep.mubr.f32.mxu0 0.0
  %7794 = vmatmul.mubr.f32.gmra.mxu0 %v5850
  %v7795 = vpop.f32.mrf.mxu0
  %v7796 = vadd.f32 0.0, %v7795
  %v7797 = vpop.f32.mrf.mxu0
  %7798 = vdwg.mxu0
  %v7799 = vpack.c.bf16 %v7656, %v7656
  %v7800 = vpack.c.bf16 %v7726, %v7726
  %v7801 = vpack.c.bf16 %v7796, %v7796
  %7802 = vmatprep.subr.bf16.mxu0 0
  %7803 = vmatpush1.bf16.msra.mxu0 %v6076
  %7804 = vmatprep.subr.bf16.mxu0 0
  %7805 = vmatpush1.bf16.msra.mxu0 %v6075
  %7806 = vmatprep.subr.bf16.mxu0 0
  %7807 = vmatpush1.bf16.msra.mxu0 %v6074
  %7808 = vmatprep.subr.bf16.mxu0 0
  %7809 = vmatpush1.bf16.msra.mxu0 %v6073
  %7810 = vmatprep.subr.bf16.mxu0 0
  %7811 = vmatpush1.bf16.msra.mxu0 %v6072
  %7812 = vmatprep.subr.bf16.mxu0 0
  %7813 = vmatpush1.bf16.msra.mxu0 %v6071
  %7814 = vmatprep.subr.bf16.mxu0 0
  %7815 = vmatpush1.bf16.msra.mxu0 %v6070
  %7816 = vmatprep.subr.bf16.mxu0 0
  %7817 = vmatpush1.bf16.msra.mxu0 %v6069
  %7818 = vmatprep.subr.bf16.mxu0 0
  %7819 = vmatpush2.bf16.msra.mxu0 %v6084
  %7820 = vmatprep.subr.bf16.mxu0 0
  %7821 = vmatpush2.bf16.msra.mxu0 %v6083
  %7822 = vmatprep.subr.bf16.mxu0 0
  %7823 = vmatpush2.bf16.msra.mxu0 %v6082
  %7824 = vmatprep.subr.bf16.mxu0 0
  %7825 = vmatpush2.bf16.msra.mxu0 %v6081
  %7826 = vmatprep.subr.bf16.mxu0 0
  %7827 = vmatpush2.bf16.msra.mxu0 %v6080
  %7828 = vmatprep.subr.bf16.mxu0 0
  %7829 = vmatpush2.bf16.msra.mxu0 %v6079
  %7830 = vmatprep.subr.bf16.mxu0 0
  %7831 = vmatpush2.bf16.msra.mxu0 %v6078
  %7832 = vmatprep.subr.bf16.mxu0 0
  %7833 = vmatpush2.bf16.msra.mxu0 %v6077
  %7834 = vmatprep.mubr.bf16.mxu0 %v7800
  %7835 = vmatmul.mubr.bf16.gmra.mxu0 %v7799
  %v7836 = vpop.f32.mrf.mxu0
  %v7837 = vadd.f32 0.0, %v7836
  %v7838 = vpop.f32.mrf.mxu0
  %v7839 = vpop.f32.mrf.mxu0
  %v7840 = vpop.f32.mrf.mxu0
  %7841 = vdwg.mxu0
  %7842 = vmatprep.subr.bf16.mxu0 0
  %7843 = vmatpush1.bf16.msra.mxu0 %v6092
  %7844 = vmatprep.subr.bf16.mxu0 0
  %7845 = vmatpush1.bf16.msra.mxu0 %v6091
  %7846 = vmatprep.subr.bf16.mxu0 0
  %7847 = vmatpush1.bf16.msra.mxu0 %v6090
  %7848 = vmatprep.subr.bf16.mxu0 0
  %7849 = vmatpush1.bf16.msra.mxu0 %v6089
  %7850 = vmatprep.subr.bf16.mxu0 0
  %7851 = vmatpush1.bf16.msra.mxu0 %v6088
  %7852 = vmatprep.subr.bf16.mxu0 0
  %7853 = vmatpush1.bf16.msra.mxu0 %v6087
  %7854 = vmatprep.subr.bf16.mxu0 0
  %7855 = vmatpush1.bf16.msra.mxu0 %v6086
  %7856 = vmatprep.subr.bf16.mxu0 0
  %7857 = vmatpush1.bf16.msra.mxu0 %v6085
  %7858 = vmatprep.subr.bf16.mxu0 0
  %7859 = vmatpush2.bf16.msra.mxu0 0
  %7860 = vmatprep.subr.bf16.mxu0 0
  %7861 = vmatpush2.bf16.msra.mxu0 0
  %7862 = vmatprep.subr.bf16.mxu0 0
  %7863 = vmatpush2.bf16.msra.mxu0 0
  %7864 = vmatprep.subr.bf16.mxu0 0
  %7865 = vmatpush2.bf16.msra.mxu0 0
  %7866 = vmatprep.subr.bf16.mxu0 0
  %7867 = vmatpush2.bf16.msra.mxu0 0
  %7868 = vmatprep.subr.bf16.mxu0 0
  %7869 = vmatpush2.bf16.msra.mxu0 0
  %7870 = vmatprep.subr.bf16.mxu0 0
  %7871 = vmatpush2.bf16.msra.mxu0 0
  %7872 = vmatprep.subr.bf16.mxu0 0
  %7873 = vmatpush2.bf16.msra.mxu0 0
  %7874 = vmatprep.mubr.bf16.mxu0 0
  %7875 = vmatmul.mubr.bf16.gmra.mxu0 %v7801
  %v7876 = vpop.f32.mrf.mxu0
  %v7877 = vadd.f32 %v7837, %v7876
  %v7878 = vpop.f32.mrf.mxu0
  %v7879 = vpop.f32.mrf.mxu0
  %v7880 = vpop.f32.mrf.mxu0
  %7881 = vdwg.mxu0
  %7882 = vmatprep.subr.mxu0 0.0
  %7883 = vmatpush1.msra.mxu0 0.0
  %7884 = vmatprep.subr.mxu0 0.0
  %7885 = vmatpush1.msra.mxu0 0.0
  %7886 = vmatprep.subr.mxu0 0.0
  %7887 = vmatpush1.msra.mxu0 0.0
  %7888 = vmatprep.subr.mxu0 0.0
  %7889 = vmatpush1.msra.mxu0 0.0
  %7890 = vmatprep.subr.mxu0 0.0
  %7891 = vmatpush1.msra.mxu0 0.0
  %7892 = vmatprep.subr.mxu0 0.0
  %7893 = vmatpush1.msra.mxu0 0.0
  %7894 = vmatprep.subr.mxu0 0.0
  %7895 = vmatpush1.msra.mxu0 0.0
  %7896 = vmatprep.subr.mxu0 0.0
  %7897 = vmatpush1.msra.mxu0 0.0
  %7898 = vmatprep.subr.mxu0 0.0
  %7899 = vmatpush1.msra.mxu0 0.0
  %7900 = vmatprep.subr.mxu0 0.0
  %7901 = vmatpush1.msra.mxu0 0.0
  %7902 = vmatprep.subr.mxu0 0.0
  %7903 = vmatpush1.msra.mxu0 0.0
  %7904 = vmatprep.subr.mxu0 0.0
  %7905 = vmatpush1.msra.mxu0 0.0
  %7906 = vmatprep.subr.mxu0 0.0
  %7907 = vmatpush1.msra.mxu0 0.0
  %7908 = vmatprep.subr.mxu0 0.0
  %7909 = vmatpush1.msra.mxu0 0.0
  %7910 = vmatprep.subr.mxu0 0.0
  %7911 = vmatpush1.msra.mxu0 0.0
  %7912 = vmatprep.subr.mxu0 0.0
  %7913 = vmatpush1.msra.mxu0 %v7877
  %7914 = vmatprep.subr.mxu0 0.0
  %7915 = vmatpush2.msra.mxu0 0.0
  %7916 = vmatprep.subr.mxu0 0.0
  %7917 = vmatpush2.msra.mxu0 0.0
  %7918 = vmatprep.subr.mxu0 0.0
  %7919 = vmatpush2.msra.mxu0 0.0
  %7920 = vmatprep.subr.mxu0 0.0
  %7921 = vmatpush2.msra.mxu0 0.0
  %7922 = vmatprep.subr.mxu0 0.0
  %7923 = vmatpush2.msra.mxu0 0.0
  %7924 = vmatprep.subr.mxu0 0.0
  %7925 = vmatpush2.msra.mxu0 0.0
  %7926 = vmatprep.subr.mxu0 0.0
  %7927 = vmatpush2.msra.mxu0 0.0
  %7928 = vmatprep.subr.mxu0 0.0
  %7929 = vmatpush2.msra.mxu0 0.0
  %7930 = vmatprep.subr.mxu0 0.0
  %7931 = vmatpush2.msra.mxu0 0.0
  %7932 = vmatprep.subr.mxu0 0.0
  %7933 = vmatpush2.msra.mxu0 0.0
  %7934 = vmatprep.subr.mxu0 0.0
  %7935 = vmatpush2.msra.mxu0 0.0
  %7936 = vmatprep.subr.mxu0 0.0
  %7937 = vmatpush2.msra.mxu0 0.0
  %7938 = vmatprep.subr.mxu0 0.0
  %7939 = vmatpush2.msra.mxu0 0.0
  %7940 = vmatprep.subr.mxu0 0.0
  %7941 = vmatpush2.msra.mxu0 0.0
  %7942 = vmatprep.subr.mxu0 0.0
  %7943 = vmatpush2.msra.mxu0 0.0
  %7944 = vmatprep.subr.mxu0 0.0
  %7945 = vmatpush2.msra.mxu0 0.0
  %7946 = vmatprep.mubr.f32.mxu0 0.0
  %7947 = vmatmul.mubr.f32.gmra.mxu0 %v6200
  %v7948 = vpop.f32.mrf.mxu0
  %v7949 = vadd.f32 0.0, %v7948
  %v7950 = vpop.f32.mrf.mxu0
  %7951 = vdwg.mxu0
  %7952 = vmatprep.subr.mxu0 0.0
  %7953 = vmatpush1.msra.mxu0 0.0
  %7954 = vmatprep.subr.mxu0 0.0
  %7955 = vmatpush1.msra.mxu0 0.0
  %7956 = vmatprep.subr.mxu0 0.0
  %7957 = vmatpush1.msra.mxu0 0.0
  %7958 = vmatprep.subr.mxu0 0.0
  %7959 = vmatpush1.msra.mxu0 0.0
  %7960 = vmatprep.subr.mxu0 0.0
  %7961 = vmatpush1.msra.mxu0 0.0
  %7962 = vmatprep.subr.mxu0 0.0
  %7963 = vmatpush1.msra.mxu0 0.0
  %7964 = vmatprep.subr.mxu0 0.0
  %7965 = vmatpush1.msra.mxu0 0.0
  %7966 = vmatprep.subr.mxu0 0.0
  %7967 = vmatpush1.msra.mxu0 0.0
  %7968 = vmatprep.subr.mxu0 0.0
  %7969 = vmatpush1.msra.mxu0 0.0
  %7970 = vmatprep.subr.mxu0 0.0
  %7971 = vmatpush1.msra.mxu0 0.0
  %7972 = vmatprep.subr.mxu0 0.0
  %7973 = vmatpush1.msra.mxu0 0.0
  %7974 = vmatprep.subr.mxu0 0.0
  %7975 = vmatpush1.msra.mxu0 0.0
  %7976 = vmatprep.subr.mxu0 0.0
  %7977 = vmatpush1.msra.mxu0 0.0
  %7978 = vmatprep.subr.mxu0 0.0
  %7979 = vmatpush1.msra.mxu0 0.0
  %7980 = vmatprep.subr.mxu0 0.0
  %7981 = vmatpush1.msra.mxu0 0.0
  %7982 = vmatprep.subr.mxu0 0.0
  %7983 = vmatpush1.msra.mxu0 %v7877
  %7984 = vmatprep.subr.mxu0 0.0
  %7985 = vmatpush2.msra.mxu0 0.0
  %7986 = vmatprep.subr.mxu0 0.0
  %7987 = vmatpush2.msra.mxu0 0.0
  %7988 = vmatprep.subr.mxu0 0.0
  %7989 = vmatpush2.msra.mxu0 0.0
  %7990 = vmatprep.subr.mxu0 0.0
  %7991 = vmatpush2.msra.mxu0 0.0
  %7992 = vmatprep.subr.mxu0 0.0
  %7993 = vmatpush2.msra.mxu0 0.0
  %7994 = vmatprep.subr.mxu0 0.0
  %7995 = vmatpush2.msra.mxu0 0.0
  %7996 = vmatprep.subr.mxu0 0.0
  %7997 = vmatpush2.msra.mxu0 0.0
  %7998 = vmatprep.subr.mxu0 0.0
  %7999 = vmatpush2.msra.mxu0 0.0
  %8000 = vmatprep.subr.mxu0 0.0
  %8001 = vmatpush2.msra.mxu0 0.0
  %8002 = vmatprep.subr.mxu0 0.0
  %8003 = vmatpush2.msra.mxu0 0.0
  %8004 = vmatprep.subr.mxu0 0.0
  %8005 = vmatpush2.msra.mxu0 0.0
  %8006 = vmatprep.subr.mxu0 0.0
  %8007 = vmatpush2.msra.mxu0 0.0
  %8008 = vmatprep.subr.mxu0 0.0
  %8009 = vmatpush2.msra.mxu0 0.0
  %8010 = vmatprep.subr.mxu0 0.0
  %8011 = vmatpush2.msra.mxu0 0.0
  %8012 = vmatprep.subr.mxu0 0.0
  %8013 = vmatpush2.msra.mxu0 0.0
  %8014 = vmatprep.subr.mxu0 0.0
  %8015 = vmatpush2.msra.mxu0 0.0
  %8016 = vmatprep.mubr.f32.mxu0 0.0
  %8017 = vmatmul.mubr.f32.gmra.mxu0 %v6275
  %v8018 = vpop.f32.mrf.mxu0
  %v8019 = vadd.f32 0.0, %v8018
  %v8020 = vpop.f32.mrf.mxu0
  %8021 = vdwg.mxu0
  %8022 = vmatprep.subr.mxu0 0.0
  %8023 = vmatpush1.msra.mxu0 0.0
  %8024 = vmatprep.subr.mxu0 0.0
  %8025 = vmatpush1.msra.mxu0 0.0
  %8026 = vmatprep.subr.mxu0 0.0
  %8027 = vmatpush1.msra.mxu0 0.0
  %8028 = vmatprep.subr.mxu0 0.0
  %8029 = vmatpush1.msra.mxu0 0.0
  %8030 = vmatprep.subr.mxu0 0.0
  %8031 = vmatpush1.msra.mxu0 0.0
  %8032 = vmatprep.subr.mxu0 0.0
  %8033 = vmatpush1.msra.mxu0 0.0
  %8034 = vmatprep.subr.mxu0 0.0
  %8035 = vmatpush1.msra.mxu0 0.0
  %8036 = vmatprep.subr.mxu0 0.0
  %8037 = vmatpush1.msra.mxu0 0.0
  %8038 = vmatprep.subr.mxu0 0.0
  %8039 = vmatpush1.msra.mxu0 0.0
  %8040 = vmatprep.subr.mxu0 0.0
  %8041 = vmatpush1.msra.mxu0 0.0
  %8042 = vmatprep.subr.mxu0 0.0
  %8043 = vmatpush1.msra.mxu0 0.0
  %8044 = vmatprep.subr.mxu0 0.0
  %8045 = vmatpush1.msra.mxu0 0.0
  %8046 = vmatprep.subr.mxu0 0.0
  %8047 = vmatpush1.msra.mxu0 0.0
  %8048 = vmatprep.subr.mxu0 0.0
  %8049 = vmatpush1.msra.mxu0 0.0
  %8050 = vmatprep.subr.mxu0 0.0
  %8051 = vmatpush1.msra.mxu0 0.0
  %8052 = vmatprep.subr.mxu0 0.0
  %8053 = vmatpush1.msra.mxu0 %v7877
  %8054 = vmatprep.subr.mxu0 0.0
  %8055 = vmatpush2.msra.mxu0 0.0
  %8056 = vmatprep.subr.mxu0 0.0
  %8057 = vmatpush2.msra.mxu0 0.0
  %8058 = vmatprep.subr.mxu0 0.0
  %8059 = vmatpush2.msra.mxu0 0.0
  %8060 = vmatprep.subr.mxu0 0.0
  %8061 = vmatpush2.msra.mxu0 0.0
  %8062 = vmatprep.subr.mxu0 0.0
  %8063 = vmatpush2.msra.mxu0 0.0
  %8064 = vmatprep.subr.mxu0 0.0
  %8065 = vmatpush2.msra.mxu0 0.0
  %8066 = vmatprep.subr.mxu0 0.0
  %8067 = vmatpush2.msra.mxu0 0.0
  %8068 = vmatprep.subr.mxu0 0.0
  %8069 = vmatpush2.msra.mxu0 0.0
  %8070 = vmatprep.subr.mxu0 0.0
  %8071 = vmatpush2.msra.mxu0 0.0
  %8072 = vmatprep.subr.mxu0 0.0
  %8073 = vmatpush2.msra.mxu0 0.0
  %8074 = vmatprep.subr.mxu0 0.0
  %8075 = vmatpush2.msra.mxu0 0.0
  %8076 = vmatprep.subr.mxu0 0.0
  %8077 = vmatpush2.msra.mxu0 0.0
  %8078 = vmatprep.subr.mxu0 0.0
  %8079 = vmatpush2.msra.mxu0 0.0
  %8080 = vmatprep.subr.mxu0 0.0
  %8081 = vmatpush2.msra.mxu0 0.0
  %8082 = vmatprep.subr.mxu0 0.0
  %8083 = vmatpush2.msra.mxu0 0.0
  %8084 = vmatprep.subr.mxu0 0.0
  %8085 = vmatpush2.msra.mxu0 0.0
  %8086 = vmatprep.mubr.f32.mxu0 0.0
  %8087 = vmatmul.mubr.f32.gmra.mxu0 %v6350
  %v8088 = vpop.f32.mrf.mxu0
  %v8089 = vadd.f32 0.0, %v8088
  %v8090 = vpop.f32.mrf.mxu0
  %8091 = vdwg.mxu0
  %8093 = vrot.lane.b32.xlu0 %v8019, 64
  %v8094 = vpop.permute.xlu0 %8093
  %v8096 = vsel %vm2853, %v7949, %v8094
  %v8097 = vpack.c.bf16 %v8096, %v8096
  %v8098 = vpack.c.bf16 %v8089, %v8089
  %v8100 = vsel %vm2853, %v8098, 0
  %8102 = vmatprep.subr.bf16.mxu0 0
  %8103 = vmatpush1.bf16.msra.mxu0 %v6508
  %8104 = vmatprep.subr.bf16.mxu0 0
  %8105 = vmatpush1.bf16.msra.mxu0 %v6507
  %8106 = vmatprep.subr.bf16.mxu0 0
  %8107 = vmatpush1.bf16.msra.mxu0 %v6506
  %8108 = vmatprep.subr.bf16.mxu0 0
  %8109 = vmatpush1.bf16.msra.mxu0 %v6505
  %8110 = vmatprep.subr.bf16.mxu0 0
  %8111 = vmatpush1.bf16.msra.mxu0 %v6504
  %8112 = vmatprep.subr.bf16.mxu0 0
  %8113 = vmatpush1.bf16.msra.mxu0 %v6503
  %8114 = vmatprep.subr.bf16.mxu0 0
  %8115 = vmatpush1.bf16.msra.mxu0 %v6502
  %8116 = vmatprep.subr.bf16.mxu0 0
  %8117 = vmatpush1.bf16.msra.mxu0 %v6501
  %8118 = vmatprep.subr.bf16.mxu0 0
  %8119 = vmatpush2.bf16.msra.mxu0 0
  %8120 = vmatprep.subr.bf16.mxu0 0
  %8121 = vmatpush2.bf16.msra.mxu0 0
  %8122 = vmatprep.subr.bf16.mxu0 0
  %8123 = vmatpush2.bf16.msra.mxu0 0
  %8124 = vmatprep.subr.bf16.mxu0 0
  %8125 = vmatpush2.bf16.msra.mxu0 0
  %8126 = vmatprep.subr.bf16.mxu0 0
  %8127 = vmatpush2.bf16.msra.mxu0 %v6512
  %8128 = vmatprep.subr.bf16.mxu0 0
  %8129 = vmatpush2.bf16.msra.mxu0 %v6511
  %8130 = vmatprep.subr.bf16.mxu0 0
  %8131 = vmatpush2.bf16.msra.mxu0 %v6510
  %8132 = vmatprep.subr.bf16.mxu0 0
  %8133 = vmatpush2.bf16.msra.mxu0 %v6509
  %8134 = vmatprep.mubr.bf16.mxu0 %v8100
  %8135 = vmatmul.mubr.bf16.gmra.mxu0 %v8097
  %v8136 = vpop.f32.mrf.mxu0
  %v8137 = vadd.f32 0.0, %v8136
  %v8138 = vpop.f32.mrf.mxu0
  %v8139 = vpop.f32.mrf.mxu0
  %v8140 = vpop.f32.mrf.mxu0
  %8141 = vdwg.mxu0
  %v8143 = vsel %vm2935, %v8137, 0
  %8145 = vmatprep.subr.mxu0 0.0
  %8146 = vmatpush1.msra.mxu0 0.0
  %8147 = vmatprep.subr.mxu0 0.0
  %8148 = vmatpush1.msra.mxu0 0.0
  %8149 = vmatprep.subr.mxu0 0.0
  %8150 = vmatpush1.msra.mxu0 0.0
  %8151 = vmatprep.subr.mxu0 0.0
  %8152 = vmatpush1.msra.mxu0 0.0
  %8153 = vmatprep.subr.mxu0 0.0
  %8154 = vmatpush1.msra.mxu0 0.0
  %8155 = vmatprep.subr.mxu0 0.0
  %8156 = vmatpush1.msra.mxu0 0.0
  %8157 = vmatprep.subr.mxu0 0.0
  %8158 = vmatpush1.msra.mxu0 0.0
  %8159 = vmatprep.subr.mxu0 0.0
  %8160 = vmatpush1.msra.mxu0 0.0
  %8161 = vmatprep.subr.mxu0 0.0
  %8162 = vmatpush1.msra.mxu0 0.0
  %8163 = vmatprep.subr.mxu0 0.0
  %8164 = vmatpush1.msra.mxu0 0.0
  %8165 = vmatprep.subr.mxu0 0.0
  %8166 = vmatpush1.msra.mxu0 0.0
  %8167 = vmatprep.subr.mxu0 0.0
  %8168 = vmatpush1.msra.mxu0 0.0
  %8169 = vmatprep.subr.mxu0 0.0
  %8170 = vmatpush1.msra.mxu0 0.0
  %8171 = vmatprep.subr.mxu0 0.0
  %8172 = vmatpush1.msra.mxu0 0.0
  %8173 = vmatprep.subr.mxu0 0.0
  %8174 = vmatpush1.msra.mxu0 0.0
  %8175 = vmatprep.subr.mxu0 0.0
  %8176 = vmatpush1.msra.mxu0 %v8143
  %8177 = vmatprep.subr.mxu0 0.0
  %8178 = vmatpush2.msra.mxu0 0.0
  %8179 = vmatprep.subr.mxu0 0.0
  %8180 = vmatpush2.msra.mxu0 0.0
  %8181 = vmatprep.subr.mxu0 0.0
  %8182 = vmatpush2.msra.mxu0 0.0
  %8183 = vmatprep.subr.mxu0 0.0
  %8184 = vmatpush2.msra.mxu0 0.0
  %8185 = vmatprep.subr.mxu0 0.0
  %8186 = vmatpush2.msra.mxu0 0.0
  %8187 = vmatprep.subr.mxu0 0.0
  %8188 = vmatpush2.msra.mxu0 0.0
  %8189 = vmatprep.subr.mxu0 0.0
  %8190 = vmatpush2.msra.mxu0 0.0
  %8191 = vmatprep.subr.mxu0 0.0
  %8192 = vmatpush2.msra.mxu0 0.0
  %8193 = vmatprep.subr.mxu0 0.0
  %8194 = vmatpush2.msra.mxu0 0.0
  %8195 = vmatprep.subr.mxu0 0.0
  %8196 = vmatpush2.msra.mxu0 0.0
  %8197 = vmatprep.subr.mxu0 0.0
  %8198 = vmatpush2.msra.mxu0 0.0
  %8199 = vmatprep.subr.mxu0 0.0
  %8200 = vmatpush2.msra.mxu0 0.0
  %8201 = vmatprep.subr.mxu0 0.0
  %8202 = vmatpush2.msra.mxu0 0.0
  %8203 = vmatprep.subr.mxu0 0.0
  %8204 = vmatpush2.msra.mxu0 0.0
  %8205 = vmatprep.subr.mxu0 0.0
  %8206 = vmatpush2.msra.mxu0 0.0
  %8207 = vmatprep.subr.mxu0 0.0
  %8208 = vmatpush2.msra.mxu0 0.0
  %8209 = vmatprep.mubr.f32.mxu0 0.0
  %8210 = vmatmul.mubr.f32.gmra.mxu0 %v6571
  %v8211 = vpop.f32.mrf.mxu0
  %v8212 = vadd.f32 0.0, %v8211
  %v8213 = vpop.f32.mrf.mxu0
  %8214 = vdwg.mxu0
  %8215 = vmatprep.subr.mxu0 0.0
  %8216 = vmatpush1.msra.mxu0 0.0
  %8217 = vmatprep.subr.mxu0 0.0
  %8218 = vmatpush1.msra.mxu0 0.0
  %8219 = vmatprep.subr.mxu0 0.0
  %8220 = vmatpush1.msra.mxu0 0.0
  %8221 = vmatprep.subr.mxu0 0.0
  %8222 = vmatpush1.msra.mxu0 0.0
  %8223 = vmatprep.subr.mxu0 0.0
  %8224 = vmatpush1.msra.mxu0 0.0
  %8225 = vmatprep.subr.mxu0 0.0
  %8226 = vmatpush1.msra.mxu0 0.0
  %8227 = vmatprep.subr.mxu0 0.0
  %8228 = vmatpush1.msra.mxu0 0.0
  %8229 = vmatprep.subr.mxu0 0.0
  %8230 = vmatpush1.msra.mxu0 0.0
  %8231 = vmatprep.subr.mxu0 0.0
  %8232 = vmatpush1.msra.mxu0 0.0
  %8233 = vmatprep.subr.mxu0 0.0
  %8234 = vmatpush1.msra.mxu0 0.0
  %8235 = vmatprep.subr.mxu0 0.0
  %8236 = vmatpush1.msra.mxu0 0.0
  %8237 = vmatprep.subr.mxu0 0.0
  %8238 = vmatpush1.msra.mxu0 0.0
  %8239 = vmatprep.subr.mxu0 0.0
  %8240 = vmatpush1.msra.mxu0 0.0
  %8241 = vmatprep.subr.mxu0 0.0
  %8242 = vmatpush1.msra.mxu0 0.0
  %8243 = vmatprep.subr.mxu0 0.0
  %8244 = vmatpush1.msra.mxu0 0.0
  %8245 = vmatprep.subr.mxu0 0.0
  %8246 = vmatpush1.msra.mxu0 %v8143
  %8247 = vmatprep.subr.mxu0 0.0
  %8248 = vmatpush2.msra.mxu0 0.0
  %8249 = vmatprep.subr.mxu0 0.0
  %8250 = vmatpush2.msra.mxu0 0.0
  %8251 = vmatprep.subr.mxu0 0.0
  %8252 = vmatpush2.msra.mxu0 0.0
  %8253 = vmatprep.subr.mxu0 0.0
  %8254 = vmatpush2.msra.mxu0 0.0
  %8255 = vmatprep.subr.mxu0 0.0
  %8256 = vmatpush2.msra.mxu0 0.0
  %8257 = vmatprep.subr.mxu0 0.0
  %8258 = vmatpush2.msra.mxu0 0.0
  %8259 = vmatprep.subr.mxu0 0.0
  %8260 = vmatpush2.msra.mxu0 0.0
  %8261 = vmatprep.subr.mxu0 0.0
  %8262 = vmatpush2.msra.mxu0 0.0
  %8263 = vmatprep.subr.mxu0 0.0
  %8264 = vmatpush2.msra.mxu0 0.0
  %8265 = vmatprep.subr.mxu0 0.0
  %8266 = vmatpush2.msra.mxu0 0.0
  %8267 = vmatprep.subr.mxu0 0.0
  %8268 = vmatpush2.msra.mxu0 0.0
  %8269 = vmatprep.subr.mxu0 0.0
  %8270 = vmatpush2.msra.mxu0 0.0
  %8271 = vmatprep.subr.mxu0 0.0
  %8272 = vmatpush2.msra.mxu0 0.0
  %8273 = vmatprep.subr.mxu0 0.0
  %8274 = vmatpush2.msra.mxu0 0.0
  %8275 = vmatprep.subr.mxu0 0.0
  %8276 = vmatpush2.msra.mxu0 0.0
  %8277 = vmatprep.subr.mxu0 0.0
  %8278 = vmatpush2.msra.mxu0 0.0
  %8279 = vmatprep.mubr.f32.mxu0 0.0
  %8280 = vmatmul.mubr.f32.gmra.mxu0 %v6649
  %v8281 = vpop.f32.mrf.mxu0
  %v8282 = vadd.f32 0.0, %v8281
  %v8283 = vpop.f32.mrf.mxu0
  %8284 = vdwg.mxu0
  %8285 = vmatprep.subr.mxu0 0.0
  %8286 = vmatpush1.msra.mxu0 0.0
  %8287 = vmatprep.subr.mxu0 0.0
  %8288 = vmatpush1.msra.mxu0 0.0
  %8289 = vmatprep.subr.mxu0 0.0
  %8290 = vmatpush1.msra.mxu0 0.0
  %8291 = vmatprep.subr.mxu0 0.0
  %8292 = vmatpush1.msra.mxu0 0.0
  %8293 = vmatprep.subr.mxu0 0.0
  %8294 = vmatpush1.msra.mxu0 0.0
  %8295 = vmatprep.subr.mxu0 0.0
  %8296 = vmatpush1.msra.mxu0 0.0
  %8297 = vmatprep.subr.mxu0 0.0
  %8298 = vmatpush1.msra.mxu0 0.0
  %8299 = vmatprep.subr.mxu0 0.0
  %8300 = vmatpush1.msra.mxu0 0.0
  %8301 = vmatprep.subr.mxu0 0.0
  %8302 = vmatpush1.msra.mxu0 0.0
  %8303 = vmatprep.subr.mxu0 0.0
  %8304 = vmatpush1.msra.mxu0 0.0
  %8305 = vmatprep.subr.mxu0 0.0
  %8306 = vmatpush1.msra.mxu0 0.0
  %8307 = vmatprep.subr.mxu0 0.0
  %8308 = vmatpush1.msra.mxu0 0.0
  %8309 = vmatprep.subr.mxu0 0.0
  %8310 = vmatpush1.msra.mxu0 0.0
  %8311 = vmatprep.subr.mxu0 0.0
  %8312 = vmatpush1.msra.mxu0 0.0
  %8313 = vmatprep.subr.mxu0 0.0
  %8314 = vmatpush1.msra.mxu0 0.0
  %8315 = vmatprep.subr.mxu0 0.0
  %8316 = vmatpush1.msra.mxu0 %v8143
  %8317 = vmatprep.subr.mxu0 0.0
  %8318 = vmatpush2.msra.mxu0 0.0
  %8319 = vmatprep.subr.mxu0 0.0
  %8320 = vmatpush2.msra.mxu0 0.0
  %8321 = vmatprep.subr.mxu0 0.0
  %8322 = vmatpush2.msra.mxu0 0.0
  %8323 = vmatprep.subr.mxu0 0.0
  %8324 = vmatpush2.msra.mxu0 0.0
  %8325 = vmatprep.subr.mxu0 0.0
  %8326 = vmatpush2.msra.mxu0 0.0
  %8327 = vmatprep.subr.mxu0 0.0
  %8328 = vmatpush2.msra.mxu0 0.0
  %8329 = vmatprep.subr.mxu0 0.0
  %8330 = vmatpush2.msra.mxu0 0.0
  %8331 = vmatprep.subr.mxu0 0.0
  %8332 = vmatpush2.msra.mxu0 0.0
  %8333 = vmatprep.subr.mxu0 0.0
  %8334 = vmatpush2.msra.mxu0 0.0
  %8335 = vmatprep.subr.mxu0 0.0
  %8336 = vmatpush2.msra.mxu0 0.0
  %8337 = vmatprep.subr.mxu0 0.0
  %8338 = vmatpush2.msra.mxu0 0.0
  %8339 = vmatprep.subr.mxu0 0.0
  %8340 = vmatpush2.msra.mxu0 0.0
  %8341 = vmatprep.subr.mxu0 0.0
  %8342 = vmatpush2.msra.mxu0 0.0
  %8343 = vmatprep.subr.mxu0 0.0
  %8344 = vmatpush2.msra.mxu0 0.0
  %8345 = vmatprep.subr.mxu0 0.0
  %8346 = vmatpush2.msra.mxu0 0.0
  %8347 = vmatprep.subr.mxu0 0.0
  %8348 = vmatpush2.msra.mxu0 0.0
  %8349 = vmatprep.mubr.f32.mxu0 0.0
  %8350 = vmatmul.mubr.f32.gmra.mxu0 %v6724
  %v8351 = vpop.f32.mrf.mxu0
  %v8352 = vadd.f32 0.0, %v8351
  %v8353 = vpop.f32.mrf.mxu0
  %8354 = vdwg.mxu0
  %8356 = vrot.lane.b32.xlu0 %v8282, 32
  %v8357 = vpop.permute.xlu0 %8356
  %8360 = vrot.lane.b32.xlu0 %v8352, 64
  %v8361 = vpop.permute.xlu0 %8360
  %v8363 = vsel %vm6804, %v8212, %v8357
  %v8364 = vsel %vm2853, %v8363, %v8361
  %v8365 = vpack.c.bf16 %v8364, %v8364
  %v8367 = vsel %vm6856, %v8365, 0
  %8369 = vmatprep.subr.bf16.mxu0 0
  %8370 = vmatpush1.bf16.msra.mxu0 0
  %8371 = vmatprep.subr.bf16.mxu0 0
  %8372 = vmatpush1.bf16.msra.mxu0 0
  %8373 = vmatprep.subr.bf16.mxu0 0
  %8374 = vmatpush1.bf16.msra.mxu0 %v6849
  %8375 = vmatprep.subr.bf16.mxu0 0
  %8376 = vmatpush1.bf16.msra.mxu0 %v6848
  %8377 = vmatprep.subr.bf16.mxu0 0
  %8378 = vmatpush1.bf16.msra.mxu0 %v6847
  %8379 = vmatprep.subr.bf16.mxu0 0
  %8380 = vmatpush1.bf16.msra.mxu0 %v6846
  %8381 = vmatprep.subr.bf16.mxu0 0
  %8382 = vmatpush1.bf16.msra.mxu0 %v6845
  %8383 = vmatprep.subr.bf16.mxu0 0
  %8384 = vmatpush1.bf16.msra.mxu0 %v6844
  %8385 = vmatprep.subr.bf16.mxu0 0
  %8386 = vmatpush2.bf16.msra.mxu0 0
  %8387 = vmatprep.subr.bf16.mxu0 0
  %8388 = vmatpush2.bf16.msra.mxu0 0
  %8389 = vmatprep.subr.bf16.mxu0 0
  %8390 = vmatpush2.bf16.msra.mxu0 0
  %8391 = vmatprep.subr.bf16.mxu0 0
  %8392 = vmatpush2.bf16.msra.mxu0 0
  %8393 = vmatprep.subr.bf16.mxu0 0
  %8394 = vmatpush2.bf16.msra.mxu0 0
  %8395 = vmatprep.subr.bf16.mxu0 0
  %8396 = vmatpush2.bf16.msra.mxu0 0
  %8397 = vmatprep.subr.bf16.mxu0 0
  %8398 = vmatpush2.bf16.msra.mxu0 0
  %8399 = vmatprep.subr.bf16.mxu0 0
  %8400 = vmatpush2.bf16.msra.mxu0 0
  %8401 = vmatprep.mubr.bf16.mxu0 0
  %8402 = vmatmul.mubr.bf16.gmra.mxu0 %v8367
  %v8403 = vpop.f32.mrf.mxu0
  %v8404 = vadd.f32 0.0, %v8403
  %v8405 = vpop.f32.mrf.mxu0
  %v8406 = vpop.f32.mrf.mxu0
  %v8407 = vpop.f32.mrf.mxu0
  %8408 = vdwg.mxu0
  %v8409 = vpack.c.bf16 %v8404, %v8404
  %v8411 = vsel %vm92, %v8409, 0
  %8413 = vmatprep.subr.bf16.mxu0 0
  %8414 = vmatpush1.bf16.msra.mxu0 0
  %8415 = vmatprep.subr.bf16.mxu0 0
  %8416 = vmatpush1.bf16.msra.mxu0 0
  %8417 = vmatprep.subr.bf16.mxu0 0
  %8418 = vmatpush1.bf16.msra.mxu0 0
  %8419 = vmatprep.subr.bf16.mxu0 0
  %8420 = vmatpush1.bf16.msra.mxu0 0
  %8421 = vmatprep.subr.bf16.mxu0 0
  %8422 = vmatpush1.bf16.msra.mxu0 0
  %8423 = vmatprep.subr.bf16.mxu0 0
  %8424 = vmatpush1.bf16.msra.mxu0 0
  %8425 = vmatprep.subr.bf16.mxu0 0
  %8426 = vmatpush1.bf16.msra.mxu0 0
  %8427 = vmatprep.subr.bf16.mxu0 0
  %8428 = vmatpush1.bf16.msra.mxu0 %v6907
  %8429 = vmatprep.subr.bf16.mxu0 0
  %8430 = vmatpush2.bf16.msra.mxu0 0
  %8431 = vmatprep.subr.bf16.mxu0 0
  %8432 = vmatpush2.bf16.msra.mxu0 0
  %8433 = vmatprep.subr.bf16.mxu0 0
  %8434 = vmatpush2.bf16.msra.mxu0 0
  %8435 = vmatprep.subr.bf16.mxu0 0
  %8436 = vmatpush2.bf16.msra.mxu0 0
  %8437 = vmatprep.subr.bf16.mxu0 0
  %8438 = vmatpush2.bf16.msra.mxu0 0
  %8439 = vmatprep.subr.bf16.mxu0 0
  %8440 = vmatpush2.bf16.msra.mxu0 0
  %8441 = vmatprep.subr.bf16.mxu0 0
  %8442 = vmatpush2.bf16.msra.mxu0 0
  %8443 = vmatprep.subr.bf16.mxu0 0
  %8444 = vmatpush2.bf16.msra.mxu0 0
  %8445 = vmatprep.mubr.bf16.mxu0 0
  %8446 = vmatmul.mubr.bf16.gmra.mxu0 %v8411
  %v8447 = vpop.f32.mrf.mxu0
  %v8448 = vadd.f32 0.0, %v8447
  %v8449 = vpop.f32.mrf.mxu0
  %v8450 = vpop.f32.mrf.mxu0
  %v8451 = vpop.f32.mrf.mxu0
  %8452 = vdwg.mxu0
  %8454 = vrot.lane.b32.xlu0 %v8448, 96
  %v8455 = vpop.permute.xlu0 %8454
  %v8456 = vsel %vm2965, %v8455, 0
  %8458 = vmatprep.subr.mxu0 0.0
  %8459 = vmatpush1.msra.mxu0 0.0
  %8460 = vmatprep.subr.mxu0 0.0
  %8461 = vmatpush1.msra.mxu0 0.0
  %8462 = vmatprep.subr.mxu0 0.0
  %8463 = vmatpush1.msra.mxu0 0.0
  %8464 = vmatprep.subr.mxu0 0.0
  %8465 = vmatpush1.msra.mxu0 0.0
  %8466 = vmatprep.subr.mxu0 0.0
  %8467 = vmatpush1.msra.mxu0 0.0
  %8468 = vmatprep.subr.mxu0 0.0
  %8469 = vmatpush1.msra.mxu0 0.0
  %8470 = vmatprep.subr.mxu0 0.0
  %8471 = vmatpush1.msra.mxu0 0.0
  %8472 = vmatprep.subr.mxu0 0.0
  %8473 = vmatpush1.msra.mxu0 0.0
  %8474 = vmatprep.subr.mxu0 0.0
  %8475 = vmatpush1.msra.mxu0 0.0
  %8476 = vmatprep.subr.mxu0 0.0
  %8477 = vmatpush1.msra.mxu0 0.0
  %8478 = vmatprep.subr.mxu0 0.0
  %8479 = vmatpush1.msra.mxu0 0.0
  %8480 = vmatprep.subr.mxu0 0.0
  %8481 = vmatpush1.msra.mxu0 0.0
  %8482 = vmatprep.subr.mxu0 0.0
  %8483 = vmatpush1.msra.mxu0 0.0
  %8484 = vmatprep.subr.mxu0 0.0
  %8485 = vmatpush1.msra.mxu0 0.0
  %8486 = vmatprep.subr.mxu0 0.0
  %8487 = vmatpush1.msra.mxu0 0.0
  %8488 = vmatprep.subr.mxu0 0.0
  %8489 = vmatpush1.msra.mxu0 %v8456
  %8490 = vmatprep.subr.mxu0 0.0
  %8491 = vmatpush2.msra.mxu0 0.0
  %8492 = vmatprep.subr.mxu0 0.0
  %8493 = vmatpush2.msra.mxu0 0.0
  %8494 = vmatprep.subr.mxu0 0.0
  %8495 = vmatpush2.msra.mxu0 0.0
  %8496 = vmatprep.subr.mxu0 0.0
  %8497 = vmatpush2.msra.mxu0 0.0
  %8498 = vmatprep.subr.mxu0 0.0
  %8499 = vmatpush2.msra.mxu0 0.0
  %8500 = vmatprep.subr.mxu0 0.0
  %8501 = vmatpush2.msra.mxu0 0.0
  %8502 = vmatprep.subr.mxu0 0.0
  %8503 = vmatpush2.msra.mxu0 0.0
  %8504 = vmatprep.subr.mxu0 0.0
  %8505 = vmatpush2.msra.mxu0 0.0
  %8506 = vmatprep.subr.mxu0 0.0
  %8507 = vmatpush2.msra.mxu0 0.0
  %8508 = vmatprep.subr.mxu0 0.0
  %8509 = vmatpush2.msra.mxu0 0.0
  %8510 = vmatprep.subr.mxu0 0.0
  %8511 = vmatpush2.msra.mxu0 0.0
  %8512 = vmatprep.subr.mxu0 0.0
  %8513 = vmatpush2.msra.mxu0 0.0
  %8514 = vmatprep.subr.mxu0 0.0
  %8515 = vmatpush2.msra.mxu0 0.0
  %8516 = vmatprep.subr.mxu0 0.0
  %8517 = vmatpush2.msra.mxu0 0.0
  %8518 = vmatprep.subr.mxu0 0.0
  %8519 = vmatpush2.msra.mxu0 0.0
  %8520 = vmatprep.subr.mxu0 0.0
  %8521 = vmatpush2.msra.mxu0 0.0
  %8522 = vmatprep.mubr.f32.mxu0 0.0
  %8523 = vmatmul.mubr.f32.gmra.mxu0 %v6960
  %v8524 = vpop.f32.mrf.mxu0
  %v8525 = vadd.f32 0.0, %v8524
  %v8526 = vpop.f32.mrf.mxu0
  %8527 = vdwg.mxu0
  %v8528 = vsel %vm2965, %v8448, 0
  %8530 = vmatprep.subr.mxu0 0.0
  %8531 = vmatpush1.msra.mxu0 0.0
  %8532 = vmatprep.subr.mxu0 0.0
  %8533 = vmatpush1.msra.mxu0 0.0
  %8534 = vmatprep.subr.mxu0 0.0
  %8535 = vmatpush1.msra.mxu0 0.0
  %8536 = vmatprep.subr.mxu0 0.0
  %8537 = vmatpush1.msra.mxu0 0.0
  %8538 = vmatprep.subr.mxu0 0.0
  %8539 = vmatpush1.msra.mxu0 0.0
  %8540 = vmatprep.subr.mxu0 0.0
  %8541 = vmatpush1.msra.mxu0 0.0
  %8542 = vmatprep.subr.mxu0 0.0
  %8543 = vmatpush1.msra.mxu0 0.0
  %8544 = vmatprep.subr.mxu0 0.0
  %8545 = vmatpush1.msra.mxu0 0.0
  %8546 = vmatprep.subr.mxu0 0.0
  %8547 = vmatpush1.msra.mxu0 0.0
  %8548 = vmatprep.subr.mxu0 0.0
  %8549 = vmatpush1.msra.mxu0 0.0
  %8550 = vmatprep.subr.mxu0 0.0
  %8551 = vmatpush1.msra.mxu0 0.0
  %8552 = vmatprep.subr.mxu0 0.0
  %8553 = vmatpush1.msra.mxu0 0.0
  %8554 = vmatprep.subr.mxu0 0.0
  %8555 = vmatpush1.msra.mxu0 0.0
  %8556 = vmatprep.subr.mxu0 0.0
  %8557 = vmatpush1.msra.mxu0 0.0
  %8558 = vmatprep.subr.mxu0 0.0
  %8559 = vmatpush1.msra.mxu0 0.0
  %8560 = vmatprep.subr.mxu0 0.0
  %8561 = vmatpush1.msra.mxu0 %v8528
  %8562 = vmatprep.subr.mxu0 0.0
  %8563 = vmatpush2.msra.mxu0 0.0
  %8564 = vmatprep.subr.mxu0 0.0
  %8565 = vmatpush2.msra.mxu0 0.0
  %8566 = vmatprep.subr.mxu0 0.0
  %8567 = vmatpush2.msra.mxu0 0.0
  %8568 = vmatprep.subr.mxu0 0.0
  %8569 = vmatpush2.msra.mxu0 0.0
  %8570 = vmatprep.subr.mxu0 0.0
  %8571 = vmatpush2.msra.mxu0 0.0
  %8572 = vmatprep.subr.mxu0 0.0
  %8573 = vmatpush2.msra.mxu0 0.0
  %8574 = vmatprep.subr.mxu0 0.0
  %8575 = vmatpush2.msra.mxu0 0.0
  %8576 = vmatprep.subr.mxu0 0.0
  %8577 = vmatpush2.msra.mxu0 0.0
  %8578 = vmatprep.subr.mxu0 0.0
  %8579 = vmatpush2.msra.mxu0 0.0
  %8580 = vmatprep.subr.mxu0 0.0
  %8581 = vmatpush2.msra.mxu0 0.0
  %8582 = vmatprep.subr.mxu0 0.0
  %8583 = vmatpush2.msra.mxu0 0.0
  %8584 = vmatprep.subr.mxu0 0.0
  %8585 = vmatpush2.msra.mxu0 0.0
  %8586 = vmatprep.subr.mxu0 0.0
  %8587 = vmatpush2.msra.mxu0 0.0
  %8588 = vmatprep.subr.mxu0 0.0
  %8589 = vmatpush2.msra.mxu0 0.0
  %8590 = vmatprep.subr.mxu0 0.0
  %8591 = vmatpush2.msra.mxu0 0.0
  %8592 = vmatprep.subr.mxu0 0.0
  %8593 = vmatpush2.msra.mxu0 0.0
  %8594 = vmatprep.mubr.f32.mxu0 0.0
  %8595 = vmatmul.mubr.f32.gmra.mxu0 %v7035
  %v8596 = vpop.f32.mrf.mxu0
  %v8597 = vadd.f32 %v8525, %v8596
  %v8598 = vpop.f32.mrf.mxu0
  %8599 = vdwg.mxu0
  %v8600 = vsub.f32 %v8137, %v8597
  %v8601 = vpack.c.bf16 %v8137, %v8137
  %v8603 = vsel %vm6804, %v8601, 0
  %8605 = vmatprep.subr.bf16.mxu0 0
  %8606 = vmatpush1.bf16.msra.mxu0 0
  %8607 = vmatprep.subr.bf16.mxu0 0
  %8608 = vmatpush1.bf16.msra.mxu0 0
  %8609 = vmatprep.subr.bf16.mxu0 0
  %8610 = vmatpush1.bf16.msra.mxu0 0
  %8611 = vmatprep.subr.bf16.mxu0 0
  %8612 = vmatpush1.bf16.msra.mxu0 0
  %8613 = vmatprep.subr.bf16.mxu0 0
  %8614 = vmatpush1.bf16.msra.mxu0 0
  %8615 = vmatprep.subr.bf16.mxu0 0
  %8616 = vmatpush1.bf16.msra.mxu0 0
  %8617 = vmatprep.subr.bf16.mxu0 0
  %8618 = vmatpush1.bf16.msra.mxu0 %v7124
  %8619 = vmatprep.subr.bf16.mxu0 0
  %8620 = vmatpush1.bf16.msra.mxu0 %v7123
  %8621 = vmatprep.subr.bf16.mxu0 0
  %8622 = vmatpush2.bf16.msra.mxu0 0
  %8623 = vmatprep.subr.bf16.mxu0 0
  %8624 = vmatpush2.bf16.msra.mxu0 0
  %8625 = vmatprep.subr.bf16.mxu0 0
  %8626 = vmatpush2.bf16.msra.mxu0 0
  %8627 = vmatprep.subr.bf16.mxu0 0
  %8628 = vmatpush2.bf16.msra.mxu0 0
  %8629 = vmatprep.subr.bf16.mxu0 0
  %8630 = vmatpush2.bf16.msra.mxu0 0
  %8631 = vmatprep.subr.bf16.mxu0 0
  %8632 = vmatpush2.bf16.msra.mxu0 0
  %8633 = vmatprep.subr.bf16.mxu0 0
  %8634 = vmatpush2.bf16.msra.mxu0 0
  %8635 = vmatprep.subr.bf16.mxu0 0
  %8636 = vmatpush2.bf16.msra.mxu0 0
  %8637 = vmatprep.mubr.bf16.mxu0 0
  %8638 = vmatmul.mubr.bf16.gmra.mxu0 %v8603
  %v8639 = vpop.f32.mrf.mxu0
  %v8640 = vadd.f32 0.0, %v8639
  %v8641 = vpop.f32.mrf.mxu0
  %v8642 = vpop.f32.mrf.mxu0
  %v8643 = vpop.f32.mrf.mxu0
  %8644 = vdwg.mxu0
  %8646 = vrot.lane.b32.xlu0 %v8640, 64
  %v8647 = vpop.permute.xlu0 %8646
  %v8648 = vsel %vm2935, %v8647, 0
  %8650 = vmatprep.subr.mxu0 0.0
  %8651 = vmatpush1.msra.mxu0 0.0
  %8652 = vmatprep.subr.mxu0 0.0
  %8653 = vmatpush1.msra.mxu0 0.0
  %8654 = vmatprep.subr.mxu0 0.0
  %8655 = vmatpush1.msra.mxu0 0.0
  %8656 = vmatprep.subr.mxu0 0.0
  %8657 = vmatpush1.msra.mxu0 0.0
  %8658 = vmatprep.subr.mxu0 0.0
  %8659 = vmatpush1.msra.mxu0 0.0
  %8660 = vmatprep.subr.mxu0 0.0
  %8661 = vmatpush1.msra.mxu0 0.0
  %8662 = vmatprep.subr.mxu0 0.0
  %8663 = vmatpush1.msra.mxu0 0.0
  %8664 = vmatprep.subr.mxu0 0.0
  %8665 = vmatpush1.msra.mxu0 0.0
  %8666 = vmatprep.subr.mxu0 0.0
  %8667 = vmatpush1.msra.mxu0 0.0
  %8668 = vmatprep.subr.mxu0 0.0
  %8669 = vmatpush1.msra.mxu0 0.0
  %8670 = vmatprep.subr.mxu0 0.0
  %8671 = vmatpush1.msra.mxu0 0.0
  %8672 = vmatprep.subr.mxu0 0.0
  %8673 = vmatpush1.msra.mxu0 0.0
  %8674 = vmatprep.subr.mxu0 0.0
  %8675 = vmatpush1.msra.mxu0 0.0
  %8676 = vmatprep.subr.mxu0 0.0
  %8677 = vmatpush1.msra.mxu0 0.0
  %8678 = vmatprep.subr.mxu0 0.0
  %8679 = vmatpush1.msra.mxu0 0.0
  %8680 = vmatprep.subr.mxu0 0.0
  %8681 = vmatpush1.msra.mxu0 %v8648
  %8682 = vmatprep.subr.mxu0 0.0
  %8683 = vmatpush2.msra.mxu0 0.0
  %8684 = vmatprep.subr.mxu0 0.0
  %8685 = vmatpush2.msra.mxu0 0.0
  %8686 = vmatprep.subr.mxu0 0.0
  %8687 = vmatpush2.msra.mxu0 0.0
  %8688 = vmatprep.subr.mxu0 0.0
  %8689 = vmatpush2.msra.mxu0 0.0
  %8690 = vmatprep.subr.mxu0 0.0
  %8691 = vmatpush2.msra.mxu0 0.0
  %8692 = vmatprep.subr.mxu0 0.0
  %8693 = vmatpush2.msra.mxu0 0.0
  %8694 = vmatprep.subr.mxu0 0.0
  %8695 = vmatpush2.msra.mxu0 0.0
  %8696 = vmatprep.subr.mxu0 0.0
  %8697 = vmatpush2.msra.mxu0 0.0
  %8698 = vmatprep.subr.mxu0 0.0
  %8699 = vmatpush2.msra.mxu0 0.0
  %8700 = vmatprep.subr.mxu0 0.0
  %8701 = vmatpush2.msra.mxu0 0.0
  %8702 = vmatprep.subr.mxu0 0.0
  %8703 = vmatpush2.msra.mxu0 0.0
  %8704 = vmatprep.subr.mxu0 0.0
  %8705 = vmatpush2.msra.mxu0 0.0
  %8706 = vmatprep.subr.mxu0 0.0
  %8707 = vmatpush2.msra.mxu0 0.0
  %8708 = vmatprep.subr.mxu0 0.0
  %8709 = vmatpush2.msra.mxu0 0.0
  %8710 = vmatprep.subr.mxu0 0.0
  %8711 = vmatpush2.msra.mxu0 0.0
  %8712 = vmatprep.subr.mxu0 0.0
  %8713 = vmatpush2.msra.mxu0 0.0
  %8714 = vmatprep.mubr.f32.mxu0 0.0
  %8715 = vmatmul.mubr.f32.gmra.mxu0 %v7177
  %v8716 = vpop.f32.mrf.mxu0
  %v8717 = vadd.f32 0.0, %v8716
  %v8718 = vpop.f32.mrf.mxu0
  %8719 = vdwg.mxu0
  %v8720 = vsel %vm2935, %v8640, 0
  %8722 = vmatprep.subr.mxu0 0.0
  %8723 = vmatpush1.msra.mxu0 0.0
  %8724 = vmatprep.subr.mxu0 0.0
  %8725 = vmatpush1.msra.mxu0 0.0
  %8726 = vmatprep.subr.mxu0 0.0
  %8727 = vmatpush1.msra.mxu0 0.0
  %8728 = vmatprep.subr.mxu0 0.0
  %8729 = vmatpush1.msra.mxu0 0.0
  %8730 = vmatprep.subr.mxu0 0.0
  %8731 = vmatpush1.msra.mxu0 0.0
  %8732 = vmatprep.subr.mxu0 0.0
  %8733 = vmatpush1.msra.mxu0 0.0
  %8734 = vmatprep.subr.mxu0 0.0
  %8735 = vmatpush1.msra.mxu0 0.0
  %8736 = vmatprep.subr.mxu0 0.0
  %8737 = vmatpush1.msra.mxu0 0.0
  %8738 = vmatprep.subr.mxu0 0.0
  %8739 = vmatpush1.msra.mxu0 0.0
  %8740 = vmatprep.subr.mxu0 0.0
  %8741 = vmatpush1.msra.mxu0 0.0
  %8742 = vmatprep.subr.mxu0 0.0
  %8743 = vmatpush1.msra.mxu0 0.0
  %8744 = vmatprep.subr.mxu0 0.0
  %8745 = vmatpush1.msra.mxu0 0.0
  %8746 = vmatprep.subr.mxu0 0.0
  %8747 = vmatpush1.msra.mxu0 0.0
  %8748 = vmatprep.subr.mxu0 0.0
  %8749 = vmatpush1.msra.mxu0 0.0
  %8750 = vmatprep.subr.mxu0 0.0
  %8751 = vmatpush1.msra.mxu0 0.0
  %8752 = vmatprep.subr.mxu0 0.0
  %8753 = vmatpush1.msra.mxu0 %v8720
  %8754 = vmatprep.subr.mxu0 0.0
  %8755 = vmatpush2.msra.mxu0 0.0
  %8756 = vmatprep.subr.mxu0 0.0
  %8757 = vmatpush2.msra.mxu0 0.0
  %8758 = vmatprep.subr.mxu0 0.0
  %8759 = vmatpush2.msra.mxu0 0.0
  %8760 = vmatprep.subr.mxu0 0.0
  %8761 = vmatpush2.msra.mxu0 0.0
  %8762 = vmatprep.subr.mxu0 0.0
  %8763 = vmatpush2.msra.mxu0 0.0
  %8764 = vmatprep.subr.mxu0 0.0
  %8765 = vmatpush2.msra.mxu0 0.0
  %8766 = vmatprep.subr.mxu0 0.0
  %8767 = vmatpush2.msra.mxu0 0.0
  %8768 = vmatprep.subr.mxu0 0.0
  %8769 = vmatpush2.msra.mxu0 0.0
  %8770 = vmatprep.subr.mxu0 0.0
  %8771 = vmatpush2.msra.mxu0 0.0
  %8772 = vmatprep.subr.mxu0 0.0
  %8773 = vmatpush2.msra.mxu0 0.0
  %8774 = vmatprep.subr.mxu0 0.0
  %8775 = vmatpush2.msra.mxu0 0.0
  %8776 = vmatprep.subr.mxu0 0.0
  %8777 = vmatpush2.msra.mxu0 0.0
  %8778 = vmatprep.subr.mxu0 0.0
  %8779 = vmatpush2.msra.mxu0 0.0
  %8780 = vmatprep.subr.mxu0 0.0
  %8781 = vmatpush2.msra.mxu0 0.0
  %8782 = vmatprep.subr.mxu0 0.0
  %8783 = vmatpush2.msra.mxu0 0.0
  %8784 = vmatprep.subr.mxu0 0.0
  %8785 = vmatpush2.msra.mxu0 0.0
  %8786 = vmatprep.mubr.f32.mxu0 0.0
  %8787 = vmatmul.mubr.f32.gmra.mxu0 %v7252
  %v8788 = vpop.f32.mrf.mxu0
  %v8789 = vadd.f32 %v8717, %v8788
  %v8790 = vpop.f32.mrf.mxu0
  %8791 = vdwg.mxu0
  %v8792 = vsub.f32 %v7877, %v8789
  %v8793 = vpack.c.bf16 %v7877, %v7877
  %v8795 = vsel %vm2853, %v8793, 0
  %8797 = vmatprep.subr.bf16.mxu0 0
  %8798 = vmatpush1.bf16.msra.mxu0 0
  %8799 = vmatprep.subr.bf16.mxu0 0
  %8800 = vmatpush1.bf16.msra.mxu0 0
  %8801 = vmatprep.subr.bf16.mxu0 0
  %8802 = vmatpush1.bf16.msra.mxu0 0
  %8803 = vmatprep.subr.bf16.mxu0 0
  %8804 = vmatpush1.bf16.msra.mxu0 0
  %8805 = vmatprep.subr.bf16.mxu0 %v7367
  %8806 = vmatpush1.bf16.msra.mxu0 %v7366
  %8807 = vmatprep.subr.bf16.mxu0 %v7365
  %8808 = vmatpush1.bf16.msra.mxu0 %v7364
  %8809 = vmatprep.subr.bf16.mxu0 %v7363
  %8810 = vmatpush1.bf16.msra.mxu0 %v7362
  %8811 = vmatprep.subr.bf16.mxu0 %v7361
  %8812 = vmatpush1.bf16.msra.mxu0 %v7360
  %8813 = vmatprep.subr.bf16.mxu0 0
  %8814 = vmatpush2.bf16.msra.mxu0 0
  %8815 = vmatprep.subr.bf16.mxu0 0
  %8816 = vmatpush2.bf16.msra.mxu0 0
  %8817 = vmatprep.subr.bf16.mxu0 0
  %8818 = vmatpush2.bf16.msra.mxu0 0
  %8819 = vmatprep.subr.bf16.mxu0 0
  %8820 = vmatpush2.bf16.msra.mxu0 0
  %8821 = vmatprep.subr.bf16.mxu0 0
  %8822 = vmatpush2.bf16.msra.mxu0 0
  %8823 = vmatprep.subr.bf16.mxu0 0
  %8824 = vmatpush2.bf16.msra.mxu0 0
  %8825 = vmatprep.subr.bf16.mxu0 0
  %8826 = vmatpush2.bf16.msra.mxu0 0
  %8827 = vmatprep.subr.bf16.mxu0 0
  %8828 = vmatpush2.bf16.msra.mxu0 0
  %8829 = vmatprep.mubr.bf16.mxu0 0
  %8830 = vmatmul.mubr.bf16.gmra.mxu0 %v8795
  %v8831 = vpop.f32.mrf.mxu0
  %v8832 = vadd.f32 0.0, %v8831
  %v8833 = vpop.f32.mrf.mxu0
  %v8834 = vadd.f32 0.0, %v8833
  %v8835 = vpop.f32.mrf.mxu0
  %v8836 = vpop.f32.mrf.mxu0
  %8837 = vdwg.mxu0
  %8838 = vmatprep.subr.mxu0 0.0
  %8839 = vmatpush1.msra.mxu0 0.0
  %8840 = vmatprep.subr.mxu0 0.0
  %8841 = vmatpush1.msra.mxu0 0.0
  %8842 = vmatprep.subr.mxu0 0.0
  %8843 = vmatpush1.msra.mxu0 0.0
  %8844 = vmatprep.subr.mxu0 0.0
  %8845 = vmatpush1.msra.mxu0 0.0
  %8846 = vmatprep.subr.mxu0 0.0
  %8847 = vmatpush1.msra.mxu0 0.0
  %8848 = vmatprep.subr.mxu0 0.0
  %8849 = vmatpush1.msra.mxu0 0.0
  %8850 = vmatprep.subr.mxu0 0.0
  %8851 = vmatpush1.msra.mxu0 0.0
  %8852 = vmatprep.subr.mxu0 0.0
  %8853 = vmatpush1.msra.mxu0 0.0
  %8854 = vmatprep.subr.mxu0 0.0
  %8855 = vmatpush1.msra.mxu0 0.0
  %8856 = vmatprep.subr.mxu0 0.0
  %8857 = vmatpush1.msra.mxu0 0.0
  %8858 = vmatprep.subr.mxu0 0.0
  %8859 = vmatpush1.msra.mxu0 0.0
  %8860 = vmatprep.subr.mxu0 0.0
  %8861 = vmatpush1.msra.mxu0 0.0
  %8862 = vmatprep.subr.mxu0 0.0
  %8863 = vmatpush1.msra.mxu0 0.0
  %8864 = vmatprep.subr.mxu0 0.0
  %8865 = vmatpush1.msra.mxu0 0.0
  %8866 = vmatprep.subr.mxu0 0.0
  %8867 = vmatpush1.msra.mxu0 0.0
  %8868 = vmatprep.subr.mxu0 0.0
  %8869 = vmatpush1.msra.mxu0 %v8834
  %8870 = vmatprep.subr.mxu0 0.0
  %8871 = vmatpush2.msra.mxu0 0.0
  %8872 = vmatprep.subr.mxu0 0.0
  %8873 = vmatpush2.msra.mxu0 0.0
  %8874 = vmatprep.subr.mxu0 0.0
  %8875 = vmatpush2.msra.mxu0 0.0
  %8876 = vmatprep.subr.mxu0 0.0
  %8877 = vmatpush2.msra.mxu0 0.0
  %8878 = vmatprep.subr.mxu0 0.0
  %8879 = vmatpush2.msra.mxu0 0.0
  %8880 = vmatprep.subr.mxu0 0.0
  %8881 = vmatpush2.msra.mxu0 0.0
  %8882 = vmatprep.subr.mxu0 0.0
  %8883 = vmatpush2.msra.mxu0 0.0
  %8884 = vmatprep.subr.mxu0 0.0
  %8885 = vmatpush2.msra.mxu0 0.0
  %8886 = vmatprep.subr.mxu0 0.0
  %8887 = vmatpush2.msra.mxu0 0.0
  %8888 = vmatprep.subr.mxu0 0.0
  %8889 = vmatpush2.msra.mxu0 0.0
  %8890 = vmatprep.subr.mxu0 0.0
  %8891 = vmatpush2.msra.mxu0 0.0
  %8892 = vmatprep.subr.mxu0 0.0
  %8893 = vmatpush2.msra.mxu0 0.0
  %8894 = vmatprep.subr.mxu0 0.0
  %8895 = vmatpush2.msra.mxu0 0.0
  %8896 = vmatprep.subr.mxu0 0.0
  %8897 = vmatpush2.msra.mxu0 0.0
  %8898 = vmatprep.subr.mxu0 0.0
  %8899 = vmatpush2.msra.mxu0 0.0
  %8900 = vmatprep.subr.mxu0 0.0
  %8901 = vmatpush2.msra.mxu0 0.0
  %8902 = vmatprep.mubr.f32.mxu0 0.0
  %8903 = vmatmul.mubr.f32.gmra.mxu0 %v7426
  %v8904 = vpop.f32.mrf.mxu0
  %v8905 = vadd.f32 0.0, %v8904
  %v8906 = vpop.f32.mrf.mxu0
  %8907 = vmatprep.mubr.f32.mxu0 0.0
  %8908 = vmatmul.mubr.f32.gmra.mxu0 %v7429
  %v8909 = vpop.f32.mrf.mxu0
  %v8910 = vadd.f32 0.0, %v8909
  %v8911 = vpop.f32.mrf.mxu0
  %8912 = vdwg.mxu0
  %8913 = vmatprep.subr.mxu0 0.0
  %8914 = vmatpush1.msra.mxu0 0.0
  %8915 = vmatprep.subr.mxu0 0.0
  %8916 = vmatpush1.msra.mxu0 0.0
  %8917 = vmatprep.subr.mxu0 0.0
  %8918 = vmatpush1.msra.mxu0 0.0
  %8919 = vmatprep.subr.mxu0 0.0
  %8920 = vmatpush1.msra.mxu0 0.0
  %8921 = vmatprep.subr.mxu0 0.0
  %8922 = vmatpush1.msra.mxu0 0.0
  %8923 = vmatprep.subr.mxu0 0.0
  %8924 = vmatpush1.msra.mxu0 0.0
  %8925 = vmatprep.subr.mxu0 0.0
  %8926 = vmatpush1.msra.mxu0 0.0
  %8927 = vmatprep.subr.mxu0 0.0
  %8928 = vmatpush1.msra.mxu0 0.0
  %8929 = vmatprep.subr.mxu0 0.0
  %8930 = vmatpush1.msra.mxu0 0.0
  %8931 = vmatprep.subr.mxu0 0.0
  %8932 = vmatpush1.msra.mxu0 0.0
  %8933 = vmatprep.subr.mxu0 0.0
  %8934 = vmatpush1.msra.mxu0 0.0
  %8935 = vmatprep.subr.mxu0 0.0
  %8936 = vmatpush1.msra.mxu0 0.0
  %8937 = vmatprep.subr.mxu0 0.0
  %8938 = vmatpush1.msra.mxu0 0.0
  %8939 = vmatprep.subr.mxu0 0.0
  %8940 = vmatpush1.msra.mxu0 0.0
  %8941 = vmatprep.subr.mxu0 0.0
  %8942 = vmatpush1.msra.mxu0 0.0
  %8943 = vmatprep.subr.mxu0 0.0
  %8944 = vmatpush1.msra.mxu0 %v8832
  %8945 = vmatprep.subr.mxu0 0.0
  %8946 = vmatpush2.msra.mxu0 0.0
  %8947 = vmatprep.subr.mxu0 0.0
  %8948 = vmatpush2.msra.mxu0 0.0
  %8949 = vmatprep.subr.mxu0 0.0
  %8950 = vmatpush2.msra.mxu0 0.0
  %8951 = vmatprep.subr.mxu0 0.0
  %8952 = vmatpush2.msra.mxu0 0.0
  %8953 = vmatprep.subr.mxu0 0.0
  %8954 = vmatpush2.msra.mxu0 0.0
  %8955 = vmatprep.subr.mxu0 0.0
  %8956 = vmatpush2.msra.mxu0 0.0
  %8957 = vmatprep.subr.mxu0 0.0
  %8958 = vmatpush2.msra.mxu0 0.0
  %8959 = vmatprep.subr.mxu0 0.0
  %8960 = vmatpush2.msra.mxu0 0.0
  %8961 = vmatprep.subr.mxu0 0.0
  %8962 = vmatpush2.msra.mxu0 0.0
  %8963 = vmatprep.subr.mxu0 0.0
  %8964 = vmatpush2.msra.mxu0 0.0
  %8965 = vmatprep.subr.mxu0 0.0
  %8966 = vmatpush2.msra.mxu0 0.0
  %8967 = vmatprep.subr.mxu0 0.0
  %8968 = vmatpush2.msra.mxu0 0.0
  %8969 = vmatprep.subr.mxu0 0.0
  %8970 = vmatpush2.msra.mxu0 0.0
  %8971 = vmatprep.subr.mxu0 0.0
  %8972 = vmatpush2.msra.mxu0 0.0
  %8973 = vmatprep.subr.mxu0 0.0
  %8974 = vmatpush2.msra.mxu0 0.0
  %8975 = vmatprep.subr.mxu0 0.0
  %8976 = vmatpush2.msra.mxu0 0.0
  %8977 = vmatprep.mubr.f32.mxu0 0.0
  %8978 = vmatmul.mubr.f32.gmra.mxu0 %v7507
  %v8979 = vpop.f32.mrf.mxu0
  %v8980 = vadd.f32 %v8905, %v8979
  %v8981 = vpop.f32.mrf.mxu0
  %8982 = vmatprep.mubr.f32.mxu0 0.0
  %8983 = vmatmul.mubr.f32.gmra.mxu0 %v7510
  %v8984 = vpop.f32.mrf.mxu0
  %v8985 = vadd.f32 %v8910, %v8984
  %v8986 = vpop.f32.mrf.mxu0
  %8987 = vdwg.mxu0
  %v8988 = vsub.f32 %v2864, %v8980
  %v8989 = vsub.f32 %v2865, %v8985
  %8990 = vmatprep.subr.mxu0 0.0
  %8991 = vmatpush1.msra.mxu0 0.0
  %8992 = vmatprep.subr.mxu0 0.0
  %8993 = vmatpush1.msra.mxu0 0.0
  %8994 = vmatprep.subr.mxu0 0.0
  %8995 = vmatpush1.msra.mxu0 0.0
  %8996 = vmatprep.subr.mxu0 0.0
  %8997 = vmatpush1.msra.mxu0 0.0
  %8998 = vmatprep.subr.mxu0 0.0
  %8999 = vmatpush1.msra.mxu0 0.0
  %9000 = vmatprep.subr.mxu0 0.0
  %9001 = vmatpush1.msra.mxu0 0.0
  %9002 = vmatprep.subr.mxu0 0.0
  %9003 = vmatpush1.msra.mxu0 0.0
  %9004 = vmatprep.subr.mxu0 0.0
  %9005 = vmatpush1.msra.mxu0 0.0
  %9006 = vmatprep.subr.mxu0 0.0
  %9007 = vmatpush1.msra.mxu0 0.0
  %9008 = vmatprep.subr.mxu0 0.0
  %9009 = vmatpush1.msra.mxu0 0.0
  %9010 = vmatprep.subr.mxu0 0.0
  %9011 = vmatpush1.msra.mxu0 0.0
  %9012 = vmatprep.subr.mxu0 0.0
  %9013 = vmatpush1.msra.mxu0 0.0
  %9014 = vmatprep.subr.mxu0 0.0
  %9015 = vmatpush1.msra.mxu0 0.0
  %9016 = vmatprep.subr.mxu0 0.0
  %9017 = vmatpush1.msra.mxu0 0.0
  %9018 = vmatprep.subr.mxu0 0.0
  %9019 = vmatpush1.msra.mxu0 %v5697
  %9020 = vmatprep.subr.mxu0 0.0
  %9021 = vmatpush1.msra.mxu0 %v5695
  %9022 = vmatprep.subr.mxu0 0.0
  %9023 = vmatpush2.msra.mxu0 0.0
  %9024 = vmatprep.subr.mxu0 0.0
  %9025 = vmatpush2.msra.mxu0 0.0
  %9026 = vmatprep.subr.mxu0 0.0
  %9027 = vmatpush2.msra.mxu0 0.0
  %9028 = vmatprep.subr.mxu0 0.0
  %9029 = vmatpush2.msra.mxu0 0.0
  %9030 = vmatprep.subr.mxu0 0.0
  %9031 = vmatpush2.msra.mxu0 0.0
  %9032 = vmatprep.subr.mxu0 0.0
  %9033 = vmatpush2.msra.mxu0 0.0
  %9034 = vmatprep.subr.mxu0 0.0
  %9035 = vmatpush2.msra.mxu0 0.0
  %9036 = vmatprep.subr.mxu0 0.0
  %9037 = vmatpush2.msra.mxu0 0.0
  %9038 = vmatprep.subr.mxu0 0.0
  %9039 = vmatpush2.msra.mxu0 0.0
  %9040 = vmatprep.subr.mxu0 0.0
  %9041 = vmatpush2.msra.mxu0 0.0
  %9042 = vmatprep.subr.mxu0 0.0
  %9043 = vmatpush2.msra.mxu0 0.0
  %9044 = vmatprep.subr.mxu0 0.0
  %9045 = vmatpush2.msra.mxu0 0.0
  %9046 = vmatprep.subr.mxu0 0.0
  %9047 = vmatpush2.msra.mxu0 0.0
  %9048 = vmatprep.subr.mxu0 0.0
  %9049 = vmatpush2.msra.mxu0 0.0
  %9050 = vmatprep.subr.mxu0 0.0
  %9051 = vmatpush2.msra.mxu0 0.0
  %9052 = vmatprep.subr.mxu0 0.0
  %9053 = vmatpush2.msra.mxu0 0.0
  %9054 = vmatprep.mubr.f32.mxu0 0.0
  %9055 = vmatmul.mubr.f32.gmra.mxu0 %v5700
  %v9056 = vpop.f32.mrf.mxu0
  %v9057 = vadd.f32 0.0, %v9056
  %v9058 = vpop.f32.mrf.mxu0
  %9059 = vdwg.mxu0
  %9060 = vmatprep.subr.mxu0 0.0
  %9061 = vmatpush1.msra.mxu0 0.0
  %9062 = vmatprep.subr.mxu0 0.0
  %9063 = vmatpush1.msra.mxu0 0.0
  %9064 = vmatprep.subr.mxu0 0.0
  %9065 = vmatpush1.msra.mxu0 0.0
  %9066 = vmatprep.subr.mxu0 0.0
  %9067 = vmatpush1.msra.mxu0 0.0
  %9068 = vmatprep.subr.mxu0 0.0
  %9069 = vmatpush1.msra.mxu0 0.0
  %9070 = vmatprep.subr.mxu0 0.0
  %9071 = vmatpush1.msra.mxu0 0.0
  %9072 = vmatprep.subr.mxu0 0.0
  %9073 = vmatpush1.msra.mxu0 0.0
  %9074 = vmatprep.subr.mxu0 0.0
  %9075 = vmatpush1.msra.mxu0 0.0
  %9076 = vmatprep.subr.mxu0 0.0
  %9077 = vmatpush1.msra.mxu0 0.0
  %9078 = vmatprep.subr.mxu0 0.0
  %9079 = vmatpush1.msra.mxu0 0.0
  %9080 = vmatprep.subr.mxu0 0.0
  %9081 = vmatpush1.msra.mxu0 0.0
  %9082 = vmatprep.subr.mxu0 0.0
  %9083 = vmatpush1.msra.mxu0 0.0
  %9084 = vmatprep.subr.mxu0 0.0
  %9085 = vmatpush1.msra.mxu0 0.0
  %9086 = vmatprep.subr.mxu0 0.0
  %9087 = vmatpush1.msra.mxu0 0.0
  %9088 = vmatprep.subr.mxu0 0.0
  %9089 = vmatpush1.msra.mxu0 %v5697
  %9090 = vmatprep.subr.mxu0 0.0
  %9091 = vmatpush1.msra.mxu0 %v5695
  %9092 = vmatprep.subr.mxu0 0.0
  %9093 = vmatpush2.msra.mxu0 0.0
  %9094 = vmatprep.subr.mxu0 0.0
  %9095 = vmatpush2.msra.mxu0 0.0
  %9096 = vmatprep.subr.mxu0 0.0
  %9097 = vmatpush2.msra.mxu0 0.0
  %9098 = vmatprep.subr.mxu0 0.0
  %9099 = vmatpush2.msra.mxu0 0.0
  %9100 = vmatprep.subr.mxu0 0.0
  %9101 = vmatpush2.msra.mxu0 0.0
  %9102 = vmatprep.subr.mxu0 0.0
  %9103 = vmatpush2.msra.mxu0 0.0
  %9104 = vmatprep.subr.mxu0 0.0
  %9105 = vmatpush2.msra.mxu0 0.0
  %9106 = vmatprep.subr.mxu0 0.0
  %9107 = vmatpush2.msra.mxu0 0.0
  %9108 = vmatprep.subr.mxu0 0.0
  %9109 = vmatpush2.msra.mxu0 0.0
  %9110 = vmatprep.subr.mxu0 0.0
  %9111 = vmatpush2.msra.mxu0 0.0
  %9112 = vmatprep.subr.mxu0 0.0
  %9113 = vmatpush2.msra.mxu0 0.0
  %9114 = vmatprep.subr.mxu0 0.0
  %9115 = vmatpush2.msra.mxu0 0.0
  %9116 = vmatprep.subr.mxu0 0.0
  %9117 = vmatpush2.msra.mxu0 0.0
  %9118 = vmatprep.subr.mxu0 0.0
  %9119 = vmatpush2.msra.mxu0 0.0
  %9120 = vmatprep.subr.mxu0 0.0
  %9121 = vmatpush2.msra.mxu0 0.0
  %9122 = vmatprep.subr.mxu0 0.0
  %9123 = vmatpush2.msra.mxu0 0.0
  %9124 = vmatprep.mubr.f32.mxu0 0.0
  %9125 = vmatmul.mubr.f32.gmra.mxu0 %v5775
  %v9126 = vpop.f32.mrf.mxu0
  %v9127 = vadd.f32 0.0, %v9126
  %v9128 = vpop.f32.mrf.mxu0
  %9129 = vdwg.mxu0
  %v9130 = vmax.f32 %v9057, %v9127
  %v9131 = vld [vmem:[%s19] sm:$0xff]
  %v9132 = vld [vmem:[%s19 + $0x8] sm:$0xff]
  %v9133 = vld [vmem:[%s19 + $0x10] sm:$0xff]
  %v9134 = vld [vmem:[%s19 + $0x18] sm:$0xff]
  %v9135 = vld [vmem:[%s19 + $0x20] sm:$0xff]
  %v9136 = vld [vmem:[%s19 + $0x28] sm:$0xff]
  %v9137 = vld [vmem:[%s19 + $0x30] sm:$0xff]
  %v9138 = vld [vmem:[%s19 + $0x38] sm:$0xff]
  %v9139 = vld [vmem:[%s19 + $0x40] sm:$0xff]
  %v9140 = vld [vmem:[%s19 + $0x48] sm:$0xff]
  %v9141 = vld [vmem:[%s19 + $0x50] sm:$0xff]
  %v9142 = vld [vmem:[%s19 + $0x58] sm:$0xff]
  %v9143 = vld [vmem:[%s19 + $0x60] sm:$0xff]
  %v9144 = vld [vmem:[%s19 + $0x68] sm:$0xff]
  %v9145 = vld [vmem:[%s19 + $0x70] sm:$0xff]
  %v9146 = vld [vmem:[%s19 + $0x78] sm:$0xff]
  %9147 = vmatprep.subr.mxu0 0.0
  %9148 = vmatpush1.msra.mxu0 %v9146
  %9149 = vmatprep.subr.mxu0 0.0
  %9150 = vmatpush1.msra.mxu0 %v9145
  %9151 = vmatprep.subr.mxu0 0.0
  %9152 = vmatpush1.msra.mxu0 %v9144
  %9153 = vmatprep.subr.mxu0 0.0
  %9154 = vmatpush1.msra.mxu0 %v9143
  %9155 = vmatprep.subr.mxu0 0.0
  %9156 = vmatpush1.msra.mxu0 %v9142
  %9157 = vmatprep.subr.mxu0 0.0
  %9158 = vmatpush1.msra.mxu0 %v9141
  %9159 = vmatprep.subr.mxu0 0.0
  %9160 = vmatpush1.msra.mxu0 %v9140
  %9161 = vmatprep.subr.mxu0 0.0
  %9162 = vmatpush1.msra.mxu0 %v9139
  %9163 = vmatprep.subr.mxu0 0.0
  %9164 = vmatpush1.msra.mxu0 %v9138
  %9165 = vmatprep.subr.mxu0 0.0
  %9166 = vmatpush1.msra.mxu0 %v9137
  %9167 = vmatprep.subr.mxu0 0.0
  %9168 = vmatpush1.msra.mxu0 %v9136
  %9169 = vmatprep.subr.mxu0 0.0
  %9170 = vmatpush1.msra.mxu0 %v9135
  %9171 = vmatprep.subr.mxu0 0.0
  %9172 = vmatpush1.msra.mxu0 %v9134
  %9173 = vmatprep.subr.mxu0 0.0
  %9174 = vmatpush1.msra.mxu0 %v9133
  %9175 = vmatprep.subr.mxu0 0.0
  %9176 = vmatpush1.msra.mxu0 %v9132
  %9177 = vmatprep.subr.mxu0 0.0
  %9178 = vmatpush1.msra.mxu0 %v9131
  %9179 = vmatprep.subr.mxu0 0.0
  %9180 = vmatpush2.msra.mxu0 0.0
  %9181 = vmatprep.subr.mxu0 0.0
  %9182 = vmatpush2.msra.mxu0 0.0
  %9183 = vmatprep.subr.mxu0 0.0
  %9184 = vmatpush2.msra.mxu0 0.0
  %9185 = vmatprep.subr.mxu0 0.0
  %9186 = vmatpush2.msra.mxu0 0.0
  %9187 = vmatprep.subr.mxu0 0.0
  %9188 = vmatpush2.msra.mxu0 0.0
  %9189 = vmatprep.subr.mxu0 0.0
  %9190 = vmatpush2.msra.mxu0 0.0
  %9191 = vmatprep.subr.mxu0 0.0
  %9192 = vmatpush2.msra.mxu0 0.0
  %9193 = vmatprep.subr.mxu0 0.0
  %9194 = vmatpush2.msra.mxu0 0.0
  %9195 = vmatprep.subr.mxu0 0.0
  %9196 = vmatpush2.msra.mxu0 0.0
  %9197 = vmatprep.subr.mxu0 0.0
  %9198 = vmatpush2.msra.mxu0 0.0
  %9199 = vmatprep.subr.mxu0 0.0
  %9200 = vmatpush2.msra.mxu0 0.0
  %9201 = vmatprep.subr.mxu0 0.0
  %9202 = vmatpush2.msra.mxu0 0.0
  %9203 = vmatprep.subr.mxu0 0.0
  %9204 = vmatpush2.msra.mxu0 0.0
  %9205 = vmatprep.subr.mxu0 0.0
  %9206 = vmatpush2.msra.mxu0 0.0
  %9207 = vmatprep.subr.mxu0 0.0
  %9208 = vmatpush2.msra.mxu0 0.0
  %9209 = vmatprep.subr.mxu0 0.0
  %9210 = vmatpush2.msra.mxu0 0.0
  %9211 = vmatprep.mubr.f32.mxu0 0.0
  %9212 = vmatmul.mubr.f32.gmra.mxu0 %v9130
  %v9213 = vpop.f32.mrf.mxu0
  %v9214 = vadd.f32 0.0, %v9213
  %v9215 = vpop.f32.mrf.mxu0
  %9216 = vdwg.mxu0
  %s9217 = scalar_lea.vmem %s19, 128
  %v9218 = vld [vmem:[%s9217] sm:$0xff]
  %v9219 = vld [vmem:[%s9217 + $0x8] sm:$0xff]
  %v9220 = vld [vmem:[%s9217 + $0x10] sm:$0xff]
  %v9221 = vld [vmem:[%s9217 + $0x18] sm:$0xff]
  %v9222 = vld [vmem:[%s9217 + $0x20] sm:$0xff]
  %v9223 = vld [vmem:[%s9217 + $0x28] sm:$0xff]
  %v9224 = vld [vmem:[%s9217 + $0x30] sm:$0xff]
  %v9225 = vld [vmem:[%s9217 + $0x38] sm:$0xff]
  %v9226 = vld [vmem:[%s9217 + $0x40] sm:$0xff]
  %v9227 = vld [vmem:[%s9217 + $0x48] sm:$0xff]
  %v9228 = vld [vmem:[%s9217 + $0x50] sm:$0xff]
  %v9229 = vld [vmem:[%s9217 + $0x58] sm:$0xff]
  %v9230 = vld [vmem:[%s9217 + $0x60] sm:$0xff]
  %v9231 = vld [vmem:[%s9217 + $0x68] sm:$0xff]
  %v9232 = vld [vmem:[%s9217 + $0x70] sm:$0xff]
  %v9233 = vld [vmem:[%s9217 + $0x78] sm:$0xff]
  %9234 = vmatprep.subr.mxu0 0.0
  %9235 = vmatpush1.msra.mxu0 %v9233
  %9236 = vmatprep.subr.mxu0 0.0
  %9237 = vmatpush1.msra.mxu0 %v9232
  %9238 = vmatprep.subr.mxu0 0.0
  %9239 = vmatpush1.msra.mxu0 %v9231
  %9240 = vmatprep.subr.mxu0 0.0
  %9241 = vmatpush1.msra.mxu0 %v9230
  %9242 = vmatprep.subr.mxu0 0.0
  %9243 = vmatpush1.msra.mxu0 %v9229
  %9244 = vmatprep.subr.mxu0 0.0
  %9245 = vmatpush1.msra.mxu0 %v9228
  %9246 = vmatprep.subr.mxu0 0.0
  %9247 = vmatpush1.msra.mxu0 %v9227
  %9248 = vmatprep.subr.mxu0 0.0
  %9249 = vmatpush1.msra.mxu0 %v9226
  %9250 = vmatprep.subr.mxu0 0.0
  %9251 = vmatpush1.msra.mxu0 %v9225
  %9252 = vmatprep.subr.mxu0 0.0
  %9253 = vmatpush1.msra.mxu0 %v9224
  %9254 = vmatprep.subr.mxu0 0.0
  %9255 = vmatpush1.msra.mxu0 %v9223
  %9256 = vmatprep.subr.mxu0 0.0
  %9257 = vmatpush1.msra.mxu0 %v9222
  %9258 = vmatprep.subr.mxu0 0.0
  %9259 = vmatpush1.msra.mxu0 %v9221
  %9260 = vmatprep.subr.mxu0 0.0
  %9261 = vmatpush1.msra.mxu0 %v9220
  %9262 = vmatprep.subr.mxu0 0.0
  %9263 = vmatpush1.msra.mxu0 %v9219
  %9264 = vmatprep.subr.mxu0 0.0
  %9265 = vmatpush1.msra.mxu0 %v9218
  %9266 = vmatprep.subr.mxu0 0.0
  %9267 = vmatpush2.msra.mxu0 0.0
  %9268 = vmatprep.subr.mxu0 0.0
  %9269 = vmatpush2.msra.mxu0 0.0
  %9270 = vmatprep.subr.mxu0 0.0
  %9271 = vmatpush2.msra.mxu0 0.0
  %9272 = vmatprep.subr.mxu0 0.0
  %9273 = vmatpush2.msra.mxu0 0.0
  %9274 = vmatprep.subr.mxu0 0.0
  %9275 = vmatpush2.msra.mxu0 0.0
  %9276 = vmatprep.subr.mxu0 0.0
  %9277 = vmatpush2.msra.mxu0 0.0
  %9278 = vmatprep.subr.mxu0 0.0
  %9279 = vmatpush2.msra.mxu0 0.0
  %9280 = vmatprep.subr.mxu0 0.0
  %9281 = vmatpush2.msra.mxu0 0.0
  %9282 = vmatprep.subr.mxu0 0.0
  %9283 = vmatpush2.msra.mxu0 0.0
  %9284 = vmatprep.subr.mxu0 0.0
  %9285 = vmatpush2.msra.mxu0 0.0
  %9286 = vmatprep.subr.mxu0 0.0
  %9287 = vmatpush2.msra.mxu0 0.0
  %9288 = vmatprep.subr.mxu0 0.0
  %9289 = vmatpush2.msra.mxu0 0.0
  %9290 = vmatprep.subr.mxu0 0.0
  %9291 = vmatpush2.msra.mxu0 0.0
  %9292 = vmatprep.subr.mxu0 0.0
  %9293 = vmatpush2.msra.mxu0 0.0
  %9294 = vmatprep.subr.mxu0 0.0
  %9295 = vmatpush2.msra.mxu0 0.0
  %9296 = vmatprep.subr.mxu0 0.0
  %9297 = vmatpush2.msra.mxu0 0.0
  %9298 = vmatprep.mubr.f32.mxu0 0.0
  %9299 = vmatmul.mubr.f32.gmra.mxu0 %v9130
  %v9300 = vpop.f32.mrf.mxu0
  %v9301 = vadd.f32 0.0, %v9300
  %v9302 = vpop.f32.mrf.mxu0
  %9303 = vdwg.mxu0
  %v9304 = vmax.f32 %v9214, %v9301
  %9305 = vmatprep.subr.mxu0 0.0
  %9306 = vmatpush1.msra.mxu0 0.0
  %9307 = vmatprep.subr.mxu0 0.0
  %9308 = vmatpush1.msra.mxu0 0.0
  %9309 = vmatprep.subr.mxu0 0.0
  %9310 = vmatpush1.msra.mxu0 0.0
  %9311 = vmatprep.subr.mxu0 0.0
  %9312 = vmatpush1.msra.mxu0 0.0
  %9313 = vmatprep.subr.mxu0 0.0
  %9314 = vmatpush1.msra.mxu0 0.0
  %9315 = vmatprep.subr.mxu0 0.0
  %9316 = vmatpush1.msra.mxu0 0.0
  %9317 = vmatprep.subr.mxu0 0.0
  %9318 = vmatpush1.msra.mxu0 0.0
  %9319 = vmatprep.subr.mxu0 0.0
  %9320 = vmatpush1.msra.mxu0 0.0
  %9321 = vmatprep.subr.mxu0 0.0
  %9322 = vmatpush1.msra.mxu0 0.0
  %9323 = vmatprep.subr.mxu0 0.0
  %9324 = vmatpush1.msra.mxu0 0.0
  %9325 = vmatprep.subr.mxu0 0.0
  %9326 = vmatpush1.msra.mxu0 0.0
  %9327 = vmatprep.subr.mxu0 0.0
  %9328 = vmatpush1.msra.mxu0 0.0
  %9329 = vmatprep.subr.mxu0 0.0
  %9330 = vmatpush1.msra.mxu0 0.0
  %9331 = vmatprep.subr.mxu0 0.0
  %9332 = vmatpush1.msra.mxu0 0.0
  %9333 = vmatprep.subr.mxu0 0.0
  %9334 = vmatpush1.msra.mxu0 0.0
  %9335 = vmatprep.subr.mxu0 0.0
  %9336 = vmatpush1.msra.mxu0 %v9304
  %9337 = vmatprep.subr.mxu0 0.0
  %9338 = vmatpush2.msra.mxu0 0.0
  %9339 = vmatprep.subr.mxu0 0.0
  %9340 = vmatpush2.msra.mxu0 0.0
  %9341 = vmatprep.subr.mxu0 0.0
  %9342 = vmatpush2.msra.mxu0 0.0
  %9343 = vmatprep.subr.mxu0 0.0
  %9344 = vmatpush2.msra.mxu0 0.0
  %9345 = vmatprep.subr.mxu0 0.0
  %9346 = vmatpush2.msra.mxu0 0.0
  %9347 = vmatprep.subr.mxu0 0.0
  %9348 = vmatpush2.msra.mxu0 0.0
  %9349 = vmatprep.subr.mxu0 0.0
  %9350 = vmatpush2.msra.mxu0 0.0
  %9351 = vmatprep.subr.mxu0 0.0
  %9352 = vmatpush2.msra.mxu0 0.0
  %9353 = vmatprep.subr.mxu0 0.0
  %9354 = vmatpush2.msra.mxu0 0.0
  %9355 = vmatprep.subr.mxu0 0.0
  %9356 = vmatpush2.msra.mxu0 0.0
  %9357 = vmatprep.subr.mxu0 0.0
  %9358 = vmatpush2.msra.mxu0 0.0
  %9359 = vmatprep.subr.mxu0 0.0
  %9360 = vmatpush2.msra.mxu0 0.0
  %9361 = vmatprep.subr.mxu0 0.0
  %9362 = vmatpush2.msra.mxu0 0.0
  %9363 = vmatprep.subr.mxu0 0.0
  %9364 = vmatpush2.msra.mxu0 0.0
  %9365 = vmatprep.subr.mxu0 0.0
  %9366 = vmatpush2.msra.mxu0 0.0
  %9367 = vmatprep.subr.mxu0 0.0
  %9368 = vmatpush2.msra.mxu0 0.0
  %9369 = vmatprep.mubr.f32.mxu0 0.0
  %9370 = vmatmul.mubr.f32.gmra.mxu0 %v6200
  %v9371 = vpop.f32.mrf.mxu0
  %v9372 = vadd.f32 0.0, %v9371
  %v9373 = vpop.f32.mrf.mxu0
  %9374 = vdwg.mxu0
  %9375 = vmatprep.subr.mxu0 0.0
  %9376 = vmatpush1.msra.mxu0 0.0
  %9377 = vmatprep.subr.mxu0 0.0
  %9378 = vmatpush1.msra.mxu0 0.0
  %9379 = vmatprep.subr.mxu0 0.0
  %9380 = vmatpush1.msra.mxu0 0.0
  %9381 = vmatprep.subr.mxu0 0.0
  %9382 = vmatpush1.msra.mxu0 0.0
  %9383 = vmatprep.subr.mxu0 0.0
  %9384 = vmatpush1.msra.mxu0 0.0
  %9385 = vmatprep.subr.mxu0 0.0
  %9386 = vmatpush1.msra.mxu0 0.0
  %9387 = vmatprep.subr.mxu0 0.0
  %9388 = vmatpush1.msra.mxu0 0.0
  %9389 = vmatprep.subr.mxu0 0.0
  %9390 = vmatpush1.msra.mxu0 0.0
  %9391 = vmatprep.subr.mxu0 0.0
  %9392 = vmatpush1.msra.mxu0 0.0
  %9393 = vmatprep.subr.mxu0 0.0
  %9394 = vmatpush1.msra.mxu0 0.0
  %9395 = vmatprep.subr.mxu0 0.0
  %9396 = vmatpush1.msra.mxu0 0.0
  %9397 = vmatprep.subr.mxu0 0.0
  %9398 = vmatpush1.msra.mxu0 0.0
  %9399 = vmatprep.subr.mxu0 0.0
  %9400 = vmatpush1.msra.mxu0 0.0
  %9401 = vmatprep.subr.mxu0 0.0
  %9402 = vmatpush1.msra.mxu0 0.0
  %9403 = vmatprep.subr.mxu0 0.0
  %9404 = vmatpush1.msra.mxu0 0.0
  %9405 = vmatprep.subr.mxu0 0.0
  %9406 = vmatpush1.msra.mxu0 %v9304
  %9407 = vmatprep.subr.mxu0 0.0
  %9408 = vmatpush2.msra.mxu0 0.0
  %9409 = vmatprep.subr.mxu0 0.0
  %9410 = vmatpush2.msra.mxu0 0.0
  %9411 = vmatprep.subr.mxu0 0.0
  %9412 = vmatpush2.msra.mxu0 0.0
  %9413 = vmatprep.subr.mxu0 0.0
  %9414 = vmatpush2.msra.mxu0 0.0
  %9415 = vmatprep.subr.mxu0 0.0
  %9416 = vmatpush2.msra.mxu0 0.0
  %9417 = vmatprep.subr.mxu0 0.0
  %9418 = vmatpush2.msra.mxu0 0.0
  %9419 = vmatprep.subr.mxu0 0.0
  %9420 = vmatpush2.msra.mxu0 0.0
  %9421 = vmatprep.subr.mxu0 0.0
  %9422 = vmatpush2.msra.mxu0 0.0
  %9423 = vmatprep.subr.mxu0 0.0
  %9424 = vmatpush2.msra.mxu0 0.0
  %9425 = vmatprep.subr.mxu0 0.0
  %9426 = vmatpush2.msra.mxu0 0.0
  %9427 = vmatprep.subr.mxu0 0.0
  %9428 = vmatpush2.msra.mxu0 0.0
  %9429 = vmatprep.subr.mxu0 0.0
  %9430 = vmatpush2.msra.mxu0 0.0
  %9431 = vmatprep.subr.mxu0 0.0
  %9432 = vmatpush2.msra.mxu0 0.0
  %9433 = vmatprep.subr.mxu0 0.0
  %9434 = vmatpush2.msra.mxu0 0.0
  %9435 = vmatprep.subr.mxu0 0.0
  %9436 = vmatpush2.msra.mxu0 0.0
  %9437 = vmatprep.subr.mxu0 0.0
  %9438 = vmatpush2.msra.mxu0 0.0
  %9439 = vmatprep.mubr.f32.mxu0 0.0
  %9440 = vmatmul.mubr.f32.gmra.mxu0 %v6275
  %v9441 = vpop.f32.mrf.mxu0
  %v9442 = vadd.f32 0.0, %v9441
  %v9443 = vpop.f32.mrf.mxu0
  %9444 = vdwg.mxu0
  %v9445 = vmax.f32 %v9372, %v9442
  %v9446 = vld [vmem:[%s20] sm:$0xff]
  %v9447 = vld [vmem:[%s20 + $0x8] sm:$0xff]
  %v9448 = vld [vmem:[%s20 + $0x10] sm:$0xff]
  %v9449 = vld [vmem:[%s20 + $0x18] sm:$0xff]
  %v9450 = vld [vmem:[%s20 + $0x20] sm:$0xff]
  %v9451 = vld [vmem:[%s20 + $0x28] sm:$0xff]
  %v9452 = vld [vmem:[%s20 + $0x30] sm:$0xff]
  %v9453 = vld [vmem:[%s20 + $0x38] sm:$0xff]
  %v9455 = vsel %vm2853, %v9445, 0
  %9457 = vmatprep.subr.mxu0 0.0
  %9458 = vmatpush1.msra.mxu0 0.0
  %9459 = vmatprep.subr.mxu0 0.0
  %9460 = vmatpush1.msra.mxu0 0.0
  %9461 = vmatprep.subr.mxu0 0.0
  %9462 = vmatpush1.msra.mxu0 0.0
  %9463 = vmatprep.subr.mxu0 0.0
  %9464 = vmatpush1.msra.mxu0 0.0
  %9465 = vmatprep.subr.mxu0 0.0
  %9466 = vmatpush1.msra.mxu0 0.0
  %9467 = vmatprep.subr.mxu0 0.0
  %9468 = vmatpush1.msra.mxu0 0.0
  %9469 = vmatprep.subr.mxu0 0.0
  %9470 = vmatpush1.msra.mxu0 0.0
  %9471 = vmatprep.subr.mxu0 0.0
  %9472 = vmatpush1.msra.mxu0 0.0
  %9473 = vmatprep.subr.mxu0 0.0
  %9474 = vmatpush1.msra.mxu0 %v9453
  %9475 = vmatprep.subr.mxu0 0.0
  %9476 = vmatpush1.msra.mxu0 %v9452
  %9477 = vmatprep.subr.mxu0 0.0
  %9478 = vmatpush1.msra.mxu0 %v9451
  %9479 = vmatprep.subr.mxu0 0.0
  %9480 = vmatpush1.msra.mxu0 %v9450
  %9481 = vmatprep.subr.mxu0 0.0
  %9482 = vmatpush1.msra.mxu0 %v9449
  %9483 = vmatprep.subr.mxu0 0.0
  %9484 = vmatpush1.msra.mxu0 %v9448
  %9485 = vmatprep.subr.mxu0 0.0
  %9486 = vmatpush1.msra.mxu0 %v9447
  %9487 = vmatprep.subr.mxu0 0.0
  %9488 = vmatpush1.msra.mxu0 %v9446
  %9489 = vmatprep.subr.mxu0 0.0
  %9490 = vmatpush2.msra.mxu0 0.0
  %9491 = vmatprep.subr.mxu0 0.0
  %9492 = vmatpush2.msra.mxu0 0.0
  %9493 = vmatprep.subr.mxu0 0.0
  %9494 = vmatpush2.msra.mxu0 0.0
  %9495 = vmatprep.subr.mxu0 0.0
  %9496 = vmatpush2.msra.mxu0 0.0
  %9497 = vmatprep.subr.mxu0 0.0
  %9498 = vmatpush2.msra.mxu0 0.0
  %9499 = vmatprep.subr.mxu0 0.0
  %9500 = vmatpush2.msra.mxu0 0.0
  %9501 = vmatprep.subr.mxu0 0.0
  %9502 = vmatpush2.msra.mxu0 0.0
  %9503 = vmatprep.subr.mxu0 0.0
  %9504 = vmatpush2.msra.mxu0 0.0
  %9505 = vmatprep.subr.mxu0 0.0
  %9506 = vmatpush2.msra.mxu0 0.0
  %9507 = vmatprep.subr.mxu0 0.0
  %9508 = vmatpush2.msra.mxu0 0.0
  %9509 = vmatprep.subr.mxu0 0.0
  %9510 = vmatpush2.msra.mxu0 0.0
  %9511 = vmatprep.subr.mxu0 0.0
  %9512 = vmatpush2.msra.mxu0 0.0
  %9513 = vmatprep.subr.mxu0 0.0
  %9514 = vmatpush2.msra.mxu0 0.0
  %9515 = vmatprep.subr.mxu0 0.0
  %9516 = vmatpush2.msra.mxu0 0.0
  %9517 = vmatprep.subr.mxu0 0.0
  %9518 = vmatpush2.msra.mxu0 0.0
  %9519 = vmatprep.subr.mxu0 0.0
  %9520 = vmatpush2.msra.mxu0 0.0
  %9521 = vmatprep.mubr.f32.mxu0 0.0
  %9522 = vmatmul.mubr.f32.gmra.mxu0 %v9455
  %v9523 = vpop.f32.mrf.mxu0
  %v9524 = vadd.f32 0.0, %v9523
  %v9525 = vpop.f32.mrf.mxu0
  %9526 = vdwg.mxu0
  %s9527 = scalar_lea.vmem %s20, 64
  %v9528 = vld [vmem:[%s9527] sm:$0xff]
  %v9529 = vld [vmem:[%s9527 + $0x8] sm:$0xff]
  %v9530 = vld [vmem:[%s9527 + $0x10] sm:$0xff]
  %v9531 = vld [vmem:[%s9527 + $0x18] sm:$0xff]
  %v9532 = vld [vmem:[%s9527 + $0x20] sm:$0xff]
  %v9533 = vld [vmem:[%s9527 + $0x28] sm:$0xff]
  %v9534 = vld [vmem:[%s9527 + $0x30] sm:$0xff]
  %v9535 = vld [vmem:[%s9527 + $0x38] sm:$0xff]
  %9536 = vmatprep.subr.mxu0 0.0
  %9537 = vmatpush1.msra.mxu0 0.0
  %9538 = vmatprep.subr.mxu0 0.0
  %9539 = vmatpush1.msra.mxu0 0.0
  %9540 = vmatprep.subr.mxu0 0.0
  %9541 = vmatpush1.msra.mxu0 0.0
  %9542 = vmatprep.subr.mxu0 0.0
  %9543 = vmatpush1.msra.mxu0 0.0
  %9544 = vmatprep.subr.mxu0 0.0
  %9545 = vmatpush1.msra.mxu0 0.0
  %9546 = vmatprep.subr.mxu0 0.0
  %9547 = vmatpush1.msra.mxu0 0.0
  %9548 = vmatprep.subr.mxu0 0.0
  %9549 = vmatpush1.msra.mxu0 0.0
  %9550 = vmatprep.subr.mxu0 0.0
  %9551 = vmatpush1.msra.mxu0 0.0
  %9552 = vmatprep.subr.mxu0 0.0
  %9553 = vmatpush1.msra.mxu0 %v9535
  %9554 = vmatprep.subr.mxu0 0.0
  %9555 = vmatpush1.msra.mxu0 %v9534
  %9556 = vmatprep.subr.mxu0 0.0
  %9557 = vmatpush1.msra.mxu0 %v9533
  %9558 = vmatprep.subr.mxu0 0.0
  %9559 = vmatpush1.msra.mxu0 %v9532
  %9560 = vmatprep.subr.mxu0 0.0
  %9561 = vmatpush1.msra.mxu0 %v9531
  %9562 = vmatprep.subr.mxu0 0.0
  %9563 = vmatpush1.msra.mxu0 %v9530
  %9564 = vmatprep.subr.mxu0 0.0
  %9565 = vmatpush1.msra.mxu0 %v9529
  %9566 = vmatprep.subr.mxu0 0.0
  %9567 = vmatpush1.msra.mxu0 %v9528
  %9568 = vmatprep.subr.mxu0 0.0
  %9569 = vmatpush2.msra.mxu0 0.0
  %9570 = vmatprep.subr.mxu0 0.0
  %9571 = vmatpush2.msra.mxu0 0.0
  %9572 = vmatprep.subr.mxu0 0.0
  %9573 = vmatpush2.msra.mxu0 0.0
  %9574 = vmatprep.subr.mxu0 0.0
  %9575 = vmatpush2.msra.mxu0 0.0
  %9576 = vmatprep.subr.mxu0 0.0
  %9577 = vmatpush2.msra.mxu0 0.0
  %9578 = vmatprep.subr.mxu0 0.0
  %9579 = vmatpush2.msra.mxu0 0.0
  %9580 = vmatprep.subr.mxu0 0.0
  %9581 = vmatpush2.msra.mxu0 0.0
  %9582 = vmatprep.subr.mxu0 0.0
  %9583 = vmatpush2.msra.mxu0 0.0
  %9584 = vmatprep.subr.mxu0 0.0
  %9585 = vmatpush2.msra.mxu0 0.0
  %9586 = vmatprep.subr.mxu0 0.0
  %9587 = vmatpush2.msra.mxu0 0.0
  %9588 = vmatprep.subr.mxu0 0.0
  %9589 = vmatpush2.msra.mxu0 0.0
  %9590 = vmatprep.subr.mxu0 0.0
  %9591 = vmatpush2.msra.mxu0 0.0
  %9592 = vmatprep.subr.mxu0 0.0
  %9593 = vmatpush2.msra.mxu0 0.0
  %9594 = vmatprep.subr.mxu0 0.0
  %9595 = vmatpush2.msra.mxu0 0.0
  %9596 = vmatprep.subr.mxu0 0.0
  %9597 = vmatpush2.msra.mxu0 0.0
  %9598 = vmatprep.subr.mxu0 0.0
  %9599 = vmatpush2.msra.mxu0 0.0
  %9600 = vmatprep.mubr.f32.mxu0 0.0
  %9601 = vmatmul.mubr.f32.gmra.mxu0 %v9455
  %v9602 = vpop.f32.mrf.mxu0
  %v9603 = vadd.f32 0.0, %v9602
  %v9604 = vpop.f32.mrf.mxu0
  %9605 = vdwg.mxu0
  %v9606 = vmax.f32 %v9524, %v9603
  %v9608 = vsel %vm2935, %v9606, 0
  %9610 = vmatprep.subr.mxu0 0.0
  %9611 = vmatpush1.msra.mxu0 0.0
  %9612 = vmatprep.subr.mxu0 0.0
  %9613 = vmatpush1.msra.mxu0 0.0
  %9614 = vmatprep.subr.mxu0 0.0
  %9615 = vmatpush1.msra.mxu0 0.0
  %9616 = vmatprep.subr.mxu0 0.0
  %9617 = vmatpush1.msra.mxu0 0.0
  %9618 = vmatprep.subr.mxu0 0.0
  %9619 = vmatpush1.msra.mxu0 0.0
  %9620 = vmatprep.subr.mxu0 0.0
  %9621 = vmatpush1.msra.mxu0 0.0
  %9622 = vmatprep.subr.mxu0 0.0
  %9623 = vmatpush1.msra.mxu0 0.0
  %9624 = vmatprep.subr.mxu0 0.0
  %9625 = vmatpush1.msra.mxu0 0.0
  %9626 = vmatprep.subr.mxu0 0.0
  %9627 = vmatpush1.msra.mxu0 0.0
  %9628 = vmatprep.subr.mxu0 0.0
  %9629 = vmatpush1.msra.mxu0 0.0
  %9630 = vmatprep.subr.mxu0 0.0
  %9631 = vmatpush1.msra.mxu0 0.0
  %9632 = vmatprep.subr.mxu0 0.0
  %9633 = vmatpush1.msra.mxu0 0.0
  %9634 = vmatprep.subr.mxu0 0.0
  %9635 = vmatpush1.msra.mxu0 0.0
  %9636 = vmatprep.subr.mxu0 0.0
  %9637 = vmatpush1.msra.mxu0 0.0
  %9638 = vmatprep.subr.mxu0 0.0
  %9639 = vmatpush1.msra.mxu0 0.0
  %9640 = vmatprep.subr.mxu0 0.0
  %9641 = vmatpush1.msra.mxu0 %v9608
  %9642 = vmatprep.subr.mxu0 0.0
  %9643 = vmatpush2.msra.mxu0 0.0
  %9644 = vmatprep.subr.mxu0 0.0
  %9645 = vmatpush2.msra.mxu0 0.0
  %9646 = vmatprep.subr.mxu0 0.0
  %9647 = vmatpush2.msra.mxu0 0.0
  %9648 = vmatprep.subr.mxu0 0.0
  %9649 = vmatpush2.msra.mxu0 0.0
  %9650 = vmatprep.subr.mxu0 0.0
  %9651 = vmatpush2.msra.mxu0 0.0
  %9652 = vmatprep.subr.mxu0 0.0
  %9653 = vmatpush2.msra.mxu0 0.0
  %9654 = vmatprep.subr.mxu0 0.0
  %9655 = vmatpush2.msra.mxu0 0.0
  %9656 = vmatprep.subr.mxu0 0.0
  %9657 = vmatpush2.msra.mxu0 0.0
  %9658 = vmatprep.subr.mxu0 0.0
  %9659 = vmatpush2.msra.mxu0 0.0
  %9660 = vmatprep.subr.mxu0 0.0
  %9661 = vmatpush2.msra.mxu0 0.0
  %9662 = vmatprep.subr.mxu0 0.0
  %9663 = vmatpush2.msra.mxu0 0.0
  %9664 = vmatprep.subr.mxu0 0.0
  %9665 = vmatpush2.msra.mxu0 0.0
  %9666 = vmatprep.subr.mxu0 0.0
  %9667 = vmatpush2.msra.mxu0 0.0
  %9668 = vmatprep.subr.mxu0 0.0
  %9669 = vmatpush2.msra.mxu0 0.0
  %9670 = vmatprep.subr.mxu0 0.0
  %9671 = vmatpush2.msra.mxu0 0.0
  %9672 = vmatprep.subr.mxu0 0.0
  %9673 = vmatpush2.msra.mxu0 0.0
  %9674 = vmatprep.mubr.f32.mxu0 0.0
  %9675 = vmatmul.mubr.f32.gmra.mxu0 %v6571
  %v9676 = vpop.f32.mrf.mxu0
  %v9677 = vadd.f32 0.0, %v9676
  %v9678 = vpop.f32.mrf.mxu0
  %9679 = vdwg.mxu0
  %9680 = vmatprep.subr.mxu0 0.0
  %9681 = vmatpush1.msra.mxu0 0.0
  %9682 = vmatprep.subr.mxu0 0.0
  %9683 = vmatpush1.msra.mxu0 0.0
  %9684 = vmatprep.subr.mxu0 0.0
  %9685 = vmatpush1.msra.mxu0 0.0
  %9686 = vmatprep.subr.mxu0 0.0
  %9687 = vmatpush1.msra.mxu0 0.0
  %9688 = vmatprep.subr.mxu0 0.0
  %9689 = vmatpush1.msra.mxu0 0.0
  %9690 = vmatprep.subr.mxu0 0.0
  %9691 = vmatpush1.msra.mxu0 0.0
  %9692 = vmatprep.subr.mxu0 0.0
  %9693 = vmatpush1.msra.mxu0 0.0
  %9694 = vmatprep.subr.mxu0 0.0
  %9695 = vmatpush1.msra.mxu0 0.0
  %9696 = vmatprep.subr.mxu0 0.0
  %9697 = vmatpush1.msra.mxu0 0.0
  %9698 = vmatprep.subr.mxu0 0.0
  %9699 = vmatpush1.msra.mxu0 0.0
  %9700 = vmatprep.subr.mxu0 0.0
  %9701 = vmatpush1.msra.mxu0 0.0
  %9702 = vmatprep.subr.mxu0 0.0
  %9703 = vmatpush1.msra.mxu0 0.0
  %9704 = vmatprep.subr.mxu0 0.0
  %9705 = vmatpush1.msra.mxu0 0.0
  %9706 = vmatprep.subr.mxu0 0.0
  %9707 = vmatpush1.msra.mxu0 0.0
  %9708 = vmatprep.subr.mxu0 0.0
  %9709 = vmatpush1.msra.mxu0 0.0
  %9710 = vmatprep.subr.mxu0 0.0
  %9711 = vmatpush1.msra.mxu0 %v9608
  %9712 = vmatprep.subr.mxu0 0.0
  %9713 = vmatpush2.msra.mxu0 0.0
  %9714 = vmatprep.subr.mxu0 0.0
  %9715 = vmatpush2.msra.mxu0 0.0
  %9716 = vmatprep.subr.mxu0 0.0
  %9717 = vmatpush2.msra.mxu0 0.0
  %9718 = vmatprep.subr.mxu0 0.0
  %9719 = vmatpush2.msra.mxu0 0.0
  %9720 = vmatprep.subr.mxu0 0.0
  %9721 = vmatpush2.msra.mxu0 0.0
  %9722 = vmatprep.subr.mxu0 0.0
  %9723 = vmatpush2.msra.mxu0 0.0
  %9724 = vmatprep.subr.mxu0 0.0
  %9725 = vmatpush2.msra.mxu0 0.0
  %9726 = vmatprep.subr.mxu0 0.0
  %9727 = vmatpush2.msra.mxu0 0.0
  %9728 = vmatprep.subr.mxu0 0.0
  %9729 = vmatpush2.msra.mxu0 0.0
  %9730 = vmatprep.subr.mxu0 0.0
  %9731 = vmatpush2.msra.mxu0 0.0
  %9732 = vmatprep.subr.mxu0 0.0
  %9733 = vmatpush2.msra.mxu0 0.0
  %9734 = vmatprep.subr.mxu0 0.0
  %9735 = vmatpush2.msra.mxu0 0.0
  %9736 = vmatprep.subr.mxu0 0.0
  %9737 = vmatpush2.msra.mxu0 0.0
  %9738 = vmatprep.subr.mxu0 0.0
  %9739 = vmatpush2.msra.mxu0 0.0
  %9740 = vmatprep.subr.mxu0 0.0
  %9741 = vmatpush2.msra.mxu0 0.0
  %9742 = vmatprep.subr.mxu0 0.0
  %9743 = vmatpush2.msra.mxu0 0.0
  %9744 = vmatprep.mubr.f32.mxu0 0.0
  %9745 = vmatmul.mubr.f32.gmra.mxu0 %v6649
  %v9746 = vpop.f32.mrf.mxu0
  %v9747 = vadd.f32 0.0, %v9746
  %v9748 = vpop.f32.mrf.mxu0
  %9749 = vdwg.mxu0
  %v9750 = vmax.f32 %v9677, %v9747
  %v9751 = vld [vmem:[%s21] sm:$0xff]
  %v9752 = vld [vmem:[%s21 + $0x8] sm:$0xff]
  %v9753 = vld [vmem:[%s21 + $0x10] sm:$0xff]
  %v9754 = vld [vmem:[%s21 + $0x18] sm:$0xff]
  %v9756 = vsel %vm6804, %v9750, 0
  %9758 = vmatprep.subr.mxu0 0.0
  %9759 = vmatpush1.msra.mxu0 0.0
  %9760 = vmatprep.subr.mxu0 0.0
  %9761 = vmatpush1.msra.mxu0 0.0
  %9762 = vmatprep.subr.mxu0 0.0
  %9763 = vmatpush1.msra.mxu0 0.0
  %9764 = vmatprep.subr.mxu0 0.0
  %9765 = vmatpush1.msra.mxu0 0.0
  %9766 = vmatprep.subr.mxu0 0.0
  %9767 = vmatpush1.msra.mxu0 0.0
  %9768 = vmatprep.subr.mxu0 0.0
  %9769 = vmatpush1.msra.mxu0 0.0
  %9770 = vmatprep.subr.mxu0 0.0
  %9771 = vmatpush1.msra.mxu0 0.0
  %9772 = vmatprep.subr.mxu0 0.0
  %9773 = vmatpush1.msra.mxu0 0.0
  %9774 = vmatprep.subr.mxu0 0.0
  %9775 = vmatpush1.msra.mxu0 0.0
  %9776 = vmatprep.subr.mxu0 0.0
  %9777 = vmatpush1.msra.mxu0 0.0
  %9778 = vmatprep.subr.mxu0 0.0
  %9779 = vmatpush1.msra.mxu0 0.0
  %9780 = vmatprep.subr.mxu0 0.0
  %9781 = vmatpush1.msra.mxu0 0.0
  %9782 = vmatprep.subr.mxu0 0.0
  %9783 = vmatpush1.msra.mxu0 %v9754
  %9784 = vmatprep.subr.mxu0 0.0
  %9785 = vmatpush1.msra.mxu0 %v9753
  %9786 = vmatprep.subr.mxu0 0.0
  %9787 = vmatpush1.msra.mxu0 %v9752
  %9788 = vmatprep.subr.mxu0 0.0
  %9789 = vmatpush1.msra.mxu0 %v9751
  %9790 = vmatprep.subr.mxu0 0.0
  %9791 = vmatpush2.msra.mxu0 0.0
  %9792 = vmatprep.subr.mxu0 0.0
  %9793 = vmatpush2.msra.mxu0 0.0
  %9794 = vmatprep.subr.mxu0 0.0
  %9795 = vmatpush2.msra.mxu0 0.0
  %9796 = vmatprep.subr.mxu0 0.0
  %9797 = vmatpush2.msra.mxu0 0.0
  %9798 = vmatprep.subr.mxu0 0.0
  %9799 = vmatpush2.msra.mxu0 0.0
  %9800 = vmatprep.subr.mxu0 0.0
  %9801 = vmatpush2.msra.mxu0 0.0
  %9802 = vmatprep.subr.mxu0 0.0
  %9803 = vmatpush2.msra.mxu0 0.0
  %9804 = vmatprep.subr.mxu0 0.0
  %9805 = vmatpush2.msra.mxu0 0.0
  %9806 = vmatprep.subr.mxu0 0.0
  %9807 = vmatpush2.msra.mxu0 0.0
  %9808 = vmatprep.subr.mxu0 0.0
  %9809 = vmatpush2.msra.mxu0 0.0
  %9810 = vmatprep.subr.mxu0 0.0
  %9811 = vmatpush2.msra.mxu0 0.0
  %9812 = vmatprep.subr.mxu0 0.0
  %9813 = vmatpush2.msra.mxu0 0.0
  %9814 = vmatprep.subr.mxu0 0.0
  %9815 = vmatpush2.msra.mxu0 0.0
  %9816 = vmatprep.subr.mxu0 0.0
  %9817 = vmatpush2.msra.mxu0 0.0
  %9818 = vmatprep.subr.mxu0 0.0
  %9819 = vmatpush2.msra.mxu0 0.0
  %9820 = vmatprep.subr.mxu0 0.0
  %9821 = vmatpush2.msra.mxu0 0.0
  %9822 = vmatprep.mubr.f32.mxu0 0.0
  %9823 = vmatmul.mubr.f32.gmra.mxu0 %v9756
  %v9824 = vpop.f32.mrf.mxu0
  %v9825 = vadd.f32 0.0, %v9824
  %v9826 = vpop.f32.mrf.mxu0
  %9827 = vdwg.mxu0
  %s9828 = scalar_lea.vmem %s21, 32
  %v9829 = vld [vmem:[%s9828] sm:$0xff]
  %v9830 = vld [vmem:[%s9828 + $0x8] sm:$0xff]
  %v9831 = vld [vmem:[%s9828 + $0x10] sm:$0xff]
  %v9832 = vld [vmem:[%s9828 + $0x18] sm:$0xff]
  %9833 = vmatprep.subr.mxu0 0.0
  %9834 = vmatpush1.msra.mxu0 0.0
  %9835 = vmatprep.subr.mxu0 0.0
  %9836 = vmatpush1.msra.mxu0 0.0
  %9837 = vmatprep.subr.mxu0 0.0
  %9838 = vmatpush1.msra.mxu0 0.0
  %9839 = vmatprep.subr.mxu0 0.0
  %9840 = vmatpush1.msra.mxu0 0.0
  %9841 = vmatprep.subr.mxu0 0.0
  %9842 = vmatpush1.msra.mxu0 0.0
  %9843 = vmatprep.subr.mxu0 0.0
  %9844 = vmatpush1.msra.mxu0 0.0
  %9845 = vmatprep.subr.mxu0 0.0
  %9846 = vmatpush1.msra.mxu0 0.0
  %9847 = vmatprep.subr.mxu0 0.0
  %9848 = vmatpush1.msra.mxu0 0.0
  %9849 = vmatprep.subr.mxu0 0.0
  %9850 = vmatpush1.msra.mxu0 0.0
  %9851 = vmatprep.subr.mxu0 0.0
  %9852 = vmatpush1.msra.mxu0 0.0
  %9853 = vmatprep.subr.mxu0 0.0
  %9854 = vmatpush1.msra.mxu0 0.0
  %9855 = vmatprep.subr.mxu0 0.0
  %9856 = vmatpush1.msra.mxu0 0.0
  %9857 = vmatprep.subr.mxu0 0.0
  %9858 = vmatpush1.msra.mxu0 %v9832
  %9859 = vmatprep.subr.mxu0 0.0
  %9860 = vmatpush1.msra.mxu0 %v9831
  %9861 = vmatprep.subr.mxu0 0.0
  %9862 = vmatpush1.msra.mxu0 %v9830
  %9863 = vmatprep.subr.mxu0 0.0
  %9864 = vmatpush1.msra.mxu0 %v9829
  %9865 = vmatprep.subr.mxu0 0.0
  %9866 = vmatpush2.msra.mxu0 0.0
  %9867 = vmatprep.subr.mxu0 0.0
  %9868 = vmatpush2.msra.mxu0 0.0
  %9869 = vmatprep.subr.mxu0 0.0
  %9870 = vmatpush2.msra.mxu0 0.0
  %9871 = vmatprep.subr.mxu0 0.0
  %9872 = vmatpush2.msra.mxu0 0.0
  %9873 = vmatprep.subr.mxu0 0.0
  %9874 = vmatpush2.msra.mxu0 0.0
  %9875 = vmatprep.subr.mxu0 0.0
  %9876 = vmatpush2.msra.mxu0 0.0
  %9877 = vmatprep.subr.mxu0 0.0
  %9878 = vmatpush2.msra.mxu0 0.0
  %9879 = vmatprep.subr.mxu0 0.0
  %9880 = vmatpush2.msra.mxu0 0.0
  %9881 = vmatprep.subr.mxu0 0.0
  %9882 = vmatpush2.msra.mxu0 0.0
  %9883 = vmatprep.subr.mxu0 0.0
  %9884 = vmatpush2.msra.mxu0 0.0
  %9885 = vmatprep.subr.mxu0 0.0
  %9886 = vmatpush2.msra.mxu0 0.0
  %9887 = vmatprep.subr.mxu0 0.0
  %9888 = vmatpush2.msra.mxu0 0.0
  %9889 = vmatprep.subr.mxu0 0.0
  %9890 = vmatpush2.msra.mxu0 0.0
  %9891 = vmatprep.subr.mxu0 0.0
  %9892 = vmatpush2.msra.mxu0 0.0
  %9893 = vmatprep.subr.mxu0 0.0
  %9894 = vmatpush2.msra.mxu0 0.0
  %9895 = vmatprep.subr.mxu0 0.0
  %9896 = vmatpush2.msra.mxu0 0.0
  %9897 = vmatprep.mubr.f32.mxu0 0.0
  %9898 = vmatmul.mubr.f32.gmra.mxu0 %v9756
  %v9899 = vpop.f32.mrf.mxu0
  %v9900 = vadd.f32 0.0, %v9899
  %v9901 = vpop.f32.mrf.mxu0
  %9902 = vdwg.mxu0
  %v9903 = vmax.f32 %v9825, %v9900
  %v9904 = vmul.f32 %v6895, %v9903
  %v9905 = vsub.f32 1.0, %v9903
  %v9906 = vmul.f32 %v8404, %v9905
  %v9907 = vadd.f32 %v9904, %v9906
  %v9908 = vmul.f32 %v7109, %v9606
  %v9909 = vsub.f32 1.0, %v9606
  %v9910 = vmul.f32 %v8600, %v9909
  %v9911 = vadd.f32 %v9908, %v9910
  %v9912 = vmul.f32 %v7326, %v9304
  %v9913 = vsub.f32 1.0, %v9304
  %v9914 = vmul.f32 %v8792, %v9913
  %v9915 = vadd.f32 %v9912, %v9914
  %v9916 = vmul.f32 %v7587, %v5695
  %v9917 = vmul.f32 %v7588, %v5697
  %v9918 = vsub.f32 1.0, %v5695
  %v9919 = vsub.f32 1.0, %v5697
  %v9920 = vmul.f32 %v8988, %v9918
  %v9921 = vmul.f32 %v8989, %v9919
  %v9922 = vadd.f32 %v9916, %v9920
  %v9923 = vadd.f32 %v9917, %v9921
  %v9924 = vpack.c.bf16 %v9907, %v9907
  %v9926 = vsel %vm92, %v9924, 0
  %9928 = vmatprep.subr.bf16.mxu0 0
  %9929 = vmatpush1.bf16.msra.mxu0 0
  %9930 = vmatprep.subr.bf16.mxu0 0
  %9931 = vmatpush1.bf16.msra.mxu0 0
  %9932 = vmatprep.subr.bf16.mxu0 0
  %9933 = vmatpush1.bf16.msra.mxu0 0
  %9934 = vmatprep.subr.bf16.mxu0 0
  %9935 = vmatpush1.bf16.msra.mxu0 0
  %9936 = vmatprep.subr.bf16.mxu0 0
  %9937 = vmatpush1.bf16.msra.mxu0 0
  %9938 = vmatprep.subr.bf16.mxu0 0
  %9939 = vmatpush1.bf16.msra.mxu0 0
  %9940 = vmatprep.subr.bf16.mxu0 0
  %9941 = vmatpush1.bf16.msra.mxu0 0
  %9942 = vmatprep.subr.bf16.mxu0 0
  %9943 = vmatpush1.bf16.msra.mxu0 %v6907
  %9944 = vmatprep.subr.bf16.mxu0 0
  %9945 = vmatpush2.bf16.msra.mxu0 0
  %9946 = vmatprep.subr.bf16.mxu0 0
  %9947 = vmatpush2.bf16.msra.mxu0 0
  %9948 = vmatprep.subr.bf16.mxu0 0
  %9949 = vmatpush2.bf16.msra.mxu0 0
  %9950 = vmatprep.subr.bf16.mxu0 0
  %9951 = vmatpush2.bf16.msra.mxu0 0
  %9952 = vmatprep.subr.bf16.mxu0 0
  %9953 = vmatpush2.bf16.msra.mxu0 0
  %9954 = vmatprep.subr.bf16.mxu0 0
  %9955 = vmatpush2.bf16.msra.mxu0 0
  %9956 = vmatprep.subr.bf16.mxu0 0
  %9957 = vmatpush2.bf16.msra.mxu0 0
  %9958 = vmatprep.subr.bf16.mxu0 0
  %9959 = vmatpush2.bf16.msra.mxu0 0
  %9960 = vmatprep.mubr.bf16.mxu0 0
  %9961 = vmatmul.mubr.bf16.gmra.mxu0 %v9926
  %v9962 = vpop.f32.mrf.mxu0
  %v9963 = vadd.f32 0.0, %v9962
  %v9964 = vpop.f32.mrf.mxu0
  %v9965 = vpop.f32.mrf.mxu0
  %v9966 = vpop.f32.mrf.mxu0
  %9967 = vdwg.mxu0
  %9969 = vrot.lane.b32.xlu0 %v9963, 96
  %v9970 = vpop.permute.xlu0 %9969
  %v9971 = vsel %vm2965, %v9970, 0
  %9973 = vmatprep.subr.mxu0 0.0
  %9974 = vmatpush1.msra.mxu0 0.0
  %9975 = vmatprep.subr.mxu0 0.0
  %9976 = vmatpush1.msra.mxu0 0.0
  %9977 = vmatprep.subr.mxu0 0.0
  %9978 = vmatpush1.msra.mxu0 0.0
  %9979 = vmatprep.subr.mxu0 0.0
  %9980 = vmatpush1.msra.mxu0 0.0
  %9981 = vmatprep.subr.mxu0 0.0
  %9982 = vmatpush1.msra.mxu0 0.0
  %9983 = vmatprep.subr.mxu0 0.0
  %9984 = vmatpush1.msra.mxu0 0.0
  %9985 = vmatprep.subr.mxu0 0.0
  %9986 = vmatpush1.msra.mxu0 0.0
  %9987 = vmatprep.subr.mxu0 0.0
  %9988 = vmatpush1.msra.mxu0 0.0
  %9989 = vmatprep.subr.mxu0 0.0
  %9990 = vmatpush1.msra.mxu0 0.0
  %9991 = vmatprep.subr.mxu0 0.0
  %9992 = vmatpush1.msra.mxu0 0.0
  %9993 = vmatprep.subr.mxu0 0.0
  %9994 = vmatpush1.msra.mxu0 0.0
  %9995 = vmatprep.subr.mxu0 0.0
  %9996 = vmatpush1.msra.mxu0 0.0
  %9997 = vmatprep.subr.mxu0 0.0
  %9998 = vmatpush1.msra.mxu0 0.0
  %9999 = vmatprep.subr.mxu0 0.0
  %10000 = vmatpush1.msra.mxu0 0.0
  %10001 = vmatprep.subr.mxu0 0.0
  %10002 = vmatpush1.msra.mxu0 0.0
  %10003 = vmatprep.subr.mxu0 0.0
  %10004 = vmatpush1.msra.mxu0 %v9971
  %10005 = vmatprep.subr.mxu0 0.0
  %10006 = vmatpush2.msra.mxu0 0.0
  %10007 = vmatprep.subr.mxu0 0.0
  %10008 = vmatpush2.msra.mxu0 0.0
  %10009 = vmatprep.subr.mxu0 0.0
  %10010 = vmatpush2.msra.mxu0 0.0
  %10011 = vmatprep.subr.mxu0 0.0
  %10012 = vmatpush2.msra.mxu0 0.0
  %10013 = vmatprep.subr.mxu0 0.0
  %10014 = vmatpush2.msra.mxu0 0.0
  %10015 = vmatprep.subr.mxu0 0.0
  %10016 = vmatpush2.msra.mxu0 0.0
  %10017 = vmatprep.subr.mxu0 0.0
  %10018 = vmatpush2.msra.mxu0 0.0
  %10019 = vmatprep.subr.mxu0 0.0
  %10020 = vmatpush2.msra.mxu0 0.0
  %10021 = vmatprep.subr.mxu0 0.0
  %10022 = vmatpush2.msra.mxu0 0.0
  %10023 = vmatprep.subr.mxu0 0.0
  %10024 = vmatpush2.msra.mxu0 0.0
  %10025 = vmatprep.subr.mxu0 0.0
  %10026 = vmatpush2.msra.mxu0 0.0
  %10027 = vmatprep.subr.mxu0 0.0
  %10028 = vmatpush2.msra.mxu0 0.0
  %10029 = vmatprep.subr.mxu0 0.0
  %10030 = vmatpush2.msra.mxu0 0.0
  %10031 = vmatprep.subr.mxu0 0.0
  %10032 = vmatpush2.msra.mxu0 0.0
  %10033 = vmatprep.subr.mxu0 0.0
  %10034 = vmatpush2.msra.mxu0 0.0
  %10035 = vmatprep.subr.mxu0 0.0
  %10036 = vmatpush2.msra.mxu0 0.0
  %10037 = vmatprep.mubr.f32.mxu0 0.0
  %10038 = vmatmul.mubr.f32.gmra.mxu0 %v6960
  %v10039 = vpop.f32.mrf.mxu0
  %v10040 = vadd.f32 0.0, %v10039
  %v10041 = vpop.f32.mrf.mxu0
  %10042 = vdwg.mxu0
  %v10043 = vsel %vm2965, %v9963, 0
  %10045 = vmatprep.subr.mxu0 0.0
  %10046 = vmatpush1.msra.mxu0 0.0
  %10047 = vmatprep.subr.mxu0 0.0
  %10048 = vmatpush1.msra.mxu0 0.0
  %10049 = vmatprep.subr.mxu0 0.0
  %10050 = vmatpush1.msra.mxu0 0.0
  %10051 = vmatprep.subr.mxu0 0.0
  %10052 = vmatpush1.msra.mxu0 0.0
  %10053 = vmatprep.subr.mxu0 0.0
  %10054 = vmatpush1.msra.mxu0 0.0
  %10055 = vmatprep.subr.mxu0 0.0
  %10056 = vmatpush1.msra.mxu0 0.0
  %10057 = vmatprep.subr.mxu0 0.0
  %10058 = vmatpush1.msra.mxu0 0.0
  %10059 = vmatprep.subr.mxu0 0.0
  %10060 = vmatpush1.msra.mxu0 0.0
  %10061 = vmatprep.subr.mxu0 0.0
  %10062 = vmatpush1.msra.mxu0 0.0
  %10063 = vmatprep.subr.mxu0 0.0
  %10064 = vmatpush1.msra.mxu0 0.0
  %10065 = vmatprep.subr.mxu0 0.0
  %10066 = vmatpush1.msra.mxu0 0.0
  %10067 = vmatprep.subr.mxu0 0.0
  %10068 = vmatpush1.msra.mxu0 0.0
  %10069 = vmatprep.subr.mxu0 0.0
  %10070 = vmatpush1.msra.mxu0 0.0
  %10071 = vmatprep.subr.mxu0 0.0
  %10072 = vmatpush1.msra.mxu0 0.0
  %10073 = vmatprep.subr.mxu0 0.0
  %10074 = vmatpush1.msra.mxu0 0.0
  %10075 = vmatprep.subr.mxu0 0.0
  %10076 = vmatpush1.msra.mxu0 %v10043
  %10077 = vmatprep.subr.mxu0 0.0
  %10078 = vmatpush2.msra.mxu0 0.0
  %10079 = vmatprep.subr.mxu0 0.0
  %10080 = vmatpush2.msra.mxu0 0.0
  %10081 = vmatprep.subr.mxu0 0.0
  %10082 = vmatpush2.msra.mxu0 0.0
  %10083 = vmatprep.subr.mxu0 0.0
  %10084 = vmatpush2.msra.mxu0 0.0
  %10085 = vmatprep.subr.mxu0 0.0
  %10086 = vmatpush2.msra.mxu0 0.0
  %10087 = vmatprep.subr.mxu0 0.0
  %10088 = vmatpush2.msra.mxu0 0.0
  %10089 = vmatprep.subr.mxu0 0.0
  %10090 = vmatpush2.msra.mxu0 0.0
  %10091 = vmatprep.subr.mxu0 0.0
  %10092 = vmatpush2.msra.mxu0 0.0
  %10093 = vmatprep.subr.mxu0 0.0
  %10094 = vmatpush2.msra.mxu0 0.0
  %10095 = vmatprep.subr.mxu0 0.0
  %10096 = vmatpush2.msra.mxu0 0.0
  %10097 = vmatprep.subr.mxu0 0.0
  %10098 = vmatpush2.msra.mxu0 0.0
  %10099 = vmatprep.subr.mxu0 0.0
  %10100 = vmatpush2.msra.mxu0 0.0
  %10101 = vmatprep.subr.mxu0 0.0
  %10102 = vmatpush2.msra.mxu0 0.0
  %10103 = vmatprep.subr.mxu0 0.0
  %10104 = vmatpush2.msra.mxu0 0.0
  %10105 = vmatprep.subr.mxu0 0.0
  %10106 = vmatpush2.msra.mxu0 0.0
  %10107 = vmatprep.subr.mxu0 0.0
  %10108 = vmatpush2.msra.mxu0 0.0
  %10109 = vmatprep.mubr.f32.mxu0 0.0
  %10110 = vmatmul.mubr.f32.gmra.mxu0 %v7035
  %v10111 = vpop.f32.mrf.mxu0
  %v10112 = vadd.f32 %v10040, %v10111
  %v10113 = vpop.f32.mrf.mxu0
  %10114 = vdwg.mxu0
  %v10115 = vadd.f32 %v10112, %v9911
  %v10116 = vpack.c.bf16 %v10115, %v10115
  %v10118 = vsel %vm6804, %v10116, 0
  %10120 = vmatprep.subr.bf16.mxu0 0
  %10121 = vmatpush1.bf16.msra.mxu0 0
  %10122 = vmatprep.subr.bf16.mxu0 0
  %10123 = vmatpush1.bf16.msra.mxu0 0
  %10124 = vmatprep.subr.bf16.mxu0 0
  %10125 = vmatpush1.bf16.msra.mxu0 0
  %10126 = vmatprep.subr.bf16.mxu0 0
  %10127 = vmatpush1.bf16.msra.mxu0 0
  %10128 = vmatprep.subr.bf16.mxu0 0
  %10129 = vmatpush1.bf16.msra.mxu0 0
  %10130 = vmatprep.subr.bf16.mxu0 0
  %10131 = vmatpush1.bf16.msra.mxu0 0
  %10132 = vmatprep.subr.bf16.mxu0 0
  %10133 = vmatpush1.bf16.msra.mxu0 %v7124
  %10134 = vmatprep.subr.bf16.mxu0 0
  %10135 = vmatpush1.bf16.msra.mxu0 %v7123
  %10136 = vmatprep.subr.bf16.mxu0 0
  %10137 = vmatpush2.bf16.msra.mxu0 0
  %10138 = vmatprep.subr.bf16.mxu0 0
  %10139 = vmatpush2.bf16.msra.mxu0 0
  %10140 = vmatprep.subr.bf16.mxu0 0
  %10141 = vmatpush2.bf16.msra.mxu0 0
  %10142 = vmatprep.subr.bf16.mxu0 0
  %10143 = vmatpush2.bf16.msra.mxu0 0
  %10144 = vmatprep.subr.bf16.mxu0 0
  %10145 = vmatpush2.bf16.msra.mxu0 0
  %10146 = vmatprep.subr.bf16.mxu0 0
  %10147 = vmatpush2.bf16.msra.mxu0 0
  %10148 = vmatprep.subr.bf16.mxu0 0
  %10149 = vmatpush2.bf16.msra.mxu0 0
  %10150 = vmatprep.subr.bf16.mxu0 0
  %10151 = vmatpush2.bf16.msra.mxu0 0
  %10152 = vmatprep.mubr.bf16.mxu0 0
  %10153 = vmatmul.mubr.bf16.gmra.mxu0 %v10118
  %v10154 = vpop.f32.mrf.mxu0
  %v10155 = vadd.f32 0.0, %v10154
  %v10156 = vpop.f32.mrf.mxu0
  %v10157 = vpop.f32.mrf.mxu0
  %v10158 = vpop.f32.mrf.mxu0
  %10159 = vdwg.mxu0
  %10161 = vrot.lane.b32.xlu0 %v10155, 64
  %v10162 = vpop.permute.xlu0 %10161
  %v10163 = vsel %vm2935, %v10162, 0
  %10165 = vmatprep.subr.mxu0 0.0
  %10166 = vmatpush1.msra.mxu0 0.0
  %10167 = vmatprep.subr.mxu0 0.0
  %10168 = vmatpush1.msra.mxu0 0.0
  %10169 = vmatprep.subr.mxu0 0.0
  %10170 = vmatpush1.msra.mxu0 0.0
  %10171 = vmatprep.subr.mxu0 0.0
  %10172 = vmatpush1.msra.mxu0 0.0
  %10173 = vmatprep.subr.mxu0 0.0
  %10174 = vmatpush1.msra.mxu0 0.0
  %10175 = vmatprep.subr.mxu0 0.0
  %10176 = vmatpush1.msra.mxu0 0.0
  %10177 = vmatprep.subr.mxu0 0.0
  %10178 = vmatpush1.msra.mxu0 0.0
  %10179 = vmatprep.subr.mxu0 0.0
  %10180 = vmatpush1.msra.mxu0 0.0
  %10181 = vmatprep.subr.mxu0 0.0
  %10182 = vmatpush1.msra.mxu0 0.0
  %10183 = vmatprep.subr.mxu0 0.0
  %10184 = vmatpush1.msra.mxu0 0.0
  %10185 = vmatprep.subr.mxu0 0.0
  %10186 = vmatpush1.msra.mxu0 0.0
  %10187 = vmatprep.subr.mxu0 0.0
  %10188 = vmatpush1.msra.mxu0 0.0
  %10189 = vmatprep.subr.mxu0 0.0
  %10190 = vmatpush1.msra.mxu0 0.0
  %10191 = vmatprep.subr.mxu0 0.0
  %10192 = vmatpush1.msra.mxu0 0.0
  %10193 = vmatprep.subr.mxu0 0.0
  %10194 = vmatpush1.msra.mxu0 0.0
  %10195 = vmatprep.subr.mxu0 0.0
  %10196 = vmatpush1.msra.mxu0 %v10163
  %10197 = vmatprep.subr.mxu0 0.0
  %10198 = vmatpush2.msra.mxu0 0.0
  %10199 = vmatprep.subr.mxu0 0.0
  %10200 = vmatpush2.msra.mxu0 0.0
  %10201 = vmatprep.subr.mxu0 0.0
  %10202 = vmatpush2.msra.mxu0 0.0
  %10203 = vmatprep.subr.mxu0 0.0
  %10204 = vmatpush2.msra.mxu0 0.0
  %10205 = vmatprep.subr.mxu0 0.0
  %10206 = vmatpush2.msra.mxu0 0.0
  %10207 = vmatprep.subr.mxu0 0.0
  %10208 = vmatpush2.msra.mxu0 0.0
  %10209 = vmatprep.subr.mxu0 0.0
  %10210 = vmatpush2.msra.mxu0 0.0
  %10211 = vmatprep.subr.mxu0 0.0
  %10212 = vmatpush2.msra.mxu0 0.0
  %10213 = vmatprep.subr.mxu0 0.0
  %10214 = vmatpush2.msra.mxu0 0.0
  %10215 = vmatprep.subr.mxu0 0.0
  %10216 = vmatpush2.msra.mxu0 0.0
  %10217 = vmatprep.subr.mxu0 0.0
  %10218 = vmatpush2.msra.mxu0 0.0
  %10219 = vmatprep.subr.mxu0 0.0
  %10220 = vmatpush2.msra.mxu0 0.0
  %10221 = vmatprep.subr.mxu0 0.0
  %10222 = vmatpush2.msra.mxu0 0.0
  %10223 = vmatprep.subr.mxu0 0.0
  %10224 = vmatpush2.msra.mxu0 0.0
  %10225 = vmatprep.subr.mxu0 0.0
  %10226 = vmatpush2.msra.mxu0 0.0
  %10227 = vmatprep.subr.mxu0 0.0
  %10228 = vmatpush2.msra.mxu0 0.0
  %10229 = vmatprep.mubr.f32.mxu0 0.0
  %10230 = vmatmul.mubr.f32.gmra.mxu0 %v7177
  %v10231 = vpop.f32.mrf.mxu0
  %v10232 = vadd.f32 0.0, %v10231
  %v10233 = vpop.f32.mrf.mxu0
  %10234 = vdwg.mxu0
  %v10235 = vsel %vm2935, %v10155, 0
  %10237 = vmatprep.subr.mxu0 0.0
  %10238 = vmatpush1.msra.mxu0 0.0
  %10239 = vmatprep.subr.mxu0 0.0
  %10240 = vmatpush1.msra.mxu0 0.0
  %10241 = vmatprep.subr.mxu0 0.0
  %10242 = vmatpush1.msra.mxu0 0.0
  %10243 = vmatprep.subr.mxu0 0.0
  %10244 = vmatpush1.msra.mxu0 0.0
  %10245 = vmatprep.subr.mxu0 0.0
  %10246 = vmatpush1.msra.mxu0 0.0
  %10247 = vmatprep.subr.mxu0 0.0
  %10248 = vmatpush1.msra.mxu0 0.0
  %10249 = vmatprep.subr.mxu0 0.0
  %10250 = vmatpush1.msra.mxu0 0.0
  %10251 = vmatprep.subr.mxu0 0.0
  %10252 = vmatpush1.msra.mxu0 0.0
  %10253 = vmatprep.subr.mxu0 0.0
  %10254 = vmatpush1.msra.mxu0 0.0
  %10255 = vmatprep.subr.mxu0 0.0
  %10256 = vmatpush1.msra.mxu0 0.0
  %10257 = vmatprep.subr.mxu0 0.0
  %10258 = vmatpush1.msra.mxu0 0.0
  %10259 = vmatprep.subr.mxu0 0.0
  %10260 = vmatpush1.msra.mxu0 0.0
  %10261 = vmatprep.subr.mxu0 0.0
  %10262 = vmatpush1.msra.mxu0 0.0
  %10263 = vmatprep.subr.mxu0 0.0
  %10264 = vmatpush1.msra.mxu0 0.0
  %10265 = vmatprep.subr.mxu0 0.0
  %10266 = vmatpush1.msra.mxu0 0.0
  %10267 = vmatprep.subr.mxu0 0.0
  %10268 = vmatpush1.msra.mxu0 %v10235
  %10269 = vmatprep.subr.mxu0 0.0
  %10270 = vmatpush2.msra.mxu0 0.0
  %10271 = vmatprep.subr.mxu0 0.0
  %10272 = vmatpush2.msra.mxu0 0.0
  %10273 = vmatprep.subr.mxu0 0.0
  %10274 = vmatpush2.msra.mxu0 0.0
  %10275 = vmatprep.subr.mxu0 0.0
  %10276 = vmatpush2.msra.mxu0 0.0
  %10277 = vmatprep.subr.mxu0 0.0
  %10278 = vmatpush2.msra.mxu0 0.0
  %10279 = vmatprep.subr.mxu0 0.0
  %10280 = vmatpush2.msra.mxu0 0.0
  %10281 = vmatprep.subr.mxu0 0.0
  %10282 = vmatpush2.msra.mxu0 0.0
  %10283 = vmatprep.subr.mxu0 0.0
  %10284 = vmatpush2.msra.mxu0 0.0
  %10285 = vmatprep.subr.mxu0 0.0
  %10286 = vmatpush2.msra.mxu0 0.0
  %10287 = vmatprep.subr.mxu0 0.0
  %10288 = vmatpush2.msra.mxu0 0.0
  %10289 = vmatprep.subr.mxu0 0.0
  %10290 = vmatpush2.msra.mxu0 0.0
  %10291 = vmatprep.subr.mxu0 0.0
  %10292 = vmatpush2.msra.mxu0 0.0
  %10293 = vmatprep.subr.mxu0 0.0
  %10294 = vmatpush2.msra.mxu0 0.0
  %10295 = vmatprep.subr.mxu0 0.0
  %10296 = vmatpush2.msra.mxu0 0.0
  %10297 = vmatprep.subr.mxu0 0.0
  %10298 = vmatpush2.msra.mxu0 0.0
  %10299 = vmatprep.subr.mxu0 0.0
  %10300 = vmatpush2.msra.mxu0 0.0
  %10301 = vmatprep.mubr.f32.mxu0 0.0
  %10302 = vmatmul.mubr.f32.gmra.mxu0 %v7252
  %v10303 = vpop.f32.mrf.mxu0
  %v10304 = vadd.f32 %v10232, %v10303
  %v10305 = vpop.f32.mrf.mxu0
  %10306 = vdwg.mxu0
  %v10307 = vadd.f32 %v10304, %v9915
  %v10308 = vpack.c.bf16 %v10307, %v10307
  %v10310 = vsel %vm2853, %v10308, 0
  %10312 = vmatprep.subr.bf16.mxu0 0
  %10313 = vmatpush1.bf16.msra.mxu0 0
  %10314 = vmatprep.subr.bf16.mxu0 0
  %10315 = vmatpush1.bf16.msra.mxu0 0
  %10316 = vmatprep.subr.bf16.mxu0 0
  %10317 = vmatpush1.bf16.msra.mxu0 0
  %10318 = vmatprep.subr.bf16.mxu0 0
  %10319 = vmatpush1.bf16.msra.mxu0 0
  %10320 = vmatprep.subr.bf16.mxu0 %v7367
  %10321 = vmatpush1.bf16.msra.mxu0 %v7366
  %10322 = vmatprep.subr.bf16.mxu0 %v7365
  %10323 = vmatpush1.bf16.msra.mxu0 %v7364
  %10324 = vmatprep.subr.bf16.mxu0 %v7363
  %10325 = vmatpush1.bf16.msra.mxu0 %v7362
  %10326 = vmatprep.subr.bf16.mxu0 %v7361
  %10327 = vmatpush1.bf16.msra.mxu0 %v7360
  %10328 = vmatprep.subr.bf16.mxu0 0
  %10329 = vmatpush2.bf16.msra.mxu0 0
  %10330 = vmatprep.subr.bf16.mxu0 0
  %10331 = vmatpush2.bf16.msra.mxu0 0
  %10332 = vmatprep.subr.bf16.mxu0 0
  %10333 = vmatpush2.bf16.msra.mxu0 0
  %10334 = vmatprep.subr.bf16.mxu0 0
  %10335 = vmatpush2.bf16.msra.mxu0 0
  %10336 = vmatprep.subr.bf16.mxu0 0
  %10337 = vmatpush2.bf16.msra.mxu0 0
  %10338 = vmatprep.subr.bf16.mxu0 0
  %10339 = vmatpush2.bf16.msra.mxu0 0
  %10340 = vmatprep.subr.bf16.mxu0 0
  %10341 = vmatpush2.bf16.msra.mxu0 0
  %10342 = vmatprep.subr.bf16.mxu0 0
  %10343 = vmatpush2.bf16.msra.mxu0 0
  %10344 = vmatprep.mubr.bf16.mxu0 0
  %10345 = vmatmul.mubr.bf16.gmra.mxu0 %v10310
  %v10346 = vpop.f32.mrf.mxu0
  %v10347 = vadd.f32 0.0, %v10346
  %v10348 = vpop.f32.mrf.mxu0
  %v10349 = vadd.f32 0.0, %v10348
  %v10350 = vpop.f32.mrf.mxu0
  %v10351 = vpop.f32.mrf.mxu0
  %10352 = vdwg.mxu0
  %10353 = vmatprep.subr.mxu0 0.0
  %10354 = vmatpush1.msra.mxu0 0.0
  %10355 = vmatprep.subr.mxu0 0.0
  %10356 = vmatpush1.msra.mxu0 0.0
  %10357 = vmatprep.subr.mxu0 0.0
  %10358 = vmatpush1.msra.mxu0 0.0
  %10359 = vmatprep.subr.mxu0 0.0
  %10360 = vmatpush1.msra.mxu0 0.0
  %10361 = vmatprep.subr.mxu0 0.0
  %10362 = vmatpush1.msra.mxu0 0.0
  %10363 = vmatprep.subr.mxu0 0.0
  %10364 = vmatpush1.msra.mxu0 0.0
  %10365 = vmatprep.subr.mxu0 0.0
  %10366 = vmatpush1.msra.mxu0 0.0
  %10367 = vmatprep.subr.mxu0 0.0
  %10368 = vmatpush1.msra.mxu0 0.0
  %10369 = vmatprep.subr.mxu0 0.0
  %10370 = vmatpush1.msra.mxu0 0.0
  %10371 = vmatprep.subr.mxu0 0.0
  %10372 = vmatpush1.msra.mxu0 0.0
  %10373 = vmatprep.subr.mxu0 0.0
  %10374 = vmatpush1.msra.mxu0 0.0
  %10375 = vmatprep.subr.mxu0 0.0
  %10376 = vmatpush1.msra.mxu0 0.0
  %10377 = vmatprep.subr.mxu0 0.0
  %10378 = vmatpush1.msra.mxu0 0.0
  %10379 = vmatprep.subr.mxu0 0.0
  %10380 = vmatpush1.msra.mxu0 0.0
  %10381 = vmatprep.subr.mxu0 0.0
  %10382 = vmatpush1.msra.mxu0 0.0
  %10383 = vmatprep.subr.mxu0 0.0
  %10384 = vmatpush1.msra.mxu0 %v10349
  %10385 = vmatprep.subr.mxu0 0.0
  %10386 = vmatpush2.msra.mxu0 0.0
  %10387 = vmatprep.subr.mxu0 0.0
  %10388 = vmatpush2.msra.mxu0 0.0
  %10389 = vmatprep.subr.mxu0 0.0
  %10390 = vmatpush2.msra.mxu0 0.0
  %10391 = vmatprep.subr.mxu0 0.0
  %10392 = vmatpush2.msra.mxu0 0.0
  %10393 = vmatprep.subr.mxu0 0.0
  %10394 = vmatpush2.msra.mxu0 0.0
  %10395 = vmatprep.subr.mxu0 0.0
  %10396 = vmatpush2.msra.mxu0 0.0
  %10397 = vmatprep.subr.mxu0 0.0
  %10398 = vmatpush2.msra.mxu0 0.0
  %10399 = vmatprep.subr.mxu0 0.0
  %10400 = vmatpush2.msra.mxu0 0.0
  %10401 = vmatprep.subr.mxu0 0.0
  %10402 = vmatpush2.msra.mxu0 0.0
  %10403 = vmatprep.subr.mxu0 0.0
  %10404 = vmatpush2.msra.mxu0 0.0
  %10405 = vmatprep.subr.mxu0 0.0
  %10406 = vmatpush2.msra.mxu0 0.0
  %10407 = vmatprep.subr.mxu0 0.0
  %10408 = vmatpush2.msra.mxu0 0.0
  %10409 = vmatprep.subr.mxu0 0.0
  %10410 = vmatpush2.msra.mxu0 0.0
  %10411 = vmatprep.subr.mxu0 0.0
  %10412 = vmatpush2.msra.mxu0 0.0
  %10413 = vmatprep.subr.mxu0 0.0
  %10414 = vmatpush2.msra.mxu0 0.0
  %10415 = vmatprep.subr.mxu0 0.0
  %10416 = vmatpush2.msra.mxu0 0.0
  %10417 = vmatprep.mubr.f32.mxu0 0.0
  %10418 = vmatmul.mubr.f32.gmra.mxu0 %v7426
  %v10419 = vpop.f32.mrf.mxu0
  %v10420 = vadd.f32 0.0, %v10419
  %v10421 = vpop.f32.mrf.mxu0
  %10422 = vmatprep.mubr.f32.mxu0 0.0
  %10423 = vmatmul.mubr.f32.gmra.mxu0 %v7429
  %v10424 = vpop.f32.mrf.mxu0
  %v10425 = vadd.f32 0.0, %v10424
  %v10426 = vpop.f32.mrf.mxu0
  %10427 = vdwg.mxu0
  %10428 = vmatprep.subr.mxu0 0.0
  %10429 = vmatpush1.msra.mxu0 0.0
  %10430 = vmatprep.subr.mxu0 0.0
  %10431 = vmatpush1.msra.mxu0 0.0
  %10432 = vmatprep.subr.mxu0 0.0
  %10433 = vmatpush1.msra.mxu0 0.0
  %10434 = vmatprep.subr.mxu0 0.0
  %10435 = vmatpush1.msra.mxu0 0.0
  %10436 = vmatprep.subr.mxu0 0.0
  %10437 = vmatpush1.msra.mxu0 0.0
  %10438 = vmatprep.subr.mxu0 0.0
  %10439 = vmatpush1.msra.mxu0 0.0
  %10440 = vmatprep.subr.mxu0 0.0
  %10441 = vmatpush1.msra.mxu0 0.0
  %10442 = vmatprep.subr.mxu0 0.0
  %10443 = vmatpush1.msra.mxu0 0.0
  %10444 = vmatprep.subr.mxu0 0.0
  %10445 = vmatpush1.msra.mxu0 0.0
  %10446 = vmatprep.subr.mxu0 0.0
  %10447 = vmatpush1.msra.mxu0 0.0
  %10448 = vmatprep.subr.mxu0 0.0
  %10449 = vmatpush1.msra.mxu0 0.0
  %10450 = vmatprep.subr.mxu0 0.0
  %10451 = vmatpush1.msra.mxu0 0.0
  %10452 = vmatprep.subr.mxu0 0.0
  %10453 = vmatpush1.msra.mxu0 0.0
  %10454 = vmatprep.subr.mxu0 0.0
  %10455 = vmatpush1.msra.mxu0 0.0
  %10456 = vmatprep.subr.mxu0 0.0
  %10457 = vmatpush1.msra.mxu0 0.0
  %10458 = vmatprep.subr.mxu0 0.0
  %10459 = vmatpush1.msra.mxu0 %v10347
  %10460 = vmatprep.subr.mxu0 0.0
  %10461 = vmatpush2.msra.mxu0 0.0
  %10462 = vmatprep.subr.mxu0 0.0
  %10463 = vmatpush2.msra.mxu0 0.0
  %10464 = vmatprep.subr.mxu0 0.0
  %10465 = vmatpush2.msra.mxu0 0.0
  %10466 = vmatprep.subr.mxu0 0.0
  %10467 = vmatpush2.msra.mxu0 0.0
  %10468 = vmatprep.subr.mxu0 0.0
  %10469 = vmatpush2.msra.mxu0 0.0
  %10470 = vmatprep.subr.mxu0 0.0
  %10471 = vmatpush2.msra.mxu0 0.0
  %10472 = vmatprep.subr.mxu0 0.0
  %10473 = vmatpush2.msra.mxu0 0.0
  %10474 = vmatprep.subr.mxu0 0.0
  %10475 = vmatpush2.msra.mxu0 0.0
  %10476 = vmatprep.subr.mxu0 0.0
  %10477 = vmatpush2.msra.mxu0 0.0
  %10478 = vmatprep.subr.mxu0 0.0
  %10479 = vmatpush2.msra.mxu0 0.0
  %10480 = vmatprep.subr.mxu0 0.0
  %10481 = vmatpush2.msra.mxu0 0.0
  %10482 = vmatprep.subr.mxu0 0.0
  %10483 = vmatpush2.msra.mxu0 0.0
  %10484 = vmatprep.subr.mxu0 0.0
  %10485 = vmatpush2.msra.mxu0 0.0
  %10486 = vmatprep.subr.mxu0 0.0
  %10487 = vmatpush2.msra.mxu0 0.0
  %10488 = vmatprep.subr.mxu0 0.0
  %10489 = vmatpush2.msra.mxu0 0.0
  %10490 = vmatprep.subr.mxu0 0.0
  %10491 = vmatpush2.msra.mxu0 0.0
  %10492 = vmatprep.mubr.f32.mxu0 0.0
  %10493 = vmatmul.mubr.f32.gmra.mxu0 %v7507
  %v10494 = vpop.f32.mrf.mxu0
  %v10495 = vadd.f32 %v10420, %v10494
  %v10496 = vpop.f32.mrf.mxu0
  %10497 = vmatprep.mubr.f32.mxu0 0.0
  %10498 = vmatmul.mubr.f32.gmra.mxu0 %v7510
  %v10499 = vpop.f32.mrf.mxu0
  %v10500 = vadd.f32 %v10425, %v10499
  %v10501 = vpop.f32.mrf.mxu0
  %10502 = vdwg.mxu0
  %v10503 = vadd.f32 %v10495, %v9922
  %v10504 = vadd.f32 %v10500, %v9923
  %10505 = vst [vmem:[%s23] sm:$0xff] %v10503
  %10506 = vst [vmem:[%s23 + $0x8] sm:$0xff] %v10504
  // Predicated region
  $region94: #{merge_layer_c_forward.1} parent=0 // pred_check
    _
  $region95: #{merge_layer_c_forward.1} parent=0 // pred_check_branch
    %10508 = sbr.rel (0) target = $region97
  $region96: #{merge_layer_c_forward.1} parent=0 // pred_region
    _
  $region97: #{merge_layer_c_forward.1} parent=0 // pred_fallthru
    _
  // Predicated region
  $region98: #{merge_layer_c_forward.1} parent=0 // pred_check
    _
  $region99: #{merge_layer_c_forward.1} parent=0 // pred_check_branch
    %10510 = sbr.rel (0) target = $region101
  $region100: #{merge_layer_c_forward.1} parent=0 // pred_region
    _
  $region101: #{merge_layer_c_forward.1} parent=0 // pred_fallthru
    _

</llo_original>
